<compile_context>
chip_gen: v6e
topology: v6e:2x2x1
jax: 0.10.0
libtpu: 0.0.40
codegen_flags: <defaults>
</compile_context>

<pallas_src>
import functools

import jax
import jax.numpy as jnp
from jax.experimental import pallas as pl
from jax.experimental.pallas import tpu as pltpu

LRELU_SLOPE = 0.01   # F.leaky_relu default negative_slope
BN_EPS = 1e-5        # nn.BatchNorm default eps

_PARALLEL_1D = pltpu.CompilerParams(dimension_semantics=("parallel",))


# ---------------------------------------------------------------------------
# Pallas kernels
# ---------------------------------------------------------------------------
def _matmul_bias_stats_kernel(x_ref, w_ref, b_ref, y_ref, stats_ref):
    """One M-tile: y = x @ w + b (bf16 MXU, f32 accum) + per-tile BN partial sums."""
    y = jnp.dot(x_ref[...], w_ref[...], preferred_element_type=jnp.float32)
    y = y + b_ref[...]
    y_ref[...] = y
    s1 = jnp.sum(y, axis=0, keepdims=True)            # (1, C)  sum
    s2 = jnp.sum(y * y, axis=0, keepdims=True)        # (1, C)  sum of squares
    stats_ref[0] = jnp.concatenate([s1, s2], axis=0)  # (2, C)


def _bn_scale_shift(stats, gamma, beta, inv_m):
    """Fold per-tile partials into a per-channel affine (scale, shift), (1, C) each."""
    s = jnp.sum(stats, axis=0) * inv_m                # (2, C): [mean, E[y^2]]
    mean = s[0:1, :]
    var = jnp.maximum(s[1:2, :] - mean * mean, 0.0)   # one-pass variance, clamped
    inv = jax.lax.rsqrt(var + BN_EPS)
    scale = gamma * inv
    shift = beta - mean * scale
    return scale, shift


def _bn_lrelu_pool_kernel(stats_ref, y_ref, g_ref, b_ref, o_ref, *, inv_m):
    """Finalize BN + LeakyReLU + fused 2x2 max-pool for one image.

    y_ref block: (1, OH/2, 2, OW/2, 2*C) f32 -- a free row-major regroup of the
    (M, C) matmul output, i.e. (n, oh_pair, oh_lo/hi, ow_pair, ow_lo/hi x channel).
    """
    scale, shift = _bn_scale_shift(stats_ref[...], g_ref[...], b_ref[...], inv_m)
    c = scale.shape[-1]
    sc = scale.reshape(1, 1, c)
    sh = shift.reshape(1, 1, c)

    def act(v):                                       # v: (OH/2, OW/2, C)
        v = v * sc + sh
        return jnp.where(v >= 0, v, LRELU_SLOPE * v)

    y = y_ref[0]                                      # (OH/2, 2, OW/2, 2*C)
    y0 = y[:, 0, :, :]                                # even output rows
    y1 = y[:, 1, :, :]                                # odd output rows
    p = jnp.maximum(
        jnp.maximum(act(y0[..., :c]), act(y0[..., c:])),
        jnp.maximum(act(y1[..., :c]), act(y1[..., c:])))
    o_ref[0] = p.astype(o_ref.dtype)


def _bn_lrelu_kernel(stats_ref, y_ref, g_ref, b_ref, o_ref, *, inv_m):
    """Finalize BN + LeakyReLU for one M-tile of the FC layer (no pooling)."""
    scale, shift = _bn_scale_shift(stats_ref[...], g_ref[...], b_ref[...], inv_m)
    v = y_ref[...] * scale + shift
    o_ref[...] = jnp.where(v >= 0, v, LRELU_SLOPE * v).astype(o_ref.dtype)


# ---------------------------------------------------------------------------
# pallas_call wrappers
# ---------------------------------------------------------------------------
def _pick_m_tile(m):
    for t in (1024, 512, 384, 256, 128, 64, 32, 16, 8):
        if m % t == 0:
            return t
    return m  # tiny / odd M: single full block (block dim == array dim is allowed)


def matmul_bias_stats(x, w, b):
    """x: (M, K) bf16, w: (K, C) bf16, b: (1, C) f32 ->
       y_pre (M, C) f32 and per-tile BN partials (T, 2, C) f32."""
    m, k = x.shape
    c = w.shape[1]
    tm = _pick_m_tile(m)
    t = m // tm
    return pl.pallas_call(
        _matmul_bias_stats_kernel,
        out_shape=(jax.ShapeDtypeStruct((m, c), jnp.float32),
                   jax.ShapeDtypeStruct((t, 2, c), jnp.float32)),
        grid=(t,),
        in_specs=[pl.BlockSpec((tm, k), lambda i: (i, 0)),
                  pl.BlockSpec((k, c), lambda i: (0, 0)),     # weights stay resident
                  pl.BlockSpec((1, c), lambda i: (0, 0))],
        out_specs=(pl.BlockSpec((tm, c), lambda i: (i, 0)),
                   pl.BlockSpec((1, 2, c), lambda i: (i, 0, 0))),
        compiler_params=_PARALLEL_1D,
    )(x, w, b)


def bn_lrelu_pool2x2(stats, y6, gamma, beta, inv_m, out_dtype=jnp.bfloat16):
    """stats: (T,2,C); y6: (N, OH/2, 2, OW/2, 2*C) f32 -> (N, OH/2, OW/2, C)."""
    n, oh2, _, ow2, c2 = y6.shape
    c = c2 // 2
    t = stats.shape[0]
    kernel = functools.partial(_bn_lrelu_pool_kernel, inv_m=inv_m)
    return pl.pallas_call(
        kernel,
        out_shape=jax.ShapeDtypeStruct((n, oh2, ow2, c), out_dtype),
        grid=(n,),
        in_specs=[pl.BlockSpec((t, 2, c), lambda i: (0, 0, 0)),
                  pl.BlockSpec((1, oh2, 2, ow2, c2), lambda i: (i, 0, 0, 0, 0)),
                  pl.BlockSpec((1, c), lambda i: (0, 0)),
                  pl.BlockSpec((1, c), lambda i: (0, 0))],
        out_specs=pl.BlockSpec((1, oh2, ow2, c), lambda i: (i, 0, 0, 0)),
        compiler_params=_PARALLEL_1D,
    )(stats, y6, gamma, beta)


def bn_lrelu(stats, y, gamma, beta, inv_m, out_dtype=jnp.float32):
    """stats: (T,2,C); y: (M, C) f32 -> (M, C) leaky_relu(BN(y))."""
    m, c = y.shape
    t = stats.shape[0]
    tm = _pick_m_tile(m)
    kernel = functools.partial(_bn_lrelu_kernel, inv_m=inv_m)
    return pl.pallas_call(
        kernel,
        out_shape=jax.ShapeDtypeStruct((m, c), out_dtype),
        grid=(m // tm,),
        in_specs=[pl.BlockSpec((t, 2, c), lambda i: (0, 0, 0)),
                  pl.BlockSpec((tm, c), lambda i: (i, 0)),
                  pl.BlockSpec((1, c), lambda i: (0, 0)),
                  pl.BlockSpec((1, c), lambda i: (0, 0))],
        out_specs=pl.BlockSpec((tm, c), lambda i: (i, 0)),
        compiler_params=_PARALLEL_1D,
    )(stats, y, gamma, beta)


# ---------------------------------------------------------------------------
# Layers
# ---------------------------------------------------------------------------
def conv_bn_lrelu_pool(x, w, b, gamma, beta, ksize=5):
    """x: (N, H, W, Cin) bf16 NHWC (real channels); w: (Cin*K*K, Cpad) bf16.
    Returns 2x2-max-pool(leaky_relu(BN(conv(x)))) as (N, OH/2, OW/2, Cpad) bf16."""
    n, h, wd, _ = x.shape
    k, cpad = w.shape
    oh, ow = h - ksize + 1, wd - ksize + 1
    # Channel-major (Cin, KH, KW) patch features == PyTorch weight flattening order.
    patches = jax.lax.conv_general_dilated_patches(
        x, (ksize, ksize), (1, 1), "VALID",
        dimension_numbers=("NHWC", "HWIO", "NHWC"))          # (N, OH, OW, K) bf16
    m = n * oh * ow
    y, stats = matmul_bias_stats(patches.reshape(m, k), w, b)
    # Free row-major regroup exposing the 2x2 pool pairs.
    y6 = y.reshape(n, oh // 2, 2, ow // 2, 2 * cpad)
    return bn_lrelu_pool2x2(stats, y6, gamma, beta, inv_m=1.0 / m)


def fc_bn_lrelu(x, w, b, gamma, beta):
    """x: (N, K) bf16; w: (K, Cpad) bf16 -> (N, Cpad) f32."""
    m = x.shape[0]
    y, stats = matmul_bias_stats(x, w, b)
    return bn_lrelu(stats, y, gamma, beta, inv_m=1.0 / m)


def extractor_forward(p, x):
    """x: (N, 1, 28, 28) NCHW f32 (PyTorch convention) -> (N, 500) f32."""
    n = x.shape[0]
    h = jnp.transpose(x, (0, 2, 3, 1)).astype(jnp.bfloat16)            # NHWC, bf16 once
    h = conv_bn_lrelu_pool(h, p["w1"], p["b1"], p["g1"], p["bt1"])     # (N, 12, 12, 128)
    h = conv_bn_lrelu_pool(h[..., :20], p["w2"], p["b2"], p["g2"], p["bt2"])  # (N,4,4,128)
    h = h.reshape(n, 4 * 4 * 128)        # free padded-NHWC flatten; fc weights match it
    out = fc_bn_lrelu(h, p["wf"], p["bf"], p["g3"], p["bt3"])          # (N, 512) f32
    return out[:, :500]                  # drop lane padding at the model boundary


# ---------------------------------------------------------------------------
# Parameters (PyTorch layout) + repacking for the TPU kernels
# ---------------------------------------------------------------------------
def init_raw_params(key):
    ks = jax.random.split(key, 6)

    def uni(k, shape, fan_in):
        bound = 1.0 / (fan_in ** 0.5)
        return jax.random.uniform(k, shape, jnp.float32, -bound, bound)

    return {
        "conv1_w": uni(ks[0], (20, 1, 5, 5), 25),
        "conv1_b": uni(ks[1], (20,), 25),
        "conv2_w": uni(ks[2], (50, 20, 5, 5), 500),
        "conv2_b": uni(ks[3], (50,), 500),
        "fc1_w":   uni(ks[4], (500, 800), 800),      # torch Linear layout (out, in)
        "fc1_b":   uni(ks[5], (500,), 800),
    }


def pack_params(raw):
    """Repack once at init: (K, Cout) matmul layout, bf16 weights, Cout zero-padded to
    128-lane multiples, fc1 permuted to the padded-NHWC flatten order."""
    def pack_conv(w, b, cpad):
        cout = w.shape[0]
        k = w.shape[1] * w.shape[2] * w.shape[3]
        w2 = jnp.pad(w.reshape(cout, k).T, ((0, 0), (0, cpad - cout)))
        b2 = jnp.pad(b, (0, cpad - cout)).reshape(1, cpad)
        return w2.astype(jnp.bfloat16), b2.astype(jnp.float32)

    def bn_pair(c_real, cpad):
        gamma = jnp.pad(jnp.ones((c_real,), jnp.float32), (0, cpad - c_real))
        return gamma.reshape(1, cpad), jnp.zeros((1, cpad), jnp.float32)

    w1, b1 = pack_conv(raw["conv1_w"], raw["conv1_b"], 128)
    w2, b2 = pack_conv(raw["conv2_w"], raw["conv2_b"], 128)

    # fc1: columns ordered (c, h, w) for NCHW flatten -> rows ordered (h, w, c_pad128).
    wf = jnp.transpose(raw["fc1_w"].reshape(500, 50, 4, 4), (2, 3, 1, 0))  # (h,w,c,out)
    wf = jnp.pad(wf, ((0, 0), (0, 0), (0, 128 - 50), (0, 512 - 500)))
    wf = wf.reshape(4 * 4 * 128, 512).astype(jnp.bfloat16)
    bf = jnp.pad(raw["fc1_b"], (0, 512 - 500)).reshape(1, 512).astype(jnp.float32)

    g1, bt1 = bn_pair(20, 128)
    g2, bt2 = bn_pair(50, 128)
    g3, bt3 = bn_pair(500, 512)
    return dict(w1=w1, b1=b1, g1=g1, bt1=bt1,
                w2=w2, b2=b2, g2=g2, bt2=bt2,
                wf=wf, bf=bf, g3=g3, bt3=bt3)


# ---------------------------------------------------------------------------
# Pure-JAX f32 reference (mirror of the PyTorch module, train-mode BN)
# ---------------------------------------------------------------------------
def reference_forward(raw, x):
    def bn(y, axes):
        mu = jnp.mean(y, axis=axes, keepdims=True)
        var = jnp.mean((y - mu) ** 2, axis=axes, keepdims=True)
        return (y - mu) * jax.lax.rsqrt(var + BN_EPS)

    def lrelu(y):
        return jnp.where(y >= 0, y, LRELU_SLOPE * y)

    def conv(y, w, b):
        out = jax.lax.conv_general_dilated(
            y, w, (1, 1), "VALID", dimension_numbers=("NCHW", "OIHW", "NCHW"))
        return out + b.reshape(1, -1, 1, 1)

    def pool(y):
        n, c, hh, ww = y.shape
        return y.reshape(n, c, hh // 2, 2, ww // 2, 2).max(axis=(3, 5))

    h = pool(lrelu(bn(conv(x, raw["conv1_w"], raw["conv1_b"]), (0, 2, 3))))
    h = pool(lrelu(bn(conv(h, raw["conv2_w"], raw["conv2_b"]), (0, 2, 3))))
    h = h.reshape(h.shape[0], -1)
    return lrelu(bn(h @ raw["fc1_w"].T + raw["fc1_b"], (0,)))


if __name__ == "__main__":
    key = jax.random.PRNGKey(0)
    k_x, k_p = jax.random.split(key)
    # fc1 (50*4*4 inputs) pins the input to 1x28x28; batch 8 keeps batch-norm stats
    # well conditioned for the reference comparison while staying small.
    x = jax.random.normal(k_x, (8, 1, 28, 28), jnp.float32)
    raw = init_raw_params(k_p)
    params = pack_params(raw)

    fwd = jax.jit(extractor_forward)
    out = jax.block_until_ready(fwd(params, x))

    assert out.shape == (8, 500), out.shape
    assert out.dtype == jnp.float32
    assert bool(jnp.all(jnp.isfinite(out)))

    # Loose numerical check vs the f32 reference (kernel path uses bf16 MXU inputs).
    ref = reference_forward(raw, x)
    mean_err = float(jnp.mean(jnp.abs(out - ref)))
    max_err = float(jnp.max(jnp.abs(out - ref)))
    assert mean_err < 0.08, f"mean abs error vs reference: {mean_err} (max {max_err})"

    print("KERNEL_OK")
</pallas_src>

<mosaic_0001>
module attributes {stable_mosaic.version = 11 : i64} {
  func.func @_matmul_bias_stats_kernel(%arg0: i32, %arg1: memref<512x25xbf16, #tpu.memory_space<vmem>>, %arg2: memref<25x128xbf16, #tpu.memory_space<vmem>>, %arg3: memref<1x128xf32, #tpu.memory_space<vmem>>, %arg4: memref<512x128xf32, #tpu.memory_space<vmem>>, %arg5: memref<1x2x128xf32, #tpu.memory_space<vmem>>) attributes {dimension_semantics = [#tpu.dimension_semantics<parallel>], iteration_bounds = array<i64: 9>, scalar_prefetch = 0 : i64, scratch_operands = 0 : i64, tpu.core_type = #tpu.core_type<tc>, window_params = [{transform_indices = @transform_0, window_bounds = array<i64: 512, 25>}, {pipeline_mode = #tpu.pipeline_mode<synchronous>, transform_indices = @transform_1, window_bounds = array<i64: 25, 128>}, {pipeline_mode = #tpu.pipeline_mode<synchronous>, transform_indices = @transform_2, window_bounds = array<i64: 1, 128>}, {transform_indices = @transform_3, window_bounds = array<i64: 512, 128>}, {transform_indices = @transform_4, window_bounds = array<i64: 1, 2, 128>}]} {
    %c0 = arith.constant 0 : index
    %c0_0 = arith.constant 0 : index
    %0 = vector.load %arg1[%c0, %c0_0] : memref<512x25xbf16, #tpu.memory_space<vmem>>, vector<512x25xbf16>
    %c0_1 = arith.constant 0 : index
    %c0_2 = arith.constant 0 : index
    %1 = vector.load %arg2[%c0_1, %c0_2] : memref<25x128xbf16, #tpu.memory_space<vmem>>, vector<25x128xbf16>
    %cst = arith.constant dense<0.000000e+00> : vector<512x128xf32>
    %2 = tpu.matmul %0, %1, %cst {dimension_numbers = #tpu.dot_dimension_numbers<[1], [0], [0], [1], [0, 0, 1, 1], [], []>} : vector<512x25xbf16>, vector<25x128xbf16>, vector<512x128xf32> -> vector<512x128xf32>
    %c0_3 = arith.constant 0 : index
    %c0_4 = arith.constant 0 : index
    %3 = vector.load %arg3[%c0_3, %c0_4] : memref<1x128xf32, #tpu.memory_space<vmem>>, vector<1x128xf32>
    %4 = vector.broadcast %3 : vector<1x128xf32> to vector<512x128xf32>
    %5 = arith.addf %2, %4 : vector<512x128xf32>
    %c0_5 = arith.constant 0 : index
    %c0_6 = arith.constant 0 : index
    %6 = vector.load %arg4[%c0_5, %c0_6] : memref<512x128xf32, #tpu.memory_space<vmem>>, vector<512x128xf32>
    tpu.vector_store %arg4[%c0_5, %c0_6], %5 {strides = array<i32>} : memref<512x128xf32, #tpu.memory_space<vmem>>, vector<512x128xf32>,
    %cst_7 = arith.constant dense<0.000000e+00> : vector<128xf32>
    %7 = vector.multi_reduction <add>, %5, %cst_7 [0] : vector<512x128xf32> to vector<128xf32>
    %8 = vector.shape_cast %7 : vector<128xf32> to vector<1x128xf32>
    %9 = arith.mulf %5, %5 : vector<512x128xf32>
    %cst_8 = arith.constant dense<0.000000e+00> : vector<128xf32>
    %10 = vector.multi_reduction <add>, %9, %cst_8 [0] : vector<512x128xf32> to vector<128xf32>
    %11 = vector.shape_cast %10 : vector<128xf32> to vector<1x128xf32>
    %12 = tpu.concatenate %8, %11 in 0 : vector<1x128xf32>, vector<1x128xf32> -> vector<2x128xf32>
    %c0_9 = arith.constant 0 : index
    %c0_10 = arith.constant 0 : index
    %c0_11 = arith.constant 0 : index
    %13 = vector.load %arg5[%c0_9, %c0_10, %c0_11] : memref<1x2x128xf32, #tpu.memory_space<vmem>>, vector<1x2x128xf32>
    %14 = vector.shape_cast %13 : vector<1x2x128xf32> to vector<2x128xf32>
    %15 = vector.shape_cast %12 : vector<2x128xf32> to vector<1x2x128xf32>
    tpu.vector_store %arg5[%c0_9, %c0_10, %c0_11], %15 {strides = array<i32>} : memref<1x2x128xf32, #tpu.memory_space<vmem>>, vector<1x2x128xf32>,
    return
  }
  func.func @transform_0(%arg0: i32) -> (i32, i32) {
    %c0_i32 = arith.constant 0 : i32
    %c0_i32_0 = arith.constant 0 : i32
    return %arg0, %c0_i32 : i32, i32
  }
  func.func @transform_1(%arg0: i32) -> (i32, i32) {
    %c0_i32 = arith.constant 0 : i32
    %c0_i32_0 = arith.constant 0 : i32
    %c0_i32_1 = arith.constant 0 : i32
    return %c0_i32, %c0_i32_0 : i32, i32
  }
  func.func @transform_2(%arg0: i32) -> (i32, i32) {
    %c0_i32 = arith.constant 0 : i32
    %c0_i32_0 = arith.constant 0 : i32
    %c0_i32_1 = arith.constant 0 : i32
    return %c0_i32, %c0_i32_0 : i32, i32
  }
  func.func @transform_3(%arg0: i32) -> (i32, i32) {
    %c0_i32 = arith.constant 0 : i32
    %c0_i32_0 = arith.constant 0 : i32
    return %arg0, %c0_i32 : i32, i32
  }
  func.func @transform_4(%arg0: i32) -> (i32, i32, i32) {
    %c0_i32 = arith.constant 0 : i32
    %c0_i32_0 = arith.constant 0 : i32
    %c0_i32_1 = arith.constant 0 : i32
    return %arg0, %c0_i32, %c0_i32_0 : i32, i32, i32
  }
}

module attributes {stable_mosaic.version = 11 : i64} {
  func.func @_bn_lrelu_pool_kernel(%arg0: i32, %arg1: memref<9x2x128xf32, #tpu.memory_space<vmem>>, %arg2: memref<1x12x2x12x256xf32, #tpu.memory_space<vmem>>, %arg3: memref<1x128xf32, #tpu.memory_space<vmem>>, %arg4: memref<1x128xf32, #tpu.memory_space<vmem>>, %arg5: memref<1x12x12x128xbf16, #tpu.memory_space<vmem>>) attributes {dimension_semantics = [#tpu.dimension_semantics<parallel>], iteration_bounds = array<i64: 8>, scalar_prefetch = 0 : i64, scratch_operands = 0 : i64, tpu.core_type = #tpu.core_type<tc>, window_params = [{pipeline_mode = #tpu.pipeline_mode<synchronous>, transform_indices = @transform_0, window_bounds = array<i64: 9, 2, 128>}, {transform_indices = @transform_1, window_bounds = array<i64: 1, 12, 2, 12, 256>}, {pipeline_mode = #tpu.pipeline_mode<synchronous>, transform_indices = @transform_2, window_bounds = array<i64: 1, 128>}, {pipeline_mode = #tpu.pipeline_mode<synchronous>, transform_indices = @transform_3, window_bounds = array<i64: 1, 128>}, {transform_indices = @transform_4, window_bounds = array<i64: 1, 12, 12, 128>}]} {
    %c0 = arith.constant 0 : index
    %c0_0 = arith.constant 0 : index
    %c0_1 = arith.constant 0 : index
    %0 = vector.load %arg1[%c0, %c0_0, %c0_1] : memref<9x2x128xf32, #tpu.memory_space<vmem>>, vector<9x2x128xf32>
    %c0_2 = arith.constant 0 : index
    %c0_3 = arith.constant 0 : index
    %1 = vector.load %arg3[%c0_2, %c0_3] : memref<1x128xf32, #tpu.memory_space<vmem>>, vector<1x128xf32>
    %c0_4 = arith.constant 0 : index
    %c0_5 = arith.constant 0 : index
    %2 = vector.load %arg4[%c0_4, %c0_5] : memref<1x128xf32, #tpu.memory_space<vmem>>, vector<1x128xf32>
    %cst = arith.constant dense<0.000000e+00> : vector<2x128xf32>
    %3 = vector.multi_reduction <add>, %0, %cst [0] : vector<9x2x128xf32> to vector<2x128xf32>
    %cst_6 = arith.constant 2.17013891E-4 : f32
    %4 = vector.broadcast %cst_6 : f32 to vector<2x128xf32>
    %5 = arith.mulf %3, %4 : vector<2x128xf32>
    %6 = vector.extract_strided_slice %5 {offsets = [0, 0], sizes = [1, 128], strides = [1, 1]} : vector<2x128xf32> to vector<1x128xf32>
    %7 = vector.extract_strided_slice %5 {offsets = [1, 0], sizes = [1, 128], strides = [1, 1]} : vector<2x128xf32> to vector<1x128xf32>
    %8 = arith.mulf %6, %6 : vector<1x128xf32>
    %9 = arith.subf %7, %8 : vector<1x128xf32>
    %cst_7 = arith.constant 0.000000e+00 : f32
    %10 = vector.broadcast %cst_7 : f32 to vector<1x128xf32>
    %11 = arith.maximumf %9, %10 : vector<1x128xf32>
    %cst_8 = arith.constant 9.99999974E-6 : f32
    %12 = vector.broadcast %cst_8 : f32 to vector<1x128xf32>
    %13 = arith.addf %11, %12 : vector<1x128xf32>
    %14 = math.rsqrt %13 : vector<1x128xf32>
    %15 = arith.mulf %1, %14 : vector<1x128xf32>
    %16 = arith.mulf %6, %15 : vector<1x128xf32>
    %17 = arith.subf %2, %16 : vector<1x128xf32>
    %18 = vector.shape_cast %15 : vector<1x128xf32> to vector<1x1x128xf32>
    %19 = vector.shape_cast %17 : vector<1x128xf32> to vector<1x1x128xf32>
    %c0_9 = arith.constant 0 : index
    %c0_10 = arith.constant 0 : index
    %c0_11 = arith.constant 0 : index
    %c0_12 = arith.constant 0 : index
    %c0_13 = arith.constant 0 : index
    %20 = vector.load %arg2[%c0_9, %c0_10, %c0_11, %c0_12, %c0_13] : memref<1x12x2x12x256xf32, #tpu.memory_space<vmem>>, vector<1x12x2x12x256xf32>
    %21 = vector.shape_cast %20 : vector<1x12x2x12x256xf32> to vector<12x2x12x256xf32>
    %22 = vector.extract_strided_slice %21 {offsets = [0, 0, 0, 0], sizes = [12, 1, 12, 256], strides = [1, 1, 1, 1]} : vector<12x2x12x256xf32> to vector<12x1x12x256xf32>
    %23 = vector.shape_cast %22 : vector<12x1x12x256xf32> to vector<12x12x256xf32>
    %24 = vector.extract_strided_slice %21 {offsets = [0, 1, 0, 0], sizes = [12, 1, 12, 256], strides = [1, 1, 1, 1]} : vector<12x2x12x256xf32> to vector<12x1x12x256xf32>
    %25 = vector.shape_cast %24 : vector<12x1x12x256xf32> to vector<12x12x256xf32>
    %26 = vector.extract_strided_slice %23 {offsets = [0, 0, 0], sizes = [12, 12, 128], strides = [1, 1, 1]} : vector<12x12x256xf32> to vector<12x12x128xf32>
    %27 = vector.broadcast %18 : vector<1x1x128xf32> to vector<12x12x128xf32>
    %28 = arith.mulf %26, %27 : vector<12x12x128xf32>
    %29 = vector.broadcast %19 : vector<1x1x128xf32> to vector<12x12x128xf32>
    %30 = arith.addf %28, %29 : vector<12x12x128xf32>
    %cst_14 = arith.constant 0.000000e+00 : f32
    %31 = vector.broadcast %cst_14 : f32 to vector<12x12x128xf32>
    %32 = arith.cmpf oge, %30, %31 : vector<12x12x128xf32>
    %cst_15 = arith.constant 0.00999999977 : f32
    %33 = vector.broadcast %cst_15 : f32 to vector<12x12x128xf32>
    %34 = arith.mulf %33, %30 : vector<12x12x128xf32>
    %35 = arith.select %32, %30, %34 : vector<12x12x128xi1>, vector<12x12x128xf32>
    %36 = vector.extract_strided_slice %23 {offsets = [0, 0, 128], sizes = [12, 12, 128], strides = [1, 1, 1]} : vector<12x12x256xf32> to vector<12x12x128xf32>
    %37 = vector.broadcast %18 : vector<1x1x128xf32> to vector<12x12x128xf32>
    %38 = arith.mulf %36, %37 : vector<12x12x128xf32>
    %39 = vector.broadcast %19 : vector<1x1x128xf32> to vector<12x12x128xf32>
    %40 = arith.addf %38, %39 : vector<12x12x128xf32>
    %cst_16 = arith.constant 0.000000e+00 : f32
    %41 = vector.broadcast %cst_16 : f32 to vector<12x12x128xf32>
    %42 = arith.cmpf oge, %40, %41 : vector<12x12x128xf32>
    %cst_17 = arith.constant 0.00999999977 : f32
    %43 = vector.broadcast %cst_17 : f32 to vector<12x12x128xf32>
    %44 = arith.mulf %43, %40 : vector<12x12x128xf32>
    %45 = arith.select %42, %40, %44 : vector<12x12x128xi1>, vector<12x12x128xf32>
    %46 = arith.maximumf %35, %45 : vector<12x12x128xf32>
    %47 = vector.extract_strided_slice %25 {offsets = [0, 0, 0], sizes = [12, 12, 128], strides = [1, 1, 1]} : vector<12x12x256xf32> to vector<12x12x128xf32>
    %48 = vector.broadcast %18 : vector<1x1x128xf32> to vector<12x12x128xf32>
    %49 = arith.mulf %47, %48 : vector<12x12x128xf32>
    %50 = vector.broadcast %19 : vector<1x1x128xf32> to vector<12x12x128xf32>
    %51 = arith.addf %49, %50 : vector<12x12x128xf32>
    %cst_18 = arith.constant 0.000000e+00 : f32
    %52 = vector.broadcast %cst_18 : f32 to vector<12x12x128xf32>
    %53 = arith.cmpf oge, %51, %52 : vector<12x12x128xf32>
    %cst_19 = arith.constant 0.00999999977 : f32
    %54 = vector.broadcast %cst_19 : f32 to vector<12x12x128xf32>
    %55 = arith.mulf %54, %51 : vector<12x12x128xf32>
    %56 = arith.select %53, %51, %55 : vector<12x12x128xi1>, vector<12x12x128xf32>
    %57 = vector.extract_strided_slice %25 {offsets = [0, 0, 128], sizes = [12, 12, 128], strides = [1, 1, 1]} : vector<12x12x256xf32> to vector<12x12x128xf32>
    %58 = vector.broadcast %18 : vector<1x1x128xf32> to vector<12x12x128xf32>
    %59 = arith.mulf %57, %58 : vector<12x12x128xf32>
    %60 = vector.broadcast %19 : vector<1x1x128xf32> to vector<12x12x128xf32>
    %61 = arith.addf %59, %60 : vector<12x12x128xf32>
    %cst_20 = arith.constant 0.000000e+00 : f32
    %62 = vector.broadcast %cst_20 : f32 to vector<12x12x128xf32>
    %63 = arith.cmpf oge, %61, %62 : vector<12x12x128xf32>
    %cst_21 = arith.constant 0.00999999977 : f32
    %64 = vector.broadcast %cst_21 : f32 to vector<12x12x128xf32>
    %65 = arith.mulf %64, %61 : vector<12x12x128xf32>
    %66 = arith.select %63, %61, %65 : vector<12x12x128xi1>, vector<12x12x128xf32>
    %67 = arith.maximumf %56, %66 : vector<12x12x128xf32>
    %68 = arith.maximumf %46, %67 : vector<12x12x128xf32>
    %69 = arith.truncf %68 : vector<12x12x128xf32> to vector<12x12x128xbf16>
    %c0_22 = arith.constant 0 : index
    %c0_23 = arith.constant 0 : index
    %c0_24 = arith.constant 0 : index
    %c0_25 = arith.constant 0 : index
    %70 = vector.load %arg5[%c0_22, %c0_23, %c0_24, %c0_25] : memref<1x12x12x128xbf16, #tpu.memory_space<vmem>>, vector<1x12x12x128xbf16>
    %71 = vector.shape_cast %70 : vector<1x12x12x128xbf16> to vector<12x12x128xbf16>
    %72 = vector.shape_cast %69 : vector<12x12x128xbf16> to vector<1x12x12x128xbf16>
    tpu.vector_store %arg5[%c0_22, %c0_23, %c0_24, %c0_25], %72 {strides = array<i32>} : memref<1x12x12x128xbf16, #tpu.memory_space<vmem>>, vector<1x12x12x128xbf16>,
    return
  }
  func.func @transform_0(%arg0: i32) -> (i32, i32, i32) {
    %c0_i32 = arith.constant 0 : i32
    %c0_i32_0 = arith.constant 0 : i32
    %c0_i32_1 = arith.constant 0 : i32
    %c0_i32_2 = arith.constant 0 : i32
    return %c0_i32, %c0_i32_0, %c0_i32_1 : i32, i32, i32
  }
  func.func @transform_1(%arg0: i32) -> (i32, i32, i32, i32, i32) {
    %c0_i32 = arith.constant 0 : i32
    %c0_i32_0 = arith.constant 0 : i32
    %c0_i32_1 = arith.constant 0 : i32
    %c0_i32_2 = arith.constant 0 : i32
    %c0_i32_3 = arith.constant 0 : i32
    return %arg0, %c0_i32, %c0_i32_0, %c0_i32_1, %c0_i32_2 : i32, i32, i32, i32, i32
  }
  func.func @transform_2(%arg0: i32) -> (i32, i32) {
    %c0_i32 = arith.constant 0 : i32
    %c0_i32_0 = arith.constant 0 : i32
    %c0_i32_1 = arith.constant 0 : i32
    return %c0_i32, %c0_i32_0 : i32, i32
  }
  func.func @transform_3(%arg0: i32) -> (i32, i32) {
    %c0_i32 = arith.constant 0 : i32
    %c0_i32_0 = arith.constant 0 : i32
    %c0_i32_1 = arith.constant 0 : i32
    return %c0_i32, %c0_i32_0 : i32, i32
  }
  func.func @transform_4(%arg0: i32) -> (i32, i32, i32, i32) {
    %c0_i32 = arith.constant 0 : i32
    %c0_i32_0 = arith.constant 0 : i32
    %c0_i32_1 = arith.constant 0 : i32
    %c0_i32_2 = arith.constant 0 : i32
    return %arg0, %c0_i32, %c0_i32_0, %c0_i32_1 : i32, i32, i32, i32
  }
}

module attributes {stable_mosaic.version = 11 : i64} {
  func.func @_matmul_bias_stats_kernel(%arg0: i32, %arg1: memref<512x500xbf16, #tpu.memory_space<vmem>>, %arg2: memref<500x128xbf16, #tpu.memory_space<vmem>>, %arg3: memref<1x128xf32, #tpu.memory_space<vmem>>, %arg4: memref<512x128xf32, #tpu.memory_space<vmem>>, %arg5: memref<1x2x128xf32, #tpu.memory_space<vmem>>) attributes {dimension_semantics = [#tpu.dimension_semantics<parallel>], iteration_bounds = array<i64: 1>, scalar_prefetch = 0 : i64, scratch_operands = 0 : i64, tpu.core_type = #tpu.core_type<tc>, window_params = [{transform_indices = @transform_0, window_bounds = array<i64: 512, 500>}, {pipeline_mode = #tpu.pipeline_mode<synchronous>, transform_indices = @transform_1, window_bounds = array<i64: 500, 128>}, {pipeline_mode = #tpu.pipeline_mode<synchronous>, transform_indices = @transform_2, window_bounds = array<i64: 1, 128>}, {transform_indices = @transform_3, window_bounds = array<i64: 512, 128>}, {transform_indices = @transform_4, window_bounds = array<i64: 1, 2, 128>}]} {
    %c0 = arith.constant 0 : index
    %c0_0 = arith.constant 0 : index
    %0 = vector.load %arg1[%c0, %c0_0] : memref<512x500xbf16, #tpu.memory_space<vmem>>, vector<512x500xbf16>
    %c0_1 = arith.constant 0 : index
    %c0_2 = arith.constant 0 : index
    %1 = vector.load %arg2[%c0_1, %c0_2] : memref<500x128xbf16, #tpu.memory_space<vmem>>, vector<500x128xbf16>
    %cst = arith.constant dense<0.000000e+00> : vector<512x128xf32>
    %2 = tpu.matmul %0, %1, %cst {dimension_numbers = #tpu.dot_dimension_numbers<[1], [0], [0], [1], [0, 0, 1, 1], [], []>} : vector<512x500xbf16>, vector<500x128xbf16>, vector<512x128xf32> -> vector<512x128xf32>
    %c0_3 = arith.constant 0 : index
    %c0_4 = arith.constant 0 : index
    %3 = vector.load %arg3[%c0_3, %c0_4] : memref<1x128xf32, #tpu.memory_space<vmem>>, vector<1x128xf32>
    %4 = vector.broadcast %3 : vector<1x128xf32> to vector<512x128xf32>
    %5 = arith.addf %2, %4 : vector<512x128xf32>
    %c0_5 = arith.constant 0 : index
    %c0_6 = arith.constant 0 : index
    %6 = vector.load %arg4[%c0_5, %c0_6] : memref<512x128xf32, #tpu.memory_space<vmem>>, vector<512x128xf32>
    tpu.vector_store %arg4[%c0_5, %c0_6], %5 {strides = array<i32>} : memref<512x128xf32, #tpu.memory_space<vmem>>, vector<512x128xf32>,
    %cst_7 = arith.constant dense<0.000000e+00> : vector<128xf32>
    %7 = vector.multi_reduction <add>, %5, %cst_7 [0] : vector<512x128xf32> to vector<128xf32>
    %8 = vector.shape_cast %7 : vector<128xf32> to vector<1x128xf32>
    %9 = arith.mulf %5, %5 : vector<512x128xf32>
    %cst_8 = arith.constant dense<0.000000e+00> : vector<128xf32>
    %10 = vector.multi_reduction <add>, %9, %cst_8 [0] : vector<512x128xf32> to vector<128xf32>
    %11 = vector.shape_cast %10 : vector<128xf32> to vector<1x128xf32>
    %12 = tpu.concatenate %8, %11 in 0 : vector<1x128xf32>, vector<1x128xf32> -> vector<2x128xf32>
    %c0_9 = arith.constant 0 : index
    %c0_10 = arith.constant 0 : index
    %c0_11 = arith.constant 0 : index
    %13 = vector.load %arg5[%c0_9, %c0_10, %c0_11] : memref<1x2x128xf32, #tpu.memory_space<vmem>>, vector<1x2x128xf32>
    %14 = vector.shape_cast %13 : vector<1x2x128xf32> to vector<2x128xf32>
    %15 = vector.shape_cast %12 : vector<2x128xf32> to vector<1x2x128xf32>
    tpu.vector_store %arg5[%c0_9, %c0_10, %c0_11], %15 {strides = array<i32>} : memref<1x2x128xf32, #tpu.memory_space<vmem>>, vector<1x2x128xf32>,
    return
  }
  func.func @transform_0(%arg0: i32) -> (i32, i32) {
    %c0_i32 = arith.constant 0 : i32
    %c0_i32_0 = arith.constant 0 : i32
    return %arg0, %c0_i32 : i32, i32
  }
  func.func @transform_1(%arg0: i32) -> (i32, i32) {
    %c0_i32 = arith.constant 0 : i32
    %c0_i32_0 = arith.constant 0 : i32
    %c0_i32_1 = arith.constant 0 : i32
    return %c0_i32, %c0_i32_0 : i32, i32
  }
  func.func @transform_2(%arg0: i32) -> (i32, i32) {
    %c0_i32 = arith.constant 0 : i32
    %c0_i32_0 = arith.constant 0 : i32
    %c0_i32_1 = arith.constant 0 : i32
    return %c0_i32, %c0_i32_0 : i32, i32
  }
  func.func @transform_3(%arg0: i32) -> (i32, i32) {
    %c0_i32 = arith.constant 0 : i32
    %c0_i32_0 = arith.constant 0 : i32
    return %arg0, %c0_i32 : i32, i32
  }
  func.func @transform_4(%arg0: i32) -> (i32, i32, i32) {
    %c0_i32 = arith.constant 0 : i32
    %c0_i32_0 = arith.constant 0 : i32
    %c0_i32_1 = arith.constant 0 : i32
    return %arg0, %c0_i32, %c0_i32_0 : i32, i32, i32
  }
}

module attributes {stable_mosaic.version = 11 : i64} {
  func.func @_bn_lrelu_pool_kernel(%arg0: i32, %arg1: memref<1x2x128xf32, #tpu.memory_space<vmem>>, %arg2: memref<1x4x2x4x256xf32, #tpu.memory_space<vmem>>, %arg3: memref<1x128xf32, #tpu.memory_space<vmem>>, %arg4: memref<1x128xf32, #tpu.memory_space<vmem>>, %arg5: memref<1x4x4x128xbf16, #tpu.memory_space<vmem>>) attributes {dimension_semantics = [#tpu.dimension_semantics<parallel>], iteration_bounds = array<i64: 8>, scalar_prefetch = 0 : i64, scratch_operands = 0 : i64, tpu.core_type = #tpu.core_type<tc>, window_params = [{pipeline_mode = #tpu.pipeline_mode<synchronous>, transform_indices = @transform_0, window_bounds = array<i64: 1, 2, 128>}, {transform_indices = @transform_1, window_bounds = array<i64: 1, 4, 2, 4, 256>}, {pipeline_mode = #tpu.pipeline_mode<synchronous>, transform_indices = @transform_2, window_bounds = array<i64: 1, 128>}, {pipeline_mode = #tpu.pipeline_mode<synchronous>, transform_indices = @transform_3, window_bounds = array<i64: 1, 128>}, {transform_indices = @transform_4, window_bounds = array<i64: 1, 4, 4, 128>}]} {
    %c0 = arith.constant 0 : index
    %c0_0 = arith.constant 0 : index
    %c0_1 = arith.constant 0 : index
    %0 = vector.load %arg1[%c0, %c0_0, %c0_1] : memref<1x2x128xf32, #tpu.memory_space<vmem>>, vector<1x2x128xf32>
    %c0_2 = arith.constant 0 : index
    %c0_3 = arith.constant 0 : index
    %1 = vector.load %arg3[%c0_2, %c0_3] : memref<1x128xf32, #tpu.memory_space<vmem>>, vector<1x128xf32>
    %c0_4 = arith.constant 0 : index
    %c0_5 = arith.constant 0 : index
    %2 = vector.load %arg4[%c0_4, %c0_5] : memref<1x128xf32, #tpu.memory_space<vmem>>, vector<1x128xf32>
    %cst = arith.constant dense<0.000000e+00> : vector<2x128xf32>
    %3 = vector.multi_reduction <add>, %0, %cst [0] : vector<1x2x128xf32> to vector<2x128xf32>
    %cst_6 = arith.constant 0.001953125 : f32
    %4 = vector.broadcast %cst_6 : f32 to vector<2x128xf32>
    %5 = arith.mulf %3, %4 : vector<2x128xf32>
    %6 = vector.extract_strided_slice %5 {offsets = [0, 0], sizes = [1, 128], strides = [1, 1]} : vector<2x128xf32> to vector<1x128xf32>
    %7 = vector.extract_strided_slice %5 {offsets = [1, 0], sizes = [1, 128], strides = [1, 1]} : vector<2x128xf32> to vector<1x128xf32>
    %8 = arith.mulf %6, %6 : vector<1x128xf32>
    %9 = arith.subf %7, %8 : vector<1x128xf32>
    %cst_7 = arith.constant 0.000000e+00 : f32
    %10 = vector.broadcast %cst_7 : f32 to vector<1x128xf32>
    %11 = arith.maximumf %9, %10 : vector<1x128xf32>
    %cst_8 = arith.constant 9.99999974E-6 : f32
    %12 = vector.broadcast %cst_8 : f32 to vector<1x128xf32>
    %13 = arith.addf %11, %12 : vector<1x128xf32>
    %14 = math.rsqrt %13 : vector<1x128xf32>
    %15 = arith.mulf %1, %14 : vector<1x128xf32>
    %16 = arith.mulf %6, %15 : vector<1x128xf32>
    %17 = arith.subf %2, %16 : vector<1x128xf32>
    %18 = vector.shape_cast %15 : vector<1x128xf32> to vector<1x1x128xf32>
    %19 = vector.shape_cast %17 : vector<1x128xf32> to vector<1x1x128xf32>
    %c0_9 = arith.constant 0 : index
    %c0_10 = arith.constant 0 : index
    %c0_11 = arith.constant 0 : index
    %c0_12 = arith.constant 0 : index
    %c0_13 = arith.constant 0 : index
    %20 = vector.load %arg2[%c0_9, %c0_10, %c0_11, %c0_12, %c0_13] : memref<1x4x2x4x256xf32, #tpu.memory_space<vmem>>, vector<1x4x2x4x256xf32>
    %21 = vector.shape_cast %20 : vector<1x4x2x4x256xf32> to vector<4x2x4x256xf32>
    %22 = vector.extract_strided_slice %21 {offsets = [0, 0, 0, 0], sizes = [4, 1, 4, 256], strides = [1, 1, 1, 1]} : vector<4x2x4x256xf32> to vector<4x1x4x256xf32>
    %23 = vector.shape_cast %22 : vector<4x1x4x256xf32> to vector<4x4x256xf32>
    %24 = vector.extract_strided_slice %21 {offsets = [0, 1, 0, 0], sizes = [4, 1, 4, 256], strides = [1, 1, 1, 1]} : vector<4x2x4x256xf32> to vector<4x1x4x256xf32>
    %25 = vector.shape_cast %24 : vector<4x1x4x256xf32> to vector<4x4x256xf32>
    %26 = vector.extract_strided_slice %23 {offsets = [0, 0, 0], sizes = [4, 4, 128], strides = [1, 1, 1]} : vector<4x4x256xf32> to vector<4x4x128xf32>
    %27 = vector.broadcast %18 : vector<1x1x128xf32> to vector<4x4x128xf32>
    %28 = arith.mulf %26, %27 : vector<4x4x128xf32>
    %29 = vector.broadcast %19 : vector<1x1x128xf32> to vector<4x4x128xf32>
    %30 = arith.addf %28, %29 : vector<4x4x128xf32>
    %cst_14 = arith.constant 0.000000e+00 : f32
    %31 = vector.broadcast %cst_14 : f32 to vector<4x4x128xf32>
    %32 = arith.cmpf oge, %30, %31 : vector<4x4x128xf32>
    %cst_15 = arith.constant 0.00999999977 : f32
    %33 = vector.broadcast %cst_15 : f32 to vector<4x4x128xf32>
    %34 = arith.mulf %33, %30 : vector<4x4x128xf32>
    %35 = arith.select %32, %30, %34 : vector<4x4x128xi1>, vector<4x4x128xf32>
    %36 = vector.extract_strided_slice %23 {offsets = [0, 0, 128], sizes = [4, 4, 128], strides = [1, 1, 1]} : vector<4x4x256xf32> to vector<4x4x128xf32>
    %37 = vector.broadcast %18 : vector<1x1x128xf32> to vector<4x4x128xf32>
    %38 = arith.mulf %36, %37 : vector<4x4x128xf32>
    %39 = vector.broadcast %19 : vector<1x1x128xf32> to vector<4x4x128xf32>
    %40 = arith.addf %38, %39 : vector<4x4x128xf32>
    %cst_16 = arith.constant 0.000000e+00 : f32
    %41 = vector.broadcast %cst_16 : f32 to vector<4x4x128xf32>
    %42 = arith.cmpf oge, %40, %41 : vector<4x4x128xf32>
    %cst_17 = arith.constant 0.00999999977 : f32
    %43 = vector.broadcast %cst_17 : f32 to vector<4x4x128xf32>
    %44 = arith.mulf %43, %40 : vector<4x4x128xf32>
    %45 = arith.select %42, %40, %44 : vector<4x4x128xi1>, vector<4x4x128xf32>
    %46 = arith.maximumf %35, %45 : vector<4x4x128xf32>
    %47 = vector.extract_strided_slice %25 {offsets = [0, 0, 0], sizes = [4, 4, 128], strides = [1, 1, 1]} : vector<4x4x256xf32> to vector<4x4x128xf32>
    %48 = vector.broadcast %18 : vector<1x1x128xf32> to vector<4x4x128xf32>
    %49 = arith.mulf %47, %48 : vector<4x4x128xf32>
    %50 = vector.broadcast %19 : vector<1x1x128xf32> to vector<4x4x128xf32>
    %51 = arith.addf %49, %50 : vector<4x4x128xf32>
    %cst_18 = arith.constant 0.000000e+00 : f32
    %52 = vector.broadcast %cst_18 : f32 to vector<4x4x128xf32>
    %53 = arith.cmpf oge, %51, %52 : vector<4x4x128xf32>
    %cst_19 = arith.constant 0.00999999977 : f32
    %54 = vector.broadcast %cst_19 : f32 to vector<4x4x128xf32>
    %55 = arith.mulf %54, %51 : vector<4x4x128xf32>
    %56 = arith.select %53, %51, %55 : vector<4x4x128xi1>, vector<4x4x128xf32>
    %57 = vector.extract_strided_slice %25 {offsets = [0, 0, 128], sizes = [4, 4, 128], strides = [1, 1, 1]} : vector<4x4x256xf32> to vector<4x4x128xf32>
    %58 = vector.broadcast %18 : vector<1x1x128xf32> to vector<4x4x128xf32>
    %59 = arith.mulf %57, %58 : vector<4x4x128xf32>
    %60 = vector.broadcast %19 : vector<1x1x128xf32> to vector<4x4x128xf32>
    %61 = arith.addf %59, %60 : vector<4x4x128xf32>
    %cst_20 = arith.constant 0.000000e+00 : f32
    %62 = vector.broadcast %cst_20 : f32 to vector<4x4x128xf32>
    %63 = arith.cmpf oge, %61, %62 : vector<4x4x128xf32>
    %cst_21 = arith.constant 0.00999999977 : f32
    %64 = vector.broadcast %cst_21 : f32 to vector<4x4x128xf32>
    %65 = arith.mulf %64, %61 : vector<4x4x128xf32>
    %66 = arith.select %63, %61, %65 : vector<4x4x128xi1>, vector<4x4x128xf32>
    %67 = arith.maximumf %56, %66 : vector<4x4x128xf32>
    %68 = arith.maximumf %46, %67 : vector<4x4x128xf32>
    %69 = arith.truncf %68 : vector<4x4x128xf32> to vector<4x4x128xbf16>
    %c0_22 = arith.constant 0 : index
    %c0_23 = arith.constant 0 : index
    %c0_24 = arith.constant 0 : index
    %c0_25 = arith.constant 0 : index
    %70 = vector.load %arg5[%c0_22, %c0_23, %c0_24, %c0_25] : memref<1x4x4x128xbf16, #tpu.memory_space<vmem>>, vector<1x4x4x128xbf16>
    %71 = vector.shape_cast %70 : vector<1x4x4x128xbf16> to vector<4x4x128xbf16>
    %72 = vector.shape_cast %69 : vector<4x4x128xbf16> to vector<1x4x4x128xbf16>
    tpu.vector_store %arg5[%c0_22, %c0_23, %c0_24, %c0_25], %72 {strides = array<i32>} : memref<1x4x4x128xbf16, #tpu.memory_space<vmem>>, vector<1x4x4x128xbf16>,
    return
  }
  func.func @transform_0(%arg0: i32) -> (i32, i32, i32) {
    %c0_i32 = arith.constant 0 : i32
    %c0_i32_0 = arith.constant 0 : i32
    %c0_i32_1 = arith.constant 0 : i32
    %c0_i32_2 = arith.constant 0 : i32
    return %c0_i32, %c0_i32_0, %c0_i32_1 : i32, i32, i32
  }
  func.func @transform_1(%arg0: i32) -> (i32, i32, i32, i32, i32) {
    %c0_i32 = arith.constant 0 : i32
    %c0_i32_0 = arith.constant 0 : i32
    %c0_i32_1 = arith.constant 0 : i32
    %c0_i32_2 = arith.constant 0 : i32
    %c0_i32_3 = arith.constant 0 : i32
    return %arg0, %c0_i32, %c0_i32_0, %c0_i32_1, %c0_i32_2 : i32, i32, i32, i32, i32
  }
  func.func @transform_2(%arg0: i32) -> (i32, i32) {
    %c0_i32 = arith.constant 0 : i32
    %c0_i32_0 = arith.constant 0 : i32
    %c0_i32_1 = arith.constant 0 : i32
    return %c0_i32, %c0_i32_0 : i32, i32
  }
  func.func @transform_3(%arg0: i32) -> (i32, i32) {
    %c0_i32 = arith.constant 0 : i32
    %c0_i32_0 = arith.constant 0 : i32
    %c0_i32_1 = arith.constant 0 : i32
    return %c0_i32, %c0_i32_0 : i32, i32
  }
  func.func @transform_4(%arg0: i32) -> (i32, i32, i32, i32) {
    %c0_i32 = arith.constant 0 : i32
    %c0_i32_0 = arith.constant 0 : i32
    %c0_i32_1 = arith.constant 0 : i32
    %c0_i32_2 = arith.constant 0 : i32
    return %arg0, %c0_i32, %c0_i32_0, %c0_i32_1 : i32, i32, i32, i32
  }
}

module attributes {stable_mosaic.version = 11 : i64} {
  func.func @_bn_lrelu_kernel(%arg0: i32, %arg1: memref<1x2x512xf32, #tpu.memory_space<vmem>>, %arg2: memref<8x512xf32, #tpu.memory_space<vmem>>, %arg3: memref<1x512xf32, #tpu.memory_space<vmem>>, %arg4: memref<1x512xf32, #tpu.memory_space<vmem>>, %arg5: memref<8x512xf32, #tpu.memory_space<vmem>>) attributes {dimension_semantics = [#tpu.dimension_semantics<parallel>], iteration_bounds = array<i64: 1>, scalar_prefetch = 0 : i64, scratch_operands = 0 : i64, tpu.core_type = #tpu.core_type<tc>, window_params = [{pipeline_mode = #tpu.pipeline_mode<synchronous>, transform_indices = @transform_0, window_bounds = array<i64: 1, 2, 512>}, {transform_indices = @transform_1, window_bounds = array<i64: 8, 512>}, {pipeline_mode = #tpu.pipeline_mode<synchronous>, transform_indices = @transform_2, window_bounds = array<i64: 1, 512>}, {pipeline_mode = #tpu.pipeline_mode<synchronous>, transform_indices = @transform_3, window_bounds = array<i64: 1, 512>}, {transform_indices = @transform_4, window_bounds = array<i64: 8, 512>}]} {
    %c0 = arith.constant 0 : index
    %c0_0 = arith.constant 0 : index
    %c0_1 = arith.constant 0 : index
    %0 = vector.load %arg1[%c0, %c0_0, %c0_1] : memref<1x2x512xf32, #tpu.memory_space<vmem>>, vector<1x2x512xf32>
    %c0_2 = arith.constant 0 : index
    %c0_3 = arith.constant 0 : index
    %1 = vector.load %arg3[%c0_2, %c0_3] : memref<1x512xf32, #tpu.memory_space<vmem>>, vector<1x512xf32>
    %c0_4 = arith.constant 0 : index
    %c0_5 = arith.constant 0 : index
    %2 = vector.load %arg4[%c0_4, %c0_5] : memref<1x512xf32, #tpu.memory_space<vmem>>, vector<1x512xf32>
    %cst = arith.constant dense<0.000000e+00> : vector<2x512xf32>
    %3 = vector.multi_reduction <add>, %0, %cst [0] : vector<1x2x512xf32> to vector<2x512xf32>
    %cst_6 = arith.constant 1.250000e-01 : f32
    %4 = vector.broadcast %cst_6 : f32 to vector<2x512xf32>
    %5 = arith.mulf %3, %4 : vector<2x512xf32>
    %6 = vector.extract_strided_slice %5 {offsets = [0, 0], sizes = [1, 512], strides = [1, 1]} : vector<2x512xf32> to vector<1x512xf32>
    %7 = vector.extract_strided_slice %5 {offsets = [1, 0], sizes = [1, 512], strides = [1, 1]} : vector<2x512xf32> to vector<1x512xf32>
    %8 = arith.mulf %6, %6 : vector<1x512xf32>
    %9 = arith.subf %7, %8 : vector<1x512xf32>
    %cst_7 = arith.constant 0.000000e+00 : f32
    %10 = vector.broadcast %cst_7 : f32 to vector<1x512xf32>
    %11 = arith.maximumf %9, %10 : vector<1x512xf32>
    %cst_8 = arith.constant 9.99999974E-6 : f32
    %12 = vector.broadcast %cst_8 : f32 to vector<1x512xf32>
    %13 = arith.addf %11, %12 : vector<1x512xf32>
    %14 = math.rsqrt %13 : vector<1x512xf32>
    %15 = arith.mulf %1, %14 : vector<1x512xf32>
    %16 = arith.mulf %6, %15 : vector<1x512xf32>
    %17 = arith.subf %2, %16 : vector<1x512xf32>
    %c0_9 = arith.constant 0 : index
    %c0_10 = arith.constant 0 : index
    %18 = vector.load %arg2[%c0_9, %c0_10] : memref<8x512xf32, #tpu.memory_space<vmem>>, vector<8x512xf32>
    %19 = vector.broadcast %15 : vector<1x512xf32> to vector<8x512xf32>
    %20 = arith.mulf %18, %19 : vector<8x512xf32>
    %21 = vector.broadcast %17 : vector<1x512xf32> to vector<8x512xf32>
    %22 = arith.addf %20, %21 : vector<8x512xf32>
    %cst_11 = arith.constant 0.000000e+00 : f32
    %23 = vector.broadcast %cst_11 : f32 to vector<8x512xf32>
    %24 = arith.cmpf oge, %22, %23 : vector<8x512xf32>
    %cst_12 = arith.constant 0.00999999977 : f32
    %25 = vector.broadcast %cst_12 : f32 to vector<8x512xf32>
    %26 = arith.mulf %25, %22 : vector<8x512xf32>
    %27 = arith.select %24, %22, %26 : vector<8x512xi1>, vector<8x512xf32>
    %c0_13 = arith.constant 0 : index
    %c0_14 = arith.constant 0 : index
    %28 = vector.load %arg5[%c0_13, %c0_14] : memref<8x512xf32, #tpu.memory_space<vmem>>, vector<8x512xf32>
    tpu.vector_store %arg5[%c0_13, %c0_14], %27 {strides = array<i32>} : memref<8x512xf32, #tpu.memory_space<vmem>>, vector<8x512xf32>,
    return
  }
  func.func @transform_0(%arg0: i32) -> (i32, i32, i32) {
    %c0_i32 = arith.constant 0 : i32
    %c0_i32_0 = arith.constant 0 : i32
    %c0_i32_1 = arith.constant 0 : i32
    %c0_i32_2 = arith.constant 0 : i32
    return %c0_i32, %c0_i32_0, %c0_i32_1 : i32, i32, i32
  }
  func.func @transform_1(%arg0: i32) -> (i32, i32) {
    %c0_i32 = arith.constant 0 : i32
    %c0_i32_0 = arith.constant 0 : i32
    return %arg0, %c0_i32 : i32, i32
  }
  func.func @transform_2(%arg0: i32) -> (i32, i32) {
    %c0_i32 = arith.constant 0 : i32
    %c0_i32_0 = arith.constant 0 : i32
    %c0_i32_1 = arith.constant 0 : i32
    return %c0_i32, %c0_i32_0 : i32, i32
  }
  func.func @transform_3(%arg0: i32) -> (i32, i32) {
    %c0_i32 = arith.constant 0 : i32
    %c0_i32_0 = arith.constant 0 : i32
    %c0_i32_1 = arith.constant 0 : i32
    return %c0_i32, %c0_i32_0 : i32, i32
  }
  func.func @transform_4(%arg0: i32) -> (i32, i32) {
    %c0_i32 = arith.constant 0 : i32
    %c0_i32_0 = arith.constant 0 : i32
    return %arg0, %c0_i32 : i32, i32
  }
}

module attributes {stable_mosaic.version = 11 : i64} {
  func.func @_matmul_bias_stats_kernel(%arg0: i32, %arg1: memref<8x2048xbf16, #tpu.memory_space<vmem>>, %arg2: memref<2048x512xbf16, #tpu.memory_space<vmem>>, %arg3: memref<1x512xf32, #tpu.memory_space<vmem>>, %arg4: memref<8x512xf32, #tpu.memory_space<vmem>>, %arg5: memref<1x2x512xf32, #tpu.memory_space<vmem>>) attributes {dimension_semantics = [#tpu.dimension_semantics<parallel>], iteration_bounds = array<i64: 1>, scalar_prefetch = 0 : i64, scratch_operands = 0 : i64, tpu.core_type = #tpu.core_type<tc>, window_params = [{transform_indices = @transform_0, window_bounds = array<i64: 8, 2048>}, {pipeline_mode = #tpu.pipeline_mode<synchronous>, transform_indices = @transform_1, window_bounds = array<i64: 2048, 512>}, {pipeline_mode = #tpu.pipeline_mode<synchronous>, transform_indices = @transform_2, window_bounds = array<i64: 1, 512>}, {transform_indices = @transform_3, window_bounds = array<i64: 8, 512>}, {transform_indices = @transform_4, window_bounds = array<i64: 1, 2, 512>}]} {
    %c0 = arith.constant 0 : index
    %c0_0 = arith.constant 0 : index
    %0 = vector.load %arg1[%c0, %c0_0] : memref<8x2048xbf16, #tpu.memory_space<vmem>>, vector<8x2048xbf16>
    %c0_1 = arith.constant 0 : index
    %c0_2 = arith.constant 0 : index
    %1 = vector.load %arg2[%c0_1, %c0_2] : memref<2048x512xbf16, #tpu.memory_space<vmem>>, vector<2048x512xbf16>
    %cst = arith.constant dense<0.000000e+00> : vector<8x512xf32>
    %2 = tpu.matmul %0, %1, %cst {dimension_numbers = #tpu.dot_dimension_numbers<[1], [0], [0], [1], [0, 0, 1, 1], [], []>} : vector<8x2048xbf16>, vector<2048x512xbf16>, vector<8x512xf32> -> vector<8x512xf32>
    %c0_3 = arith.constant 0 : index
    %c0_4 = arith.constant 0 : index
    %3 = vector.load %arg3[%c0_3, %c0_4] : memref<1x512xf32, #tpu.memory_space<vmem>>, vector<1x512xf32>
    %4 = vector.broadcast %3 : vector<1x512xf32> to vector<8x512xf32>
    %5 = arith.addf %2, %4 : vector<8x512xf32>
    %c0_5 = arith.constant 0 : index
    %c0_6 = arith.constant 0 : index
    %6 = vector.load %arg4[%c0_5, %c0_6] : memref<8x512xf32, #tpu.memory_space<vmem>>, vector<8x512xf32>
    tpu.vector_store %arg4[%c0_5, %c0_6], %5 {strides = array<i32>} : memref<8x512xf32, #tpu.memory_space<vmem>>, vector<8x512xf32>,
    %cst_7 = arith.constant dense<0.000000e+00> : vector<512xf32>
    %7 = vector.multi_reduction <add>, %5, %cst_7 [0] : vector<8x512xf32> to vector<512xf32>
    %8 = vector.shape_cast %7 : vector<512xf32> to vector<1x512xf32>
    %9 = arith.mulf %5, %5 : vector<8x512xf32>
    %cst_8 = arith.constant dense<0.000000e+00> : vector<512xf32>
    %10 = vector.multi_reduction <add>, %9, %cst_8 [0] : vector<8x512xf32> to vector<512xf32>
    %11 = vector.shape_cast %10 : vector<512xf32> to vector<1x512xf32>
    %12 = tpu.concatenate %8, %11 in 0 : vector<1x512xf32>, vector<1x512xf32> -> vector<2x512xf32>
    %c0_9 = arith.constant 0 : index
    %c0_10 = arith.constant 0 : index
    %c0_11 = arith.constant 0 : index
    %13 = vector.load %arg5[%c0_9, %c0_10, %c0_11] : memref<1x2x512xf32, #tpu.memory_space<vmem>>, vector<1x2x512xf32>
    %14 = vector.shape_cast %13 : vector<1x2x512xf32> to vector<2x512xf32>
    %15 = vector.shape_cast %12 : vector<2x512xf32> to vector<1x2x512xf32>
    tpu.vector_store %arg5[%c0_9, %c0_10, %c0_11], %15 {strides = array<i32>} : memref<1x2x512xf32, #tpu.memory_space<vmem>>, vector<1x2x512xf32>,
    return
  }
  func.func @transform_0(%arg0: i32) -> (i32, i32) {
    %c0_i32 = arith.constant 0 : i32
    %c0_i32_0 = arith.constant 0 : i32
    return %arg0, %c0_i32 : i32, i32
  }
  func.func @transform_1(%arg0: i32) -> (i32, i32) {
    %c0_i32 = arith.constant 0 : i32
    %c0_i32_0 = arith.constant 0 : i32
    %c0_i32_1 = arith.constant 0 : i32
    return %c0_i32, %c0_i32_0 : i32, i32
  }
  func.func @transform_2(%arg0: i32) -> (i32, i32) {
    %c0_i32 = arith.constant 0 : i32
    %c0_i32_0 = arith.constant 0 : i32
    %c0_i32_1 = arith.constant 0 : i32
    return %c0_i32, %c0_i32_0 : i32, i32
  }
  func.func @transform_3(%arg0: i32) -> (i32, i32) {
    %c0_i32 = arith.constant 0 : i32
    %c0_i32_0 = arith.constant 0 : i32
    return %arg0, %c0_i32 : i32, i32
  }
  func.func @transform_4(%arg0: i32) -> (i32, i32, i32) {
    %c0_i32 = arith.constant 0 : i32
    %c0_i32_0 = arith.constant 0 : i32
    %c0_i32_1 = arith.constant 0 : i32
    return %arg0, %c0_i32, %c0_i32_0 : i32, i32, i32
  }
}

</mosaic_0001>

<llo_original>
// kernel: extractor_forward.6
$region0: #{extractor_forward.6}
  #allocation0 [shape = 'u32[]', space=smem, size = 0x4, offset = 0x4, fixed_abs, tag = 'smem constant byte address 0x4 - core index']
  #allocation1 [shape = 'u32[144,128]{1,0:T(1,128)}', space=vmem, size = 0x12000, scoped, tag = 'internal scratch']
  %s0 = inlined_call_operand.vmem [shape: bf16[4608,25], index: 0, kind: input, shape index: {}]
  %s1 = inlined_call_operand.vmem [shape: bf16[25,128], index: 1, kind: input, shape index: {}]
  %s2 = inlined_call_operand.vmem [shape: f32[1,128], index: 2, kind: input, shape index: {}]
  %s3 = inlined_call_operand.vmem [shape: f32[4608,128], index: 3, kind: output, shape index: {0}]
  %s4 = inlined_call_operand.vmem [shape: f32[9,2,128], index: 4, kind: output, shape index: {1}]
  %5 = xla_tuple %s3, %s4
  %s6 = sld [smem:[#allocation0]]
  $region53: #{extractor_forward.6} parent=0
    _
  %s8 = ssub.s32 1, %s6
  %s9 = scalar_select 0, %s8, %s6
  loop: start=0, step=1, limit=11
  $region2: #{extractor_forward.6} parent=0 // loop_pre_header
    _
  $region3: #{extractor_forward.6} parent=0 // loop_header
    %s11 = sphi 0, %s15
    %p12 = scmp.ge.s32.totalorder %s11, 11
    %s21 = sphi 0, %s23
    %s24 = sphi 0, %s21
    %s25 = sphi 0, %s24
    %s41 = sphi 0, %s25
    %s45 = sphi 0, %s45
    %s47 = sphi 0, %s45
    %s48 = sphi 0, %s47
    %s62 = sphi 0, %s48
    %s66 = sphi 0, %s66
    %s68 = sphi 0, %s66
    %s69 = sphi 0, %s68
    %s83 = sphi 0, %s69
    %s89 = sphi 0, %s91
    %s92 = sphi 0, %s89
    %s93 = sphi 0, %s92
    %s109 = sphi 0, %s93
    %s115 = sphi 0, %s117
    %s118 = sphi 0, %s115
    %s119 = sphi 0, %s118
    %s135 = sphi 0, %s119
  $region4: #{extractor_forward.6} parent=0 // loop_header_branch
    %14 = sbr.rel (%p12) target = $region8
  $region5: #{extractor_forward.6} parent=0 // loop_body
    %s16 = ssub.s32 %s11, 1
    %s17 = ssub.s32 %s11, 2
    %s18 = sadd.s32 %s11, 1
    %s19 = ssub.s32 %s11, %s18
    %p20 = scmp.eq.s32.totalorder %s19, 0
    %s22 = sadd.s32 %s21, 1
    %s23 = scalar_select %p20, %s21, %s22
    %p26 = pneg %p20
    %p27 = scmp.eq.s32.totalorder %s11, 8
    %p28 = por %p26, %p27
    %p29 = scmp.ne.s32.totalorder %s21, %s24
    %p30 = scmp.eq.s32.totalorder %s11, 0
    %p31 = por %p29, %p30
    %p32 = scmp.ne.s32.totalorder %s21, %s24
    %p33 = scmp.eq.s32.totalorder %s16, 8
    %p34 = por %p32, %p33
    %p35 = scmp.ne.s32.totalorder %s24, %s25
    %p36 = scmp.eq.s32.totalorder %s16, 0
    %p37 = por %p35, %p36
    %p38 = scmp.ne.s32.totalorder %s24, %s25
    %p39 = scmp.eq.s32.totalorder %s17, 8
    %p40 = por %p38, %p39
    %p42 = scmp.ne.s32.totalorder %s25, %s41
    %p43 = scmp.eq.s32.totalorder %s17, 0
    %p44 = por %p42, %p43
    %s46 = sadd.s32 %s45, 1
    %p49 = scmp.eq.s32.totalorder %s11, 8
    %p50 = scmp.ne.s32.totalorder %s45, %s47
    %p51 = scmp.eq.s32.totalorder %s11, 0
    %p52 = por %p50, %p51
    %p53 = scmp.ne.s32.totalorder %s45, %s47
    %p54 = scmp.eq.s32.totalorder %s16, 8
    %p55 = por %p53, %p54
    %p56 = scmp.ne.s32.totalorder %s47, %s48
    %p57 = scmp.eq.s32.totalorder %s16, 0
    %p58 = por %p56, %p57
    %p59 = scmp.ne.s32.totalorder %s47, %s48
    %p60 = scmp.eq.s32.totalorder %s17, 8
    %p61 = por %p59, %p60
    %p63 = scmp.ne.s32.totalorder %s48, %s62
    %p64 = scmp.eq.s32.totalorder %s17, 0
    %p65 = por %p63, %p64
    %s67 = sadd.s32 %s66, 1
    %p70 = scmp.eq.s32.totalorder %s11, 8
    %p71 = scmp.ne.s32.totalorder %s66, %s68
    %p72 = scmp.eq.s32.totalorder %s11, 0
    %p73 = por %p71, %p72
    %p74 = scmp.ne.s32.totalorder %s66, %s68
    %p75 = scmp.eq.s32.totalorder %s16, 8
    %p76 = por %p74, %p75
    %p77 = scmp.ne.s32.totalorder %s68, %s69
    %p78 = scmp.eq.s32.totalorder %s16, 0
    %p79 = por %p77, %p78
    %p80 = scmp.ne.s32.totalorder %s68, %s69
    %p81 = scmp.eq.s32.totalorder %s17, 8
    %p82 = por %p80, %p81
    %p84 = scmp.ne.s32.totalorder %s69, %s83
    %p85 = scmp.eq.s32.totalorder %s17, 0
    %p86 = por %p84, %p85
    %s87 = ssub.s32 %s11, %s18
    %p88 = scmp.eq.s32.totalorder %s87, 0
    %s90 = sadd.s32 %s89, 1
    %s91 = scalar_select %p88, %s89, %s90
    %p94 = pneg %p88
    %p95 = scmp.eq.s32.totalorder %s11, 8
    %p96 = por %p94, %p95
    %p97 = scmp.ne.s32.totalorder %s89, %s92
    %p98 = scmp.eq.s32.totalorder %s11, 0
    %p99 = por %p97, %p98
    %p100 = scmp.ne.s32.totalorder %s89, %s92
    %p101 = scmp.eq.s32.totalorder %s16, 8
    %p102 = por %p100, %p101
    %p103 = scmp.ne.s32.totalorder %s92, %s93
    %p104 = scmp.eq.s32.totalorder %s16, 0
    %p105 = por %p103, %p104
    %p106 = scmp.ne.s32.totalorder %s92, %s93
    %p107 = scmp.eq.s32.totalorder %s17, 8
    %p108 = por %p106, %p107
    %p110 = scmp.ne.s32.totalorder %s93, %s109
    %p111 = scmp.eq.s32.totalorder %s17, 0
    %p112 = por %p110, %p111
    %s113 = ssub.s32 %s11, %s18
    %p114 = scmp.eq.s32.totalorder %s113, 0
    %s116 = sadd.s32 %s115, 1
    %s117 = scalar_select %p114, %s115, %s116
    %p120 = pneg %p114
    %p121 = scmp.eq.s32.totalorder %s11, 8
    %p122 = por %p120, %p121
    %p123 = scmp.ne.s32.totalorder %s115, %s118
    %p124 = scmp.eq.s32.totalorder %s11, 0
    %p125 = por %p123, %p124
    %p126 = scmp.ne.s32.totalorder %s115, %s118
    %p127 = scmp.eq.s32.totalorder %s16, 8
    %p128 = por %p126, %p127
    %p129 = scmp.ne.s32.totalorder %s118, %s119
    %p130 = scmp.eq.s32.totalorder %s16, 0
    %p131 = por %p129, %p130
    %p132 = scmp.ne.s32.totalorder %s118, %s119
    %p133 = scmp.eq.s32.totalorder %s17, 8
    %p134 = por %p132, %p133
    %p136 = scmp.ne.s32.totalorder %s119, %s135
    %p137 = scmp.eq.s32.totalorder %s17, 0
    %p138 = por %p136, %p137
    %p139 = scmp.le.s32.totalorder 1, %s11
    %p140 = scmp.lt.s32.totalorder %s11, 10
    %p141 = pnand %p139, %p140
    %p142 = pneg %p141
    // Predicated region
    $region9: #{extractor_forward.6} parent=5 // pred_check
      _
    $region10: #{extractor_forward.6} parent=5 // pred_check_branch
      %144 = sbr.rel (%p141) target = $region12
    $region11: #{extractor_forward.6} parent=5 // pred_region
      %s145 = ssub.s32 %s11, 1
      // Predicated region
      $region13: #{extractor_forward.6} parent=11 // pred_check
        %p146 = pneg %p58
      $region14: #{extractor_forward.6} parent=11 // pred_check_branch
        %148 = sbr.rel (%p146) target = $region16
      $region15: #{extractor_forward.6} parent=11 // pred_region
        _
      $region16: #{extractor_forward.6} parent=11 // pred_fallthru
        _
      // Predicated region
      $region17: #{extractor_forward.6} parent=11 // pred_check
        %p149 = pneg %p79
      $region18: #{extractor_forward.6} parent=11 // pred_check_branch
        %151 = sbr.rel (%p149) target = $region20
      $region19: #{extractor_forward.6} parent=11 // pred_region
        _
      $region20: #{extractor_forward.6} parent=11 // pred_fallthru
        _
    $region12: #{extractor_forward.6} parent=5 // pred_fallthru
      _
    %p152 = scmp.lt.s32.totalorder %s11, 9
    // Predicated region
    $region21: #{extractor_forward.6} parent=5 // pred_check
      %p153 = pneg %p152
    $region22: #{extractor_forward.6} parent=5 // pred_check_branch
      %155 = sbr.rel (%p153) target = $region24
    $region23: #{extractor_forward.6} parent=5 // pred_region
      // Predicated region
      $region25: #{extractor_forward.6} parent=23 // pred_check
        %p156 = pneg %p31
      $region26: #{extractor_forward.6} parent=23 // pred_check_branch
        %158 = sbr.rel (%p156) target = $region28
      $region27: #{extractor_forward.6} parent=23 // pred_region
        %s159 = smul.u32 64, %s11
        %p160 = scmp.lt.s32.totalorder %s159, 575
        %s161 = scalar_select %p160, %s159, 575
        %s162 = smul.addr %s161, 4
        %s163 = scalar_lea.vmem %s0, %s162
        %s164 = smul.u32 64, %s11
      $region28: #{extractor_forward.6} parent=23 // pred_fallthru
        _
    $region24: #{extractor_forward.6} parent=5 // pred_fallthru
      _
    %p165 = scmp.le.s32.totalorder 1, %s11
    %p166 = scmp.lt.s32.totalorder %s11, 10
    %p167 = pnand %p165, %p166
    %p168 = pneg %p167
    // Predicated region
    $region29: #{extractor_forward.6} parent=5 // pred_check
      _
    $region30: #{extractor_forward.6} parent=5 // pred_check_branch
      %170 = sbr.rel (%p167) target = $region32
    $region31: #{extractor_forward.6} parent=5 // pred_region
      %s171 = ssub.s32 %s11, 1
      %s172 = smul.u32 64, %s16
      %p173 = scmp.lt.s32.totalorder %s172, 575
      %s174 = scalar_select %p173, %s172, 575
      %s175 = smul.addr %s174, 4
      %s176 = scalar_lea.vmem %s0, %s175
      %p177 = pneg %p37
      %p178 = pneg %p34
      %p179 = pneg %p58
      %p180 = pneg %p55
      %p181 = pneg %p79
      %p182 = pneg %p76
      %p183 = pneg %p105
      %p184 = pneg %p102
      %s185 = smul.u32 64, %s16
      %p186 = scmp.lt.s32.totalorder %s185, 575
      %s187 = scalar_select %p186, %s185, 575
      %s188 = smul.addr %s187, 8
      %s189 = scalar_lea.vmem %s3, %s188
      %p190 = pneg %p131
      %p191 = pneg %p128
      %p192 = scmp.lt.s32.totalorder %s16, 8
      %s193 = scalar_select %p192, %s16, 8
      %s194 = smul.addr %s193, 2
      %s195 = scalar_lea.vmem %s4, %s194
      %s196 = smul.u32 64, %s16
      %p197 = scmp.lt.s32.totalorder %s196, 575
      %s198 = scalar_select %p197, %s196, 575
      %s199 = smul.addr %s198, 4
      %s200 = scalar_lea.vmem %s0, %s199
      %s201 = smul.u32 64, %s16
      %s202 = smul.u32 64, %s16
      %p203 = scmp.lt.s32.totalorder %s202, 575
      %s204 = scalar_select %p203, %s202, 575
      %s205 = smul.addr %s204, 8
      %s206 = scalar_lea.vmem %s3, %s205
      %s207 = smul.u32 64, %s16
      %p208 = scmp.lt.s32.totalorder %s16, 8
      %s209 = scalar_select %p208, %s16, 8
      %s210 = smul.addr %s209, 2
      %s211 = scalar_lea.vmem %s4, %s210
      %v213 = vld [vmem:[%s200] sm:$0xf]
      %v214 = vld [vmem:[%s200 + $0x4] sm:$0xf]
      %v215 = vld [vmem:[%s200 + $0x8] sm:$0xf]
      %v216 = vld [vmem:[%s200 + $0xc] sm:$0xf]
      %v217 = vld [vmem:[%s200 + $0x10] sm:$0xf]
      %v218 = vld [vmem:[%s200 + $0x14] sm:$0xf]
      %v219 = vld [vmem:[%s200 + $0x18] sm:$0xf]
      %v220 = vld [vmem:[%s200 + $0x1c] sm:$0xf]
      %v221 = vld [vmem:[%s200 + $0x20] sm:$0xf]
      %v222 = vld [vmem:[%s200 + $0x24] sm:$0xf]
      %v223 = vld [vmem:[%s200 + $0x28] sm:$0xf]
      %v224 = vld [vmem:[%s200 + $0x2c] sm:$0xf]
      %v225 = vld [vmem:[%s200 + $0x30] sm:$0xf]
      %v226 = vld [vmem:[%s200 + $0x34] sm:$0xf]
      %v227 = vld [vmem:[%s200 + $0x38] sm:$0xf]
      %v228 = vld [vmem:[%s200 + $0x3c] sm:$0xf]
      %v229 = vld [vmem:[%s200 + $0x40] sm:$0xf]
      %v230 = vld [vmem:[%s200 + $0x44] sm:$0xf]
      %v231 = vld [vmem:[%s200 + $0x48] sm:$0xf]
      %v232 = vld [vmem:[%s200 + $0x4c] sm:$0xf]
      %v233 = vld [vmem:[%s200 + $0x50] sm:$0xf]
      %v234 = vld [vmem:[%s200 + $0x54] sm:$0xf]
      %v235 = vld [vmem:[%s200 + $0x58] sm:$0xf]
      %v236 = vld [vmem:[%s200 + $0x5c] sm:$0xf]
      %v237 = vld [vmem:[%s200 + $0x60] sm:$0xf]
      %v238 = vld [vmem:[%s200 + $0x64] sm:$0xf]
      %v239 = vld [vmem:[%s200 + $0x68] sm:$0xf]
      %v240 = vld [vmem:[%s200 + $0x6c] sm:$0xf]
      %v241 = vld [vmem:[%s200 + $0x70] sm:$0xf]
      %v242 = vld [vmem:[%s200 + $0x74] sm:$0xf]
      %v243 = vld [vmem:[%s200 + $0x78] sm:$0xf]
      %v244 = vld [vmem:[%s200 + $0x7c] sm:$0xf]
      %v245 = vld [vmem:[%s200 + $0x80] sm:$0xf]
      %v246 = vld [vmem:[%s200 + $0x84] sm:$0xf]
      %v247 = vld [vmem:[%s200 + $0x88] sm:$0xf]
      %v248 = vld [vmem:[%s200 + $0x8c] sm:$0xf]
      %v249 = vld [vmem:[%s200 + $0x90] sm:$0xf]
      %v250 = vld [vmem:[%s200 + $0x94] sm:$0xf]
      %v251 = vld [vmem:[%s200 + $0x98] sm:$0xf]
      %v252 = vld [vmem:[%s200 + $0x9c] sm:$0xf]
      %v253 = vld [vmem:[%s200 + $0xa0] sm:$0xf]
      %v254 = vld [vmem:[%s200 + $0xa4] sm:$0xf]
      %v255 = vld [vmem:[%s200 + $0xa8] sm:$0xf]
      %v256 = vld [vmem:[%s200 + $0xac] sm:$0xf]
      %v257 = vld [vmem:[%s200 + $0xb0] sm:$0xf]
      %v258 = vld [vmem:[%s200 + $0xb4] sm:$0xf]
      %v259 = vld [vmem:[%s200 + $0xb8] sm:$0xf]
      %v260 = vld [vmem:[%s200 + $0xbc] sm:$0xf]
      %v261 = vld [vmem:[%s200 + $0xc0] sm:$0xf]
      %v262 = vld [vmem:[%s200 + $0xc4] sm:$0xf]
      %v263 = vld [vmem:[%s200 + $0xc8] sm:$0xf]
      %v264 = vld [vmem:[%s200 + $0xcc] sm:$0xf]
      %v265 = vld [vmem:[%s200 + $0xd0] sm:$0xf]
      %v266 = vld [vmem:[%s200 + $0xd4] sm:$0xf]
      %v267 = vld [vmem:[%s200 + $0xd8] sm:$0xf]
      %v268 = vld [vmem:[%s200 + $0xdc] sm:$0xf]
      %v269 = vld [vmem:[%s200 + $0xe0] sm:$0xf]
      %v270 = vld [vmem:[%s200 + $0xe4] sm:$0xf]
      %v271 = vld [vmem:[%s200 + $0xe8] sm:$0xf]
      %v272 = vld [vmem:[%s200 + $0xec] sm:$0xf]
      %v273 = vld [vmem:[%s200 + $0xf0] sm:$0xf]
      %v274 = vld [vmem:[%s200 + $0xf4] sm:$0xf]
      %v275 = vld [vmem:[%s200 + $0xf8] sm:$0xf]
      %v276 = vld [vmem:[%s200 + $0xfc] sm:$0xf]
      %v277 = vld [vmem:[%s1] sm:$0xf]
      %v278 = vld [vmem:[%s1 + $0x4] sm:$0xf]
      %v279 = vld [vmem:[%s1 + $0x8] sm:$0xf]
      %v280 = vld [vmem:[%s1 + $0xc] sm:$0x1]
      %v281 = vld [vmem:[%s2] sm:$0x1]
      %v283 = vlaneseq
      %v284 = vshrl.u32 %v283, 7
      %v285 = vsub.s32 0, %v284
      %v286 = vrot.slane %v281, %v285
      %v352 = vunpack.c.l.b16 %v213
      %v353 = vunpack.c.l.b16 %v214
      %v354 = vunpack.c.l.b16 %v215
      %v355 = vunpack.c.l.b16 %v216
      %v356 = vunpack.c.l.b16 %v217
      %v357 = vunpack.c.l.b16 %v218
      %v358 = vunpack.c.l.b16 %v219
      %v359 = vunpack.c.l.b16 %v220
      %v360 = vunpack.c.l.b16 %v221
      %v361 = vunpack.c.l.b16 %v222
      %v362 = vunpack.c.l.b16 %v223
      %v363 = vunpack.c.l.b16 %v224
      %v364 = vunpack.c.l.b16 %v225
      %v365 = vunpack.c.l.b16 %v226
      %v366 = vunpack.c.l.b16 %v227
      %v367 = vunpack.c.l.b16 %v228
      %v368 = vunpack.c.l.b16 %v229
      %v369 = vunpack.c.l.b16 %v230
      %v370 = vunpack.c.l.b16 %v231
      %v371 = vunpack.c.l.b16 %v232
      %v372 = vunpack.c.l.b16 %v233
      %v373 = vunpack.c.l.b16 %v234
      %v374 = vunpack.c.l.b16 %v235
      %v375 = vunpack.c.l.b16 %v236
      %v376 = vunpack.c.l.b16 %v237
      %v377 = vunpack.c.l.b16 %v238
      %v378 = vunpack.c.l.b16 %v239
      %v379 = vunpack.c.l.b16 %v240
      %v380 = vunpack.c.l.b16 %v241
      %v381 = vunpack.c.l.b16 %v242
      %v382 = vunpack.c.l.b16 %v243
      %v383 = vunpack.c.l.b16 %v244
      %v384 = vunpack.c.l.b16 %v245
      %v385 = vunpack.c.l.b16 %v246
      %v386 = vunpack.c.l.b16 %v247
      %v387 = vunpack.c.l.b16 %v248
      %v388 = vunpack.c.l.b16 %v249
      %v389 = vunpack.c.l.b16 %v250
      %v390 = vunpack.c.l.b16 %v251
      %v391 = vunpack.c.l.b16 %v252
      %v392 = vunpack.c.l.b16 %v253
      %v393 = vunpack.c.l.b16 %v254
      %v394 = vunpack.c.l.b16 %v255
      %v395 = vunpack.c.l.b16 %v256
      %v396 = vunpack.c.l.b16 %v257
      %v397 = vunpack.c.l.b16 %v258
      %v398 = vunpack.c.l.b16 %v259
      %v399 = vunpack.c.l.b16 %v260
      %v400 = vunpack.c.l.b16 %v261
      %v401 = vunpack.c.l.b16 %v262
      %v402 = vunpack.c.l.b16 %v263
      %v403 = vunpack.c.l.b16 %v264
      %v404 = vunpack.c.l.b16 %v265
      %v405 = vunpack.c.l.b16 %v266
      %v406 = vunpack.c.l.b16 %v267
      %v407 = vunpack.c.l.b16 %v268
      %v408 = vunpack.c.l.b16 %v269
      %v409 = vunpack.c.l.b16 %v270
      %v410 = vunpack.c.l.b16 %v271
      %v411 = vunpack.c.l.b16 %v272
      %v412 = vunpack.c.l.b16 %v273
      %v413 = vunpack.c.l.b16 %v274
      %v414 = vunpack.c.l.b16 %v275
      %v415 = vunpack.c.l.b16 %v276
      %v416 = vpack.c.b16 %v353, %v352
      %v417 = vpack.c.b16 %v355, %v354
      %v418 = vpack.c.b16 %v357, %v356
      %v419 = vpack.c.b16 %v359, %v358
      %v420 = vpack.c.b16 %v361, %v360
      %v421 = vpack.c.b16 %v363, %v362
      %v422 = vpack.c.b16 %v365, %v364
      %v423 = vpack.c.b16 %v367, %v366
      %v424 = vpack.c.b16 %v369, %v368
      %v425 = vpack.c.b16 %v371, %v370
      %v426 = vpack.c.b16 %v373, %v372
      %v427 = vpack.c.b16 %v375, %v374
      %v428 = vpack.c.b16 %v377, %v376
      %v429 = vpack.c.b16 %v379, %v378
      %v430 = vpack.c.b16 %v381, %v380
      %v431 = vpack.c.b16 %v383, %v382
      %v432 = vpack.c.b16 %v385, %v384
      %v433 = vpack.c.b16 %v387, %v386
      %v434 = vpack.c.b16 %v389, %v388
      %v435 = vpack.c.b16 %v391, %v390
      %v436 = vpack.c.b16 %v393, %v392
      %v437 = vpack.c.b16 %v395, %v394
      %v438 = vpack.c.b16 %v397, %v396
      %v439 = vpack.c.b16 %v399, %v398
      %v440 = vpack.c.b16 %v401, %v400
      %v441 = vpack.c.b16 %v403, %v402
      %v442 = vpack.c.b16 %v405, %v404
      %v443 = vpack.c.b16 %v407, %v406
      %v444 = vpack.c.b16 %v409, %v408
      %v445 = vpack.c.b16 %v411, %v410
      %v446 = vpack.c.b16 %v413, %v412
      %v447 = vpack.c.b16 %v415, %v414
      %v452 = vunpack.c.l.b16 %v277
      %v453 = vunpack.c.l.b16 %v278
      %v454 = vunpack.c.l.b16 %v279
      %v455 = vunpack.c.l.b16 %v280
      %v456 = vpack.c.b16 %v453, %v452
      %v457 = vpack.c.b16 %v455, %v454
      %vm459 = vcmask 203776
      %v461 = vsel %vm459, %v416, 0
      %v464 = vsel %vm459, %v417, 0
      %v467 = vsel %vm459, %v418, 0
      %v470 = vsel %vm459, %v419, 0
      %v473 = vsel %vm459, %v420, 0
      %v476 = vsel %vm459, %v421, 0
      %v479 = vsel %vm459, %v422, 0
      %v482 = vsel %vm459, %v423, 0
      %v485 = vsel %vm459, %v424, 0
      %v488 = vsel %vm459, %v425, 0
      %v491 = vsel %vm459, %v426, 0
      %v494 = vsel %vm459, %v427, 0
      %v497 = vsel %vm459, %v428, 0
      %v500 = vsel %vm459, %v429, 0
      %v503 = vsel %vm459, %v430, 0
      %v506 = vsel %vm459, %v431, 0
      %v509 = vsel %vm459, %v432, 0
      %v512 = vsel %vm459, %v433, 0
      %v515 = vsel %vm459, %v434, 0
      %v518 = vsel %vm459, %v435, 0
      %v521 = vsel %vm459, %v436, 0
      %v524 = vsel %vm459, %v437, 0
      %v527 = vsel %vm459, %v438, 0
      %v530 = vsel %vm459, %v439, 0
      %v533 = vsel %vm459, %v440, 0
      %v536 = vsel %vm459, %v441, 0
      %v539 = vsel %vm459, %v442, 0
      %v542 = vsel %vm459, %v443, 0
      %v545 = vsel %vm459, %v444, 0
      %v548 = vsel %vm459, %v445, 0
      %v551 = vsel %vm459, %v446, 0
      %v554 = vsel %vm459, %v447, 0
      %vm556 = vcmask 1043456
      %vm557 = vcmask 1044480
      %v558 = vsel %vm556, 4294967295, 65535
      %v559 = vsel %vm557, %v558, 0
      %v561 = vand.u32 %v457, %v559
      %563 = vmatprep.subr.bf16.mxu0 0
      %564 = vmatpush1.bf16.msra.mxu0 0
      %565 = vmatprep.subr.bf16.mxu0 0
      %566 = vmatpush1.bf16.msra.mxu0 0
      %567 = vmatprep.subr.bf16.mxu0 0
      %568 = vmatpush1.bf16.msra.mxu0 0
      %569 = vmatprep.subr.bf16.mxu0 0
      %570 = vmatpush1.bf16.msra.mxu0 0
      %571 = vmatprep.subr.bf16.mxu0 0
      %572 = vmatpush1.bf16.msra.mxu0 0
      %573 = vmatprep.subr.bf16.mxu0 0
      %574 = vmatpush1.bf16.msra.mxu0 0
      %575 = vmatprep.subr.bf16.mxu0 0
      %576 = vmatpush1.bf16.msra.mxu0 %v561
      %577 = vmatprep.subr.bf16.mxu0 0
      %578 = vmatpush1.bf16.msra.mxu0 %v456
      %579 = vmatprep.subr.bf16.mxu0 0
      %580 = vmatpush2.bf16.msra.mxu0 0
      %581 = vmatprep.subr.bf16.mxu0 0
      %582 = vmatpush2.bf16.msra.mxu0 0
      %583 = vmatprep.subr.bf16.mxu0 0
      %584 = vmatpush2.bf16.msra.mxu0 0
      %585 = vmatprep.subr.bf16.mxu0 0
      %586 = vmatpush2.bf16.msra.mxu0 0
      %587 = vmatprep.subr.bf16.mxu0 0
      %588 = vmatpush2.bf16.msra.mxu0 0
      %589 = vmatprep.subr.bf16.mxu0 0
      %590 = vmatpush2.bf16.msra.mxu0 0
      %591 = vmatprep.subr.bf16.mxu0 0
      %592 = vmatpush2.bf16.msra.mxu0 0
      %593 = vmatprep.subr.bf16.mxu0 0
      %594 = vmatpush2.bf16.msra.mxu0 0
      %595 = vmatprep.mubr.bf16.mxu0 0
      %596 = vmatmul.mubr.bf16.gmra.mxu0 %v461
      %v597 = vpop.f32.mrf.mxu0
      %v598 = vadd.f32 %v286, %v597
      %v599 = vpop.f32.mrf.mxu0
      %v600 = vpop.f32.mrf.mxu0
      %v601 = vadd.f32 %v286, %v600
      %v602 = vpop.f32.mrf.mxu0
      %603 = vmatprep.mubr.bf16.mxu0 0
      %604 = vmatmul.mubr.bf16.gmra.mxu0 %v464
      %v605 = vpop.f32.mrf.mxu0
      %v606 = vadd.f32 %v286, %v605
      %v607 = vpop.f32.mrf.mxu0
      %v608 = vpop.f32.mrf.mxu0
      %v609 = vadd.f32 %v286, %v608
      %v610 = vpop.f32.mrf.mxu0
      %611 = vmatprep.mubr.bf16.mxu0 0
      %612 = vmatmul.mubr.bf16.gmra.mxu0 %v467
      %v613 = vpop.f32.mrf.mxu0
      %v614 = vadd.f32 %v286, %v613
      %v615 = vpop.f32.mrf.mxu0
      %v616 = vpop.f32.mrf.mxu0
      %v617 = vadd.f32 %v286, %v616
      %v618 = vpop.f32.mrf.mxu0
      %619 = vmatprep.mubr.bf16.mxu0 0
      %620 = vmatmul.mubr.bf16.gmra.mxu0 %v470
      %v621 = vpop.f32.mrf.mxu0
      %v622 = vadd.f32 %v286, %v621
      %v623 = vpop.f32.mrf.mxu0
      %v624 = vpop.f32.mrf.mxu0
      %v625 = vadd.f32 %v286, %v624
      %v626 = vpop.f32.mrf.mxu0
      %627 = vmatprep.mubr.bf16.mxu0 0
      %628 = vmatmul.mubr.bf16.gmra.mxu0 %v473
      %v629 = vpop.f32.mrf.mxu0
      %v630 = vadd.f32 %v286, %v629
      %v631 = vpop.f32.mrf.mxu0
      %v632 = vpop.f32.mrf.mxu0
      %v633 = vadd.f32 %v286, %v632
      %v634 = vpop.f32.mrf.mxu0
      %635 = vmatprep.mubr.bf16.mxu0 0
      %636 = vmatmul.mubr.bf16.gmra.mxu0 %v476
      %v637 = vpop.f32.mrf.mxu0
      %v638 = vadd.f32 %v286, %v637
      %v639 = vpop.f32.mrf.mxu0
      %v640 = vpop.f32.mrf.mxu0
      %v641 = vadd.f32 %v286, %v640
      %v642 = vpop.f32.mrf.mxu0
      %643 = vmatprep.mubr.bf16.mxu0 0
      %644 = vmatmul.mubr.bf16.gmra.mxu0 %v479
      %v645 = vpop.f32.mrf.mxu0
      %v646 = vadd.f32 %v286, %v645
      %v647 = vpop.f32.mrf.mxu0
      %v648 = vpop.f32.mrf.mxu0
      %v649 = vadd.f32 %v286, %v648
      %v650 = vpop.f32.mrf.mxu0
      %651 = vmatprep.mubr.bf16.mxu0 0
      %652 = vmatmul.mubr.bf16.gmra.mxu0 %v482
      %v653 = vpop.f32.mrf.mxu0
      %v654 = vadd.f32 %v286, %v653
      %v655 = vpop.f32.mrf.mxu0
      %v656 = vpop.f32.mrf.mxu0
      %v657 = vadd.f32 %v286, %v656
      %v658 = vpop.f32.mrf.mxu0
      %659 = vmatprep.mubr.bf16.mxu0 0
      %660 = vmatmul.mubr.bf16.gmra.mxu0 %v485
      %v661 = vpop.f32.mrf.mxu0
      %v662 = vadd.f32 %v286, %v661
      %v663 = vpop.f32.mrf.mxu0
      %v664 = vpop.f32.mrf.mxu0
      %v665 = vadd.f32 %v286, %v664
      %v666 = vpop.f32.mrf.mxu0
      %667 = vmatprep.mubr.bf16.mxu0 0
      %668 = vmatmul.mubr.bf16.gmra.mxu0 %v488
      %v669 = vpop.f32.mrf.mxu0
      %v670 = vadd.f32 %v286, %v669
      %v671 = vpop.f32.mrf.mxu0
      %v672 = vpop.f32.mrf.mxu0
      %v673 = vadd.f32 %v286, %v672
      %v674 = vpop.f32.mrf.mxu0
      %675 = vmatprep.mubr.bf16.mxu0 0
      %676 = vmatmul.mubr.bf16.gmra.mxu0 %v491
      %v677 = vpop.f32.mrf.mxu0
      %v678 = vadd.f32 %v286, %v677
      %v679 = vpop.f32.mrf.mxu0
      %v680 = vpop.f32.mrf.mxu0
      %v681 = vadd.f32 %v286, %v680
      %v682 = vpop.f32.mrf.mxu0
      %683 = vmatprep.mubr.bf16.mxu0 0
      %684 = vmatmul.mubr.bf16.gmra.mxu0 %v494
      %v685 = vpop.f32.mrf.mxu0
      %v686 = vadd.f32 %v286, %v685
      %v687 = vpop.f32.mrf.mxu0
      %v688 = vpop.f32.mrf.mxu0
      %v689 = vadd.f32 %v286, %v688
      %v690 = vpop.f32.mrf.mxu0
      %691 = vmatprep.mubr.bf16.mxu0 0
      %692 = vmatmul.mubr.bf16.gmra.mxu0 %v497
      %v693 = vpop.f32.mrf.mxu0
      %v694 = vadd.f32 %v286, %v693
      %v695 = vpop.f32.mrf.mxu0
      %v696 = vpop.f32.mrf.mxu0
      %v697 = vadd.f32 %v286, %v696
      %v698 = vpop.f32.mrf.mxu0
      %699 = vmatprep.mubr.bf16.mxu0 0
      %700 = vmatmul.mubr.bf16.gmra.mxu0 %v500
      %v701 = vpop.f32.mrf.mxu0
      %v702 = vadd.f32 %v286, %v701
      %v703 = vpop.f32.mrf.mxu0
      %v704 = vpop.f32.mrf.mxu0
      %v705 = vadd.f32 %v286, %v704
      %v706 = vpop.f32.mrf.mxu0
      %707 = vmatprep.mubr.bf16.mxu0 0
      %708 = vmatmul.mubr.bf16.gmra.mxu0 %v503
      %v709 = vpop.f32.mrf.mxu0
      %v710 = vadd.f32 %v286, %v709
      %v711 = vpop.f32.mrf.mxu0
      %v712 = vpop.f32.mrf.mxu0
      %v713 = vadd.f32 %v286, %v712
      %v714 = vpop.f32.mrf.mxu0
      %715 = vmatprep.mubr.bf16.mxu0 0
      %716 = vmatmul.mubr.bf16.gmra.mxu0 %v506
      %v717 = vpop.f32.mrf.mxu0
      %v718 = vadd.f32 %v286, %v717
      %v719 = vpop.f32.mrf.mxu0
      %v720 = vpop.f32.mrf.mxu0
      %v721 = vadd.f32 %v286, %v720
      %v722 = vpop.f32.mrf.mxu0
      %723 = vmatprep.mubr.bf16.mxu0 0
      %724 = vmatmul.mubr.bf16.gmra.mxu0 %v509
      %v725 = vpop.f32.mrf.mxu0
      %v726 = vadd.f32 %v286, %v725
      %v727 = vpop.f32.mrf.mxu0
      %v728 = vpop.f32.mrf.mxu0
      %v729 = vadd.f32 %v286, %v728
      %v730 = vpop.f32.mrf.mxu0
      %731 = vmatprep.mubr.bf16.mxu0 0
      %732 = vmatmul.mubr.bf16.gmra.mxu0 %v512
      %v733 = vpop.f32.mrf.mxu0
      %v734 = vadd.f32 %v286, %v733
      %v735 = vpop.f32.mrf.mxu0
      %v736 = vpop.f32.mrf.mxu0
      %v737 = vadd.f32 %v286, %v736
      %v738 = vpop.f32.mrf.mxu0
      %739 = vmatprep.mubr.bf16.mxu0 0
      %740 = vmatmul.mubr.bf16.gmra.mxu0 %v515
      %v741 = vpop.f32.mrf.mxu0
      %v742 = vadd.f32 %v286, %v741
      %v743 = vpop.f32.mrf.mxu0
      %v744 = vpop.f32.mrf.mxu0
      %v745 = vadd.f32 %v286, %v744
      %v746 = vpop.f32.mrf.mxu0
      %747 = vmatprep.mubr.bf16.mxu0 0
      %748 = vmatmul.mubr.bf16.gmra.mxu0 %v518
      %v749 = vpop.f32.mrf.mxu0
      %v750 = vadd.f32 %v286, %v749
      %v751 = vpop.f32.mrf.mxu0
      %v752 = vpop.f32.mrf.mxu0
      %v753 = vadd.f32 %v286, %v752
      %v754 = vpop.f32.mrf.mxu0
      %755 = vmatprep.mubr.bf16.mxu0 0
      %756 = vmatmul.mubr.bf16.gmra.mxu0 %v521
      %v757 = vpop.f32.mrf.mxu0
      %v758 = vadd.f32 %v286, %v757
      %v759 = vpop.f32.mrf.mxu0
      %v760 = vpop.f32.mrf.mxu0
      %v761 = vadd.f32 %v286, %v760
      %v762 = vpop.f32.mrf.mxu0
      %763 = vmatprep.mubr.bf16.mxu0 0
      %764 = vmatmul.mubr.bf16.gmra.mxu0 %v524
      %v765 = vpop.f32.mrf.mxu0
      %v766 = vadd.f32 %v286, %v765
      %v767 = vpop.f32.mrf.mxu0
      %v768 = vpop.f32.mrf.mxu0
      %v769 = vadd.f32 %v286, %v768
      %v770 = vpop.f32.mrf.mxu0
      %771 = vmatprep.mubr.bf16.mxu0 0
      %772 = vmatmul.mubr.bf16.gmra.mxu0 %v527
      %v773 = vpop.f32.mrf.mxu0
      %v774 = vadd.f32 %v286, %v773
      %v775 = vpop.f32.mrf.mxu0
      %v776 = vpop.f32.mrf.mxu0
      %v777 = vadd.f32 %v286, %v776
      %v778 = vpop.f32.mrf.mxu0
      %779 = vmatprep.mubr.bf16.mxu0 0
      %780 = vmatmul.mubr.bf16.gmra.mxu0 %v530
      %v781 = vpop.f32.mrf.mxu0
      %v782 = vadd.f32 %v286, %v781
      %v783 = vpop.f32.mrf.mxu0
      %v784 = vpop.f32.mrf.mxu0
      %v785 = vadd.f32 %v286, %v784
      %v786 = vpop.f32.mrf.mxu0
      %787 = vmatprep.mubr.bf16.mxu0 0
      %788 = vmatmul.mubr.bf16.gmra.mxu0 %v533
      %v789 = vpop.f32.mrf.mxu0
      %v790 = vadd.f32 %v286, %v789
      %v791 = vpop.f32.mrf.mxu0
      %v792 = vpop.f32.mrf.mxu0
      %v793 = vadd.f32 %v286, %v792
      %v794 = vpop.f32.mrf.mxu0
      %795 = vmatprep.mubr.bf16.mxu0 0
      %796 = vmatmul.mubr.bf16.gmra.mxu0 %v536
      %v797 = vpop.f32.mrf.mxu0
      %v798 = vadd.f32 %v286, %v797
      %v799 = vpop.f32.mrf.mxu0
      %v800 = vpop.f32.mrf.mxu0
      %v801 = vadd.f32 %v286, %v800
      %v802 = vpop.f32.mrf.mxu0
      %803 = vmatprep.mubr.bf16.mxu0 0
      %804 = vmatmul.mubr.bf16.gmra.mxu0 %v539
      %v805 = vpop.f32.mrf.mxu0
      %v806 = vadd.f32 %v286, %v805
      %v807 = vpop.f32.mrf.mxu0
      %v808 = vpop.f32.mrf.mxu0
      %v809 = vadd.f32 %v286, %v808
      %v810 = vpop.f32.mrf.mxu0
      %811 = vmatprep.mubr.bf16.mxu0 0
      %812 = vmatmul.mubr.bf16.gmra.mxu0 %v542
      %v813 = vpop.f32.mrf.mxu0
      %v814 = vadd.f32 %v286, %v813
      %v815 = vpop.f32.mrf.mxu0
      %v816 = vpop.f32.mrf.mxu0
      %v817 = vadd.f32 %v286, %v816
      %v818 = vpop.f32.mrf.mxu0
      %819 = vmatprep.mubr.bf16.mxu0 0
      %820 = vmatmul.mubr.bf16.gmra.mxu0 %v545
      %v821 = vpop.f32.mrf.mxu0
      %v822 = vadd.f32 %v286, %v821
      %v823 = vpop.f32.mrf.mxu0
      %v824 = vpop.f32.mrf.mxu0
      %v825 = vadd.f32 %v286, %v824
      %v826 = vpop.f32.mrf.mxu0
      %827 = vmatprep.mubr.bf16.mxu0 0
      %828 = vmatmul.mubr.bf16.gmra.mxu0 %v548
      %v829 = vpop.f32.mrf.mxu0
      %v830 = vadd.f32 %v286, %v829
      %v831 = vpop.f32.mrf.mxu0
      %v832 = vpop.f32.mrf.mxu0
      %v833 = vadd.f32 %v286, %v832
      %v834 = vpop.f32.mrf.mxu0
      %835 = vmatprep.mubr.bf16.mxu0 0
      %836 = vmatmul.mubr.bf16.gmra.mxu0 %v551
      %v837 = vpop.f32.mrf.mxu0
      %v838 = vadd.f32 %v286, %v837
      %v839 = vpop.f32.mrf.mxu0
      %v840 = vpop.f32.mrf.mxu0
      %v841 = vadd.f32 %v286, %v840
      %v842 = vpop.f32.mrf.mxu0
      %843 = vmatprep.mubr.bf16.mxu0 0
      %844 = vmatmul.mubr.bf16.gmra.mxu0 %v554
      %v845 = vpop.f32.mrf.mxu0
      %v846 = vadd.f32 %v286, %v845
      %v847 = vpop.f32.mrf.mxu0
      %v848 = vpop.f32.mrf.mxu0
      %v849 = vadd.f32 %v286, %v848
      %v850 = vpop.f32.mrf.mxu0
      %851 = vdwg.mxu0
      %852 = vst [vmem:[%s206] sm:$0xff] %v598
      %853 = vst [vmem:[%s206 + $0x8] sm:$0xff] %v601
      %854 = vst [vmem:[%s206 + $0x10] sm:$0xff] %v606
      %855 = vst [vmem:[%s206 + $0x18] sm:$0xff] %v609
      %856 = vst [vmem:[%s206 + $0x20] sm:$0xff] %v614
      %857 = vst [vmem:[%s206 + $0x28] sm:$0xff] %v617
      %858 = vst [vmem:[%s206 + $0x30] sm:$0xff] %v622
      %859 = vst [vmem:[%s206 + $0x38] sm:$0xff] %v625
      %860 = vst [vmem:[%s206 + $0x40] sm:$0xff] %v630
      %861 = vst [vmem:[%s206 + $0x48] sm:$0xff] %v633
      %862 = vst [vmem:[%s206 + $0x50] sm:$0xff] %v638
      %863 = vst [vmem:[%s206 + $0x58] sm:$0xff] %v641
      %864 = vst [vmem:[%s206 + $0x60] sm:$0xff] %v646
      %865 = vst [vmem:[%s206 + $0x68] sm:$0xff] %v649
      %866 = vst [vmem:[%s206 + $0x70] sm:$0xff] %v654
      %867 = vst [vmem:[%s206 + $0x78] sm:$0xff] %v657
      %868 = vst [vmem:[%s206 + $0x80] sm:$0xff] %v662
      %869 = vst [vmem:[%s206 + $0x88] sm:$0xff] %v665
      %870 = vst [vmem:[%s206 + $0x90] sm:$0xff] %v670
      %871 = vst [vmem:[%s206 + $0x98] sm:$0xff] %v673
      %872 = vst [vmem:[%s206 + $0xa0] sm:$0xff] %v678
      %873 = vst [vmem:[%s206 + $0xa8] sm:$0xff] %v681
      %874 = vst [vmem:[%s206 + $0xb0] sm:$0xff] %v686
      %875 = vst [vmem:[%s206 + $0xb8] sm:$0xff] %v689
      %876 = vst [vmem:[%s206 + $0xc0] sm:$0xff] %v694
      %877 = vst [vmem:[%s206 + $0xc8] sm:$0xff] %v697
      %878 = vst [vmem:[%s206 + $0xd0] sm:$0xff] %v702
      %879 = vst [vmem:[%s206 + $0xd8] sm:$0xff] %v705
      %880 = vst [vmem:[%s206 + $0xe0] sm:$0xff] %v710
      %881 = vst [vmem:[%s206 + $0xe8] sm:$0xff] %v713
      %882 = vst [vmem:[%s206 + $0xf0] sm:$0xff] %v718
      %883 = vst [vmem:[%s206 + $0xf8] sm:$0xff] %v721
      %884 = vst [vmem:[%s206 + $0x100] sm:$0xff] %v726
      %885 = vst [vmem:[%s206 + $0x108] sm:$0xff] %v729
      %886 = vst [vmem:[%s206 + $0x110] sm:$0xff] %v734
      %887 = vst [vmem:[%s206 + $0x118] sm:$0xff] %v737
      %888 = vst [vmem:[%s206 + $0x120] sm:$0xff] %v742
      %889 = vst [vmem:[%s206 + $0x128] sm:$0xff] %v745
      %890 = vst [vmem:[%s206 + $0x130] sm:$0xff] %v750
      %891 = vst [vmem:[%s206 + $0x138] sm:$0xff] %v753
      %892 = vst [vmem:[%s206 + $0x140] sm:$0xff] %v758
      %893 = vst [vmem:[%s206 + $0x148] sm:$0xff] %v761
      %894 = vst [vmem:[%s206 + $0x150] sm:$0xff] %v766
      %895 = vst [vmem:[%s206 + $0x158] sm:$0xff] %v769
      %896 = vst [vmem:[%s206 + $0x160] sm:$0xff] %v774
      %897 = vst [vmem:[%s206 + $0x168] sm:$0xff] %v777
      %898 = vst [vmem:[%s206 + $0x170] sm:$0xff] %v782
      %899 = vst [vmem:[%s206 + $0x178] sm:$0xff] %v785
      %900 = vst [vmem:[%s206 + $0x180] sm:$0xff] %v790
      %901 = vst [vmem:[%s206 + $0x188] sm:$0xff] %v793
      %902 = vst [vmem:[%s206 + $0x190] sm:$0xff] %v798
      %903 = vst [vmem:[%s206 + $0x198] sm:$0xff] %v801
      %904 = vst [vmem:[%s206 + $0x1a0] sm:$0xff] %v806
      %905 = vst [vmem:[%s206 + $0x1a8] sm:$0xff] %v809
      %906 = vst [vmem:[%s206 + $0x1b0] sm:$0xff] %v814
      %907 = vst [vmem:[%s206 + $0x1b8] sm:$0xff] %v817
      %908 = vst [vmem:[%s206 + $0x1c0] sm:$0xff] %v822
      %909 = vst [vmem:[%s206 + $0x1c8] sm:$0xff] %v825
      %910 = vst [vmem:[%s206 + $0x1d0] sm:$0xff] %v830
      %911 = vst [vmem:[%s206 + $0x1d8] sm:$0xff] %v833
      %912 = vst [vmem:[%s206 + $0x1e0] sm:$0xff] %v838
      %913 = vst [vmem:[%s206 + $0x1e8] sm:$0xff] %v841
      %914 = vst [vmem:[%s206 + $0x1f0] sm:$0xff] %v846
      %915 = vst [vmem:[%s206 + $0x1f8] sm:$0xff] %v849
      %v916 = vadd.f32 %v598, %v601
      %v917 = vadd.f32 %v916, %v606
      %v918 = vadd.f32 %v917, %v609
      %v919 = vadd.f32 %v918, %v614
      %v920 = vadd.f32 %v919, %v617
      %v921 = vadd.f32 %v920, %v622
      %v922 = vadd.f32 %v921, %v625
      %v923 = vadd.f32 %v922, %v630
      %v924 = vadd.f32 %v923, %v633
      %v925 = vadd.f32 %v924, %v638
      %v926 = vadd.f32 %v925, %v641
      %v927 = vadd.f32 %v926, %v646
      %v928 = vadd.f32 %v927, %v649
      %v929 = vadd.f32 %v928, %v654
      %v930 = vadd.f32 %v929, %v657
      %v931 = vadd.f32 %v930, %v662
      %v932 = vadd.f32 %v931, %v665
      %v933 = vadd.f32 %v932, %v670
      %v934 = vadd.f32 %v933, %v673
      %v935 = vadd.f32 %v934, %v678
      %v936 = vadd.f32 %v935, %v681
      %v937 = vadd.f32 %v936, %v686
      %v938 = vadd.f32 %v937, %v689
      %v939 = vadd.f32 %v938, %v694
      %v940 = vadd.f32 %v939, %v697
      %v941 = vadd.f32 %v940, %v702
      %v942 = vadd.f32 %v941, %v705
      %v943 = vadd.f32 %v942, %v710
      %v944 = vadd.f32 %v943, %v713
      %v945 = vadd.f32 %v944, %v718
      %v946 = vadd.f32 %v945, %v721
      %v947 = vadd.f32 %v946, %v726
      %v948 = vadd.f32 %v947, %v729
      %v949 = vadd.f32 %v948, %v734
      %v950 = vadd.f32 %v949, %v737
      %v951 = vadd.f32 %v950, %v742
      %v952 = vadd.f32 %v951, %v745
      %v953 = vadd.f32 %v952, %v750
      %v954 = vadd.f32 %v953, %v753
      %v955 = vadd.f32 %v954, %v758
      %v956 = vadd.f32 %v955, %v761
      %v957 = vadd.f32 %v956, %v766
      %v958 = vadd.f32 %v957, %v769
      %v959 = vadd.f32 %v958, %v774
      %v960 = vadd.f32 %v959, %v777
      %v961 = vadd.f32 %v960, %v782
      %v962 = vadd.f32 %v961, %v785
      %v963 = vadd.f32 %v962, %v790
      %v964 = vadd.f32 %v963, %v793
      %v965 = vadd.f32 %v964, %v798
      %v966 = vadd.f32 %v965, %v801
      %v967 = vadd.f32 %v966, %v806
      %v968 = vadd.f32 %v967, %v809
      %v969 = vadd.f32 %v968, %v814
      %v970 = vadd.f32 %v969, %v817
      %v971 = vadd.f32 %v970, %v822
      %v972 = vadd.f32 %v971, %v825
      %v973 = vadd.f32 %v972, %v830
      %v974 = vadd.f32 %v973, %v833
      %v975 = vadd.f32 %v974, %v838
      %v976 = vadd.f32 %v975, %v841
      %v977 = vadd.f32 %v976, %v846
      %v978 = vadd.f32 %v977, %v849
      %v979 = vrot.slane %v978, 4
      %v980 = vadd.f32 %v978, %v979
      %v981 = vrot.slane %v980, 2
      %v982 = vadd.f32 %v980, %v981
      %v983 = vrot.slane %v982, 1
      %v984 = vadd.f32 %v982, %v983
      %v985 = vmul.f32 %v598, %v598
      %v986 = vmul.f32 %v601, %v601
      %v987 = vmul.f32 %v606, %v606
      %v988 = vmul.f32 %v609, %v609
      %v989 = vmul.f32 %v614, %v614
      %v990 = vmul.f32 %v617, %v617
      %v991 = vmul.f32 %v622, %v622
      %v992 = vmul.f32 %v625, %v625
      %v993 = vmul.f32 %v630, %v630
      %v994 = vmul.f32 %v633, %v633
      %v995 = vmul.f32 %v638, %v638
      %v996 = vmul.f32 %v641, %v641
      %v997 = vmul.f32 %v646, %v646
      %v998 = vmul.f32 %v649, %v649
      %v999 = vmul.f32 %v654, %v654
      %v1000 = vmul.f32 %v657, %v657
      %v1001 = vmul.f32 %v662, %v662
      %v1002 = vmul.f32 %v665, %v665
      %v1003 = vmul.f32 %v670, %v670
      %v1004 = vmul.f32 %v673, %v673
      %v1005 = vmul.f32 %v678, %v678
      %v1006 = vmul.f32 %v681, %v681
      %v1007 = vmul.f32 %v686, %v686
      %v1008 = vmul.f32 %v689, %v689
      %v1009 = vmul.f32 %v694, %v694
      %v1010 = vmul.f32 %v697, %v697
      %v1011 = vmul.f32 %v702, %v702
      %v1012 = vmul.f32 %v705, %v705
      %v1013 = vmul.f32 %v710, %v710
      %v1014 = vmul.f32 %v713, %v713
      %v1015 = vmul.f32 %v718, %v718
      %v1016 = vmul.f32 %v721, %v721
      %v1017 = vmul.f32 %v726, %v726
      %v1018 = vmul.f32 %v729, %v729
      %v1019 = vmul.f32 %v734, %v734
      %v1020 = vmul.f32 %v737, %v737
      %v1021 = vmul.f32 %v742, %v742
      %v1022 = vmul.f32 %v745, %v745
      %v1023 = vmul.f32 %v750, %v750
      %v1024 = vmul.f32 %v753, %v753
      %v1025 = vmul.f32 %v758, %v758
      %v1026 = vmul.f32 %v761, %v761
      %v1027 = vmul.f32 %v766, %v766
      %v1028 = vmul.f32 %v769, %v769
      %v1029 = vmul.f32 %v774, %v774
      %v1030 = vmul.f32 %v777, %v777
      %v1031 = vmul.f32 %v782, %v782
      %v1032 = vmul.f32 %v785, %v785
      %v1033 = vmul.f32 %v790, %v790
      %v1034 = vmul.f32 %v793, %v793
      %v1035 = vmul.f32 %v798, %v798
      %v1036 = vmul.f32 %v801, %v801
      %v1037 = vmul.f32 %v806, %v806
      %v1038 = vmul.f32 %v809, %v809
      %v1039 = vmul.f32 %v814, %v814
      %v1040 = vmul.f32 %v817, %v817
      %v1041 = vmul.f32 %v822, %v822
      %v1042 = vmul.f32 %v825, %v825
      %v1043 = vmul.f32 %v830, %v830
      %v1044 = vmul.f32 %v833, %v833
      %v1045 = vmul.f32 %v838, %v838
      %v1046 = vmul.f32 %v841, %v841
      %v1047 = vmul.f32 %v846, %v846
      %v1048 = vmul.f32 %v849, %v849
      %v1049 = vadd.f32 %v985, %v986
      %v1050 = vadd.f32 %v1049, %v987
      %v1051 = vadd.f32 %v1050, %v988
      %v1052 = vadd.f32 %v1051, %v989
      %v1053 = vadd.f32 %v1052, %v990
      %v1054 = vadd.f32 %v1053, %v991
      %v1055 = vadd.f32 %v1054, %v992
      %v1056 = vadd.f32 %v1055, %v993
      %v1057 = vadd.f32 %v1056, %v994
      %v1058 = vadd.f32 %v1057, %v995
      %v1059 = vadd.f32 %v1058, %v996
      %v1060 = vadd.f32 %v1059, %v997
      %v1061 = vadd.f32 %v1060, %v998
      %v1062 = vadd.f32 %v1061, %v999
      %v1063 = vadd.f32 %v1062, %v1000
      %v1064 = vadd.f32 %v1063, %v1001
      %v1065 = vadd.f32 %v1064, %v1002
      %v1066 = vadd.f32 %v1065, %v1003
      %v1067 = vadd.f32 %v1066, %v1004
      %v1068 = vadd.f32 %v1067, %v1005
      %v1069 = vadd.f32 %v1068, %v1006
      %v1070 = vadd.f32 %v1069, %v1007
      %v1071 = vadd.f32 %v1070, %v1008
      %v1072 = vadd.f32 %v1071, %v1009
      %v1073 = vadd.f32 %v1072, %v1010
      %v1074 = vadd.f32 %v1073, %v1011
      %v1075 = vadd.f32 %v1074, %v1012
      %v1076 = vadd.f32 %v1075, %v1013
      %v1077 = vadd.f32 %v1076, %v1014
      %v1078 = vadd.f32 %v1077, %v1015
      %v1079 = vadd.f32 %v1078, %v1016
      %v1080 = vadd.f32 %v1079, %v1017
      %v1081 = vadd.f32 %v1080, %v1018
      %v1082 = vadd.f32 %v1081, %v1019
      %v1083 = vadd.f32 %v1082, %v1020
      %v1084 = vadd.f32 %v1083, %v1021
      %v1085 = vadd.f32 %v1084, %v1022
      %v1086 = vadd.f32 %v1085, %v1023
      %v1087 = vadd.f32 %v1086, %v1024
      %v1088 = vadd.f32 %v1087, %v1025
      %v1089 = vadd.f32 %v1088, %v1026
      %v1090 = vadd.f32 %v1089, %v1027
      %v1091 = vadd.f32 %v1090, %v1028
      %v1092 = vadd.f32 %v1091, %v1029
      %v1093 = vadd.f32 %v1092, %v1030
      %v1094 = vadd.f32 %v1093, %v1031
      %v1095 = vadd.f32 %v1094, %v1032
      %v1096 = vadd.f32 %v1095, %v1033
      %v1097 = vadd.f32 %v1096, %v1034
      %v1098 = vadd.f32 %v1097, %v1035
      %v1099 = vadd.f32 %v1098, %v1036
      %v1100 = vadd.f32 %v1099, %v1037
      %v1101 = vadd.f32 %v1100, %v1038
      %v1102 = vadd.f32 %v1101, %v1039
      %v1103 = vadd.f32 %v1102, %v1040
      %v1104 = vadd.f32 %v1103, %v1041
      %v1105 = vadd.f32 %v1104, %v1042
      %v1106 = vadd.f32 %v1105, %v1043
      %v1107 = vadd.f32 %v1106, %v1044
      %v1108 = vadd.f32 %v1107, %v1045
      %v1109 = vadd.f32 %v1108, %v1046
      %v1110 = vadd.f32 %v1109, %v1047
      %v1111 = vadd.f32 %v1110, %v1048
      %v1112 = vrot.slane %v1111, 4
      %v1113 = vadd.f32 %v1111, %v1112
      %v1114 = vrot.slane %v1113, 2
      %v1115 = vadd.f32 %v1113, %v1114
      %v1116 = vrot.slane %v1115, 1
      %v1117 = vadd.f32 %v1115, %v1116
      %vm1118 = vcmask 1040384
      %v1119 = vsel %vm1118, %v984, %v1117
      %1120 = vst [vmem:[%s211] sm:$0x3] %v1119
      %s1121 = smul.u32 64, %s16
      %p1122 = scmp.lt.s32.totalorder %s1121, 575
      %s1123 = scalar_select %p1122, %s1121, 575
      %s1124 = smul.addr %s1123, 8
      %s1125 = scalar_lea.vmem %s3, %s1124
      %p1126 = scmp.lt.s32.totalorder %s16, 8
      %s1127 = scalar_select %p1126, %s16, 8
      %s1128 = smul.addr %s1127, 2
      %s1129 = scalar_lea.vmem %s4, %s1128
      // Predicated region
      $region33: #{extractor_forward.6} parent=31 // pred_check
        %p1130 = pneg %p102
      $region34: #{extractor_forward.6} parent=31 // pred_check_branch
        %1132 = sbr.rel (%p1130) target = $region36
      $region35: #{extractor_forward.6} parent=31 // pred_region
        %s1133 = smul.u32 64, %s16
      $region36: #{extractor_forward.6} parent=31 // pred_fallthru
        _
      // Predicated region
      $region37: #{extractor_forward.6} parent=31 // pred_check
        %p1134 = pneg %p128
      $region38: #{extractor_forward.6} parent=31 // pred_check_branch
        %1136 = sbr.rel (%p1134) target = $region40
      $region39: #{extractor_forward.6} parent=31 // pred_region
        _
      $region40: #{extractor_forward.6} parent=31 // pred_fallthru
        _
    $region32: #{extractor_forward.6} parent=5 // pred_fallthru
      _
    %p1137 = scmp.le.s32.totalorder 2, %s11
    // Predicated region
    $region41: #{extractor_forward.6} parent=5 // pred_check
      %p1138 = pneg %p1137
    $region42: #{extractor_forward.6} parent=5 // pred_check_branch
      %1140 = sbr.rel (%p1138) target = $region44
    $region43: #{extractor_forward.6} parent=5 // pred_region
      %s1141 = ssub.s32 %s11, 2
      // Predicated region
      $region45: #{extractor_forward.6} parent=43 // pred_check
        %p1142 = pneg %p108
      $region46: #{extractor_forward.6} parent=43 // pred_check_branch
        %1144 = sbr.rel (%p1142) target = $region48
      $region47: #{extractor_forward.6} parent=43 // pred_region
        %s1145 = smul.u32 64, %s17
        %p1146 = scmp.lt.s32.totalorder %s1145, 575
        %s1147 = scalar_select %p1146, %s1145, 575
        %s1148 = smul.addr %s1147, 8
        %s1149 = scalar_lea.vmem %s3, %s1148
      $region48: #{extractor_forward.6} parent=43 // pred_fallthru
        _
      // Predicated region
      $region49: #{extractor_forward.6} parent=43 // pred_check
        %p1150 = pneg %p134
      $region50: #{extractor_forward.6} parent=43 // pred_check_branch
        %1152 = sbr.rel (%p1150) target = $region52
      $region51: #{extractor_forward.6} parent=43 // pred_region
        %p1153 = scmp.lt.s32.totalorder %s17, 8
        %s1154 = scalar_select %p1153, %s17, 8
        %s1155 = smul.addr %s1154, 2
        %s1156 = scalar_lea.vmem %s4, %s1155
      $region52: #{extractor_forward.6} parent=43 // pred_fallthru
        _
    $region44: #{extractor_forward.6} parent=5 // pred_fallthru
      _
  $region6: #{extractor_forward.6} parent=0 // loop_footer
    %s15 = sadd.s32 1, %s11
  $region7: #{extractor_forward.6} parent=0 // loop_footer_branch
    %10 = sbr.rel target = $region3
  $region8: #{extractor_forward.6} parent=0 // loop_exit
    _

// kernel: extractor_forward.7
$region0: #{extractor_forward.7}
  #allocation0 [shape = 'u32[]', space=smem, size = 0x4, offset = 0x4, fixed_abs, tag = 'smem constant byte address 0x4 - core index']
  #allocation1 [shape = 'u32[144,128]{1,0:T(1,128)}', space=vmem, size = 0x12000, scoped, tag = 'internal scratch']
  %s0 = inlined_call_operand.vmem [shape: f32[9,2,128], index: 0, kind: input, shape index: {}]
  %s1 = inlined_call_operand.vmem [shape: f32[8,12,2,12,256], index: 1, kind: input, shape index: {}]
  %s2 = inlined_call_operand.vmem [shape: f32[1,128], index: 2, kind: input, shape index: {}]
  %s3 = inlined_call_operand.vmem [shape: f32[1,128], index: 3, kind: input, shape index: {}]
  %s4 = inlined_call_operand.vmem [shape: bf16[8,12,12,128], index: 4, kind: output, shape index: {}]
  %s5 = sld [smem:[#allocation0]]
  $region49: #{extractor_forward.7} parent=0
    _
  %s7 = ssub.s32 1, %s5
  %s8 = scalar_select 0, %s7, %s5
  loop: start=0, step=1, limit=10
  $region2: #{extractor_forward.7} parent=0 // loop_pre_header
    _
  $region3: #{extractor_forward.7} parent=0 // loop_header
    %s10 = sphi 0, %s14
    %p11 = scmp.ge.s32.totalorder %s10, 10
    %s18 = sphi 0, %s18
    %s20 = sphi 0, %s18
    %s21 = sphi 0, %s20
    %s35 = sphi 0, %s21
    %s41 = sphi 0, %s43
    %s44 = sphi 0, %s41
    %s45 = sphi 0, %s44
    %s61 = sphi 0, %s45
    %s65 = sphi 0, %s65
    %s67 = sphi 0, %s65
    %s68 = sphi 0, %s67
    %s82 = sphi 0, %s68
    %s86 = sphi 0, %s86
    %s88 = sphi 0, %s86
    %s89 = sphi 0, %s88
    %s103 = sphi 0, %s89
    %s109 = sphi 0, %s111
    %s112 = sphi 0, %s109
    %s113 = sphi 0, %s112
    %s129 = sphi 0, %s113
  $region4: #{extractor_forward.7} parent=0 // loop_header_branch
    %13 = sbr.rel (%p11) target = $region8
  $region5: #{extractor_forward.7} parent=0 // loop_body
    %s15 = ssub.s32 %s10, 1
    %s16 = ssub.s32 %s10, 2
    %s17 = sadd.s32 %s10, 1
    %s19 = sadd.s32 %s18, 1
    %p22 = scmp.eq.s32.totalorder %s10, 7
    %p23 = scmp.ne.s32.totalorder %s18, %s20
    %p24 = scmp.eq.s32.totalorder %s10, 0
    %p25 = por %p23, %p24
    %p26 = scmp.ne.s32.totalorder %s18, %s20
    %p27 = scmp.eq.s32.totalorder %s15, 7
    %p28 = por %p26, %p27
    %p29 = scmp.ne.s32.totalorder %s20, %s21
    %p30 = scmp.eq.s32.totalorder %s15, 0
    %p31 = por %p29, %p30
    %p32 = scmp.ne.s32.totalorder %s20, %s21
    %p33 = scmp.eq.s32.totalorder %s16, 7
    %p34 = por %p32, %p33
    %p36 = scmp.ne.s32.totalorder %s21, %s35
    %p37 = scmp.eq.s32.totalorder %s16, 0
    %p38 = por %p36, %p37
    %s39 = ssub.s32 %s10, %s17
    %p40 = scmp.eq.s32.totalorder %s39, 0
    %s42 = sadd.s32 %s41, 1
    %s43 = scalar_select %p40, %s41, %s42
    %p46 = pneg %p40
    %p47 = scmp.eq.s32.totalorder %s10, 7
    %p48 = por %p46, %p47
    %p49 = scmp.ne.s32.totalorder %s41, %s44
    %p50 = scmp.eq.s32.totalorder %s10, 0
    %p51 = por %p49, %p50
    %p52 = scmp.ne.s32.totalorder %s41, %s44
    %p53 = scmp.eq.s32.totalorder %s15, 7
    %p54 = por %p52, %p53
    %p55 = scmp.ne.s32.totalorder %s44, %s45
    %p56 = scmp.eq.s32.totalorder %s15, 0
    %p57 = por %p55, %p56
    %p58 = scmp.ne.s32.totalorder %s44, %s45
    %p59 = scmp.eq.s32.totalorder %s16, 7
    %p60 = por %p58, %p59
    %p62 = scmp.ne.s32.totalorder %s45, %s61
    %p63 = scmp.eq.s32.totalorder %s16, 0
    %p64 = por %p62, %p63
    %s66 = sadd.s32 %s65, 1
    %p69 = scmp.eq.s32.totalorder %s10, 7
    %p70 = scmp.ne.s32.totalorder %s65, %s67
    %p71 = scmp.eq.s32.totalorder %s10, 0
    %p72 = por %p70, %p71
    %p73 = scmp.ne.s32.totalorder %s65, %s67
    %p74 = scmp.eq.s32.totalorder %s15, 7
    %p75 = por %p73, %p74
    %p76 = scmp.ne.s32.totalorder %s67, %s68
    %p77 = scmp.eq.s32.totalorder %s15, 0
    %p78 = por %p76, %p77
    %p79 = scmp.ne.s32.totalorder %s67, %s68
    %p80 = scmp.eq.s32.totalorder %s16, 7
    %p81 = por %p79, %p80
    %p83 = scmp.ne.s32.totalorder %s68, %s82
    %p84 = scmp.eq.s32.totalorder %s16, 0
    %p85 = por %p83, %p84
    %s87 = sadd.s32 %s86, 1
    %p90 = scmp.eq.s32.totalorder %s10, 7
    %p91 = scmp.ne.s32.totalorder %s86, %s88
    %p92 = scmp.eq.s32.totalorder %s10, 0
    %p93 = por %p91, %p92
    %p94 = scmp.ne.s32.totalorder %s86, %s88
    %p95 = scmp.eq.s32.totalorder %s15, 7
    %p96 = por %p94, %p95
    %p97 = scmp.ne.s32.totalorder %s88, %s89
    %p98 = scmp.eq.s32.totalorder %s15, 0
    %p99 = por %p97, %p98
    %p100 = scmp.ne.s32.totalorder %s88, %s89
    %p101 = scmp.eq.s32.totalorder %s16, 7
    %p102 = por %p100, %p101
    %p104 = scmp.ne.s32.totalorder %s89, %s103
    %p105 = scmp.eq.s32.totalorder %s16, 0
    %p106 = por %p104, %p105
    %s107 = ssub.s32 %s10, %s17
    %p108 = scmp.eq.s32.totalorder %s107, 0
    %s110 = sadd.s32 %s109, 1
    %s111 = scalar_select %p108, %s109, %s110
    %p114 = pneg %p108
    %p115 = scmp.eq.s32.totalorder %s10, 7
    %p116 = por %p114, %p115
    %p117 = scmp.ne.s32.totalorder %s109, %s112
    %p118 = scmp.eq.s32.totalorder %s10, 0
    %p119 = por %p117, %p118
    %p120 = scmp.ne.s32.totalorder %s109, %s112
    %p121 = scmp.eq.s32.totalorder %s15, 7
    %p122 = por %p120, %p121
    %p123 = scmp.ne.s32.totalorder %s112, %s113
    %p124 = scmp.eq.s32.totalorder %s15, 0
    %p125 = por %p123, %p124
    %p126 = scmp.ne.s32.totalorder %s112, %s113
    %p127 = scmp.eq.s32.totalorder %s16, 7
    %p128 = por %p126, %p127
    %p130 = scmp.ne.s32.totalorder %s113, %s129
    %p131 = scmp.eq.s32.totalorder %s16, 0
    %p132 = por %p130, %p131
    %p133 = scmp.le.s32.totalorder 1, %s10
    %p134 = scmp.lt.s32.totalorder %s10, 9
    %p135 = pnand %p133, %p134
    %p136 = pneg %p135
    // Predicated region
    $region9: #{extractor_forward.7} parent=5 // pred_check
      _
    $region10: #{extractor_forward.7} parent=5 // pred_check_branch
      %138 = sbr.rel (%p135) target = $region12
    $region11: #{extractor_forward.7} parent=5 // pred_region
      %s139 = ssub.s32 %s10, 1
      // Predicated region
      $region13: #{extractor_forward.7} parent=11 // pred_check
        %p140 = pneg %p31
      $region14: #{extractor_forward.7} parent=11 // pred_check_branch
        %142 = sbr.rel (%p140) target = $region16
      $region15: #{extractor_forward.7} parent=11 // pred_region
        _
      $region16: #{extractor_forward.7} parent=11 // pred_fallthru
        _
      // Predicated region
      $region17: #{extractor_forward.7} parent=11 // pred_check
        %p143 = pneg %p78
      $region18: #{extractor_forward.7} parent=11 // pred_check_branch
        %145 = sbr.rel (%p143) target = $region20
      $region19: #{extractor_forward.7} parent=11 // pred_region
        _
      $region20: #{extractor_forward.7} parent=11 // pred_fallthru
        _
      // Predicated region
      $region21: #{extractor_forward.7} parent=11 // pred_check
        %p146 = pneg %p99
      $region22: #{extractor_forward.7} parent=11 // pred_check_branch
        %148 = sbr.rel (%p146) target = $region24
      $region23: #{extractor_forward.7} parent=11 // pred_region
        _
      $region24: #{extractor_forward.7} parent=11 // pred_fallthru
        _
    $region12: #{extractor_forward.7} parent=5 // pred_fallthru
      _
    %p149 = scmp.lt.s32.totalorder %s10, 8
    // Predicated region
    $region25: #{extractor_forward.7} parent=5 // pred_check
      %p150 = pneg %p149
    $region26: #{extractor_forward.7} parent=5 // pred_check_branch
      %152 = sbr.rel (%p150) target = $region28
    $region27: #{extractor_forward.7} parent=5 // pred_region
      // Predicated region
      $region29: #{extractor_forward.7} parent=27 // pred_check
        %p153 = pneg %p51
      $region30: #{extractor_forward.7} parent=27 // pred_check_branch
        %155 = sbr.rel (%p153) target = $region32
      $region31: #{extractor_forward.7} parent=27 // pred_region
        %p156 = scmp.lt.s32.totalorder %s10, 7
        %s157 = scalar_select %p156, %s10, 7
        %s158 = smul.addr %s157, 96
        %s159 = smul.addr %s158, 8
        %s160 = scalar_lea.vmem %s1, %s159
      $region32: #{extractor_forward.7} parent=27 // pred_fallthru
        _
    $region28: #{extractor_forward.7} parent=5 // pred_fallthru
      _
    %p161 = scmp.le.s32.totalorder 1, %s10
    %p162 = scmp.lt.s32.totalorder %s10, 9
    %p163 = pnand %p161, %p162
    %p164 = pneg %p163
    // Predicated region
    $region33: #{extractor_forward.7} parent=5 // pred_check
      _
    $region34: #{extractor_forward.7} parent=5 // pred_check_branch
      %166 = sbr.rel (%p163) target = $region36
    $region35: #{extractor_forward.7} parent=5 // pred_region
      %s167 = ssub.s32 %s10, 1
      %p168 = pneg %p31
      %p169 = pneg %p28
      %p170 = scmp.lt.s32.totalorder %s15, 7
      %s171 = scalar_select %p170, %s15, 7
      %s172 = smul.addr %s171, 96
      %s173 = smul.addr %s172, 8
      %s174 = scalar_lea.vmem %s1, %s173
      %p175 = pneg %p57
      %p176 = pneg %p54
      %p177 = pneg %p78
      %p178 = pneg %p75
      %p179 = pneg %p99
      %p180 = pneg %p96
      %p181 = pneg %p125
      %p182 = pneg %p122
      %p183 = scmp.lt.s32.totalorder %s15, 7
      %s184 = scalar_select %p183, %s15, 7
      %s185 = smul.addr %s184, 24
      %s186 = smul.addr %s185, 4
      %s187 = scalar_lea.vmem %s4, %s186
      %p188 = scmp.lt.s32.totalorder %s15, 7
      %s189 = scalar_select %p188, %s15, 7
      %s190 = smul.addr %s189, 96
      %s191 = smul.addr %s190, 8
      %s192 = scalar_lea.vmem %s1, %s191
      %p193 = scmp.lt.s32.totalorder %s15, 7
      %s194 = scalar_select %p193, %s15, 7
      %s195 = smul.addr %s194, 24
      %s196 = smul.addr %s195, 4
      %s197 = scalar_lea.vmem %s4, %s196
      %v198 = vld [vmem:[%s0] sm:$0x3]
      %v199 = vld [vmem:[%s0 + $0x2] sm:$0x3]
      %v200 = vld [vmem:[%s0 + $0x4] sm:$0x3]
      %v201 = vld [vmem:[%s0 + $0x6] sm:$0x3]
      %v202 = vld [vmem:[%s0 + $0x8] sm:$0x3]
      %v203 = vld [vmem:[%s0 + $0xa] sm:$0x3]
      %v204 = vld [vmem:[%s0 + $0xc] sm:$0x3]
      %v205 = vld [vmem:[%s0 + $0xe] sm:$0x3]
      %v206 = vld [vmem:[%s0 + $0x10] sm:$0x3]
      %v207 = vld [vmem:[%s2] sm:$0x1]
      %v208 = vld [vmem:[%s3] sm:$0x1]
      %vm209 = vcmask 1041408
      %v210 = vsel %vm209, %v198, 0.0
      %v211 = vsel %vm209, %v199, 0.0
      %v212 = vadd.f32 %v210, %v211
      %v213 = vsel %vm209, %v200, 0.0
      %v214 = vadd.f32 %v212, %v213
      %v215 = vsel %vm209, %v201, 0.0
      %v216 = vadd.f32 %v214, %v215
      %v217 = vsel %vm209, %v202, 0.0
      %v218 = vadd.f32 %v216, %v217
      %v219 = vsel %vm209, %v203, 0.0
      %v220 = vadd.f32 %v218, %v219
      %v221 = vsel %vm209, %v204, 0.0
      %v222 = vadd.f32 %v220, %v221
      %v223 = vsel %vm209, %v205, 0.0
      %v224 = vadd.f32 %v222, %v223
      %v225 = vsel %vm209, %v206, 0.0
      %v226 = vadd.f32 %v224, %v225
      %v227 = vmul.f32 %v226, 0.00021701389
      %v228 = vmul.f32 %v227, %v227
      %v230 = vrot.slane %v228, 7
      %v232 = vsub.f32 %v227, %v230
      %v233 = vmax.f32 %v232, 0.0
      %v234 = vadd.f32 %v233, 1e-05
      %v235 = vrsqrt.pop %v234
      %v238 = vunpack.c.l.s4 1966171168
      %v239 = vunpack.c.0.s8 %v238
      %v240 = vlaneseq
      %v241 = vshrl.u32 %v240, 7
      %v242 = vsub.s32 %v239, %v241
      %v243 = vrot.slane %v235, %v242
      %v244 = vcombine.high %v243, %v243
      %v246 = vunpack.c.l.s4 1966171168
      %v247 = vunpack.c.0.s8 %v246
      %v248 = vlaneseq
      %v249 = vshrl.u32 %v248, 7
      %v250 = vsub.s32 %v247, %v249
      %v251 = vrot.slane %v244, %v250
      %v253 = vmul.f32 %v207, %v251
      %v254 = vmul.f32 %v227, %v253
      %v255 = vsub.f32 %v208, %v254
      %v256 = vld [vmem:[%s192] sm:$0xff]
      %v257 = vld [vmem:[%s192 + $0x8] sm:$0xff]
      %v258 = vld [vmem:[%s192 + $0x10] sm:$0xf]
      %v259 = vld [vmem:[%s192 + $0x18] sm:$0xf]
      %v260 = vld [vmem:[%s192 + $0x20] sm:$0xff]
      %v261 = vld [vmem:[%s192 + $0x28] sm:$0xff]
      %v262 = vld [vmem:[%s192 + $0x30] sm:$0xf]
      %v263 = vld [vmem:[%s192 + $0x38] sm:$0xf]
      %v264 = vld [vmem:[%s192 + $0x40] sm:$0xff]
      %v265 = vld [vmem:[%s192 + $0x48] sm:$0xff]
      %v266 = vld [vmem:[%s192 + $0x50] sm:$0xf]
      %v267 = vld [vmem:[%s192 + $0x58] sm:$0xf]
      %v268 = vld [vmem:[%s192 + $0x60] sm:$0xff]
      %v269 = vld [vmem:[%s192 + $0x68] sm:$0xff]
      %v270 = vld [vmem:[%s192 + $0x70] sm:$0xf]
      %v271 = vld [vmem:[%s192 + $0x78] sm:$0xf]
      %v272 = vld [vmem:[%s192 + $0x80] sm:$0xff]
      %v273 = vld [vmem:[%s192 + $0x88] sm:$0xff]
      %v274 = vld [vmem:[%s192 + $0x90] sm:$0xf]
      %v275 = vld [vmem:[%s192 + $0x98] sm:$0xf]
      %v276 = vld [vmem:[%s192 + $0xa0] sm:$0xff]
      %v277 = vld [vmem:[%s192 + $0xa8] sm:$0xff]
      %v278 = vld [vmem:[%s192 + $0xb0] sm:$0xf]
      %v279 = vld [vmem:[%s192 + $0xb8] sm:$0xf]
      %v280 = vld [vmem:[%s192 + $0xc0] sm:$0xff]
      %v281 = vld [vmem:[%s192 + $0xc8] sm:$0xff]
      %v282 = vld [vmem:[%s192 + $0xd0] sm:$0xf]
      %v283 = vld [vmem:[%s192 + $0xd8] sm:$0xf]
      %v284 = vld [vmem:[%s192 + $0xe0] sm:$0xff]
      %v285 = vld [vmem:[%s192 + $0xe8] sm:$0xff]
      %v286 = vld [vmem:[%s192 + $0xf0] sm:$0xf]
      %v287 = vld [vmem:[%s192 + $0xf8] sm:$0xf]
      %v288 = vld [vmem:[%s192 + $0x100] sm:$0xff]
      %v289 = vld [vmem:[%s192 + $0x108] sm:$0xff]
      %v290 = vld [vmem:[%s192 + $0x110] sm:$0xf]
      %v291 = vld [vmem:[%s192 + $0x118] sm:$0xf]
      %v292 = vld [vmem:[%s192 + $0x120] sm:$0xff]
      %v293 = vld [vmem:[%s192 + $0x128] sm:$0xff]
      %v294 = vld [vmem:[%s192 + $0x130] sm:$0xf]
      %v295 = vld [vmem:[%s192 + $0x138] sm:$0xf]
      %v296 = vld [vmem:[%s192 + $0x140] sm:$0xff]
      %v297 = vld [vmem:[%s192 + $0x148] sm:$0xff]
      %v298 = vld [vmem:[%s192 + $0x150] sm:$0xf]
      %v299 = vld [vmem:[%s192 + $0x158] sm:$0xf]
      %v300 = vld [vmem:[%s192 + $0x160] sm:$0xff]
      %v301 = vld [vmem:[%s192 + $0x168] sm:$0xff]
      %v302 = vld [vmem:[%s192 + $0x170] sm:$0xf]
      %v303 = vld [vmem:[%s192 + $0x178] sm:$0xf]
      %v304 = vld [vmem:[%s192 + $0x180] sm:$0xff]
      %v305 = vld [vmem:[%s192 + $0x188] sm:$0xff]
      %v306 = vld [vmem:[%s192 + $0x190] sm:$0xf]
      %v307 = vld [vmem:[%s192 + $0x198] sm:$0xf]
      %v308 = vld [vmem:[%s192 + $0x1a0] sm:$0xff]
      %v309 = vld [vmem:[%s192 + $0x1a8] sm:$0xff]
      %v310 = vld [vmem:[%s192 + $0x1b0] sm:$0xf]
      %v311 = vld [vmem:[%s192 + $0x1b8] sm:$0xf]
      %v312 = vld [vmem:[%s192 + $0x1c0] sm:$0xff]
      %v313 = vld [vmem:[%s192 + $0x1c8] sm:$0xff]
      %v314 = vld [vmem:[%s192 + $0x1d0] sm:$0xf]
      %v315 = vld [vmem:[%s192 + $0x1d8] sm:$0xf]
      %v316 = vld [vmem:[%s192 + $0x1e0] sm:$0xff]
      %v317 = vld [vmem:[%s192 + $0x1e8] sm:$0xff]
      %v318 = vld [vmem:[%s192 + $0x1f0] sm:$0xf]
      %v319 = vld [vmem:[%s192 + $0x1f8] sm:$0xf]
      %v320 = vld [vmem:[%s192 + $0x200] sm:$0xff]
      %v321 = vld [vmem:[%s192 + $0x208] sm:$0xff]
      %v322 = vld [vmem:[%s192 + $0x210] sm:$0xf]
      %v323 = vld [vmem:[%s192 + $0x218] sm:$0xf]
      %v324 = vld [vmem:[%s192 + $0x220] sm:$0xff]
      %v325 = vld [vmem:[%s192 + $0x228] sm:$0xff]
      %v326 = vld [vmem:[%s192 + $0x230] sm:$0xf]
      %v327 = vld [vmem:[%s192 + $0x238] sm:$0xf]
      %v328 = vld [vmem:[%s192 + $0x240] sm:$0xff]
      %v329 = vld [vmem:[%s192 + $0x248] sm:$0xff]
      %v330 = vld [vmem:[%s192 + $0x250] sm:$0xf]
      %v331 = vld [vmem:[%s192 + $0x258] sm:$0xf]
      %v332 = vld [vmem:[%s192 + $0x260] sm:$0xff]
      %v333 = vld [vmem:[%s192 + $0x268] sm:$0xff]
      %v334 = vld [vmem:[%s192 + $0x270] sm:$0xf]
      %v335 = vld [vmem:[%s192 + $0x278] sm:$0xf]
      %v336 = vld [vmem:[%s192 + $0x280] sm:$0xff]
      %v337 = vld [vmem:[%s192 + $0x288] sm:$0xff]
      %v338 = vld [vmem:[%s192 + $0x290] sm:$0xf]
      %v339 = vld [vmem:[%s192 + $0x298] sm:$0xf]
      %v340 = vld [vmem:[%s192 + $0x2a0] sm:$0xff]
      %v341 = vld [vmem:[%s192 + $0x2a8] sm:$0xff]
      %v342 = vld [vmem:[%s192 + $0x2b0] sm:$0xf]
      %v343 = vld [vmem:[%s192 + $0x2b8] sm:$0xf]
      %v344 = vld [vmem:[%s192 + $0x2c0] sm:$0xff]
      %v345 = vld [vmem:[%s192 + $0x2c8] sm:$0xff]
      %v346 = vld [vmem:[%s192 + $0x2d0] sm:$0xf]
      %v347 = vld [vmem:[%s192 + $0x2d8] sm:$0xf]
      %v348 = vld [vmem:[%s192 + $0x2e0] sm:$0xff]
      %v349 = vld [vmem:[%s192 + $0x2e8] sm:$0xff]
      %v350 = vld [vmem:[%s192 + $0x2f0] sm:$0xf]
      %v351 = vld [vmem:[%s192 + $0x2f8] sm:$0xf]
      %v353 = vlaneseq
      %v354 = vshrl.u32 %v353, 7
      %v355 = vsub.s32 0, %v354
      %v356 = vrot.slane %v253, %v355
      %v358 = vmul.f32 %v256, %v356
      %v359 = vmul.f32 %v258, %v356
      %v360 = vmul.f32 %v264, %v356
      %v361 = vmul.f32 %v266, %v356
      %v362 = vmul.f32 %v272, %v356
      %v363 = vmul.f32 %v274, %v356
      %v364 = vmul.f32 %v280, %v356
      %v365 = vmul.f32 %v282, %v356
      %v366 = vmul.f32 %v288, %v356
      %v367 = vmul.f32 %v290, %v356
      %v368 = vmul.f32 %v296, %v356
      %v369 = vmul.f32 %v298, %v356
      %v370 = vmul.f32 %v304, %v356
      %v371 = vmul.f32 %v306, %v356
      %v372 = vmul.f32 %v312, %v356
      %v373 = vmul.f32 %v314, %v356
      %v374 = vmul.f32 %v320, %v356
      %v375 = vmul.f32 %v322, %v356
      %v376 = vmul.f32 %v328, %v356
      %v377 = vmul.f32 %v330, %v356
      %v378 = vmul.f32 %v336, %v356
      %v379 = vmul.f32 %v338, %v356
      %v380 = vmul.f32 %v344, %v356
      %v381 = vmul.f32 %v346, %v356
      %v383 = vlaneseq
      %v384 = vshrl.u32 %v383, 7
      %v385 = vsub.s32 0, %v384
      %v386 = vrot.slane %v255, %v385
      %v388 = vadd.f32 %v358, %v386
      %v389 = vadd.f32 %v359, %v386
      %v390 = vadd.f32 %v360, %v386
      %v391 = vadd.f32 %v361, %v386
      %v392 = vadd.f32 %v362, %v386
      %v393 = vadd.f32 %v363, %v386
      %v394 = vadd.f32 %v364, %v386
      %v395 = vadd.f32 %v365, %v386
      %v396 = vadd.f32 %v366, %v386
      %v397 = vadd.f32 %v367, %v386
      %v398 = vadd.f32 %v368, %v386
      %v399 = vadd.f32 %v369, %v386
      %v400 = vadd.f32 %v370, %v386
      %v401 = vadd.f32 %v371, %v386
      %v402 = vadd.f32 %v372, %v386
      %v403 = vadd.f32 %v373, %v386
      %v404 = vadd.f32 %v374, %v386
      %v405 = vadd.f32 %v375, %v386
      %v406 = vadd.f32 %v376, %v386
      %v407 = vadd.f32 %v377, %v386
      %v408 = vadd.f32 %v378, %v386
      %v409 = vadd.f32 %v379, %v386
      %v410 = vadd.f32 %v380, %v386
      %v411 = vadd.f32 %v381, %v386
      %vm412 = vcmp.ge.f32.partialorder %v388, 0.0
      %vm413 = vcmp.ge.f32.partialorder %v389, 0.0
      %vm414 = vcmp.ge.f32.partialorder %v390, 0.0
      %vm415 = vcmp.ge.f32.partialorder %v391, 0.0
      %vm416 = vcmp.ge.f32.partialorder %v392, 0.0
      %vm417 = vcmp.ge.f32.partialorder %v393, 0.0
      %vm418 = vcmp.ge.f32.partialorder %v394, 0.0
      %vm419 = vcmp.ge.f32.partialorder %v395, 0.0
      %vm420 = vcmp.ge.f32.partialorder %v396, 0.0
      %vm421 = vcmp.ge.f32.partialorder %v397, 0.0
      %vm422 = vcmp.ge.f32.partialorder %v398, 0.0
      %vm423 = vcmp.ge.f32.partialorder %v399, 0.0
      %vm424 = vcmp.ge.f32.partialorder %v400, 0.0
      %vm425 = vcmp.ge.f32.partialorder %v401, 0.0
      %vm426 = vcmp.ge.f32.partialorder %v402, 0.0
      %vm427 = vcmp.ge.f32.partialorder %v403, 0.0
      %vm428 = vcmp.ge.f32.partialorder %v404, 0.0
      %vm429 = vcmp.ge.f32.partialorder %v405, 0.0
      %vm430 = vcmp.ge.f32.partialorder %v406, 0.0
      %vm431 = vcmp.ge.f32.partialorder %v407, 0.0
      %vm432 = vcmp.ge.f32.partialorder %v408, 0.0
      %vm433 = vcmp.ge.f32.partialorder %v409, 0.0
      %vm434 = vcmp.ge.f32.partialorder %v410, 0.0
      %vm435 = vcmp.ge.f32.partialorder %v411, 0.0
      %v436 = vmul.f32 %v388, 0.01
      %v437 = vmul.f32 %v389, 0.01
      %v438 = vmul.f32 %v390, 0.01
      %v439 = vmul.f32 %v391, 0.01
      %v440 = vmul.f32 %v392, 0.01
      %v441 = vmul.f32 %v393, 0.01
      %v442 = vmul.f32 %v394, 0.01
      %v443 = vmul.f32 %v395, 0.01
      %v444 = vmul.f32 %v396, 0.01
      %v445 = vmul.f32 %v397, 0.01
      %v446 = vmul.f32 %v398, 0.01
      %v447 = vmul.f32 %v399, 0.01
      %v448 = vmul.f32 %v400, 0.01
      %v449 = vmul.f32 %v401, 0.01
      %v450 = vmul.f32 %v402, 0.01
      %v451 = vmul.f32 %v403, 0.01
      %v452 = vmul.f32 %v404, 0.01
      %v453 = vmul.f32 %v405, 0.01
      %v454 = vmul.f32 %v406, 0.01
      %v455 = vmul.f32 %v407, 0.01
      %v456 = vmul.f32 %v408, 0.01
      %v457 = vmul.f32 %v409, 0.01
      %v458 = vmul.f32 %v410, 0.01
      %v459 = vmul.f32 %v411, 0.01
      %v460 = vsel %vm412, %v388, %v436
      %v461 = vsel %vm413, %v389, %v437
      %v462 = vsel %vm414, %v390, %v438
      %v463 = vsel %vm415, %v391, %v439
      %v464 = vsel %vm416, %v392, %v440
      %v465 = vsel %vm417, %v393, %v441
      %v466 = vsel %vm418, %v394, %v442
      %v467 = vsel %vm419, %v395, %v443
      %v468 = vsel %vm420, %v396, %v444
      %v469 = vsel %vm421, %v397, %v445
      %v470 = vsel %vm422, %v398, %v446
      %v471 = vsel %vm423, %v399, %v447
      %v472 = vsel %vm424, %v400, %v448
      %v473 = vsel %vm425, %v401, %v449
      %v474 = vsel %vm426, %v402, %v450
      %v475 = vsel %vm427, %v403, %v451
      %v476 = vsel %vm428, %v404, %v452
      %v477 = vsel %vm429, %v405, %v453
      %v478 = vsel %vm430, %v406, %v454
      %v479 = vsel %vm431, %v407, %v455
      %v480 = vsel %vm432, %v408, %v456
      %v481 = vsel %vm433, %v409, %v457
      %v482 = vsel %vm434, %v410, %v458
      %v483 = vsel %vm435, %v411, %v459
      %v484 = vmul.f32 %v257, %v356
      %v485 = vmul.f32 %v259, %v356
      %v486 = vmul.f32 %v265, %v356
      %v487 = vmul.f32 %v267, %v356
      %v488 = vmul.f32 %v273, %v356
      %v489 = vmul.f32 %v275, %v356
      %v490 = vmul.f32 %v281, %v356
      %v491 = vmul.f32 %v283, %v356
      %v492 = vmul.f32 %v289, %v356
      %v493 = vmul.f32 %v291, %v356
      %v494 = vmul.f32 %v297, %v356
      %v495 = vmul.f32 %v299, %v356
      %v496 = vmul.f32 %v305, %v356
      %v497 = vmul.f32 %v307, %v356
      %v498 = vmul.f32 %v313, %v356
      %v499 = vmul.f32 %v315, %v356
      %v500 = vmul.f32 %v321, %v356
      %v501 = vmul.f32 %v323, %v356
      %v502 = vmul.f32 %v329, %v356
      %v503 = vmul.f32 %v331, %v356
      %v504 = vmul.f32 %v337, %v356
      %v505 = vmul.f32 %v339, %v356
      %v506 = vmul.f32 %v345, %v356
      %v507 = vmul.f32 %v347, %v356
      %v508 = vadd.f32 %v484, %v386
      %v509 = vadd.f32 %v485, %v386
      %v510 = vadd.f32 %v486, %v386
      %v511 = vadd.f32 %v487, %v386
      %v512 = vadd.f32 %v488, %v386
      %v513 = vadd.f32 %v489, %v386
      %v514 = vadd.f32 %v490, %v386
      %v515 = vadd.f32 %v491, %v386
      %v516 = vadd.f32 %v492, %v386
      %v517 = vadd.f32 %v493, %v386
      %v518 = vadd.f32 %v494, %v386
      %v519 = vadd.f32 %v495, %v386
      %v520 = vadd.f32 %v496, %v386
      %v521 = vadd.f32 %v497, %v386
      %v522 = vadd.f32 %v498, %v386
      %v523 = vadd.f32 %v499, %v386
      %v524 = vadd.f32 %v500, %v386
      %v525 = vadd.f32 %v501, %v386
      %v526 = vadd.f32 %v502, %v386
      %v527 = vadd.f32 %v503, %v386
      %v528 = vadd.f32 %v504, %v386
      %v529 = vadd.f32 %v505, %v386
      %v530 = vadd.f32 %v506, %v386
      %v531 = vadd.f32 %v507, %v386
      %vm532 = vcmp.ge.f32.partialorder %v508, 0.0
      %vm533 = vcmp.ge.f32.partialorder %v509, 0.0
      %vm534 = vcmp.ge.f32.partialorder %v510, 0.0
      %vm535 = vcmp.ge.f32.partialorder %v511, 0.0
      %vm536 = vcmp.ge.f32.partialorder %v512, 0.0
      %vm537 = vcmp.ge.f32.partialorder %v513, 0.0
      %vm538 = vcmp.ge.f32.partialorder %v514, 0.0
      %vm539 = vcmp.ge.f32.partialorder %v515, 0.0
      %vm540 = vcmp.ge.f32.partialorder %v516, 0.0
      %vm541 = vcmp.ge.f32.partialorder %v517, 0.0
      %vm542 = vcmp.ge.f32.partialorder %v518, 0.0
      %vm543 = vcmp.ge.f32.partialorder %v519, 0.0
      %vm544 = vcmp.ge.f32.partialorder %v520, 0.0
      %vm545 = vcmp.ge.f32.partialorder %v521, 0.0
      %vm546 = vcmp.ge.f32.partialorder %v522, 0.0
      %vm547 = vcmp.ge.f32.partialorder %v523, 0.0
      %vm548 = vcmp.ge.f32.partialorder %v524, 0.0
      %vm549 = vcmp.ge.f32.partialorder %v525, 0.0
      %vm550 = vcmp.ge.f32.partialorder %v526, 0.0
      %vm551 = vcmp.ge.f32.partialorder %v527, 0.0
      %vm552 = vcmp.ge.f32.partialorder %v528, 0.0
      %vm553 = vcmp.ge.f32.partialorder %v529, 0.0
      %vm554 = vcmp.ge.f32.partialorder %v530, 0.0
      %vm555 = vcmp.ge.f32.partialorder %v531, 0.0
      %v556 = vmul.f32 %v508, 0.01
      %v557 = vmul.f32 %v509, 0.01
      %v558 = vmul.f32 %v510, 0.01
      %v559 = vmul.f32 %v511, 0.01
      %v560 = vmul.f32 %v512, 0.01
      %v561 = vmul.f32 %v513, 0.01
      %v562 = vmul.f32 %v514, 0.01
      %v563 = vmul.f32 %v515, 0.01
      %v564 = vmul.f32 %v516, 0.01
      %v565 = vmul.f32 %v517, 0.01
      %v566 = vmul.f32 %v518, 0.01
      %v567 = vmul.f32 %v519, 0.01
      %v568 = vmul.f32 %v520, 0.01
      %v569 = vmul.f32 %v521, 0.01
      %v570 = vmul.f32 %v522, 0.01
      %v571 = vmul.f32 %v523, 0.01
      %v572 = vmul.f32 %v524, 0.01
      %v573 = vmul.f32 %v525, 0.01
      %v574 = vmul.f32 %v526, 0.01
      %v575 = vmul.f32 %v527, 0.01
      %v576 = vmul.f32 %v528, 0.01
      %v577 = vmul.f32 %v529, 0.01
      %v578 = vmul.f32 %v530, 0.01
      %v579 = vmul.f32 %v531, 0.01
      %v580 = vsel %vm532, %v508, %v556
      %v581 = vsel %vm533, %v509, %v557
      %v582 = vsel %vm534, %v510, %v558
      %v583 = vsel %vm535, %v511, %v559
      %v584 = vsel %vm536, %v512, %v560
      %v585 = vsel %vm537, %v513, %v561
      %v586 = vsel %vm538, %v514, %v562
      %v587 = vsel %vm539, %v515, %v563
      %v588 = vsel %vm540, %v516, %v564
      %v589 = vsel %vm541, %v517, %v565
      %v590 = vsel %vm542, %v518, %v566
      %v591 = vsel %vm543, %v519, %v567
      %v592 = vsel %vm544, %v520, %v568
      %v593 = vsel %vm545, %v521, %v569
      %v594 = vsel %vm546, %v522, %v570
      %v595 = vsel %vm547, %v523, %v571
      %v596 = vsel %vm548, %v524, %v572
      %v597 = vsel %vm549, %v525, %v573
      %v598 = vsel %vm550, %v526, %v574
      %v599 = vsel %vm551, %v527, %v575
      %v600 = vsel %vm552, %v528, %v576
      %v601 = vsel %vm553, %v529, %v577
      %v602 = vsel %vm554, %v530, %v578
      %v603 = vsel %vm555, %v531, %v579
      %v604 = vmax.f32 %v460, %v580
      %v605 = vmax.f32 %v461, %v581
      %v606 = vmax.f32 %v462, %v582
      %v607 = vmax.f32 %v463, %v583
      %v608 = vmax.f32 %v464, %v584
      %v609 = vmax.f32 %v465, %v585
      %v610 = vmax.f32 %v466, %v586
      %v611 = vmax.f32 %v467, %v587
      %v612 = vmax.f32 %v468, %v588
      %v613 = vmax.f32 %v469, %v589
      %v614 = vmax.f32 %v470, %v590
      %v615 = vmax.f32 %v471, %v591
      %v616 = vmax.f32 %v472, %v592
      %v617 = vmax.f32 %v473, %v593
      %v618 = vmax.f32 %v474, %v594
      %v619 = vmax.f32 %v475, %v595
      %v620 = vmax.f32 %v476, %v596
      %v621 = vmax.f32 %v477, %v597
      %v622 = vmax.f32 %v478, %v598
      %v623 = vmax.f32 %v479, %v599
      %v624 = vmax.f32 %v480, %v600
      %v625 = vmax.f32 %v481, %v601
      %v626 = vmax.f32 %v482, %v602
      %v627 = vmax.f32 %v483, %v603
      %v628 = vmul.f32 %v260, %v356
      %v629 = vmul.f32 %v262, %v356
      %v630 = vmul.f32 %v268, %v356
      %v631 = vmul.f32 %v270, %v356
      %v632 = vmul.f32 %v276, %v356
      %v633 = vmul.f32 %v278, %v356
      %v634 = vmul.f32 %v284, %v356
      %v635 = vmul.f32 %v286, %v356
      %v636 = vmul.f32 %v292, %v356
      %v637 = vmul.f32 %v294, %v356
      %v638 = vmul.f32 %v300, %v356
      %v639 = vmul.f32 %v302, %v356
      %v640 = vmul.f32 %v308, %v356
      %v641 = vmul.f32 %v310, %v356
      %v642 = vmul.f32 %v316, %v356
      %v643 = vmul.f32 %v318, %v356
      %v644 = vmul.f32 %v324, %v356
      %v645 = vmul.f32 %v326, %v356
      %v646 = vmul.f32 %v332, %v356
      %v647 = vmul.f32 %v334, %v356
      %v648 = vmul.f32 %v340, %v356
      %v649 = vmul.f32 %v342, %v356
      %v650 = vmul.f32 %v348, %v356
      %v651 = vmul.f32 %v350, %v356
      %v652 = vadd.f32 %v628, %v386
      %v653 = vadd.f32 %v629, %v386
      %v654 = vadd.f32 %v630, %v386
      %v655 = vadd.f32 %v631, %v386
      %v656 = vadd.f32 %v632, %v386
      %v657 = vadd.f32 %v633, %v386
      %v658 = vadd.f32 %v634, %v386
      %v659 = vadd.f32 %v635, %v386
      %v660 = vadd.f32 %v636, %v386
      %v661 = vadd.f32 %v637, %v386
      %v662 = vadd.f32 %v638, %v386
      %v663 = vadd.f32 %v639, %v386
      %v664 = vadd.f32 %v640, %v386
      %v665 = vadd.f32 %v641, %v386
      %v666 = vadd.f32 %v642, %v386
      %v667 = vadd.f32 %v643, %v386
      %v668 = vadd.f32 %v644, %v386
      %v669 = vadd.f32 %v645, %v386
      %v670 = vadd.f32 %v646, %v386
      %v671 = vadd.f32 %v647, %v386
      %v672 = vadd.f32 %v648, %v386
      %v673 = vadd.f32 %v649, %v386
      %v674 = vadd.f32 %v650, %v386
      %v675 = vadd.f32 %v651, %v386
      %vm676 = vcmp.ge.f32.partialorder %v652, 0.0
      %vm677 = vcmp.ge.f32.partialorder %v653, 0.0
      %vm678 = vcmp.ge.f32.partialorder %v654, 0.0
      %vm679 = vcmp.ge.f32.partialorder %v655, 0.0
      %vm680 = vcmp.ge.f32.partialorder %v656, 0.0
      %vm681 = vcmp.ge.f32.partialorder %v657, 0.0
      %vm682 = vcmp.ge.f32.partialorder %v658, 0.0
      %vm683 = vcmp.ge.f32.partialorder %v659, 0.0
      %vm684 = vcmp.ge.f32.partialorder %v660, 0.0
      %vm685 = vcmp.ge.f32.partialorder %v661, 0.0
      %vm686 = vcmp.ge.f32.partialorder %v662, 0.0
      %vm687 = vcmp.ge.f32.partialorder %v663, 0.0
      %vm688 = vcmp.ge.f32.partialorder %v664, 0.0
      %vm689 = vcmp.ge.f32.partialorder %v665, 0.0
      %vm690 = vcmp.ge.f32.partialorder %v666, 0.0
      %vm691 = vcmp.ge.f32.partialorder %v667, 0.0
      %vm692 = vcmp.ge.f32.partialorder %v668, 0.0
      %vm693 = vcmp.ge.f32.partialorder %v669, 0.0
      %vm694 = vcmp.ge.f32.partialorder %v670, 0.0
      %vm695 = vcmp.ge.f32.partialorder %v671, 0.0
      %vm696 = vcmp.ge.f32.partialorder %v672, 0.0
      %vm697 = vcmp.ge.f32.partialorder %v673, 0.0
      %vm698 = vcmp.ge.f32.partialorder %v674, 0.0
      %vm699 = vcmp.ge.f32.partialorder %v675, 0.0
      %v700 = vmul.f32 %v652, 0.01
      %v701 = vmul.f32 %v653, 0.01
      %v702 = vmul.f32 %v654, 0.01
      %v703 = vmul.f32 %v655, 0.01
      %v704 = vmul.f32 %v656, 0.01
      %v705 = vmul.f32 %v657, 0.01
      %v706 = vmul.f32 %v658, 0.01
      %v707 = vmul.f32 %v659, 0.01
      %v708 = vmul.f32 %v660, 0.01
      %v709 = vmul.f32 %v661, 0.01
      %v710 = vmul.f32 %v662, 0.01
      %v711 = vmul.f32 %v663, 0.01
      %v712 = vmul.f32 %v664, 0.01
      %v713 = vmul.f32 %v665, 0.01
      %v714 = vmul.f32 %v666, 0.01
      %v715 = vmul.f32 %v667, 0.01
      %v716 = vmul.f32 %v668, 0.01
      %v717 = vmul.f32 %v669, 0.01
      %v718 = vmul.f32 %v670, 0.01
      %v719 = vmul.f32 %v671, 0.01
      %v720 = vmul.f32 %v672, 0.01
      %v721 = vmul.f32 %v673, 0.01
      %v722 = vmul.f32 %v674, 0.01
      %v723 = vmul.f32 %v675, 0.01
      %v724 = vsel %vm676, %v652, %v700
      %v725 = vsel %vm677, %v653, %v701
      %v726 = vsel %vm678, %v654, %v702
      %v727 = vsel %vm679, %v655, %v703
      %v728 = vsel %vm680, %v656, %v704
      %v729 = vsel %vm681, %v657, %v705
      %v730 = vsel %vm682, %v658, %v706
      %v731 = vsel %vm683, %v659, %v707
      %v732 = vsel %vm684, %v660, %v708
      %v733 = vsel %vm685, %v661, %v709
      %v734 = vsel %vm686, %v662, %v710
      %v735 = vsel %vm687, %v663, %v711
      %v736 = vsel %vm688, %v664, %v712
      %v737 = vsel %vm689, %v665, %v713
      %v738 = vsel %vm690, %v666, %v714
      %v739 = vsel %vm691, %v667, %v715
      %v740 = vsel %vm692, %v668, %v716
      %v741 = vsel %vm693, %v669, %v717
      %v742 = vsel %vm694, %v670, %v718
      %v743 = vsel %vm695, %v671, %v719
      %v744 = vsel %vm696, %v672, %v720
      %v745 = vsel %vm697, %v673, %v721
      %v746 = vsel %vm698, %v674, %v722
      %v747 = vsel %vm699, %v675, %v723
      %v748 = vmul.f32 %v261, %v356
      %v749 = vmul.f32 %v263, %v356
      %v750 = vmul.f32 %v269, %v356
      %v751 = vmul.f32 %v271, %v356
      %v752 = vmul.f32 %v277, %v356
      %v753 = vmul.f32 %v279, %v356
      %v754 = vmul.f32 %v285, %v356
      %v755 = vmul.f32 %v287, %v356
      %v756 = vmul.f32 %v293, %v356
      %v757 = vmul.f32 %v295, %v356
      %v758 = vmul.f32 %v301, %v356
      %v759 = vmul.f32 %v303, %v356
      %v760 = vmul.f32 %v309, %v356
      %v761 = vmul.f32 %v311, %v356
      %v762 = vmul.f32 %v317, %v356
      %v763 = vmul.f32 %v319, %v356
      %v764 = vmul.f32 %v325, %v356
      %v765 = vmul.f32 %v327, %v356
      %v766 = vmul.f32 %v333, %v356
      %v767 = vmul.f32 %v335, %v356
      %v768 = vmul.f32 %v341, %v356
      %v769 = vmul.f32 %v343, %v356
      %v770 = vmul.f32 %v349, %v356
      %v771 = vmul.f32 %v351, %v356
      %v772 = vadd.f32 %v748, %v386
      %v773 = vadd.f32 %v749, %v386
      %v774 = vadd.f32 %v750, %v386
      %v775 = vadd.f32 %v751, %v386
      %v776 = vadd.f32 %v752, %v386
      %v777 = vadd.f32 %v753, %v386
      %v778 = vadd.f32 %v754, %v386
      %v779 = vadd.f32 %v755, %v386
      %v780 = vadd.f32 %v756, %v386
      %v781 = vadd.f32 %v757, %v386
      %v782 = vadd.f32 %v758, %v386
      %v783 = vadd.f32 %v759, %v386
      %v784 = vadd.f32 %v760, %v386
      %v785 = vadd.f32 %v761, %v386
      %v786 = vadd.f32 %v762, %v386
      %v787 = vadd.f32 %v763, %v386
      %v788 = vadd.f32 %v764, %v386
      %v789 = vadd.f32 %v765, %v386
      %v790 = vadd.f32 %v766, %v386
      %v791 = vadd.f32 %v767, %v386
      %v792 = vadd.f32 %v768, %v386
      %v793 = vadd.f32 %v769, %v386
      %v794 = vadd.f32 %v770, %v386
      %v795 = vadd.f32 %v771, %v386
      %vm796 = vcmp.ge.f32.partialorder %v772, 0.0
      %vm797 = vcmp.ge.f32.partialorder %v773, 0.0
      %vm798 = vcmp.ge.f32.partialorder %v774, 0.0
      %vm799 = vcmp.ge.f32.partialorder %v775, 0.0
      %vm800 = vcmp.ge.f32.partialorder %v776, 0.0
      %vm801 = vcmp.ge.f32.partialorder %v777, 0.0
      %vm802 = vcmp.ge.f32.partialorder %v778, 0.0
      %vm803 = vcmp.ge.f32.partialorder %v779, 0.0
      %vm804 = vcmp.ge.f32.partialorder %v780, 0.0
      %vm805 = vcmp.ge.f32.partialorder %v781, 0.0
      %vm806 = vcmp.ge.f32.partialorder %v782, 0.0
      %vm807 = vcmp.ge.f32.partialorder %v783, 0.0
      %vm808 = vcmp.ge.f32.partialorder %v784, 0.0
      %vm809 = vcmp.ge.f32.partialorder %v785, 0.0
      %vm810 = vcmp.ge.f32.partialorder %v786, 0.0
      %vm811 = vcmp.ge.f32.partialorder %v787, 0.0
      %vm812 = vcmp.ge.f32.partialorder %v788, 0.0
      %vm813 = vcmp.ge.f32.partialorder %v789, 0.0
      %vm814 = vcmp.ge.f32.partialorder %v790, 0.0
      %vm815 = vcmp.ge.f32.partialorder %v791, 0.0
      %vm816 = vcmp.ge.f32.partialorder %v792, 0.0
      %vm817 = vcmp.ge.f32.partialorder %v793, 0.0
      %vm818 = vcmp.ge.f32.partialorder %v794, 0.0
      %vm819 = vcmp.ge.f32.partialorder %v795, 0.0
      %v820 = vmul.f32 %v772, 0.01
      %v821 = vmul.f32 %v773, 0.01
      %v822 = vmul.f32 %v774, 0.01
      %v823 = vmul.f32 %v775, 0.01
      %v824 = vmul.f32 %v776, 0.01
      %v825 = vmul.f32 %v777, 0.01
      %v826 = vmul.f32 %v778, 0.01
      %v827 = vmul.f32 %v779, 0.01
      %v828 = vmul.f32 %v780, 0.01
      %v829 = vmul.f32 %v781, 0.01
      %v830 = vmul.f32 %v782, 0.01
      %v831 = vmul.f32 %v783, 0.01
      %v832 = vmul.f32 %v784, 0.01
      %v833 = vmul.f32 %v785, 0.01
      %v834 = vmul.f32 %v786, 0.01
      %v835 = vmul.f32 %v787, 0.01
      %v836 = vmul.f32 %v788, 0.01
      %v837 = vmul.f32 %v789, 0.01
      %v838 = vmul.f32 %v790, 0.01
      %v839 = vmul.f32 %v791, 0.01
      %v840 = vmul.f32 %v792, 0.01
      %v841 = vmul.f32 %v793, 0.01
      %v842 = vmul.f32 %v794, 0.01
      %v843 = vmul.f32 %v795, 0.01
      %v844 = vsel %vm796, %v772, %v820
      %v845 = vsel %vm797, %v773, %v821
      %v846 = vsel %vm798, %v774, %v822
      %v847 = vsel %vm799, %v775, %v823
      %v848 = vsel %vm800, %v776, %v824
      %v849 = vsel %vm801, %v777, %v825
      %v850 = vsel %vm802, %v778, %v826
      %v851 = vsel %vm803, %v779, %v827
      %v852 = vsel %vm804, %v780, %v828
      %v853 = vsel %vm805, %v781, %v829
      %v854 = vsel %vm806, %v782, %v830
      %v855 = vsel %vm807, %v783, %v831
      %v856 = vsel %vm808, %v784, %v832
      %v857 = vsel %vm809, %v785, %v833
      %v858 = vsel %vm810, %v786, %v834
      %v859 = vsel %vm811, %v787, %v835
      %v860 = vsel %vm812, %v788, %v836
      %v861 = vsel %vm813, %v789, %v837
      %v862 = vsel %vm814, %v790, %v838
      %v863 = vsel %vm815, %v791, %v839
      %v864 = vsel %vm816, %v792, %v840
      %v865 = vsel %vm817, %v793, %v841
      %v866 = vsel %vm818, %v794, %v842
      %v867 = vsel %vm819, %v795, %v843
      %v868 = vmax.f32 %v724, %v844
      %v869 = vmax.f32 %v725, %v845
      %v870 = vmax.f32 %v726, %v846
      %v871 = vmax.f32 %v727, %v847
      %v872 = vmax.f32 %v728, %v848
      %v873 = vmax.f32 %v729, %v849
      %v874 = vmax.f32 %v730, %v850
      %v875 = vmax.f32 %v731, %v851
      %v876 = vmax.f32 %v732, %v852
      %v877 = vmax.f32 %v733, %v853
      %v878 = vmax.f32 %v734, %v854
      %v879 = vmax.f32 %v735, %v855
      %v880 = vmax.f32 %v736, %v856
      %v881 = vmax.f32 %v737, %v857
      %v882 = vmax.f32 %v738, %v858
      %v883 = vmax.f32 %v739, %v859
      %v884 = vmax.f32 %v740, %v860
      %v885 = vmax.f32 %v741, %v861
      %v886 = vmax.f32 %v742, %v862
      %v887 = vmax.f32 %v743, %v863
      %v888 = vmax.f32 %v744, %v864
      %v889 = vmax.f32 %v745, %v865
      %v890 = vmax.f32 %v746, %v866
      %v891 = vmax.f32 %v747, %v867
      %v892 = vmax.f32 %v604, %v868
      %v893 = vmax.f32 %v605, %v869
      %v894 = vmax.f32 %v606, %v870
      %v895 = vmax.f32 %v607, %v871
      %v896 = vmax.f32 %v608, %v872
      %v897 = vmax.f32 %v609, %v873
      %v898 = vmax.f32 %v610, %v874
      %v899 = vmax.f32 %v611, %v875
      %v900 = vmax.f32 %v612, %v876
      %v901 = vmax.f32 %v613, %v877
      %v902 = vmax.f32 %v614, %v878
      %v903 = vmax.f32 %v615, %v879
      %v904 = vmax.f32 %v616, %v880
      %v905 = vmax.f32 %v617, %v881
      %v906 = vmax.f32 %v618, %v882
      %v907 = vmax.f32 %v619, %v883
      %v908 = vmax.f32 %v620, %v884
      %v909 = vmax.f32 %v621, %v885
      %v910 = vmax.f32 %v622, %v886
      %v911 = vmax.f32 %v623, %v887
      %v912 = vmax.f32 %v624, %v888
      %v913 = vmax.f32 %v625, %v889
      %v914 = vmax.f32 %v626, %v890
      %v915 = vmax.f32 %v627, %v891
      %v916 = vpack.c.bf16 %v893, %v892
      %v917 = vpack.c.bf16 %v895, %v894
      %v918 = vpack.c.bf16 %v897, %v896
      %v919 = vpack.c.bf16 %v899, %v898
      %v920 = vpack.c.bf16 %v901, %v900
      %v921 = vpack.c.bf16 %v903, %v902
      %v922 = vpack.c.bf16 %v905, %v904
      %v923 = vpack.c.bf16 %v907, %v906
      %v924 = vpack.c.bf16 %v909, %v908
      %v925 = vpack.c.bf16 %v911, %v910
      %v926 = vpack.c.bf16 %v913, %v912
      %v927 = vpack.c.bf16 %v915, %v914
      %v940 = vunpack.c.l.b16 %v916
      %v941 = vunpack.c.h.b16 %v916
      %v942 = vunpack.c.l.b16 %v917
      %v943 = vunpack.c.h.b16 %v917
      %v944 = vunpack.c.l.b16 %v918
      %v945 = vunpack.c.h.b16 %v918
      %v946 = vunpack.c.l.b16 %v919
      %v947 = vunpack.c.h.b16 %v919
      %v948 = vunpack.c.l.b16 %v920
      %v949 = vunpack.c.h.b16 %v920
      %v950 = vunpack.c.l.b16 %v921
      %v951 = vunpack.c.h.b16 %v921
      %v952 = vunpack.c.l.b16 %v922
      %v953 = vunpack.c.h.b16 %v922
      %v954 = vunpack.c.l.b16 %v923
      %v955 = vunpack.c.h.b16 %v923
      %v956 = vunpack.c.l.b16 %v924
      %v957 = vunpack.c.h.b16 %v924
      %v958 = vunpack.c.l.b16 %v925
      %v959 = vunpack.c.h.b16 %v925
      %v960 = vunpack.c.l.b16 %v926
      %v961 = vunpack.c.h.b16 %v926
      %v962 = vunpack.c.l.b16 %v927
      %v963 = vunpack.c.h.b16 %v927
      %v964 = vpack.c.b16 %v940, %v940
      %v965 = vpack.c.b16 %v941, %v941
      %v966 = vpack.c.b16 %v942, %v942
      %v967 = vpack.c.b16 %v943, %v943
      %v968 = vpack.c.b16 %v944, %v944
      %v969 = vpack.c.b16 %v945, %v945
      %v970 = vpack.c.b16 %v946, %v946
      %v971 = vpack.c.b16 %v947, %v947
      %v972 = vpack.c.b16 %v948, %v948
      %v973 = vpack.c.b16 %v949, %v949
      %v974 = vpack.c.b16 %v950, %v950
      %v975 = vpack.c.b16 %v951, %v951
      %v976 = vpack.c.b16 %v952, %v952
      %v977 = vpack.c.b16 %v953, %v953
      %v978 = vpack.c.b16 %v954, %v954
      %v979 = vpack.c.b16 %v955, %v955
      %v980 = vpack.c.b16 %v956, %v956
      %v981 = vpack.c.b16 %v957, %v957
      %v982 = vpack.c.b16 %v958, %v958
      %v983 = vpack.c.b16 %v959, %v959
      %v984 = vpack.c.b16 %v960, %v960
      %v985 = vpack.c.b16 %v961, %v961
      %v986 = vpack.c.b16 %v962, %v962
      %v987 = vpack.c.b16 %v963, %v963
      %1012 = vst [vmem:[%s197] sm:$0xf] %v964
      %1013 = vst [vmem:[%s197 + $0x4] sm:$0x3] %v965
      %1014 = vst [vmem:[%s197 + $0x8] sm:$0xf] %v966
      %1015 = vst [vmem:[%s197 + $0xc] sm:$0x3] %v967
      %1016 = vst [vmem:[%s197 + $0x10] sm:$0xf] %v968
      %1017 = vst [vmem:[%s197 + $0x14] sm:$0x3] %v969
      %1018 = vst [vmem:[%s197 + $0x18] sm:$0xf] %v970
      %1019 = vst [vmem:[%s197 + $0x1c] sm:$0x3] %v971
      %1020 = vst [vmem:[%s197 + $0x20] sm:$0xf] %v972
      %1021 = vst [vmem:[%s197 + $0x24] sm:$0x3] %v973
      %1022 = vst [vmem:[%s197 + $0x28] sm:$0xf] %v974
      %1023 = vst [vmem:[%s197 + $0x2c] sm:$0x3] %v975
      %1024 = vst [vmem:[%s197 + $0x30] sm:$0xf] %v976
      %1025 = vst [vmem:[%s197 + $0x34] sm:$0x3] %v977
      %1026 = vst [vmem:[%s197 + $0x38] sm:$0xf] %v978
      %1027 = vst [vmem:[%s197 + $0x3c] sm:$0x3] %v979
      %1028 = vst [vmem:[%s197 + $0x40] sm:$0xf] %v980
      %1029 = vst [vmem:[%s197 + $0x44] sm:$0x3] %v981
      %1030 = vst [vmem:[%s197 + $0x48] sm:$0xf] %v982
      %1031 = vst [vmem:[%s197 + $0x4c] sm:$0x3] %v983
      %1032 = vst [vmem:[%s197 + $0x50] sm:$0xf] %v984
      %1033 = vst [vmem:[%s197 + $0x54] sm:$0x3] %v985
      %1034 = vst [vmem:[%s197 + $0x58] sm:$0xf] %v986
      %1035 = vst [vmem:[%s197 + $0x5c] sm:$0x3] %v987
      %p1036 = scmp.lt.s32.totalorder %s15, 7
      %s1037 = scalar_select %p1036, %s15, 7
      %s1038 = smul.addr %s1037, 24
      %s1039 = smul.addr %s1038, 4
      %s1040 = scalar_lea.vmem %s4, %s1039
      // Predicated region
      $region37: #{extractor_forward.7} parent=35 // pred_check
        %p1041 = pneg %p122
      $region38: #{extractor_forward.7} parent=35 // pred_check_branch
        %1043 = sbr.rel (%p1041) target = $region40
      $region39: #{extractor_forward.7} parent=35 // pred_region
        _
      $region40: #{extractor_forward.7} parent=35 // pred_fallthru
        _
    $region36: #{extractor_forward.7} parent=5 // pred_fallthru
      _
    %p1044 = scmp.le.s32.totalorder 2, %s10
    // Predicated region
    $region41: #{extractor_forward.7} parent=5 // pred_check
      %p1045 = pneg %p1044
    $region42: #{extractor_forward.7} parent=5 // pred_check_branch
      %1047 = sbr.rel (%p1045) target = $region44
    $region43: #{extractor_forward.7} parent=5 // pred_region
      %s1048 = ssub.s32 %s10, 2
      // Predicated region
      $region45: #{extractor_forward.7} parent=43 // pred_check
        %p1049 = pneg %p128
      $region46: #{extractor_forward.7} parent=43 // pred_check_branch
        %1051 = sbr.rel (%p1049) target = $region48
      $region47: #{extractor_forward.7} parent=43 // pred_region
        %p1052 = scmp.lt.s32.totalorder %s16, 7
        %s1053 = scalar_select %p1052, %s16, 7
        %s1054 = smul.addr %s1053, 24
        %s1055 = smul.addr %s1054, 4
        %s1056 = scalar_lea.vmem %s4, %s1055
      $region48: #{extractor_forward.7} parent=43 // pred_fallthru
        _
    $region44: #{extractor_forward.7} parent=5 // pred_fallthru
      _
  $region6: #{extractor_forward.7} parent=0 // loop_footer
    %s14 = sadd.s32 1, %s10
  $region7: #{extractor_forward.7} parent=0 // loop_footer_branch
    %9 = sbr.rel target = $region3
  $region8: #{extractor_forward.7} parent=0 // loop_exit
    _

// kernel: extractor_forward.8
$region0: #{extractor_forward.8}
  #allocation0 [shape = 'u32[]', space=smem, size = 0x4, offset = 0x4, fixed_abs, tag = 'smem constant byte address 0x4 - core index']
  #allocation1 [shape = 'u32[144,128]{1,0:T(1,128)}', space=vmem, size = 0x12000, scoped, tag = 'internal scratch']
  %s0 = inlined_call_operand.vmem [shape: bf16[512,500], index: 0, kind: input, shape index: {}]
  %s1 = inlined_call_operand.vmem [shape: bf16[500,128], index: 1, kind: input, shape index: {}]
  %s2 = inlined_call_operand.vmem [shape: f32[1,128], index: 2, kind: input, shape index: {}]
  %s3 = inlined_call_operand.vmem [shape: f32[512,128], index: 3, kind: output, shape index: {0}]
  %s4 = inlined_call_operand.vmem [shape: f32[1,2,128], index: 4, kind: output, shape index: {1}]
  %5 = xla_tuple %s3, %s4
  %s6 = sld [smem:[#allocation0]]
  $region30: #{extractor_forward.8} parent=0
    _
  %s8 = ssub.s32 1, %s6
  %s9 = scalar_select 0, %s8, %s6
  // Predicated region
  $region2: #{extractor_forward.8} parent=0 // pred_check
    _
  $region3: #{extractor_forward.8} parent=0 // pred_check_branch
    %11 = sbr.rel (0) target = $region5
  $region4: #{extractor_forward.8} parent=0 // pred_region
    _
  $region5: #{extractor_forward.8} parent=0 // pred_fallthru
    _
  // Predicated region
  $region6: #{extractor_forward.8} parent=0 // pred_check
    _
  $region7: #{extractor_forward.8} parent=0 // pred_check_branch
    %13 = sbr.rel (0) target = $region9
  $region8: #{extractor_forward.8} parent=0 // pred_region
    _
  $region9: #{extractor_forward.8} parent=0 // pred_fallthru
    _
  // Predicated region
  $region10: #{extractor_forward.8} parent=0 // pred_check
    _
  $region11: #{extractor_forward.8} parent=0 // pred_check_branch
    %15 = sbr.rel (0) target = $region13
  $region12: #{extractor_forward.8} parent=0 // pred_region
    _
  $region13: #{extractor_forward.8} parent=0 // pred_fallthru
    _
  %v17 = vld [vmem:[%s0] sm:$0xff]
  %v18 = vld [vmem:[%s0 + $0x8] sm:$0xff]
  %v19 = vld [vmem:[%s0 + $0x10] sm:$0xff]
  %v20 = vld [vmem:[%s0 + $0x18] sm:$0xff]
  %v21 = vld [vmem:[%s0 + $0x20] sm:$0xff]
  %v22 = vld [vmem:[%s0 + $0x28] sm:$0xff]
  %v23 = vld [vmem:[%s0 + $0x30] sm:$0xff]
  %v24 = vld [vmem:[%s0 + $0x38] sm:$0xff]
  %v25 = vld [vmem:[%s0 + $0x40] sm:$0xff]
  %v26 = vld [vmem:[%s0 + $0x48] sm:$0xff]
  %v27 = vld [vmem:[%s0 + $0x50] sm:$0xff]
  %v28 = vld [vmem:[%s0 + $0x58] sm:$0xff]
  %v29 = vld [vmem:[%s0 + $0x60] sm:$0xff]
  %v30 = vld [vmem:[%s0 + $0x68] sm:$0xff]
  %v31 = vld [vmem:[%s0 + $0x70] sm:$0xff]
  %v32 = vld [vmem:[%s0 + $0x78] sm:$0xff]
  %v33 = vld [vmem:[%s0 + $0x80] sm:$0xff]
  %v34 = vld [vmem:[%s0 + $0x88] sm:$0xff]
  %v35 = vld [vmem:[%s0 + $0x90] sm:$0xff]
  %v36 = vld [vmem:[%s0 + $0x98] sm:$0xff]
  %v37 = vld [vmem:[%s0 + $0xa0] sm:$0xff]
  %v38 = vld [vmem:[%s0 + $0xa8] sm:$0xff]
  %v39 = vld [vmem:[%s0 + $0xb0] sm:$0xff]
  %v40 = vld [vmem:[%s0 + $0xb8] sm:$0xff]
  %v41 = vld [vmem:[%s0 + $0xc0] sm:$0xff]
  %v42 = vld [vmem:[%s0 + $0xc8] sm:$0xff]
  %v43 = vld [vmem:[%s0 + $0xd0] sm:$0xff]
  %v44 = vld [vmem:[%s0 + $0xd8] sm:$0xff]
  %v45 = vld [vmem:[%s0 + $0xe0] sm:$0xff]
  %v46 = vld [vmem:[%s0 + $0xe8] sm:$0xff]
  %v47 = vld [vmem:[%s0 + $0xf0] sm:$0xff]
  %v48 = vld [vmem:[%s0 + $0xf8] sm:$0xff]
  %v49 = vld [vmem:[%s0 + $0x100] sm:$0xff]
  %v50 = vld [vmem:[%s0 + $0x108] sm:$0xff]
  %v51 = vld [vmem:[%s0 + $0x110] sm:$0xff]
  %v52 = vld [vmem:[%s0 + $0x118] sm:$0xff]
  %v53 = vld [vmem:[%s0 + $0x120] sm:$0xff]
  %v54 = vld [vmem:[%s0 + $0x128] sm:$0xff]
  %v55 = vld [vmem:[%s0 + $0x130] sm:$0xff]
  %v56 = vld [vmem:[%s0 + $0x138] sm:$0xff]
  %v57 = vld [vmem:[%s0 + $0x140] sm:$0xff]
  %v58 = vld [vmem:[%s0 + $0x148] sm:$0xff]
  %v59 = vld [vmem:[%s0 + $0x150] sm:$0xff]
  %v60 = vld [vmem:[%s0 + $0x158] sm:$0xff]
  %v61 = vld [vmem:[%s0 + $0x160] sm:$0xff]
  %v62 = vld [vmem:[%s0 + $0x168] sm:$0xff]
  %v63 = vld [vmem:[%s0 + $0x170] sm:$0xff]
  %v64 = vld [vmem:[%s0 + $0x178] sm:$0xff]
  %v65 = vld [vmem:[%s0 + $0x180] sm:$0xff]
  %v66 = vld [vmem:[%s0 + $0x188] sm:$0xff]
  %v67 = vld [vmem:[%s0 + $0x190] sm:$0xff]
  %v68 = vld [vmem:[%s0 + $0x198] sm:$0xff]
  %v69 = vld [vmem:[%s0 + $0x1a0] sm:$0xff]
  %v70 = vld [vmem:[%s0 + $0x1a8] sm:$0xff]
  %v71 = vld [vmem:[%s0 + $0x1b0] sm:$0xff]
  %v72 = vld [vmem:[%s0 + $0x1b8] sm:$0xff]
  %v73 = vld [vmem:[%s0 + $0x1c0] sm:$0xff]
  %v74 = vld [vmem:[%s0 + $0x1c8] sm:$0xff]
  %v75 = vld [vmem:[%s0 + $0x1d0] sm:$0xff]
  %v76 = vld [vmem:[%s0 + $0x1d8] sm:$0xff]
  %v77 = vld [vmem:[%s0 + $0x1e0] sm:$0xff]
  %v78 = vld [vmem:[%s0 + $0x1e8] sm:$0xff]
  %v79 = vld [vmem:[%s0 + $0x1f0] sm:$0xff]
  %v80 = vld [vmem:[%s0 + $0x1f8] sm:$0xff]
  %v81 = vld [vmem:[%s0 + $0x200] sm:$0xff]
  %v82 = vld [vmem:[%s0 + $0x208] sm:$0xff]
  %v83 = vld [vmem:[%s0 + $0x210] sm:$0xff]
  %v84 = vld [vmem:[%s0 + $0x218] sm:$0xff]
  %v85 = vld [vmem:[%s0 + $0x220] sm:$0xff]
  %v86 = vld [vmem:[%s0 + $0x228] sm:$0xff]
  %v87 = vld [vmem:[%s0 + $0x230] sm:$0xff]
  %v88 = vld [vmem:[%s0 + $0x238] sm:$0xff]
  %v89 = vld [vmem:[%s0 + $0x240] sm:$0xff]
  %v90 = vld [vmem:[%s0 + $0x248] sm:$0xff]
  %v91 = vld [vmem:[%s0 + $0x250] sm:$0xff]
  %v92 = vld [vmem:[%s0 + $0x258] sm:$0xff]
  %v93 = vld [vmem:[%s0 + $0x260] sm:$0xff]
  %v94 = vld [vmem:[%s0 + $0x268] sm:$0xff]
  %v95 = vld [vmem:[%s0 + $0x270] sm:$0xff]
  %v96 = vld [vmem:[%s0 + $0x278] sm:$0xff]
  %v97 = vld [vmem:[%s0 + $0x280] sm:$0xff]
  %v98 = vld [vmem:[%s0 + $0x288] sm:$0xff]
  %v99 = vld [vmem:[%s0 + $0x290] sm:$0xff]
  %v100 = vld [vmem:[%s0 + $0x298] sm:$0xff]
  %v101 = vld [vmem:[%s0 + $0x2a0] sm:$0xff]
  %v102 = vld [vmem:[%s0 + $0x2a8] sm:$0xff]
  %v103 = vld [vmem:[%s0 + $0x2b0] sm:$0xff]
  %v104 = vld [vmem:[%s0 + $0x2b8] sm:$0xff]
  %v105 = vld [vmem:[%s0 + $0x2c0] sm:$0xff]
  %v106 = vld [vmem:[%s0 + $0x2c8] sm:$0xff]
  %v107 = vld [vmem:[%s0 + $0x2d0] sm:$0xff]
  %v108 = vld [vmem:[%s0 + $0x2d8] sm:$0xff]
  %v109 = vld [vmem:[%s0 + $0x2e0] sm:$0xff]
  %v110 = vld [vmem:[%s0 + $0x2e8] sm:$0xff]
  %v111 = vld [vmem:[%s0 + $0x2f0] sm:$0xff]
  %v112 = vld [vmem:[%s0 + $0x2f8] sm:$0xff]
  %v113 = vld [vmem:[%s0 + $0x300] sm:$0xff]
  %v114 = vld [vmem:[%s0 + $0x308] sm:$0xff]
  %v115 = vld [vmem:[%s0 + $0x310] sm:$0xff]
  %v116 = vld [vmem:[%s0 + $0x318] sm:$0xff]
  %v117 = vld [vmem:[%s0 + $0x320] sm:$0xff]
  %v118 = vld [vmem:[%s0 + $0x328] sm:$0xff]
  %v119 = vld [vmem:[%s0 + $0x330] sm:$0xff]
  %v120 = vld [vmem:[%s0 + $0x338] sm:$0xff]
  %v121 = vld [vmem:[%s0 + $0x340] sm:$0xff]
  %v122 = vld [vmem:[%s0 + $0x348] sm:$0xff]
  %v123 = vld [vmem:[%s0 + $0x350] sm:$0xff]
  %v124 = vld [vmem:[%s0 + $0x358] sm:$0xff]
  %v125 = vld [vmem:[%s0 + $0x360] sm:$0xff]
  %v126 = vld [vmem:[%s0 + $0x368] sm:$0xff]
  %v127 = vld [vmem:[%s0 + $0x370] sm:$0xff]
  %v128 = vld [vmem:[%s0 + $0x378] sm:$0xff]
  %v129 = vld [vmem:[%s0 + $0x380] sm:$0xff]
  %v130 = vld [vmem:[%s0 + $0x388] sm:$0xff]
  %v131 = vld [vmem:[%s0 + $0x390] sm:$0xff]
  %v132 = vld [vmem:[%s0 + $0x398] sm:$0xff]
  %v133 = vld [vmem:[%s0 + $0x3a0] sm:$0xff]
  %v134 = vld [vmem:[%s0 + $0x3a8] sm:$0xff]
  %v135 = vld [vmem:[%s0 + $0x3b0] sm:$0xff]
  %v136 = vld [vmem:[%s0 + $0x3b8] sm:$0xff]
  %v137 = vld [vmem:[%s0 + $0x3c0] sm:$0xff]
  %v138 = vld [vmem:[%s0 + $0x3c8] sm:$0xff]
  %v139 = vld [vmem:[%s0 + $0x3d0] sm:$0xff]
  %v140 = vld [vmem:[%s0 + $0x3d8] sm:$0xff]
  %v141 = vld [vmem:[%s0 + $0x3e0] sm:$0xff]
  %v142 = vld [vmem:[%s0 + $0x3e8] sm:$0xff]
  %v143 = vld [vmem:[%s0 + $0x3f0] sm:$0xff]
  %v144 = vld [vmem:[%s0 + $0x3f8] sm:$0xff]
  %v145 = vld [vmem:[%s1] sm:$0xf]
  %v146 = vld [vmem:[%s1 + $0x4] sm:$0xf]
  %v147 = vld [vmem:[%s1 + $0x8] sm:$0xf]
  %v148 = vld [vmem:[%s1 + $0xc] sm:$0xf]
  %v149 = vld [vmem:[%s1 + $0x10] sm:$0xf]
  %v150 = vld [vmem:[%s1 + $0x14] sm:$0xf]
  %v151 = vld [vmem:[%s1 + $0x18] sm:$0xf]
  %v152 = vld [vmem:[%s1 + $0x1c] sm:$0xf]
  %v153 = vld [vmem:[%s1 + $0x20] sm:$0xf]
  %v154 = vld [vmem:[%s1 + $0x24] sm:$0xf]
  %v155 = vld [vmem:[%s1 + $0x28] sm:$0xf]
  %v156 = vld [vmem:[%s1 + $0x2c] sm:$0xf]
  %v157 = vld [vmem:[%s1 + $0x30] sm:$0xf]
  %v158 = vld [vmem:[%s1 + $0x34] sm:$0xf]
  %v159 = vld [vmem:[%s1 + $0x38] sm:$0xf]
  %v160 = vld [vmem:[%s1 + $0x3c] sm:$0xf]
  %v161 = vld [vmem:[%s1 + $0x40] sm:$0xf]
  %v162 = vld [vmem:[%s1 + $0x44] sm:$0xf]
  %v163 = vld [vmem:[%s1 + $0x48] sm:$0xf]
  %v164 = vld [vmem:[%s1 + $0x4c] sm:$0xf]
  %v165 = vld [vmem:[%s1 + $0x50] sm:$0xf]
  %v166 = vld [vmem:[%s1 + $0x54] sm:$0xf]
  %v167 = vld [vmem:[%s1 + $0x58] sm:$0xf]
  %v168 = vld [vmem:[%s1 + $0x5c] sm:$0xf]
  %v169 = vld [vmem:[%s1 + $0x60] sm:$0xf]
  %v170 = vld [vmem:[%s1 + $0x64] sm:$0xf]
  %v171 = vld [vmem:[%s1 + $0x68] sm:$0xf]
  %v172 = vld [vmem:[%s1 + $0x6c] sm:$0xf]
  %v173 = vld [vmem:[%s1 + $0x70] sm:$0xf]
  %v174 = vld [vmem:[%s1 + $0x74] sm:$0xf]
  %v175 = vld [vmem:[%s1 + $0x78] sm:$0xf]
  %v176 = vld [vmem:[%s1 + $0x7c] sm:$0xf]
  %v177 = vld [vmem:[%s1 + $0x80] sm:$0xf]
  %v178 = vld [vmem:[%s1 + $0x84] sm:$0xf]
  %v179 = vld [vmem:[%s1 + $0x88] sm:$0xf]
  %v180 = vld [vmem:[%s1 + $0x8c] sm:$0xf]
  %v181 = vld [vmem:[%s1 + $0x90] sm:$0xf]
  %v182 = vld [vmem:[%s1 + $0x94] sm:$0xf]
  %v183 = vld [vmem:[%s1 + $0x98] sm:$0xf]
  %v184 = vld [vmem:[%s1 + $0x9c] sm:$0xf]
  %v185 = vld [vmem:[%s1 + $0xa0] sm:$0xf]
  %v186 = vld [vmem:[%s1 + $0xa4] sm:$0xf]
  %v187 = vld [vmem:[%s1 + $0xa8] sm:$0xf]
  %v188 = vld [vmem:[%s1 + $0xac] sm:$0xf]
  %v189 = vld [vmem:[%s1 + $0xb0] sm:$0xf]
  %v190 = vld [vmem:[%s1 + $0xb4] sm:$0xf]
  %v191 = vld [vmem:[%s1 + $0xb8] sm:$0xf]
  %v192 = vld [vmem:[%s1 + $0xbc] sm:$0xf]
  %v193 = vld [vmem:[%s1 + $0xc0] sm:$0xf]
  %v194 = vld [vmem:[%s1 + $0xc4] sm:$0xf]
  %v195 = vld [vmem:[%s1 + $0xc8] sm:$0xf]
  %v196 = vld [vmem:[%s1 + $0xcc] sm:$0xf]
  %v197 = vld [vmem:[%s1 + $0xd0] sm:$0xf]
  %v198 = vld [vmem:[%s1 + $0xd4] sm:$0xf]
  %v199 = vld [vmem:[%s1 + $0xd8] sm:$0xf]
  %v200 = vld [vmem:[%s1 + $0xdc] sm:$0xf]
  %v201 = vld [vmem:[%s1 + $0xe0] sm:$0xf]
  %v202 = vld [vmem:[%s1 + $0xe4] sm:$0xf]
  %v203 = vld [vmem:[%s1 + $0xe8] sm:$0xf]
  %v204 = vld [vmem:[%s1 + $0xec] sm:$0xf]
  %v205 = vld [vmem:[%s1 + $0xf0] sm:$0xf]
  %v206 = vld [vmem:[%s1 + $0xf4] sm:$0xf]
  %v207 = vld [vmem:[%s1 + $0xf8] sm:$0x3]
  %v208 = vld [vmem:[%s2] sm:$0x1]
  %v210 = vlaneseq
  %v211 = vshrl.u32 %v210, 7
  %v212 = vsub.s32 0, %v211
  %v213 = vrot.slane %v208, %v212
  %v343 = vunpack.c.l.b16 %v17
  %v344 = vunpack.c.h.b16 %v17
  %v345 = vunpack.c.l.b16 %v18
  %v346 = vunpack.c.h.b16 %v18
  %v347 = vunpack.c.l.b16 %v19
  %v348 = vunpack.c.h.b16 %v19
  %v349 = vunpack.c.l.b16 %v20
  %v350 = vunpack.c.h.b16 %v20
  %v351 = vunpack.c.l.b16 %v21
  %v352 = vunpack.c.h.b16 %v21
  %v353 = vunpack.c.l.b16 %v22
  %v354 = vunpack.c.h.b16 %v22
  %v355 = vunpack.c.l.b16 %v23
  %v356 = vunpack.c.h.b16 %v23
  %v357 = vunpack.c.l.b16 %v24
  %v358 = vunpack.c.h.b16 %v24
  %v359 = vunpack.c.l.b16 %v25
  %v360 = vunpack.c.h.b16 %v25
  %v361 = vunpack.c.l.b16 %v26
  %v362 = vunpack.c.h.b16 %v26
  %v363 = vunpack.c.l.b16 %v27
  %v364 = vunpack.c.h.b16 %v27
  %v365 = vunpack.c.l.b16 %v28
  %v366 = vunpack.c.h.b16 %v28
  %v367 = vunpack.c.l.b16 %v29
  %v368 = vunpack.c.h.b16 %v29
  %v369 = vunpack.c.l.b16 %v30
  %v370 = vunpack.c.h.b16 %v30
  %v371 = vunpack.c.l.b16 %v31
  %v372 = vunpack.c.h.b16 %v31
  %v373 = vunpack.c.l.b16 %v32
  %v374 = vunpack.c.h.b16 %v32
  %v375 = vunpack.c.l.b16 %v33
  %v376 = vunpack.c.h.b16 %v33
  %v377 = vunpack.c.l.b16 %v34
  %v378 = vunpack.c.h.b16 %v34
  %v379 = vunpack.c.l.b16 %v35
  %v380 = vunpack.c.h.b16 %v35
  %v381 = vunpack.c.l.b16 %v36
  %v382 = vunpack.c.h.b16 %v36
  %v383 = vunpack.c.l.b16 %v37
  %v384 = vunpack.c.h.b16 %v37
  %v385 = vunpack.c.l.b16 %v38
  %v386 = vunpack.c.h.b16 %v38
  %v387 = vunpack.c.l.b16 %v39
  %v388 = vunpack.c.h.b16 %v39
  %v389 = vunpack.c.l.b16 %v40
  %v390 = vunpack.c.h.b16 %v40
  %v391 = vunpack.c.l.b16 %v41
  %v392 = vunpack.c.h.b16 %v41
  %v393 = vunpack.c.l.b16 %v42
  %v394 = vunpack.c.h.b16 %v42
  %v395 = vunpack.c.l.b16 %v43
  %v396 = vunpack.c.h.b16 %v43
  %v397 = vunpack.c.l.b16 %v44
  %v398 = vunpack.c.h.b16 %v44
  %v399 = vunpack.c.l.b16 %v45
  %v400 = vunpack.c.h.b16 %v45
  %v401 = vunpack.c.l.b16 %v46
  %v402 = vunpack.c.h.b16 %v46
  %v403 = vunpack.c.l.b16 %v47
  %v404 = vunpack.c.h.b16 %v47
  %v405 = vunpack.c.l.b16 %v48
  %v406 = vunpack.c.h.b16 %v48
  %v407 = vunpack.c.l.b16 %v49
  %v408 = vunpack.c.h.b16 %v49
  %v409 = vunpack.c.l.b16 %v50
  %v410 = vunpack.c.h.b16 %v50
  %v411 = vunpack.c.l.b16 %v51
  %v412 = vunpack.c.h.b16 %v51
  %v413 = vunpack.c.l.b16 %v52
  %v414 = vunpack.c.h.b16 %v52
  %v415 = vunpack.c.l.b16 %v53
  %v416 = vunpack.c.h.b16 %v53
  %v417 = vunpack.c.l.b16 %v54
  %v418 = vunpack.c.h.b16 %v54
  %v419 = vunpack.c.l.b16 %v55
  %v420 = vunpack.c.h.b16 %v55
  %v421 = vunpack.c.l.b16 %v56
  %v422 = vunpack.c.h.b16 %v56
  %v423 = vunpack.c.l.b16 %v57
  %v424 = vunpack.c.h.b16 %v57
  %v425 = vunpack.c.l.b16 %v58
  %v426 = vunpack.c.h.b16 %v58
  %v427 = vunpack.c.l.b16 %v59
  %v428 = vunpack.c.h.b16 %v59
  %v429 = vunpack.c.l.b16 %v60
  %v430 = vunpack.c.h.b16 %v60
  %v431 = vunpack.c.l.b16 %v61
  %v432 = vunpack.c.h.b16 %v61
  %v433 = vunpack.c.l.b16 %v62
  %v434 = vunpack.c.h.b16 %v62
  %v435 = vunpack.c.l.b16 %v63
  %v436 = vunpack.c.h.b16 %v63
  %v437 = vunpack.c.l.b16 %v64
  %v438 = vunpack.c.h.b16 %v64
  %v439 = vunpack.c.l.b16 %v65
  %v440 = vunpack.c.h.b16 %v65
  %v441 = vunpack.c.l.b16 %v66
  %v442 = vunpack.c.h.b16 %v66
  %v443 = vunpack.c.l.b16 %v67
  %v444 = vunpack.c.h.b16 %v67
  %v445 = vunpack.c.l.b16 %v68
  %v446 = vunpack.c.h.b16 %v68
  %v447 = vunpack.c.l.b16 %v69
  %v448 = vunpack.c.h.b16 %v69
  %v449 = vunpack.c.l.b16 %v70
  %v450 = vunpack.c.h.b16 %v70
  %v451 = vunpack.c.l.b16 %v71
  %v452 = vunpack.c.h.b16 %v71
  %v453 = vunpack.c.l.b16 %v72
  %v454 = vunpack.c.h.b16 %v72
  %v455 = vunpack.c.l.b16 %v73
  %v456 = vunpack.c.h.b16 %v73
  %v457 = vunpack.c.l.b16 %v74
  %v458 = vunpack.c.h.b16 %v74
  %v459 = vunpack.c.l.b16 %v75
  %v460 = vunpack.c.h.b16 %v75
  %v461 = vunpack.c.l.b16 %v76
  %v462 = vunpack.c.h.b16 %v76
  %v463 = vunpack.c.l.b16 %v77
  %v464 = vunpack.c.h.b16 %v77
  %v465 = vunpack.c.l.b16 %v78
  %v466 = vunpack.c.h.b16 %v78
  %v467 = vunpack.c.l.b16 %v79
  %v468 = vunpack.c.h.b16 %v79
  %v469 = vunpack.c.l.b16 %v80
  %v470 = vunpack.c.h.b16 %v80
  %v471 = vunpack.c.l.b16 %v81
  %v472 = vunpack.c.h.b16 %v81
  %v473 = vunpack.c.l.b16 %v82
  %v474 = vunpack.c.h.b16 %v82
  %v475 = vunpack.c.l.b16 %v83
  %v476 = vunpack.c.h.b16 %v83
  %v477 = vunpack.c.l.b16 %v84
  %v478 = vunpack.c.h.b16 %v84
  %v479 = vunpack.c.l.b16 %v85
  %v480 = vunpack.c.h.b16 %v85
  %v481 = vunpack.c.l.b16 %v86
  %v482 = vunpack.c.h.b16 %v86
  %v483 = vunpack.c.l.b16 %v87
  %v484 = vunpack.c.h.b16 %v87
  %v485 = vunpack.c.l.b16 %v88
  %v486 = vunpack.c.h.b16 %v88
  %v487 = vunpack.c.l.b16 %v89
  %v488 = vunpack.c.h.b16 %v89
  %v489 = vunpack.c.l.b16 %v90
  %v490 = vunpack.c.h.b16 %v90
  %v491 = vunpack.c.l.b16 %v91
  %v492 = vunpack.c.h.b16 %v91
  %v493 = vunpack.c.l.b16 %v92
  %v494 = vunpack.c.h.b16 %v92
  %v495 = vunpack.c.l.b16 %v93
  %v496 = vunpack.c.h.b16 %v93
  %v497 = vunpack.c.l.b16 %v94
  %v498 = vunpack.c.h.b16 %v94
  %v499 = vunpack.c.l.b16 %v95
  %v500 = vunpack.c.h.b16 %v95
  %v501 = vunpack.c.l.b16 %v96
  %v502 = vunpack.c.h.b16 %v96
  %v503 = vunpack.c.l.b16 %v97
  %v504 = vunpack.c.h.b16 %v97
  %v505 = vunpack.c.l.b16 %v98
  %v506 = vunpack.c.h.b16 %v98
  %v507 = vunpack.c.l.b16 %v99
  %v508 = vunpack.c.h.b16 %v99
  %v509 = vunpack.c.l.b16 %v100
  %v510 = vunpack.c.h.b16 %v100
  %v511 = vunpack.c.l.b16 %v101
  %v512 = vunpack.c.h.b16 %v101
  %v513 = vunpack.c.l.b16 %v102
  %v514 = vunpack.c.h.b16 %v102
  %v515 = vunpack.c.l.b16 %v103
  %v516 = vunpack.c.h.b16 %v103
  %v517 = vunpack.c.l.b16 %v104
  %v518 = vunpack.c.h.b16 %v104
  %v519 = vunpack.c.l.b16 %v105
  %v520 = vunpack.c.h.b16 %v105
  %v521 = vunpack.c.l.b16 %v106
  %v522 = vunpack.c.h.b16 %v106
  %v523 = vunpack.c.l.b16 %v107
  %v524 = vunpack.c.h.b16 %v107
  %v525 = vunpack.c.l.b16 %v108
  %v526 = vunpack.c.h.b16 %v108
  %v527 = vunpack.c.l.b16 %v109
  %v528 = vunpack.c.h.b16 %v109
  %v529 = vunpack.c.l.b16 %v110
  %v530 = vunpack.c.h.b16 %v110
  %v531 = vunpack.c.l.b16 %v111
  %v532 = vunpack.c.h.b16 %v111
  %v533 = vunpack.c.l.b16 %v112
  %v534 = vunpack.c.h.b16 %v112
  %v535 = vunpack.c.l.b16 %v113
  %v536 = vunpack.c.h.b16 %v113
  %v537 = vunpack.c.l.b16 %v114
  %v538 = vunpack.c.h.b16 %v114
  %v539 = vunpack.c.l.b16 %v115
  %v540 = vunpack.c.h.b16 %v115
  %v541 = vunpack.c.l.b16 %v116
  %v542 = vunpack.c.h.b16 %v116
  %v543 = vunpack.c.l.b16 %v117
  %v544 = vunpack.c.h.b16 %v117
  %v545 = vunpack.c.l.b16 %v118
  %v546 = vunpack.c.h.b16 %v118
  %v547 = vunpack.c.l.b16 %v119
  %v548 = vunpack.c.h.b16 %v119
  %v549 = vunpack.c.l.b16 %v120
  %v550 = vunpack.c.h.b16 %v120
  %v551 = vunpack.c.l.b16 %v121
  %v552 = vunpack.c.h.b16 %v121
  %v553 = vunpack.c.l.b16 %v122
  %v554 = vunpack.c.h.b16 %v122
  %v555 = vunpack.c.l.b16 %v123
  %v556 = vunpack.c.h.b16 %v123
  %v557 = vunpack.c.l.b16 %v124
  %v558 = vunpack.c.h.b16 %v124
  %v559 = vunpack.c.l.b16 %v125
  %v560 = vunpack.c.h.b16 %v125
  %v561 = vunpack.c.l.b16 %v126
  %v562 = vunpack.c.h.b16 %v126
  %v563 = vunpack.c.l.b16 %v127
  %v564 = vunpack.c.h.b16 %v127
  %v565 = vunpack.c.l.b16 %v128
  %v566 = vunpack.c.h.b16 %v128
  %v567 = vunpack.c.l.b16 %v129
  %v568 = vunpack.c.h.b16 %v129
  %v569 = vunpack.c.l.b16 %v130
  %v570 = vunpack.c.h.b16 %v130
  %v571 = vunpack.c.l.b16 %v131
  %v572 = vunpack.c.h.b16 %v131
  %v573 = vunpack.c.l.b16 %v132
  %v574 = vunpack.c.h.b16 %v132
  %v575 = vunpack.c.l.b16 %v133
  %v576 = vunpack.c.h.b16 %v133
  %v577 = vunpack.c.l.b16 %v134
  %v578 = vunpack.c.h.b16 %v134
  %v579 = vunpack.c.l.b16 %v135
  %v580 = vunpack.c.h.b16 %v135
  %v581 = vunpack.c.l.b16 %v136
  %v582 = vunpack.c.h.b16 %v136
  %v583 = vunpack.c.l.b16 %v137
  %v584 = vunpack.c.h.b16 %v137
  %v585 = vunpack.c.l.b16 %v138
  %v586 = vunpack.c.h.b16 %v138
  %v587 = vunpack.c.l.b16 %v139
  %v588 = vunpack.c.h.b16 %v139
  %v589 = vunpack.c.l.b16 %v140
  %v590 = vunpack.c.h.b16 %v140
  %v591 = vunpack.c.l.b16 %v141
  %v592 = vunpack.c.h.b16 %v141
  %v593 = vunpack.c.l.b16 %v142
  %v594 = vunpack.c.h.b16 %v142
  %v595 = vunpack.c.l.b16 %v143
  %v596 = vunpack.c.h.b16 %v143
  %v597 = vunpack.c.l.b16 %v144
  %v598 = vunpack.c.h.b16 %v144
  %v599 = vpack.c.b16 %v347, %v343
  %v600 = vpack.c.b16 %v348, %v344
  %v601 = vpack.c.b16 %v349, %v345
  %v602 = vpack.c.b16 %v350, %v346
  %v603 = vpack.c.b16 %v355, %v351
  %v604 = vpack.c.b16 %v356, %v352
  %v605 = vpack.c.b16 %v357, %v353
  %v606 = vpack.c.b16 %v358, %v354
  %v607 = vpack.c.b16 %v363, %v359
  %v608 = vpack.c.b16 %v364, %v360
  %v609 = vpack.c.b16 %v365, %v361
  %v610 = vpack.c.b16 %v366, %v362
  %v611 = vpack.c.b16 %v371, %v367
  %v612 = vpack.c.b16 %v372, %v368
  %v613 = vpack.c.b16 %v373, %v369
  %v614 = vpack.c.b16 %v374, %v370
  %v615 = vpack.c.b16 %v379, %v375
  %v616 = vpack.c.b16 %v380, %v376
  %v617 = vpack.c.b16 %v381, %v377
  %v618 = vpack.c.b16 %v382, %v378
  %v619 = vpack.c.b16 %v387, %v383
  %v620 = vpack.c.b16 %v388, %v384
  %v621 = vpack.c.b16 %v389, %v385
  %v622 = vpack.c.b16 %v390, %v386
  %v623 = vpack.c.b16 %v395, %v391
  %v624 = vpack.c.b16 %v396, %v392
  %v625 = vpack.c.b16 %v397, %v393
  %v626 = vpack.c.b16 %v398, %v394
  %v627 = vpack.c.b16 %v403, %v399
  %v628 = vpack.c.b16 %v404, %v400
  %v629 = vpack.c.b16 %v405, %v401
  %v630 = vpack.c.b16 %v406, %v402
  %v631 = vpack.c.b16 %v411, %v407
  %v632 = vpack.c.b16 %v412, %v408
  %v633 = vpack.c.b16 %v413, %v409
  %v634 = vpack.c.b16 %v414, %v410
  %v635 = vpack.c.b16 %v419, %v415
  %v636 = vpack.c.b16 %v420, %v416
  %v637 = vpack.c.b16 %v421, %v417
  %v638 = vpack.c.b16 %v422, %v418
  %v639 = vpack.c.b16 %v427, %v423
  %v640 = vpack.c.b16 %v428, %v424
  %v641 = vpack.c.b16 %v429, %v425
  %v642 = vpack.c.b16 %v430, %v426
  %v643 = vpack.c.b16 %v435, %v431
  %v644 = vpack.c.b16 %v436, %v432
  %v645 = vpack.c.b16 %v437, %v433
  %v646 = vpack.c.b16 %v438, %v434
  %v647 = vpack.c.b16 %v443, %v439
  %v648 = vpack.c.b16 %v444, %v440
  %v649 = vpack.c.b16 %v445, %v441
  %v650 = vpack.c.b16 %v446, %v442
  %v651 = vpack.c.b16 %v451, %v447
  %v652 = vpack.c.b16 %v452, %v448
  %v653 = vpack.c.b16 %v453, %v449
  %v654 = vpack.c.b16 %v454, %v450
  %v655 = vpack.c.b16 %v459, %v455
  %v656 = vpack.c.b16 %v460, %v456
  %v657 = vpack.c.b16 %v461, %v457
  %v658 = vpack.c.b16 %v462, %v458
  %v659 = vpack.c.b16 %v467, %v463
  %v660 = vpack.c.b16 %v468, %v464
  %v661 = vpack.c.b16 %v469, %v465
  %v662 = vpack.c.b16 %v470, %v466
  %v663 = vpack.c.b16 %v475, %v471
  %v664 = vpack.c.b16 %v476, %v472
  %v665 = vpack.c.b16 %v477, %v473
  %v666 = vpack.c.b16 %v478, %v474
  %v667 = vpack.c.b16 %v483, %v479
  %v668 = vpack.c.b16 %v484, %v480
  %v669 = vpack.c.b16 %v485, %v481
  %v670 = vpack.c.b16 %v486, %v482
  %v671 = vpack.c.b16 %v491, %v487
  %v672 = vpack.c.b16 %v492, %v488
  %v673 = vpack.c.b16 %v493, %v489
  %v674 = vpack.c.b16 %v494, %v490
  %v675 = vpack.c.b16 %v499, %v495
  %v676 = vpack.c.b16 %v500, %v496
  %v677 = vpack.c.b16 %v501, %v497
  %v678 = vpack.c.b16 %v502, %v498
  %v679 = vpack.c.b16 %v507, %v503
  %v680 = vpack.c.b16 %v508, %v504
  %v681 = vpack.c.b16 %v509, %v505
  %v682 = vpack.c.b16 %v510, %v506
  %v683 = vpack.c.b16 %v515, %v511
  %v684 = vpack.c.b16 %v516, %v512
  %v685 = vpack.c.b16 %v517, %v513
  %v686 = vpack.c.b16 %v518, %v514
  %v687 = vpack.c.b16 %v523, %v519
  %v688 = vpack.c.b16 %v524, %v520
  %v689 = vpack.c.b16 %v525, %v521
  %v690 = vpack.c.b16 %v526, %v522
  %v691 = vpack.c.b16 %v531, %v527
  %v692 = vpack.c.b16 %v532, %v528
  %v693 = vpack.c.b16 %v533, %v529
  %v694 = vpack.c.b16 %v534, %v530
  %v695 = vpack.c.b16 %v539, %v535
  %v696 = vpack.c.b16 %v540, %v536
  %v697 = vpack.c.b16 %v541, %v537
  %v698 = vpack.c.b16 %v542, %v538
  %v699 = vpack.c.b16 %v547, %v543
  %v700 = vpack.c.b16 %v548, %v544
  %v701 = vpack.c.b16 %v549, %v545
  %v702 = vpack.c.b16 %v550, %v546
  %v703 = vpack.c.b16 %v555, %v551
  %v704 = vpack.c.b16 %v556, %v552
  %v705 = vpack.c.b16 %v557, %v553
  %v706 = vpack.c.b16 %v558, %v554
  %v707 = vpack.c.b16 %v563, %v559
  %v708 = vpack.c.b16 %v564, %v560
  %v709 = vpack.c.b16 %v565, %v561
  %v710 = vpack.c.b16 %v566, %v562
  %v711 = vpack.c.b16 %v571, %v567
  %v712 = vpack.c.b16 %v572, %v568
  %v713 = vpack.c.b16 %v573, %v569
  %v714 = vpack.c.b16 %v574, %v570
  %v715 = vpack.c.b16 %v579, %v575
  %v716 = vpack.c.b16 %v580, %v576
  %v717 = vpack.c.b16 %v581, %v577
  %v718 = vpack.c.b16 %v582, %v578
  %v719 = vpack.c.b16 %v587, %v583
  %v720 = vpack.c.b16 %v588, %v584
  %v721 = vpack.c.b16 %v589, %v585
  %v722 = vpack.c.b16 %v590, %v586
  %v723 = vpack.c.b16 %v595, %v591
  %v724 = vpack.c.b16 %v596, %v592
  %v725 = vpack.c.b16 %v597, %v593
  %v726 = vpack.c.b16 %v598, %v594
  %v886 = vunpack.c.l.b16 %v145
  %v887 = vunpack.c.l.b16 %v146
  %v888 = vunpack.c.l.b16 %v147
  %v889 = vunpack.c.l.b16 %v148
  %v890 = vunpack.c.l.b16 %v149
  %v891 = vunpack.c.l.b16 %v150
  %v892 = vunpack.c.l.b16 %v151
  %v893 = vunpack.c.l.b16 %v152
  %v894 = vunpack.c.l.b16 %v153
  %v895 = vunpack.c.l.b16 %v154
  %v896 = vunpack.c.l.b16 %v155
  %v897 = vunpack.c.l.b16 %v156
  %v898 = vunpack.c.l.b16 %v157
  %v899 = vunpack.c.l.b16 %v158
  %v900 = vunpack.c.l.b16 %v159
  %v901 = vunpack.c.l.b16 %v160
  %v902 = vunpack.c.l.b16 %v161
  %v903 = vunpack.c.l.b16 %v162
  %v904 = vunpack.c.l.b16 %v163
  %v905 = vunpack.c.l.b16 %v164
  %v906 = vunpack.c.l.b16 %v165
  %v907 = vunpack.c.l.b16 %v166
  %v908 = vunpack.c.l.b16 %v167
  %v909 = vunpack.c.l.b16 %v168
  %v910 = vunpack.c.l.b16 %v169
  %v911 = vunpack.c.l.b16 %v170
  %v912 = vunpack.c.l.b16 %v171
  %v913 = vunpack.c.l.b16 %v172
  %v914 = vunpack.c.l.b16 %v173
  %v915 = vunpack.c.l.b16 %v174
  %v916 = vunpack.c.l.b16 %v175
  %v917 = vunpack.c.l.b16 %v176
  %v918 = vunpack.c.l.b16 %v177
  %v919 = vunpack.c.l.b16 %v178
  %v920 = vunpack.c.l.b16 %v179
  %v921 = vunpack.c.l.b16 %v180
  %v922 = vunpack.c.l.b16 %v181
  %v923 = vunpack.c.l.b16 %v182
  %v924 = vunpack.c.l.b16 %v183
  %v925 = vunpack.c.l.b16 %v184
  %v926 = vunpack.c.l.b16 %v185
  %v927 = vunpack.c.l.b16 %v186
  %v928 = vunpack.c.l.b16 %v187
  %v929 = vunpack.c.l.b16 %v188
  %v930 = vunpack.c.l.b16 %v189
  %v931 = vunpack.c.l.b16 %v190
  %v932 = vunpack.c.l.b16 %v191
  %v933 = vunpack.c.l.b16 %v192
  %v934 = vunpack.c.l.b16 %v193
  %v935 = vunpack.c.l.b16 %v194
  %v936 = vunpack.c.l.b16 %v195
  %v937 = vunpack.c.l.b16 %v196
  %v938 = vunpack.c.l.b16 %v197
  %v939 = vunpack.c.l.b16 %v198
  %v940 = vunpack.c.l.b16 %v199
  %v941 = vunpack.c.l.b16 %v200
  %v942 = vunpack.c.l.b16 %v201
  %v943 = vunpack.c.l.b16 %v202
  %v944 = vunpack.c.l.b16 %v203
  %v945 = vunpack.c.l.b16 %v204
  %v946 = vunpack.c.l.b16 %v205
  %v947 = vunpack.c.l.b16 %v206
  %v948 = vunpack.c.l.b16 %v207
  %v949 = vpack.c.b16 %v887, %v886
  %v950 = vpack.c.b16 %v889, %v888
  %v951 = vpack.c.b16 %v891, %v890
  %v952 = vpack.c.b16 %v893, %v892
  %v953 = vpack.c.b16 %v895, %v894
  %v954 = vpack.c.b16 %v897, %v896
  %v955 = vpack.c.b16 %v899, %v898
  %v956 = vpack.c.b16 %v901, %v900
  %v957 = vpack.c.b16 %v903, %v902
  %v958 = vpack.c.b16 %v905, %v904
  %v959 = vpack.c.b16 %v907, %v906
  %v960 = vpack.c.b16 %v909, %v908
  %v961 = vpack.c.b16 %v911, %v910
  %v962 = vpack.c.b16 %v913, %v912
  %v963 = vpack.c.b16 %v915, %v914
  %v964 = vpack.c.b16 %v917, %v916
  %v965 = vpack.c.b16 %v919, %v918
  %v966 = vpack.c.b16 %v921, %v920
  %v967 = vpack.c.b16 %v923, %v922
  %v968 = vpack.c.b16 %v925, %v924
  %v969 = vpack.c.b16 %v927, %v926
  %v970 = vpack.c.b16 %v929, %v928
  %v971 = vpack.c.b16 %v931, %v930
  %v972 = vpack.c.b16 %v933, %v932
  %v973 = vpack.c.b16 %v935, %v934
  %v974 = vpack.c.b16 %v937, %v936
  %v975 = vpack.c.b16 %v939, %v938
  %v976 = vpack.c.b16 %v941, %v940
  %v977 = vpack.c.b16 %v943, %v942
  %v978 = vpack.c.b16 %v945, %v944
  %v979 = vpack.c.b16 %v947, %v946
  %v980 = vpack.c.b16 %v948, %v948
  %vm1012 = vcmask 949248
  %v1014 = vsel %vm1012, %v602, 0
  %v1017 = vsel %vm1012, %v606, 0
  %v1020 = vsel %vm1012, %v610, 0
  %v1023 = vsel %vm1012, %v614, 0
  %v1026 = vsel %vm1012, %v618, 0
  %v1029 = vsel %vm1012, %v622, 0
  %v1032 = vsel %vm1012, %v626, 0
  %v1035 = vsel %vm1012, %v630, 0
  %v1038 = vsel %vm1012, %v634, 0
  %v1041 = vsel %vm1012, %v638, 0
  %v1044 = vsel %vm1012, %v642, 0
  %v1047 = vsel %vm1012, %v646, 0
  %v1050 = vsel %vm1012, %v650, 0
  %v1053 = vsel %vm1012, %v654, 0
  %v1056 = vsel %vm1012, %v658, 0
  %v1059 = vsel %vm1012, %v662, 0
  %v1062 = vsel %vm1012, %v666, 0
  %v1065 = vsel %vm1012, %v670, 0
  %v1068 = vsel %vm1012, %v674, 0
  %v1071 = vsel %vm1012, %v678, 0
  %v1074 = vsel %vm1012, %v682, 0
  %v1077 = vsel %vm1012, %v686, 0
  %v1080 = vsel %vm1012, %v690, 0
  %v1083 = vsel %vm1012, %v694, 0
  %v1086 = vsel %vm1012, %v698, 0
  %v1089 = vsel %vm1012, %v702, 0
  %v1092 = vsel %vm1012, %v706, 0
  %v1095 = vsel %vm1012, %v710, 0
  %v1098 = vsel %vm1012, %v714, 0
  %v1101 = vsel %vm1012, %v718, 0
  %v1104 = vsel %vm1012, %v722, 0
  %v1107 = vsel %vm1012, %v726, 0
  %vm1109 = vcmask 1041408
  %v1111 = vsel %vm1109, %v980, 0
  %1113 = vmatprep.subr.bf16.mxu0 0
  %1114 = vmatpush1.bf16.msra.mxu0 %v956
  %1115 = vmatprep.subr.bf16.mxu0 0
  %1116 = vmatpush1.bf16.msra.mxu0 %v955
  %1117 = vmatprep.subr.bf16.mxu0 0
  %1118 = vmatpush1.bf16.msra.mxu0 %v954
  %1119 = vmatprep.subr.bf16.mxu0 0
  %1120 = vmatpush1.bf16.msra.mxu0 %v953
  %1121 = vmatprep.subr.bf16.mxu0 0
  %1122 = vmatpush1.bf16.msra.mxu0 %v952
  %1123 = vmatprep.subr.bf16.mxu0 0
  %1124 = vmatpush1.bf16.msra.mxu0 %v951
  %1125 = vmatprep.subr.bf16.mxu0 0
  %1126 = vmatpush1.bf16.msra.mxu0 %v950
  %1127 = vmatprep.subr.bf16.mxu0 0
  %1128 = vmatpush1.bf16.msra.mxu0 %v949
  %1129 = vmatprep.subr.bf16.mxu0 0
  %1130 = vmatpush2.bf16.msra.mxu0 %v964
  %1131 = vmatprep.subr.bf16.mxu0 0
  %1132 = vmatpush2.bf16.msra.mxu0 %v963
  %1133 = vmatprep.subr.bf16.mxu0 0
  %1134 = vmatpush2.bf16.msra.mxu0 %v962
  %1135 = vmatprep.subr.bf16.mxu0 0
  %1136 = vmatpush2.bf16.msra.mxu0 %v961
  %1137 = vmatprep.subr.bf16.mxu0 0
  %1138 = vmatpush2.bf16.msra.mxu0 %v960
  %1139 = vmatprep.subr.bf16.mxu0 0
  %1140 = vmatpush2.bf16.msra.mxu0 %v959
  %1141 = vmatprep.subr.bf16.mxu0 0
  %1142 = vmatpush2.bf16.msra.mxu0 %v958
  %1143 = vmatprep.subr.bf16.mxu0 0
  %1144 = vmatpush2.bf16.msra.mxu0 %v957
  %1145 = vmatprep.mubr.bf16.mxu0 %v600
  %1146 = vmatmul.mubr.bf16.gmra.mxu0 %v599
  %v1147 = vpop.f32.mrf.mxu0
  %v1148 = vadd.f32 %v213, %v1147
  %v1149 = vpop.f32.mrf.mxu0
  %v1150 = vpop.f32.mrf.mxu0
  %v1151 = vadd.f32 %v213, %v1150
  %v1152 = vpop.f32.mrf.mxu0
  %1153 = vmatprep.mubr.bf16.mxu0 %v604
  %1154 = vmatmul.mubr.bf16.gmra.mxu0 %v603
  %v1155 = vpop.f32.mrf.mxu0
  %v1156 = vadd.f32 %v213, %v1155
  %v1157 = vpop.f32.mrf.mxu0
  %v1158 = vpop.f32.mrf.mxu0
  %v1159 = vadd.f32 %v213, %v1158
  %v1160 = vpop.f32.mrf.mxu0
  %1161 = vmatprep.mubr.bf16.mxu0 %v608
  %1162 = vmatmul.mubr.bf16.gmra.mxu0 %v607
  %v1163 = vpop.f32.mrf.mxu0
  %v1164 = vadd.f32 %v213, %v1163
  %v1165 = vpop.f32.mrf.mxu0
  %v1166 = vpop.f32.mrf.mxu0
  %v1167 = vadd.f32 %v213, %v1166
  %v1168 = vpop.f32.mrf.mxu0
  %1169 = vmatprep.mubr.bf16.mxu0 %v612
  %1170 = vmatmul.mubr.bf16.gmra.mxu0 %v611
  %v1171 = vpop.f32.mrf.mxu0
  %v1172 = vadd.f32 %v213, %v1171
  %v1173 = vpop.f32.mrf.mxu0
  %v1174 = vpop.f32.mrf.mxu0
  %v1175 = vadd.f32 %v213, %v1174
  %v1176 = vpop.f32.mrf.mxu0
  %1177 = vmatprep.mubr.bf16.mxu0 %v616
  %1178 = vmatmul.mubr.bf16.gmra.mxu0 %v615
  %v1179 = vpop.f32.mrf.mxu0
  %v1180 = vadd.f32 %v213, %v1179
  %v1181 = vpop.f32.mrf.mxu0
  %v1182 = vpop.f32.mrf.mxu0
  %v1183 = vadd.f32 %v213, %v1182
  %v1184 = vpop.f32.mrf.mxu0
  %1185 = vmatprep.mubr.bf16.mxu0 %v620
  %1186 = vmatmul.mubr.bf16.gmra.mxu0 %v619
  %v1187 = vpop.f32.mrf.mxu0
  %v1188 = vadd.f32 %v213, %v1187
  %v1189 = vpop.f32.mrf.mxu0
  %v1190 = vpop.f32.mrf.mxu0
  %v1191 = vadd.f32 %v213, %v1190
  %v1192 = vpop.f32.mrf.mxu0
  %1193 = vmatprep.mubr.bf16.mxu0 %v624
  %1194 = vmatmul.mubr.bf16.gmra.mxu0 %v623
  %v1195 = vpop.f32.mrf.mxu0
  %v1196 = vadd.f32 %v213, %v1195
  %v1197 = vpop.f32.mrf.mxu0
  %v1198 = vpop.f32.mrf.mxu0
  %v1199 = vadd.f32 %v213, %v1198
  %v1200 = vpop.f32.mrf.mxu0
  %1201 = vmatprep.mubr.bf16.mxu0 %v628
  %1202 = vmatmul.mubr.bf16.gmra.mxu0 %v627
  %v1203 = vpop.f32.mrf.mxu0
  %v1204 = vadd.f32 %v213, %v1203
  %v1205 = vpop.f32.mrf.mxu0
  %v1206 = vpop.f32.mrf.mxu0
  %v1207 = vadd.f32 %v213, %v1206
  %v1208 = vpop.f32.mrf.mxu0
  %1209 = vmatprep.mubr.bf16.mxu0 %v632
  %1210 = vmatmul.mubr.bf16.gmra.mxu0 %v631
  %v1211 = vpop.f32.mrf.mxu0
  %v1212 = vadd.f32 %v213, %v1211
  %v1213 = vpop.f32.mrf.mxu0
  %v1214 = vpop.f32.mrf.mxu0
  %v1215 = vadd.f32 %v213, %v1214
  %v1216 = vpop.f32.mrf.mxu0
  %1217 = vmatprep.mubr.bf16.mxu0 %v636
  %1218 = vmatmul.mubr.bf16.gmra.mxu0 %v635
  %v1219 = vpop.f32.mrf.mxu0
  %v1220 = vadd.f32 %v213, %v1219
  %v1221 = vpop.f32.mrf.mxu0
  %v1222 = vpop.f32.mrf.mxu0
  %v1223 = vadd.f32 %v213, %v1222
  %v1224 = vpop.f32.mrf.mxu0
  %1225 = vmatprep.mubr.bf16.mxu0 %v640
  %1226 = vmatmul.mubr.bf16.gmra.mxu0 %v639
  %v1227 = vpop.f32.mrf.mxu0
  %v1228 = vadd.f32 %v213, %v1227
  %v1229 = vpop.f32.mrf.mxu0
  %v1230 = vpop.f32.mrf.mxu0
  %v1231 = vadd.f32 %v213, %v1230
  %v1232 = vpop.f32.mrf.mxu0
  %1233 = vmatprep.mubr.bf16.mxu0 %v644
  %1234 = vmatmul.mubr.bf16.gmra.mxu0 %v643
  %v1235 = vpop.f32.mrf.mxu0
  %v1236 = vadd.f32 %v213, %v1235
  %v1237 = vpop.f32.mrf.mxu0
  %v1238 = vpop.f32.mrf.mxu0
  %v1239 = vadd.f32 %v213, %v1238
  %v1240 = vpop.f32.mrf.mxu0
  %1241 = vmatprep.mubr.bf16.mxu0 %v648
  %1242 = vmatmul.mubr.bf16.gmra.mxu0 %v647
  %v1243 = vpop.f32.mrf.mxu0
  %v1244 = vadd.f32 %v213, %v1243
  %v1245 = vpop.f32.mrf.mxu0
  %v1246 = vpop.f32.mrf.mxu0
  %v1247 = vadd.f32 %v213, %v1246
  %v1248 = vpop.f32.mrf.mxu0
  %1249 = vmatprep.mubr.bf16.mxu0 %v652
  %1250 = vmatmul.mubr.bf16.gmra.mxu0 %v651
  %v1251 = vpop.f32.mrf.mxu0
  %v1252 = vadd.f32 %v213, %v1251
  %v1253 = vpop.f32.mrf.mxu0
  %v1254 = vpop.f32.mrf.mxu0
  %v1255 = vadd.f32 %v213, %v1254
  %v1256 = vpop.f32.mrf.mxu0
  %1257 = vmatprep.mubr.bf16.mxu0 %v656
  %1258 = vmatmul.mubr.bf16.gmra.mxu0 %v655
  %v1259 = vpop.f32.mrf.mxu0
  %v1260 = vadd.f32 %v213, %v1259
  %v1261 = vpop.f32.mrf.mxu0
  %v1262 = vpop.f32.mrf.mxu0
  %v1263 = vadd.f32 %v213, %v1262
  %v1264 = vpop.f32.mrf.mxu0
  %1265 = vmatprep.mubr.bf16.mxu0 %v660
  %1266 = vmatmul.mubr.bf16.gmra.mxu0 %v659
  %v1267 = vpop.f32.mrf.mxu0
  %v1268 = vadd.f32 %v213, %v1267
  %v1269 = vpop.f32.mrf.mxu0
  %v1270 = vpop.f32.mrf.mxu0
  %v1271 = vadd.f32 %v213, %v1270
  %v1272 = vpop.f32.mrf.mxu0
  %1273 = vmatprep.mubr.bf16.mxu0 %v664
  %1274 = vmatmul.mubr.bf16.gmra.mxu0 %v663
  %v1275 = vpop.f32.mrf.mxu0
  %v1276 = vadd.f32 %v213, %v1275
  %v1277 = vpop.f32.mrf.mxu0
  %v1278 = vpop.f32.mrf.mxu0
  %v1279 = vadd.f32 %v213, %v1278
  %v1280 = vpop.f32.mrf.mxu0
  %1281 = vmatprep.mubr.bf16.mxu0 %v668
  %1282 = vmatmul.mubr.bf16.gmra.mxu0 %v667
  %v1283 = vpop.f32.mrf.mxu0
  %v1284 = vadd.f32 %v213, %v1283
  %v1285 = vpop.f32.mrf.mxu0
  %v1286 = vpop.f32.mrf.mxu0
  %v1287 = vadd.f32 %v213, %v1286
  %v1288 = vpop.f32.mrf.mxu0
  %1289 = vmatprep.mubr.bf16.mxu0 %v672
  %1290 = vmatmul.mubr.bf16.gmra.mxu0 %v671
  %v1291 = vpop.f32.mrf.mxu0
  %v1292 = vadd.f32 %v213, %v1291
  %v1293 = vpop.f32.mrf.mxu0
  %v1294 = vpop.f32.mrf.mxu0
  %v1295 = vadd.f32 %v213, %v1294
  %v1296 = vpop.f32.mrf.mxu0
  %1297 = vmatprep.mubr.bf16.mxu0 %v676
  %1298 = vmatmul.mubr.bf16.gmra.mxu0 %v675
  %v1299 = vpop.f32.mrf.mxu0
  %v1300 = vadd.f32 %v213, %v1299
  %v1301 = vpop.f32.mrf.mxu0
  %v1302 = vpop.f32.mrf.mxu0
  %v1303 = vadd.f32 %v213, %v1302
  %v1304 = vpop.f32.mrf.mxu0
  %1305 = vmatprep.mubr.bf16.mxu0 %v680
  %1306 = vmatmul.mubr.bf16.gmra.mxu0 %v679
  %v1307 = vpop.f32.mrf.mxu0
  %v1308 = vadd.f32 %v213, %v1307
  %v1309 = vpop.f32.mrf.mxu0
  %v1310 = vpop.f32.mrf.mxu0
  %v1311 = vadd.f32 %v213, %v1310
  %v1312 = vpop.f32.mrf.mxu0
  %1313 = vmatprep.mubr.bf16.mxu0 %v684
  %1314 = vmatmul.mubr.bf16.gmra.mxu0 %v683
  %v1315 = vpop.f32.mrf.mxu0
  %v1316 = vadd.f32 %v213, %v1315
  %v1317 = vpop.f32.mrf.mxu0
  %v1318 = vpop.f32.mrf.mxu0
  %v1319 = vadd.f32 %v213, %v1318
  %v1320 = vpop.f32.mrf.mxu0
  %1321 = vmatprep.mubr.bf16.mxu0 %v688
  %1322 = vmatmul.mubr.bf16.gmra.mxu0 %v687
  %v1323 = vpop.f32.mrf.mxu0
  %v1324 = vadd.f32 %v213, %v1323
  %v1325 = vpop.f32.mrf.mxu0
  %v1326 = vpop.f32.mrf.mxu0
  %v1327 = vadd.f32 %v213, %v1326
  %v1328 = vpop.f32.mrf.mxu0
  %1329 = vmatprep.mubr.bf16.mxu0 %v692
  %1330 = vmatmul.mubr.bf16.gmra.mxu0 %v691
  %v1331 = vpop.f32.mrf.mxu0
  %v1332 = vadd.f32 %v213, %v1331
  %v1333 = vpop.f32.mrf.mxu0
  %v1334 = vpop.f32.mrf.mxu0
  %v1335 = vadd.f32 %v213, %v1334
  %v1336 = vpop.f32.mrf.mxu0
  %1337 = vmatprep.mubr.bf16.mxu0 %v696
  %1338 = vmatmul.mubr.bf16.gmra.mxu0 %v695
  %v1339 = vpop.f32.mrf.mxu0
  %v1340 = vadd.f32 %v213, %v1339
  %v1341 = vpop.f32.mrf.mxu0
  %v1342 = vpop.f32.mrf.mxu0
  %v1343 = vadd.f32 %v213, %v1342
  %v1344 = vpop.f32.mrf.mxu0
  %1345 = vmatprep.mubr.bf16.mxu0 %v700
  %1346 = vmatmul.mubr.bf16.gmra.mxu0 %v699
  %v1347 = vpop.f32.mrf.mxu0
  %v1348 = vadd.f32 %v213, %v1347
  %v1349 = vpop.f32.mrf.mxu0
  %v1350 = vpop.f32.mrf.mxu0
  %v1351 = vadd.f32 %v213, %v1350
  %v1352 = vpop.f32.mrf.mxu0
  %1353 = vmatprep.mubr.bf16.mxu0 %v704
  %1354 = vmatmul.mubr.bf16.gmra.mxu0 %v703
  %v1355 = vpop.f32.mrf.mxu0
  %v1356 = vadd.f32 %v213, %v1355
  %v1357 = vpop.f32.mrf.mxu0
  %v1358 = vpop.f32.mrf.mxu0
  %v1359 = vadd.f32 %v213, %v1358
  %v1360 = vpop.f32.mrf.mxu0
  %1361 = vmatprep.mubr.bf16.mxu0 %v708
  %1362 = vmatmul.mubr.bf16.gmra.mxu0 %v707
  %v1363 = vpop.f32.mrf.mxu0
  %v1364 = vadd.f32 %v213, %v1363
  %v1365 = vpop.f32.mrf.mxu0
  %v1366 = vpop.f32.mrf.mxu0
  %v1367 = vadd.f32 %v213, %v1366
  %v1368 = vpop.f32.mrf.mxu0
  %1369 = vmatprep.mubr.bf16.mxu0 %v712
  %1370 = vmatmul.mubr.bf16.gmra.mxu0 %v711
  %v1371 = vpop.f32.mrf.mxu0
  %v1372 = vadd.f32 %v213, %v1371
  %v1373 = vpop.f32.mrf.mxu0
  %v1374 = vpop.f32.mrf.mxu0
  %v1375 = vadd.f32 %v213, %v1374
  %v1376 = vpop.f32.mrf.mxu0
  %1377 = vmatprep.mubr.bf16.mxu0 %v716
  %1378 = vmatmul.mubr.bf16.gmra.mxu0 %v715
  %v1379 = vpop.f32.mrf.mxu0
  %v1380 = vadd.f32 %v213, %v1379
  %v1381 = vpop.f32.mrf.mxu0
  %v1382 = vpop.f32.mrf.mxu0
  %v1383 = vadd.f32 %v213, %v1382
  %v1384 = vpop.f32.mrf.mxu0
  %1385 = vmatprep.mubr.bf16.mxu0 %v720
  %1386 = vmatmul.mubr.bf16.gmra.mxu0 %v719
  %v1387 = vpop.f32.mrf.mxu0
  %v1388 = vadd.f32 %v213, %v1387
  %v1389 = vpop.f32.mrf.mxu0
  %v1390 = vpop.f32.mrf.mxu0
  %v1391 = vadd.f32 %v213, %v1390
  %v1392 = vpop.f32.mrf.mxu0
  %1393 = vmatprep.mubr.bf16.mxu0 %v724
  %1394 = vmatmul.mubr.bf16.gmra.mxu0 %v723
  %v1395 = vpop.f32.mrf.mxu0
  %v1396 = vadd.f32 %v213, %v1395
  %v1397 = vpop.f32.mrf.mxu0
  %v1398 = vpop.f32.mrf.mxu0
  %v1399 = vadd.f32 %v213, %v1398
  %v1400 = vpop.f32.mrf.mxu0
  %1401 = vdwg.mxu0
  %1402 = vmatprep.subr.bf16.mxu0 0
  %1403 = vmatpush1.bf16.msra.mxu0 %v972
  %1404 = vmatprep.subr.bf16.mxu0 0
  %1405 = vmatpush1.bf16.msra.mxu0 %v971
  %1406 = vmatprep.subr.bf16.mxu0 0
  %1407 = vmatpush1.bf16.msra.mxu0 %v970
  %1408 = vmatprep.subr.bf16.mxu0 0
  %1409 = vmatpush1.bf16.msra.mxu0 %v969
  %1410 = vmatprep.subr.bf16.mxu0 0
  %1411 = vmatpush1.bf16.msra.mxu0 %v968
  %1412 = vmatprep.subr.bf16.mxu0 0
  %1413 = vmatpush1.bf16.msra.mxu0 %v967
  %1414 = vmatprep.subr.bf16.mxu0 0
  %1415 = vmatpush1.bf16.msra.mxu0 %v966
  %1416 = vmatprep.subr.bf16.mxu0 0
  %1417 = vmatpush1.bf16.msra.mxu0 %v965
  %1418 = vmatprep.subr.bf16.mxu0 0
  %1419 = vmatpush2.bf16.msra.mxu0 %v1111
  %1420 = vmatprep.subr.bf16.mxu0 0
  %1421 = vmatpush2.bf16.msra.mxu0 %v979
  %1422 = vmatprep.subr.bf16.mxu0 0
  %1423 = vmatpush2.bf16.msra.mxu0 %v978
  %1424 = vmatprep.subr.bf16.mxu0 0
  %1425 = vmatpush2.bf16.msra.mxu0 %v977
  %1426 = vmatprep.subr.bf16.mxu0 0
  %1427 = vmatpush2.bf16.msra.mxu0 %v976
  %1428 = vmatprep.subr.bf16.mxu0 0
  %1429 = vmatpush2.bf16.msra.mxu0 %v975
  %1430 = vmatprep.subr.bf16.mxu0 0
  %1431 = vmatpush2.bf16.msra.mxu0 %v974
  %1432 = vmatprep.subr.bf16.mxu0 0
  %1433 = vmatpush2.bf16.msra.mxu0 %v973
  %1434 = vmatprep.mubr.bf16.mxu0 %v1014
  %1435 = vmatmul.mubr.bf16.gmra.mxu0 %v601
  %v1436 = vpop.f32.mrf.mxu0
  %v1437 = vadd.f32 %v1148, %v1436
  %v1438 = vpop.f32.mrf.mxu0
  %v1439 = vpop.f32.mrf.mxu0
  %v1440 = vadd.f32 %v1151, %v1439
  %v1441 = vpop.f32.mrf.mxu0
  %1442 = vmatprep.mubr.bf16.mxu0 %v1017
  %1443 = vmatmul.mubr.bf16.gmra.mxu0 %v605
  %v1444 = vpop.f32.mrf.mxu0
  %v1445 = vadd.f32 %v1156, %v1444
  %v1446 = vpop.f32.mrf.mxu0
  %v1447 = vpop.f32.mrf.mxu0
  %v1448 = vadd.f32 %v1159, %v1447
  %v1449 = vpop.f32.mrf.mxu0
  %1450 = vmatprep.mubr.bf16.mxu0 %v1020
  %1451 = vmatmul.mubr.bf16.gmra.mxu0 %v609
  %v1452 = vpop.f32.mrf.mxu0
  %v1453 = vadd.f32 %v1164, %v1452
  %v1454 = vpop.f32.mrf.mxu0
  %v1455 = vpop.f32.mrf.mxu0
  %v1456 = vadd.f32 %v1167, %v1455
  %v1457 = vpop.f32.mrf.mxu0
  %1458 = vmatprep.mubr.bf16.mxu0 %v1023
  %1459 = vmatmul.mubr.bf16.gmra.mxu0 %v613
  %v1460 = vpop.f32.mrf.mxu0
  %v1461 = vadd.f32 %v1172, %v1460
  %v1462 = vpop.f32.mrf.mxu0
  %v1463 = vpop.f32.mrf.mxu0
  %v1464 = vadd.f32 %v1175, %v1463
  %v1465 = vpop.f32.mrf.mxu0
  %1466 = vmatprep.mubr.bf16.mxu0 %v1026
  %1467 = vmatmul.mubr.bf16.gmra.mxu0 %v617
  %v1468 = vpop.f32.mrf.mxu0
  %v1469 = vadd.f32 %v1180, %v1468
  %v1470 = vpop.f32.mrf.mxu0
  %v1471 = vpop.f32.mrf.mxu0
  %v1472 = vadd.f32 %v1183, %v1471
  %v1473 = vpop.f32.mrf.mxu0
  %1474 = vmatprep.mubr.bf16.mxu0 %v1029
  %1475 = vmatmul.mubr.bf16.gmra.mxu0 %v621
  %v1476 = vpop.f32.mrf.mxu0
  %v1477 = vadd.f32 %v1188, %v1476
  %v1478 = vpop.f32.mrf.mxu0
  %v1479 = vpop.f32.mrf.mxu0
  %v1480 = vadd.f32 %v1191, %v1479
  %v1481 = vpop.f32.mrf.mxu0
  %1482 = vmatprep.mubr.bf16.mxu0 %v1032
  %1483 = vmatmul.mubr.bf16.gmra.mxu0 %v625
  %v1484 = vpop.f32.mrf.mxu0
  %v1485 = vadd.f32 %v1196, %v1484
  %v1486 = vpop.f32.mrf.mxu0
  %v1487 = vpop.f32.mrf.mxu0
  %v1488 = vadd.f32 %v1199, %v1487
  %v1489 = vpop.f32.mrf.mxu0
  %1490 = vmatprep.mubr.bf16.mxu0 %v1035
  %1491 = vmatmul.mubr.bf16.gmra.mxu0 %v629
  %v1492 = vpop.f32.mrf.mxu0
  %v1493 = vadd.f32 %v1204, %v1492
  %v1494 = vpop.f32.mrf.mxu0
  %v1495 = vpop.f32.mrf.mxu0
  %v1496 = vadd.f32 %v1207, %v1495
  %v1497 = vpop.f32.mrf.mxu0
  %1498 = vmatprep.mubr.bf16.mxu0 %v1038
  %1499 = vmatmul.mubr.bf16.gmra.mxu0 %v633
  %v1500 = vpop.f32.mrf.mxu0
  %v1501 = vadd.f32 %v1212, %v1500
  %v1502 = vpop.f32.mrf.mxu0
  %v1503 = vpop.f32.mrf.mxu0
  %v1504 = vadd.f32 %v1215, %v1503
  %v1505 = vpop.f32.mrf.mxu0
  %1506 = vmatprep.mubr.bf16.mxu0 %v1041
  %1507 = vmatmul.mubr.bf16.gmra.mxu0 %v637
  %v1508 = vpop.f32.mrf.mxu0
  %v1509 = vadd.f32 %v1220, %v1508
  %v1510 = vpop.f32.mrf.mxu0
  %v1511 = vpop.f32.mrf.mxu0
  %v1512 = vadd.f32 %v1223, %v1511
  %v1513 = vpop.f32.mrf.mxu0
  %1514 = vmatprep.mubr.bf16.mxu0 %v1044
  %1515 = vmatmul.mubr.bf16.gmra.mxu0 %v641
  %v1516 = vpop.f32.mrf.mxu0
  %v1517 = vadd.f32 %v1228, %v1516
  %v1518 = vpop.f32.mrf.mxu0
  %v1519 = vpop.f32.mrf.mxu0
  %v1520 = vadd.f32 %v1231, %v1519
  %v1521 = vpop.f32.mrf.mxu0
  %1522 = vmatprep.mubr.bf16.mxu0 %v1047
  %1523 = vmatmul.mubr.bf16.gmra.mxu0 %v645
  %v1524 = vpop.f32.mrf.mxu0
  %v1525 = vadd.f32 %v1236, %v1524
  %v1526 = vpop.f32.mrf.mxu0
  %v1527 = vpop.f32.mrf.mxu0
  %v1528 = vadd.f32 %v1239, %v1527
  %v1529 = vpop.f32.mrf.mxu0
  %1530 = vmatprep.mubr.bf16.mxu0 %v1050
  %1531 = vmatmul.mubr.bf16.gmra.mxu0 %v649
  %v1532 = vpop.f32.mrf.mxu0
  %v1533 = vadd.f32 %v1244, %v1532
  %v1534 = vpop.f32.mrf.mxu0
  %v1535 = vpop.f32.mrf.mxu0
  %v1536 = vadd.f32 %v1247, %v1535
  %v1537 = vpop.f32.mrf.mxu0
  %1538 = vmatprep.mubr.bf16.mxu0 %v1053
  %1539 = vmatmul.mubr.bf16.gmra.mxu0 %v653
  %v1540 = vpop.f32.mrf.mxu0
  %v1541 = vadd.f32 %v1252, %v1540
  %v1542 = vpop.f32.mrf.mxu0
  %v1543 = vpop.f32.mrf.mxu0
  %v1544 = vadd.f32 %v1255, %v1543
  %v1545 = vpop.f32.mrf.mxu0
  %1546 = vmatprep.mubr.bf16.mxu0 %v1056
  %1547 = vmatmul.mubr.bf16.gmra.mxu0 %v657
  %v1548 = vpop.f32.mrf.mxu0
  %v1549 = vadd.f32 %v1260, %v1548
  %v1550 = vpop.f32.mrf.mxu0
  %v1551 = vpop.f32.mrf.mxu0
  %v1552 = vadd.f32 %v1263, %v1551
  %v1553 = vpop.f32.mrf.mxu0
  %1554 = vmatprep.mubr.bf16.mxu0 %v1059
  %1555 = vmatmul.mubr.bf16.gmra.mxu0 %v661
  %v1556 = vpop.f32.mrf.mxu0
  %v1557 = vadd.f32 %v1268, %v1556
  %v1558 = vpop.f32.mrf.mxu0
  %v1559 = vpop.f32.mrf.mxu0
  %v1560 = vadd.f32 %v1271, %v1559
  %v1561 = vpop.f32.mrf.mxu0
  %1562 = vmatprep.mubr.bf16.mxu0 %v1062
  %1563 = vmatmul.mubr.bf16.gmra.mxu0 %v665
  %v1564 = vpop.f32.mrf.mxu0
  %v1565 = vadd.f32 %v1276, %v1564
  %v1566 = vpop.f32.mrf.mxu0
  %v1567 = vpop.f32.mrf.mxu0
  %v1568 = vadd.f32 %v1279, %v1567
  %v1569 = vpop.f32.mrf.mxu0
  %1570 = vmatprep.mubr.bf16.mxu0 %v1065
  %1571 = vmatmul.mubr.bf16.gmra.mxu0 %v669
  %v1572 = vpop.f32.mrf.mxu0
  %v1573 = vadd.f32 %v1284, %v1572
  %v1574 = vpop.f32.mrf.mxu0
  %v1575 = vpop.f32.mrf.mxu0
  %v1576 = vadd.f32 %v1287, %v1575
  %v1577 = vpop.f32.mrf.mxu0
  %1578 = vmatprep.mubr.bf16.mxu0 %v1068
  %1579 = vmatmul.mubr.bf16.gmra.mxu0 %v673
  %v1580 = vpop.f32.mrf.mxu0
  %v1581 = vadd.f32 %v1292, %v1580
  %v1582 = vpop.f32.mrf.mxu0
  %v1583 = vpop.f32.mrf.mxu0
  %v1584 = vadd.f32 %v1295, %v1583
  %v1585 = vpop.f32.mrf.mxu0
  %1586 = vmatprep.mubr.bf16.mxu0 %v1071
  %1587 = vmatmul.mubr.bf16.gmra.mxu0 %v677
  %v1588 = vpop.f32.mrf.mxu0
  %v1589 = vadd.f32 %v1300, %v1588
  %v1590 = vpop.f32.mrf.mxu0
  %v1591 = vpop.f32.mrf.mxu0
  %v1592 = vadd.f32 %v1303, %v1591
  %v1593 = vpop.f32.mrf.mxu0
  %1594 = vmatprep.mubr.bf16.mxu0 %v1074
  %1595 = vmatmul.mubr.bf16.gmra.mxu0 %v681
  %v1596 = vpop.f32.mrf.mxu0
  %v1597 = vadd.f32 %v1308, %v1596
  %v1598 = vpop.f32.mrf.mxu0
  %v1599 = vpop.f32.mrf.mxu0
  %v1600 = vadd.f32 %v1311, %v1599
  %v1601 = vpop.f32.mrf.mxu0
  %1602 = vmatprep.mubr.bf16.mxu0 %v1077
  %1603 = vmatmul.mubr.bf16.gmra.mxu0 %v685
  %v1604 = vpop.f32.mrf.mxu0
  %v1605 = vadd.f32 %v1316, %v1604
  %v1606 = vpop.f32.mrf.mxu0
  %v1607 = vpop.f32.mrf.mxu0
  %v1608 = vadd.f32 %v1319, %v1607
  %v1609 = vpop.f32.mrf.mxu0
  %1610 = vmatprep.mubr.bf16.mxu0 %v1080
  %1611 = vmatmul.mubr.bf16.gmra.mxu0 %v689
  %v1612 = vpop.f32.mrf.mxu0
  %v1613 = vadd.f32 %v1324, %v1612
  %v1614 = vpop.f32.mrf.mxu0
  %v1615 = vpop.f32.mrf.mxu0
  %v1616 = vadd.f32 %v1327, %v1615
  %v1617 = vpop.f32.mrf.mxu0
  %1618 = vmatprep.mubr.bf16.mxu0 %v1083
  %1619 = vmatmul.mubr.bf16.gmra.mxu0 %v693
  %v1620 = vpop.f32.mrf.mxu0
  %v1621 = vadd.f32 %v1332, %v1620
  %v1622 = vpop.f32.mrf.mxu0
  %v1623 = vpop.f32.mrf.mxu0
  %v1624 = vadd.f32 %v1335, %v1623
  %v1625 = vpop.f32.mrf.mxu0
  %1626 = vmatprep.mubr.bf16.mxu0 %v1086
  %1627 = vmatmul.mubr.bf16.gmra.mxu0 %v697
  %v1628 = vpop.f32.mrf.mxu0
  %v1629 = vadd.f32 %v1340, %v1628
  %v1630 = vpop.f32.mrf.mxu0
  %v1631 = vpop.f32.mrf.mxu0
  %v1632 = vadd.f32 %v1343, %v1631
  %v1633 = vpop.f32.mrf.mxu0
  %1634 = vmatprep.mubr.bf16.mxu0 %v1089
  %1635 = vmatmul.mubr.bf16.gmra.mxu0 %v701
  %v1636 = vpop.f32.mrf.mxu0
  %v1637 = vadd.f32 %v1348, %v1636
  %v1638 = vpop.f32.mrf.mxu0
  %v1639 = vpop.f32.mrf.mxu0
  %v1640 = vadd.f32 %v1351, %v1639
  %v1641 = vpop.f32.mrf.mxu0
  %1642 = vmatprep.mubr.bf16.mxu0 %v1092
  %1643 = vmatmul.mubr.bf16.gmra.mxu0 %v705
  %v1644 = vpop.f32.mrf.mxu0
  %v1645 = vadd.f32 %v1356, %v1644
  %v1646 = vpop.f32.mrf.mxu0
  %v1647 = vpop.f32.mrf.mxu0
  %v1648 = vadd.f32 %v1359, %v1647
  %v1649 = vpop.f32.mrf.mxu0
  %1650 = vmatprep.mubr.bf16.mxu0 %v1095
  %1651 = vmatmul.mubr.bf16.gmra.mxu0 %v709
  %v1652 = vpop.f32.mrf.mxu0
  %v1653 = vadd.f32 %v1364, %v1652
  %v1654 = vpop.f32.mrf.mxu0
  %v1655 = vpop.f32.mrf.mxu0
  %v1656 = vadd.f32 %v1367, %v1655
  %v1657 = vpop.f32.mrf.mxu0
  %1658 = vmatprep.mubr.bf16.mxu0 %v1098
  %1659 = vmatmul.mubr.bf16.gmra.mxu0 %v713
  %v1660 = vpop.f32.mrf.mxu0
  %v1661 = vadd.f32 %v1372, %v1660
  %v1662 = vpop.f32.mrf.mxu0
  %v1663 = vpop.f32.mrf.mxu0
  %v1664 = vadd.f32 %v1375, %v1663
  %v1665 = vpop.f32.mrf.mxu0
  %1666 = vmatprep.mubr.bf16.mxu0 %v1101
  %1667 = vmatmul.mubr.bf16.gmra.mxu0 %v717
  %v1668 = vpop.f32.mrf.mxu0
  %v1669 = vadd.f32 %v1380, %v1668
  %v1670 = vpop.f32.mrf.mxu0
  %v1671 = vpop.f32.mrf.mxu0
  %v1672 = vadd.f32 %v1383, %v1671
  %v1673 = vpop.f32.mrf.mxu0
  %1674 = vmatprep.mubr.bf16.mxu0 %v1104
  %1675 = vmatmul.mubr.bf16.gmra.mxu0 %v721
  %v1676 = vpop.f32.mrf.mxu0
  %v1677 = vadd.f32 %v1388, %v1676
  %v1678 = vpop.f32.mrf.mxu0
  %v1679 = vpop.f32.mrf.mxu0
  %v1680 = vadd.f32 %v1391, %v1679
  %v1681 = vpop.f32.mrf.mxu0
  %1682 = vmatprep.mubr.bf16.mxu0 %v1107
  %1683 = vmatmul.mubr.bf16.gmra.mxu0 %v725
  %v1684 = vpop.f32.mrf.mxu0
  %v1685 = vadd.f32 %v1396, %v1684
  %v1686 = vpop.f32.mrf.mxu0
  %v1687 = vpop.f32.mrf.mxu0
  %v1688 = vadd.f32 %v1399, %v1687
  %v1689 = vpop.f32.mrf.mxu0
  %1690 = vdwg.mxu0
  %1691 = vst [vmem:[%s3] sm:$0xff] %v1437
  %1692 = vst [vmem:[%s3 + $0x8] sm:$0xff] %v1440
  %1693 = vst [vmem:[%s3 + $0x10] sm:$0xff] %v1445
  %1694 = vst [vmem:[%s3 + $0x18] sm:$0xff] %v1448
  %1695 = vst [vmem:[%s3 + $0x20] sm:$0xff] %v1453
  %1696 = vst [vmem:[%s3 + $0x28] sm:$0xff] %v1456
  %1697 = vst [vmem:[%s3 + $0x30] sm:$0xff] %v1461
  %1698 = vst [vmem:[%s3 + $0x38] sm:$0xff] %v1464
  %1699 = vst [vmem:[%s3 + $0x40] sm:$0xff] %v1469
  %1700 = vst [vmem:[%s3 + $0x48] sm:$0xff] %v1472
  %1701 = vst [vmem:[%s3 + $0x50] sm:$0xff] %v1477
  %1702 = vst [vmem:[%s3 + $0x58] sm:$0xff] %v1480
  %1703 = vst [vmem:[%s3 + $0x60] sm:$0xff] %v1485
  %1704 = vst [vmem:[%s3 + $0x68] sm:$0xff] %v1488
  %1705 = vst [vmem:[%s3 + $0x70] sm:$0xff] %v1493
  %1706 = vst [vmem:[%s3 + $0x78] sm:$0xff] %v1496
  %1707 = vst [vmem:[%s3 + $0x80] sm:$0xff] %v1501
  %1708 = vst [vmem:[%s3 + $0x88] sm:$0xff] %v1504
  %1709 = vst [vmem:[%s3 + $0x90] sm:$0xff] %v1509
  %1710 = vst [vmem:[%s3 + $0x98] sm:$0xff] %v1512
  %1711 = vst [vmem:[%s3 + $0xa0] sm:$0xff] %v1517
  %1712 = vst [vmem:[%s3 + $0xa8] sm:$0xff] %v1520
  %1713 = vst [vmem:[%s3 + $0xb0] sm:$0xff] %v1525
  %1714 = vst [vmem:[%s3 + $0xb8] sm:$0xff] %v1528
  %1715 = vst [vmem:[%s3 + $0xc0] sm:$0xff] %v1533
  %1716 = vst [vmem:[%s3 + $0xc8] sm:$0xff] %v1536
  %1717 = vst [vmem:[%s3 + $0xd0] sm:$0xff] %v1541
  %1718 = vst [vmem:[%s3 + $0xd8] sm:$0xff] %v1544
  %1719 = vst [vmem:[%s3 + $0xe0] sm:$0xff] %v1549
  %1720 = vst [vmem:[%s3 + $0xe8] sm:$0xff] %v1552
  %1721 = vst [vmem:[%s3 + $0xf0] sm:$0xff] %v1557
  %1722 = vst [vmem:[%s3 + $0xf8] sm:$0xff] %v1560
  %1723 = vst [vmem:[%s3 + $0x100] sm:$0xff] %v1565
  %1724 = vst [vmem:[%s3 + $0x108] sm:$0xff] %v1568
  %1725 = vst [vmem:[%s3 + $0x110] sm:$0xff] %v1573
  %1726 = vst [vmem:[%s3 + $0x118] sm:$0xff] %v1576
  %1727 = vst [vmem:[%s3 + $0x120] sm:$0xff] %v1581
  %1728 = vst [vmem:[%s3 + $0x128] sm:$0xff] %v1584
  %1729 = vst [vmem:[%s3 + $0x130] sm:$0xff] %v1589
  %1730 = vst [vmem:[%s3 + $0x138] sm:$0xff] %v1592
  %1731 = vst [vmem:[%s3 + $0x140] sm:$0xff] %v1597
  %1732 = vst [vmem:[%s3 + $0x148] sm:$0xff] %v1600
  %1733 = vst [vmem:[%s3 + $0x150] sm:$0xff] %v1605
  %1734 = vst [vmem:[%s3 + $0x158] sm:$0xff] %v1608
  %1735 = vst [vmem:[%s3 + $0x160] sm:$0xff] %v1613
  %1736 = vst [vmem:[%s3 + $0x168] sm:$0xff] %v1616
  %1737 = vst [vmem:[%s3 + $0x170] sm:$0xff] %v1621
  %1738 = vst [vmem:[%s3 + $0x178] sm:$0xff] %v1624
  %1739 = vst [vmem:[%s3 + $0x180] sm:$0xff] %v1629
  %1740 = vst [vmem:[%s3 + $0x188] sm:$0xff] %v1632
  %1741 = vst [vmem:[%s3 + $0x190] sm:$0xff] %v1637
  %1742 = vst [vmem:[%s3 + $0x198] sm:$0xff] %v1640
  %1743 = vst [vmem:[%s3 + $0x1a0] sm:$0xff] %v1645
  %1744 = vst [vmem:[%s3 + $0x1a8] sm:$0xff] %v1648
  %1745 = vst [vmem:[%s3 + $0x1b0] sm:$0xff] %v1653
  %1746 = vst [vmem:[%s3 + $0x1b8] sm:$0xff] %v1656
  %1747 = vst [vmem:[%s3 + $0x1c0] sm:$0xff] %v1661
  %1748 = vst [vmem:[%s3 + $0x1c8] sm:$0xff] %v1664
  %1749 = vst [vmem:[%s3 + $0x1d0] sm:$0xff] %v1669
  %1750 = vst [vmem:[%s3 + $0x1d8] sm:$0xff] %v1672
  %1751 = vst [vmem:[%s3 + $0x1e0] sm:$0xff] %v1677
  %1752 = vst [vmem:[%s3 + $0x1e8] sm:$0xff] %v1680
  %1753 = vst [vmem:[%s3 + $0x1f0] sm:$0xff] %v1685
  %1754 = vst [vmem:[%s3 + $0x1f8] sm:$0xff] %v1688
  %v1755 = vadd.f32 %v1437, %v1440
  %v1756 = vadd.f32 %v1755, %v1445
  %v1757 = vadd.f32 %v1756, %v1448
  %v1758 = vadd.f32 %v1757, %v1453
  %v1759 = vadd.f32 %v1758, %v1456
  %v1760 = vadd.f32 %v1759, %v1461
  %v1761 = vadd.f32 %v1760, %v1464
  %v1762 = vadd.f32 %v1761, %v1469
  %v1763 = vadd.f32 %v1762, %v1472
  %v1764 = vadd.f32 %v1763, %v1477
  %v1765 = vadd.f32 %v1764, %v1480
  %v1766 = vadd.f32 %v1765, %v1485
  %v1767 = vadd.f32 %v1766, %v1488
  %v1768 = vadd.f32 %v1767, %v1493
  %v1769 = vadd.f32 %v1768, %v1496
  %v1770 = vadd.f32 %v1769, %v1501
  %v1771 = vadd.f32 %v1770, %v1504
  %v1772 = vadd.f32 %v1771, %v1509
  %v1773 = vadd.f32 %v1772, %v1512
  %v1774 = vadd.f32 %v1773, %v1517
  %v1775 = vadd.f32 %v1774, %v1520
  %v1776 = vadd.f32 %v1775, %v1525
  %v1777 = vadd.f32 %v1776, %v1528
  %v1778 = vadd.f32 %v1777, %v1533
  %v1779 = vadd.f32 %v1778, %v1536
  %v1780 = vadd.f32 %v1779, %v1541
  %v1781 = vadd.f32 %v1780, %v1544
  %v1782 = vadd.f32 %v1781, %v1549
  %v1783 = vadd.f32 %v1782, %v1552
  %v1784 = vadd.f32 %v1783, %v1557
  %v1785 = vadd.f32 %v1784, %v1560
  %v1786 = vadd.f32 %v1785, %v1565
  %v1787 = vadd.f32 %v1786, %v1568
  %v1788 = vadd.f32 %v1787, %v1573
  %v1789 = vadd.f32 %v1788, %v1576
  %v1790 = vadd.f32 %v1789, %v1581
  %v1791 = vadd.f32 %v1790, %v1584
  %v1792 = vadd.f32 %v1791, %v1589
  %v1793 = vadd.f32 %v1792, %v1592
  %v1794 = vadd.f32 %v1793, %v1597
  %v1795 = vadd.f32 %v1794, %v1600
  %v1796 = vadd.f32 %v1795, %v1605
  %v1797 = vadd.f32 %v1796, %v1608
  %v1798 = vadd.f32 %v1797, %v1613
  %v1799 = vadd.f32 %v1798, %v1616
  %v1800 = vadd.f32 %v1799, %v1621
  %v1801 = vadd.f32 %v1800, %v1624
  %v1802 = vadd.f32 %v1801, %v1629
  %v1803 = vadd.f32 %v1802, %v1632
  %v1804 = vadd.f32 %v1803, %v1637
  %v1805 = vadd.f32 %v1804, %v1640
  %v1806 = vadd.f32 %v1805, %v1645
  %v1807 = vadd.f32 %v1806, %v1648
  %v1808 = vadd.f32 %v1807, %v1653
  %v1809 = vadd.f32 %v1808, %v1656
  %v1810 = vadd.f32 %v1809, %v1661
  %v1811 = vadd.f32 %v1810, %v1664
  %v1812 = vadd.f32 %v1811, %v1669
  %v1813 = vadd.f32 %v1812, %v1672
  %v1814 = vadd.f32 %v1813, %v1677
  %v1815 = vadd.f32 %v1814, %v1680
  %v1816 = vadd.f32 %v1815, %v1685
  %v1817 = vadd.f32 %v1816, %v1688
  %v1818 = vrot.slane %v1817, 4
  %v1819 = vadd.f32 %v1817, %v1818
  %v1820 = vrot.slane %v1819, 2
  %v1821 = vadd.f32 %v1819, %v1820
  %v1822 = vrot.slane %v1821, 1
  %v1823 = vadd.f32 %v1821, %v1822
  %v1824 = vmul.f32 %v1437, %v1437
  %v1825 = vmul.f32 %v1440, %v1440
  %v1826 = vmul.f32 %v1445, %v1445
  %v1827 = vmul.f32 %v1448, %v1448
  %v1828 = vmul.f32 %v1453, %v1453
  %v1829 = vmul.f32 %v1456, %v1456
  %v1830 = vmul.f32 %v1461, %v1461
  %v1831 = vmul.f32 %v1464, %v1464
  %v1832 = vmul.f32 %v1469, %v1469
  %v1833 = vmul.f32 %v1472, %v1472
  %v1834 = vmul.f32 %v1477, %v1477
  %v1835 = vmul.f32 %v1480, %v1480
  %v1836 = vmul.f32 %v1485, %v1485
  %v1837 = vmul.f32 %v1488, %v1488
  %v1838 = vmul.f32 %v1493, %v1493
  %v1839 = vmul.f32 %v1496, %v1496
  %v1840 = vmul.f32 %v1501, %v1501
  %v1841 = vmul.f32 %v1504, %v1504
  %v1842 = vmul.f32 %v1509, %v1509
  %v1843 = vmul.f32 %v1512, %v1512
  %v1844 = vmul.f32 %v1517, %v1517
  %v1845 = vmul.f32 %v1520, %v1520
  %v1846 = vmul.f32 %v1525, %v1525
  %v1847 = vmul.f32 %v1528, %v1528
  %v1848 = vmul.f32 %v1533, %v1533
  %v1849 = vmul.f32 %v1536, %v1536
  %v1850 = vmul.f32 %v1541, %v1541
  %v1851 = vmul.f32 %v1544, %v1544
  %v1852 = vmul.f32 %v1549, %v1549
  %v1853 = vmul.f32 %v1552, %v1552
  %v1854 = vmul.f32 %v1557, %v1557
  %v1855 = vmul.f32 %v1560, %v1560
  %v1856 = vmul.f32 %v1565, %v1565
  %v1857 = vmul.f32 %v1568, %v1568
  %v1858 = vmul.f32 %v1573, %v1573
  %v1859 = vmul.f32 %v1576, %v1576
  %v1860 = vmul.f32 %v1581, %v1581
  %v1861 = vmul.f32 %v1584, %v1584
  %v1862 = vmul.f32 %v1589, %v1589
  %v1863 = vmul.f32 %v1592, %v1592
  %v1864 = vmul.f32 %v1597, %v1597
  %v1865 = vmul.f32 %v1600, %v1600
  %v1866 = vmul.f32 %v1605, %v1605
  %v1867 = vmul.f32 %v1608, %v1608
  %v1868 = vmul.f32 %v1613, %v1613
  %v1869 = vmul.f32 %v1616, %v1616
  %v1870 = vmul.f32 %v1621, %v1621
  %v1871 = vmul.f32 %v1624, %v1624
  %v1872 = vmul.f32 %v1629, %v1629
  %v1873 = vmul.f32 %v1632, %v1632
  %v1874 = vmul.f32 %v1637, %v1637
  %v1875 = vmul.f32 %v1640, %v1640
  %v1876 = vmul.f32 %v1645, %v1645
  %v1877 = vmul.f32 %v1648, %v1648
  %v1878 = vmul.f32 %v1653, %v1653
  %v1879 = vmul.f32 %v1656, %v1656
  %v1880 = vmul.f32 %v1661, %v1661
  %v1881 = vmul.f32 %v1664, %v1664
  %v1882 = vmul.f32 %v1669, %v1669
  %v1883 = vmul.f32 %v1672, %v1672
  %v1884 = vmul.f32 %v1677, %v1677
  %v1885 = vmul.f32 %v1680, %v1680
  %v1886 = vmul.f32 %v1685, %v1685
  %v1887 = vmul.f32 %v1688, %v1688
  %v1888 = vadd.f32 %v1824, %v1825
  %v1889 = vadd.f32 %v1888, %v1826
  %v1890 = vadd.f32 %v1889, %v1827
  %v1891 = vadd.f32 %v1890, %v1828
  %v1892 = vadd.f32 %v1891, %v1829
  %v1893 = vadd.f32 %v1892, %v1830
  %v1894 = vadd.f32 %v1893, %v1831
  %v1895 = vadd.f32 %v1894, %v1832
  %v1896 = vadd.f32 %v1895, %v1833
  %v1897 = vadd.f32 %v1896, %v1834
  %v1898 = vadd.f32 %v1897, %v1835
  %v1899 = vadd.f32 %v1898, %v1836
  %v1900 = vadd.f32 %v1899, %v1837
  %v1901 = vadd.f32 %v1900, %v1838
  %v1902 = vadd.f32 %v1901, %v1839
  %v1903 = vadd.f32 %v1902, %v1840
  %v1904 = vadd.f32 %v1903, %v1841
  %v1905 = vadd.f32 %v1904, %v1842
  %v1906 = vadd.f32 %v1905, %v1843
  %v1907 = vadd.f32 %v1906, %v1844
  %v1908 = vadd.f32 %v1907, %v1845
  %v1909 = vadd.f32 %v1908, %v1846
  %v1910 = vadd.f32 %v1909, %v1847
  %v1911 = vadd.f32 %v1910, %v1848
  %v1912 = vadd.f32 %v1911, %v1849
  %v1913 = vadd.f32 %v1912, %v1850
  %v1914 = vadd.f32 %v1913, %v1851
  %v1915 = vadd.f32 %v1914, %v1852
  %v1916 = vadd.f32 %v1915, %v1853
  %v1917 = vadd.f32 %v1916, %v1854
  %v1918 = vadd.f32 %v1917, %v1855
  %v1919 = vadd.f32 %v1918, %v1856
  %v1920 = vadd.f32 %v1919, %v1857
  %v1921 = vadd.f32 %v1920, %v1858
  %v1922 = vadd.f32 %v1921, %v1859
  %v1923 = vadd.f32 %v1922, %v1860
  %v1924 = vadd.f32 %v1923, %v1861
  %v1925 = vadd.f32 %v1924, %v1862
  %v1926 = vadd.f32 %v1925, %v1863
  %v1927 = vadd.f32 %v1926, %v1864
  %v1928 = vadd.f32 %v1927, %v1865
  %v1929 = vadd.f32 %v1928, %v1866
  %v1930 = vadd.f32 %v1929, %v1867
  %v1931 = vadd.f32 %v1930, %v1868
  %v1932 = vadd.f32 %v1931, %v1869
  %v1933 = vadd.f32 %v1932, %v1870
  %v1934 = vadd.f32 %v1933, %v1871
  %v1935 = vadd.f32 %v1934, %v1872
  %v1936 = vadd.f32 %v1935, %v1873
  %v1937 = vadd.f32 %v1936, %v1874
  %v1938 = vadd.f32 %v1937, %v1875
  %v1939 = vadd.f32 %v1938, %v1876
  %v1940 = vadd.f32 %v1939, %v1877
  %v1941 = vadd.f32 %v1940, %v1878
  %v1942 = vadd.f32 %v1941, %v1879
  %v1943 = vadd.f32 %v1942, %v1880
  %v1944 = vadd.f32 %v1943, %v1881
  %v1945 = vadd.f32 %v1944, %v1882
  %v1946 = vadd.f32 %v1945, %v1883
  %v1947 = vadd.f32 %v1946, %v1884
  %v1948 = vadd.f32 %v1947, %v1885
  %v1949 = vadd.f32 %v1948, %v1886
  %v1950 = vadd.f32 %v1949, %v1887
  %v1951 = vrot.slane %v1950, 4
  %v1952 = vadd.f32 %v1950, %v1951
  %v1953 = vrot.slane %v1952, 2
  %v1954 = vadd.f32 %v1952, %v1953
  %v1955 = vrot.slane %v1954, 1
  %v1956 = vadd.f32 %v1954, %v1955
  %vm1957 = vcmask 1040384
  %v1958 = vsel %vm1957, %v1823, %v1956
  %1959 = vst [vmem:[%s4] sm:$0x3] %v1958
  // Predicated region
  $region14: #{extractor_forward.8} parent=0 // pred_check
    _
  $region15: #{extractor_forward.8} parent=0 // pred_check_branch
    %1961 = sbr.rel (0) target = $region17
  $region16: #{extractor_forward.8} parent=0 // pred_region
    _
  $region17: #{extractor_forward.8} parent=0 // pred_fallthru
    _
  // Predicated region
  $region18: #{extractor_forward.8} parent=0 // pred_check
    _
  $region19: #{extractor_forward.8} parent=0 // pred_check_branch
    %1963 = sbr.rel (0) target = $region21
  $region20: #{extractor_forward.8} parent=0 // pred_region
    _
  $region21: #{extractor_forward.8} parent=0 // pred_fallthru
    _
  // Predicated region
  $region22: #{extractor_forward.8} parent=0 // pred_check
    _
  $region23: #{extractor_forward.8} parent=0 // pred_check_branch
    %1965 = sbr.rel (0) target = $region25
  $region24: #{extractor_forward.8} parent=0 // pred_region
    _
  $region25: #{extractor_forward.8} parent=0 // pred_fallthru
    _
  // Predicated region
  $region26: #{extractor_forward.8} parent=0 // pred_check
    _
  $region27: #{extractor_forward.8} parent=0 // pred_check_branch
    %1967 = sbr.rel (0) target = $region29
  $region28: #{extractor_forward.8} parent=0 // pred_region
    _
  $region29: #{extractor_forward.8} parent=0 // pred_fallthru
    _

// kernel: extractor_forward.9
$region0: #{extractor_forward.9}
  #allocation0 [shape = 'u32[]', space=smem, size = 0x4, offset = 0x4, fixed_abs, tag = 'smem constant byte address 0x4 - core index']
  #allocation1 [shape = 'u32[144,128]{1,0:T(1,128)}', space=vmem, size = 0x12000, scoped, tag = 'internal scratch']
  %s0 = inlined_call_operand.vmem [shape: f32[1,2,128], index: 0, kind: input, shape index: {}]
  %s1 = inlined_call_operand.vmem [shape: f32[8,4,2,4,256], index: 1, kind: input, shape index: {}]
  %s2 = inlined_call_operand.vmem [shape: f32[1,128], index: 2, kind: input, shape index: {}]
  %s3 = inlined_call_operand.vmem [shape: f32[1,128], index: 3, kind: input, shape index: {}]
  %s4 = inlined_call_operand.vmem [shape: bf16[8,4,4,128], index: 4, kind: output, shape index: {}]
  %s5 = sld [smem:[#allocation0]]
  $region49: #{extractor_forward.9} parent=0
    _
  %s7 = ssub.s32 1, %s5
  %s8 = scalar_select 0, %s7, %s5
  loop: start=0, step=1, limit=10
  $region2: #{extractor_forward.9} parent=0 // loop_pre_header
    _
  $region3: #{extractor_forward.9} parent=0 // loop_header
    %s10 = sphi 0, %s14
    %p11 = scmp.ge.s32.totalorder %s10, 10
    %s18 = sphi 0, %s18
    %s20 = sphi 0, %s18
    %s21 = sphi 0, %s20
    %s35 = sphi 0, %s21
    %s41 = sphi 0, %s43
    %s44 = sphi 0, %s41
    %s45 = sphi 0, %s44
    %s61 = sphi 0, %s45
    %s65 = sphi 0, %s65
    %s67 = sphi 0, %s65
    %s68 = sphi 0, %s67
    %s82 = sphi 0, %s68
    %s86 = sphi 0, %s86
    %s88 = sphi 0, %s86
    %s89 = sphi 0, %s88
    %s103 = sphi 0, %s89
    %s109 = sphi 0, %s111
    %s112 = sphi 0, %s109
    %s113 = sphi 0, %s112
    %s129 = sphi 0, %s113
  $region4: #{extractor_forward.9} parent=0 // loop_header_branch
    %13 = sbr.rel (%p11) target = $region8
  $region5: #{extractor_forward.9} parent=0 // loop_body
    %s15 = ssub.s32 %s10, 1
    %s16 = ssub.s32 %s10, 2
    %s17 = sadd.s32 %s10, 1
    %s19 = sadd.s32 %s18, 1
    %p22 = scmp.eq.s32.totalorder %s10, 7
    %p23 = scmp.ne.s32.totalorder %s18, %s20
    %p24 = scmp.eq.s32.totalorder %s10, 0
    %p25 = por %p23, %p24
    %p26 = scmp.ne.s32.totalorder %s18, %s20
    %p27 = scmp.eq.s32.totalorder %s15, 7
    %p28 = por %p26, %p27
    %p29 = scmp.ne.s32.totalorder %s20, %s21
    %p30 = scmp.eq.s32.totalorder %s15, 0
    %p31 = por %p29, %p30
    %p32 = scmp.ne.s32.totalorder %s20, %s21
    %p33 = scmp.eq.s32.totalorder %s16, 7
    %p34 = por %p32, %p33
    %p36 = scmp.ne.s32.totalorder %s21, %s35
    %p37 = scmp.eq.s32.totalorder %s16, 0
    %p38 = por %p36, %p37
    %s39 = ssub.s32 %s10, %s17
    %p40 = scmp.eq.s32.totalorder %s39, 0
    %s42 = sadd.s32 %s41, 1
    %s43 = scalar_select %p40, %s41, %s42
    %p46 = pneg %p40
    %p47 = scmp.eq.s32.totalorder %s10, 7
    %p48 = por %p46, %p47
    %p49 = scmp.ne.s32.totalorder %s41, %s44
    %p50 = scmp.eq.s32.totalorder %s10, 0
    %p51 = por %p49, %p50
    %p52 = scmp.ne.s32.totalorder %s41, %s44
    %p53 = scmp.eq.s32.totalorder %s15, 7
    %p54 = por %p52, %p53
    %p55 = scmp.ne.s32.totalorder %s44, %s45
    %p56 = scmp.eq.s32.totalorder %s15, 0
    %p57 = por %p55, %p56
    %p58 = scmp.ne.s32.totalorder %s44, %s45
    %p59 = scmp.eq.s32.totalorder %s16, 7
    %p60 = por %p58, %p59
    %p62 = scmp.ne.s32.totalorder %s45, %s61
    %p63 = scmp.eq.s32.totalorder %s16, 0
    %p64 = por %p62, %p63
    %s66 = sadd.s32 %s65, 1
    %p69 = scmp.eq.s32.totalorder %s10, 7
    %p70 = scmp.ne.s32.totalorder %s65, %s67
    %p71 = scmp.eq.s32.totalorder %s10, 0
    %p72 = por %p70, %p71
    %p73 = scmp.ne.s32.totalorder %s65, %s67
    %p74 = scmp.eq.s32.totalorder %s15, 7
    %p75 = por %p73, %p74
    %p76 = scmp.ne.s32.totalorder %s67, %s68
    %p77 = scmp.eq.s32.totalorder %s15, 0
    %p78 = por %p76, %p77
    %p79 = scmp.ne.s32.totalorder %s67, %s68
    %p80 = scmp.eq.s32.totalorder %s16, 7
    %p81 = por %p79, %p80
    %p83 = scmp.ne.s32.totalorder %s68, %s82
    %p84 = scmp.eq.s32.totalorder %s16, 0
    %p85 = por %p83, %p84
    %s87 = sadd.s32 %s86, 1
    %p90 = scmp.eq.s32.totalorder %s10, 7
    %p91 = scmp.ne.s32.totalorder %s86, %s88
    %p92 = scmp.eq.s32.totalorder %s10, 0
    %p93 = por %p91, %p92
    %p94 = scmp.ne.s32.totalorder %s86, %s88
    %p95 = scmp.eq.s32.totalorder %s15, 7
    %p96 = por %p94, %p95
    %p97 = scmp.ne.s32.totalorder %s88, %s89
    %p98 = scmp.eq.s32.totalorder %s15, 0
    %p99 = por %p97, %p98
    %p100 = scmp.ne.s32.totalorder %s88, %s89
    %p101 = scmp.eq.s32.totalorder %s16, 7
    %p102 = por %p100, %p101
    %p104 = scmp.ne.s32.totalorder %s89, %s103
    %p105 = scmp.eq.s32.totalorder %s16, 0
    %p106 = por %p104, %p105
    %s107 = ssub.s32 %s10, %s17
    %p108 = scmp.eq.s32.totalorder %s107, 0
    %s110 = sadd.s32 %s109, 1
    %s111 = scalar_select %p108, %s109, %s110
    %p114 = pneg %p108
    %p115 = scmp.eq.s32.totalorder %s10, 7
    %p116 = por %p114, %p115
    %p117 = scmp.ne.s32.totalorder %s109, %s112
    %p118 = scmp.eq.s32.totalorder %s10, 0
    %p119 = por %p117, %p118
    %p120 = scmp.ne.s32.totalorder %s109, %s112
    %p121 = scmp.eq.s32.totalorder %s15, 7
    %p122 = por %p120, %p121
    %p123 = scmp.ne.s32.totalorder %s112, %s113
    %p124 = scmp.eq.s32.totalorder %s15, 0
    %p125 = por %p123, %p124
    %p126 = scmp.ne.s32.totalorder %s112, %s113
    %p127 = scmp.eq.s32.totalorder %s16, 7
    %p128 = por %p126, %p127
    %p130 = scmp.ne.s32.totalorder %s113, %s129
    %p131 = scmp.eq.s32.totalorder %s16, 0
    %p132 = por %p130, %p131
    %p133 = scmp.le.s32.totalorder 1, %s10
    %p134 = scmp.lt.s32.totalorder %s10, 9
    %p135 = pnand %p133, %p134
    %p136 = pneg %p135
    // Predicated region
    $region9: #{extractor_forward.9} parent=5 // pred_check
      _
    $region10: #{extractor_forward.9} parent=5 // pred_check_branch
      %138 = sbr.rel (%p135) target = $region12
    $region11: #{extractor_forward.9} parent=5 // pred_region
      %s139 = ssub.s32 %s10, 1
      // Predicated region
      $region13: #{extractor_forward.9} parent=11 // pred_check
        %p140 = pneg %p31
      $region14: #{extractor_forward.9} parent=11 // pred_check_branch
        %142 = sbr.rel (%p140) target = $region16
      $region15: #{extractor_forward.9} parent=11 // pred_region
        _
      $region16: #{extractor_forward.9} parent=11 // pred_fallthru
        _
      // Predicated region
      $region17: #{extractor_forward.9} parent=11 // pred_check
        %p143 = pneg %p78
      $region18: #{extractor_forward.9} parent=11 // pred_check_branch
        %145 = sbr.rel (%p143) target = $region20
      $region19: #{extractor_forward.9} parent=11 // pred_region
        _
      $region20: #{extractor_forward.9} parent=11 // pred_fallthru
        _
      // Predicated region
      $region21: #{extractor_forward.9} parent=11 // pred_check
        %p146 = pneg %p99
      $region22: #{extractor_forward.9} parent=11 // pred_check_branch
        %148 = sbr.rel (%p146) target = $region24
      $region23: #{extractor_forward.9} parent=11 // pred_region
        _
      $region24: #{extractor_forward.9} parent=11 // pred_fallthru
        _
    $region12: #{extractor_forward.9} parent=5 // pred_fallthru
      _
    %p149 = scmp.lt.s32.totalorder %s10, 8
    // Predicated region
    $region25: #{extractor_forward.9} parent=5 // pred_check
      %p150 = pneg %p149
    $region26: #{extractor_forward.9} parent=5 // pred_check_branch
      %152 = sbr.rel (%p150) target = $region28
    $region27: #{extractor_forward.9} parent=5 // pred_region
      // Predicated region
      $region29: #{extractor_forward.9} parent=27 // pred_check
        %p153 = pneg %p51
      $region30: #{extractor_forward.9} parent=27 // pred_check_branch
        %155 = sbr.rel (%p153) target = $region32
      $region31: #{extractor_forward.9} parent=27 // pred_region
        %p156 = scmp.lt.s32.totalorder %s10, 7
        %s157 = scalar_select %p156, %s10, 7
        %s158 = smul.addr %s157, 16
        %s159 = smul.addr %s158, 4
        %s160 = scalar_lea.vmem %s1, %s159
      $region32: #{extractor_forward.9} parent=27 // pred_fallthru
        _
    $region28: #{extractor_forward.9} parent=5 // pred_fallthru
      _
    %p161 = scmp.le.s32.totalorder 1, %s10
    %p162 = scmp.lt.s32.totalorder %s10, 9
    %p163 = pnand %p161, %p162
    %p164 = pneg %p163
    // Predicated region
    $region33: #{extractor_forward.9} parent=5 // pred_check
      _
    $region34: #{extractor_forward.9} parent=5 // pred_check_branch
      %166 = sbr.rel (%p163) target = $region36
    $region35: #{extractor_forward.9} parent=5 // pred_region
      %s167 = ssub.s32 %s10, 1
      %p168 = pneg %p31
      %p169 = pneg %p28
      %p170 = scmp.lt.s32.totalorder %s15, 7
      %s171 = scalar_select %p170, %s15, 7
      %s172 = smul.addr %s171, 16
      %s173 = smul.addr %s172, 4
      %s174 = scalar_lea.vmem %s1, %s173
      %p175 = pneg %p57
      %p176 = pneg %p54
      %p177 = pneg %p78
      %p178 = pneg %p75
      %p179 = pneg %p99
      %p180 = pneg %p96
      %p181 = pneg %p125
      %p182 = pneg %p122
      %p183 = scmp.lt.s32.totalorder %s15, 7
      %s184 = scalar_select %p183, %s15, 7
      %s185 = smul.addr %s184, 4
      %s186 = smul.addr %s185, 2
      %s187 = scalar_lea.vmem %s4, %s186
      %p188 = scmp.lt.s32.totalorder %s15, 7
      %s189 = scalar_select %p188, %s15, 7
      %s190 = smul.addr %s189, 16
      %s191 = smul.addr %s190, 4
      %s192 = scalar_lea.vmem %s1, %s191
      %p193 = scmp.lt.s32.totalorder %s15, 7
      %s194 = scalar_select %p193, %s15, 7
      %s195 = smul.addr %s194, 4
      %s196 = smul.addr %s195, 2
      %s197 = scalar_lea.vmem %s4, %s196
      %v198 = vld [vmem:[%s0] sm:$0x3]
      %v199 = vld [vmem:[%s2] sm:$0x1]
      %v200 = vld [vmem:[%s3] sm:$0x1]
      %v201 = vadd.f32 %v198, 0.0
      %v202 = vmul.f32 %v201, 0.001953125
      %v203 = vmul.f32 %v202, %v202
      %v205 = vrot.slane %v203, 7
      %v207 = vsub.f32 %v202, %v205
      %v208 = vmax.f32 %v207, 0.0
      %v209 = vadd.f32 %v208, 1e-05
      %v210 = vrsqrt.pop %v209
      %v213 = vunpack.c.l.s4 1966171168
      %v214 = vunpack.c.0.s8 %v213
      %v215 = vlaneseq
      %v216 = vshrl.u32 %v215, 7
      %v217 = vsub.s32 %v214, %v216
      %v218 = vrot.slane %v210, %v217
      %v219 = vcombine.high %v218, %v218
      %v221 = vunpack.c.l.s4 1966171168
      %v222 = vunpack.c.0.s8 %v221
      %v223 = vlaneseq
      %v224 = vshrl.u32 %v223, 7
      %v225 = vsub.s32 %v222, %v224
      %v226 = vrot.slane %v219, %v225
      %v228 = vmul.f32 %v199, %v226
      %v229 = vmul.f32 %v202, %v228
      %v230 = vsub.f32 %v200, %v229
      %v231 = vld [vmem:[%s192] sm:$0xff]
      %v232 = vld [vmem:[%s192 + $0x8] sm:$0xff]
      %v233 = vld [vmem:[%s192 + $0x10] sm:$0xff]
      %v234 = vld [vmem:[%s192 + $0x18] sm:$0xff]
      %v235 = vld [vmem:[%s192 + $0x20] sm:$0xff]
      %v236 = vld [vmem:[%s192 + $0x28] sm:$0xff]
      %v237 = vld [vmem:[%s192 + $0x30] sm:$0xff]
      %v238 = vld [vmem:[%s192 + $0x38] sm:$0xff]
      %v240 = vlaneseq
      %v241 = vshrl.u32 %v240, 7
      %v242 = vsub.s32 0, %v241
      %v243 = vrot.slane %v228, %v242
      %v245 = vmul.f32 %v231, %v243
      %v246 = vmul.f32 %v233, %v243
      %v247 = vmul.f32 %v235, %v243
      %v248 = vmul.f32 %v237, %v243
      %v250 = vlaneseq
      %v251 = vshrl.u32 %v250, 7
      %v252 = vsub.s32 0, %v251
      %v253 = vrot.slane %v230, %v252
      %v255 = vadd.f32 %v245, %v253
      %v256 = vadd.f32 %v246, %v253
      %v257 = vadd.f32 %v247, %v253
      %v258 = vadd.f32 %v248, %v253
      %vm259 = vcmp.ge.f32.partialorder %v255, 0.0
      %vm260 = vcmp.ge.f32.partialorder %v256, 0.0
      %vm261 = vcmp.ge.f32.partialorder %v257, 0.0
      %vm262 = vcmp.ge.f32.partialorder %v258, 0.0
      %v263 = vmul.f32 %v255, 0.01
      %v264 = vmul.f32 %v256, 0.01
      %v265 = vmul.f32 %v257, 0.01
      %v266 = vmul.f32 %v258, 0.01
      %v267 = vsel %vm259, %v255, %v263
      %v268 = vsel %vm260, %v256, %v264
      %v269 = vsel %vm261, %v257, %v265
      %v270 = vsel %vm262, %v258, %v266
      %v275 = vrot.slane %v231, 4
      %v276 = vrot.slane %v233, 4
      %v277 = vrot.slane %v235, 4
      %v278 = vrot.slane %v237, 4
      %v283 = vmul.f32 %v275, %v243
      %v284 = vmul.f32 %v276, %v243
      %v285 = vmul.f32 %v277, %v243
      %v286 = vmul.f32 %v278, %v243
      %v287 = vadd.f32 %v283, %v253
      %v288 = vadd.f32 %v284, %v253
      %v289 = vadd.f32 %v285, %v253
      %v290 = vadd.f32 %v286, %v253
      %vm291 = vcmp.ge.f32.partialorder %v287, 0.0
      %vm292 = vcmp.ge.f32.partialorder %v288, 0.0
      %vm293 = vcmp.ge.f32.partialorder %v289, 0.0
      %vm294 = vcmp.ge.f32.partialorder %v290, 0.0
      %v295 = vmul.f32 %v287, 0.01
      %v296 = vmul.f32 %v288, 0.01
      %v297 = vmul.f32 %v289, 0.01
      %v298 = vmul.f32 %v290, 0.01
      %v299 = vsel %vm291, %v287, %v295
      %v300 = vsel %vm292, %v288, %v296
      %v301 = vsel %vm293, %v289, %v297
      %v302 = vsel %vm294, %v290, %v298
      %v303 = vmax.f32 %v267, %v299
      %v304 = vmax.f32 %v268, %v300
      %v305 = vmax.f32 %v269, %v301
      %v306 = vmax.f32 %v270, %v302
      %v307 = vmul.f32 %v232, %v243
      %v308 = vmul.f32 %v234, %v243
      %v309 = vmul.f32 %v236, %v243
      %v310 = vmul.f32 %v238, %v243
      %v311 = vadd.f32 %v307, %v253
      %v312 = vadd.f32 %v308, %v253
      %v313 = vadd.f32 %v309, %v253
      %v314 = vadd.f32 %v310, %v253
      %vm315 = vcmp.ge.f32.partialorder %v311, 0.0
      %vm316 = vcmp.ge.f32.partialorder %v312, 0.0
      %vm317 = vcmp.ge.f32.partialorder %v313, 0.0
      %vm318 = vcmp.ge.f32.partialorder %v314, 0.0
      %v319 = vmul.f32 %v311, 0.01
      %v320 = vmul.f32 %v312, 0.01
      %v321 = vmul.f32 %v313, 0.01
      %v322 = vmul.f32 %v314, 0.01
      %v323 = vsel %vm315, %v311, %v319
      %v324 = vsel %vm316, %v312, %v320
      %v325 = vsel %vm317, %v313, %v321
      %v326 = vsel %vm318, %v314, %v322
      %v331 = vrot.slane %v232, 4
      %v332 = vrot.slane %v234, 4
      %v333 = vrot.slane %v236, 4
      %v334 = vrot.slane %v238, 4
      %v339 = vmul.f32 %v331, %v243
      %v340 = vmul.f32 %v332, %v243
      %v341 = vmul.f32 %v333, %v243
      %v342 = vmul.f32 %v334, %v243
      %v343 = vadd.f32 %v339, %v253
      %v344 = vadd.f32 %v340, %v253
      %v345 = vadd.f32 %v341, %v253
      %v346 = vadd.f32 %v342, %v253
      %vm347 = vcmp.ge.f32.partialorder %v343, 0.0
      %vm348 = vcmp.ge.f32.partialorder %v344, 0.0
      %vm349 = vcmp.ge.f32.partialorder %v345, 0.0
      %vm350 = vcmp.ge.f32.partialorder %v346, 0.0
      %v351 = vmul.f32 %v343, 0.01
      %v352 = vmul.f32 %v344, 0.01
      %v353 = vmul.f32 %v345, 0.01
      %v354 = vmul.f32 %v346, 0.01
      %v355 = vsel %vm347, %v343, %v351
      %v356 = vsel %vm348, %v344, %v352
      %v357 = vsel %vm349, %v345, %v353
      %v358 = vsel %vm350, %v346, %v354
      %v359 = vmax.f32 %v323, %v355
      %v360 = vmax.f32 %v324, %v356
      %v361 = vmax.f32 %v325, %v357
      %v362 = vmax.f32 %v326, %v358
      %v363 = vmax.f32 %v303, %v359
      %v364 = vmax.f32 %v304, %v360
      %v365 = vmax.f32 %v305, %v361
      %v366 = vmax.f32 %v306, %v362
      %v367 = vpack.c.bf16 %v363, %v363
      %v368 = vpack.c.bf16 %v364, %v364
      %v369 = vpack.c.bf16 %v365, %v365
      %v370 = vpack.c.bf16 %v366, %v366
      %371 = vst [vmem:[%s197] sm:$0x3] %v367
      %372 = vst [vmem:[%s197 + $0x2] sm:$0x3] %v368
      %373 = vst [vmem:[%s197 + $0x4] sm:$0x3] %v369
      %374 = vst [vmem:[%s197 + $0x6] sm:$0x3] %v370
      %p375 = scmp.lt.s32.totalorder %s15, 7
      %s376 = scalar_select %p375, %s15, 7
      %s377 = smul.addr %s376, 4
      %s378 = smul.addr %s377, 2
      %s379 = scalar_lea.vmem %s4, %s378
      // Predicated region
      $region37: #{extractor_forward.9} parent=35 // pred_check
        %p380 = pneg %p122
      $region38: #{extractor_forward.9} parent=35 // pred_check_branch
        %382 = sbr.rel (%p380) target = $region40
      $region39: #{extractor_forward.9} parent=35 // pred_region
        _
      $region40: #{extractor_forward.9} parent=35 // pred_fallthru
        _
    $region36: #{extractor_forward.9} parent=5 // pred_fallthru
      _
    %p383 = scmp.le.s32.totalorder 2, %s10
    // Predicated region
    $region41: #{extractor_forward.9} parent=5 // pred_check
      %p384 = pneg %p383
    $region42: #{extractor_forward.9} parent=5 // pred_check_branch
      %386 = sbr.rel (%p384) target = $region44
    $region43: #{extractor_forward.9} parent=5 // pred_region
      %s387 = ssub.s32 %s10, 2
      // Predicated region
      $region45: #{extractor_forward.9} parent=43 // pred_check
        %p388 = pneg %p128
      $region46: #{extractor_forward.9} parent=43 // pred_check_branch
        %390 = sbr.rel (%p388) target = $region48
      $region47: #{extractor_forward.9} parent=43 // pred_region
        %p391 = scmp.lt.s32.totalorder %s16, 7
        %s392 = scalar_select %p391, %s16, 7
        %s393 = smul.addr %s392, 4
        %s394 = smul.addr %s393, 2
        %s395 = scalar_lea.vmem %s4, %s394
      $region48: #{extractor_forward.9} parent=43 // pred_fallthru
        _
    $region44: #{extractor_forward.9} parent=5 // pred_fallthru
      _
  $region6: #{extractor_forward.9} parent=0 // loop_footer
    %s14 = sadd.s32 1, %s10
  $region7: #{extractor_forward.9} parent=0 // loop_footer_branch
    %9 = sbr.rel target = $region3
  $region8: #{extractor_forward.9} parent=0 // loop_exit
    _

// kernel: extractor_forward.11
$region0: #{extractor_forward.11}
  #allocation0 [shape = 'u32[]', space=smem, size = 0x4, offset = 0x4, fixed_abs, tag = 'smem constant byte address 0x4 - core index']
  #allocation1 [shape = 'u32[144,128]{1,0:T(1,128)}', space=vmem, size = 0x12000, scoped, tag = 'internal scratch']
  %s0 = inlined_call_operand.vmem [shape: f32[1,2,512], index: 0, kind: input, shape index: {}]
  %s1 = inlined_call_operand.vmem [shape: f32[8,512], index: 1, kind: input, shape index: {}]
  %s2 = inlined_call_operand.vmem [shape: f32[1,512], index: 2, kind: input, shape index: {}]
  %s3 = inlined_call_operand.vmem [shape: f32[1,512], index: 3, kind: input, shape index: {}]
  %s4 = inlined_call_operand.hbm [shape: f32[8,512], index: 4, kind: output, shape index: {}]
  %s5 = sld [smem:[#allocation0]]
  $region26: #{extractor_forward.11} parent=0
    _
  %s7 = ssub.s32 1, %s5
  %s8 = scalar_select 0, %s7, %s5
  $region1: #{extractor_forward.11} parent=0
    #allocation2 [shape = 'u8[16384]{0}', space=vmem, size = 0x4000, scoped, tag = 'output window, operand 0, single buffered']
    #allocation3 [shape = 's32[1]{0}', space=sflag, size = 0x4, scoped, tag = 'scoped memory for extractor_forward.11']
    %9 = vsyncpa [#allocation3], 0
    // Predicated region
    $region2: #{extractor_forward.11} parent=1 // pred_check
      _
    $region3: #{extractor_forward.11} parent=1 // pred_check_branch
      %11 = sbr.rel (0) target = $region5
    $region4: #{extractor_forward.11} parent=1 // pred_region
      _
    $region5: #{extractor_forward.11} parent=1 // pred_fallthru
      _
    // Predicated region
    $region6: #{extractor_forward.11} parent=1 // pred_check
      _
    $region7: #{extractor_forward.11} parent=1 // pred_check_branch
      %13 = sbr.rel (0) target = $region9
    $region8: #{extractor_forward.11} parent=1 // pred_region
      _
    $region9: #{extractor_forward.11} parent=1 // pred_fallthru
      _
    // Predicated region
    $region10: #{extractor_forward.11} parent=1 // pred_check
      _
    $region11: #{extractor_forward.11} parent=1 // pred_check_branch
      %15 = sbr.rel (0) target = $region13
    $region12: #{extractor_forward.11} parent=1 // pred_region
      _
    $region13: #{extractor_forward.11} parent=1 // pred_fallthru
      _
    // Predicated region
    $region14: #{extractor_forward.11} parent=1 // pred_check
      _
    $region15: #{extractor_forward.11} parent=1 // pred_check_branch
      %17 = sbr.rel (0) target = $region17
    $region16: #{extractor_forward.11} parent=1 // pred_region
      _
    $region17: #{extractor_forward.11} parent=1 // pred_fallthru
      _
    %v18 = vld [vmem:[%s0] sm:$0xff]
    %v19 = vld [vmem:[%s2] sm:$0xf]
    %v20 = vld [vmem:[%s3] sm:$0xf]
    %v21 = vadd.f32 %v18, 0.0
    %v22 = vmul.f32 %v21, 0.125
    %v23 = vmul.f32 %v22, %v22
    %v25 = vrot.slane %v23, 7
    %v27 = vsub.f32 %v22, %v25
    %v28 = vmax.f32 %v27, 0.0
    %v29 = vadd.f32 %v28, 1e-05
    %v30 = vrsqrt.pop %v29
    %v33 = vunpack.c.l.s4 1966171168
    %v34 = vunpack.c.0.s8 %v33
    %v35 = vlaneseq
    %v36 = vshrl.u32 %v35, 7
    %v37 = vsub.s32 %v34, %v36
    %v38 = vrot.slane %v30, %v37
    %v39 = vcombine.high %v38, %v38
    %v41 = vmul.f32 %v19, %v39
    %v44 = vunpack.c.l.s4 857870592
    %v45 = vunpack.c.0.s8 %v44
    %v46 = vlaneseq
    %v47 = vshrl.u32 %v46, 7
    %v48 = vsub.s32 %v45, %v47
    %v49 = vrot.slane %v41, %v48
    %v51 = vmul.f32 %v22, %v49
    %v54 = vunpack.c.l.s4 1966171168
    %v55 = vunpack.c.0.s8 %v54
    %v56 = vlaneseq
    %v57 = vshrl.u32 %v56, 7
    %v58 = vsub.s32 %v55, %v57
    %v59 = vrot.slane %v51, %v58
    %v61 = vsub.f32 %v20, %v59
    %v62 = vld [vmem:[%s1] sm:$0xff]
    %v63 = vld [vmem:[%s1 + $0x8] sm:$0xff]
    %v64 = vld [vmem:[%s1 + $0x10] sm:$0xff]
    %v65 = vld [vmem:[%s1 + $0x18] sm:$0xff]
    %v66 = vlaneseq
    %v67 = vshrl.u32 %v66, 7
    %v68 = vsub.s32 0, %v67
    %v69 = vrot.slane %v41, %v68
    %v70 = vlaneseq
    %v71 = vshrl.u32 %v70, 7
    %v72 = vsub.s32 1, %v71
    %v73 = vrot.slane %v41, %v72
    %v74 = vlaneseq
    %v75 = vshrl.u32 %v74, 7
    %v76 = vsub.s32 2, %v75
    %v77 = vrot.slane %v41, %v76
    %v78 = vlaneseq
    %v79 = vshrl.u32 %v78, 7
    %v80 = vsub.s32 3, %v79
    %v81 = vrot.slane %v41, %v80
    %v86 = vmul.f32 %v62, %v69
    %v87 = vmul.f32 %v63, %v73
    %v88 = vmul.f32 %v64, %v77
    %v89 = vmul.f32 %v65, %v81
    %v91 = vlaneseq
    %v92 = vshrl.u32 %v91, 7
    %v93 = vsub.s32 0, %v92
    %v94 = vrot.slane %v61, %v93
    %v95 = vlaneseq
    %v96 = vshrl.u32 %v95, 7
    %v97 = vsub.s32 1, %v96
    %v98 = vrot.slane %v61, %v97
    %v99 = vlaneseq
    %v100 = vshrl.u32 %v99, 7
    %v101 = vsub.s32 2, %v100
    %v102 = vrot.slane %v61, %v101
    %v103 = vlaneseq
    %v104 = vshrl.u32 %v103, 7
    %v105 = vsub.s32 3, %v104
    %v106 = vrot.slane %v61, %v105
    %v111 = vadd.f32 %v86, %v94
    %v112 = vadd.f32 %v87, %v98
    %v113 = vadd.f32 %v88, %v102
    %v114 = vadd.f32 %v89, %v106
    %vm115 = vcmp.ge.f32.partialorder %v111, 0.0
    %vm116 = vcmp.ge.f32.partialorder %v112, 0.0
    %vm117 = vcmp.ge.f32.partialorder %v113, 0.0
    %vm118 = vcmp.ge.f32.partialorder %v114, 0.0
    %v119 = vmul.f32 %v111, 0.01
    %v120 = vmul.f32 %v112, 0.01
    %v121 = vmul.f32 %v113, 0.01
    %v122 = vmul.f32 %v114, 0.01
    %v123 = vsel %vm115, %v111, %v119
    %v124 = vsel %vm116, %v112, %v120
    %v125 = vsel %vm117, %v113, %v121
    %v126 = vsel %vm118, %v114, %v122
    %127 = vst [vmem:[#allocation2] sm:$0xff] %v123
    %128 = vst [vmem:[#allocation2 + $0x8] sm:$0xff] %v124
    %129 = vst [vmem:[#allocation2 + $0x10] sm:$0xff] %v125
    %130 = vst [vmem:[#allocation2 + $0x18] sm:$0xff] %v126
    // Predicated region
    $region18: #{extractor_forward.11} parent=1 // pred_check
      _
    $region19: #{extractor_forward.11} parent=1 // pred_check_branch
      %132 = sbr.rel (0) target = $region21
    $region20: #{extractor_forward.11} parent=1 // pred_region
      %s134 = ssub.s32 512, 512
      %135 = vsyncadd [#allocation3], %s134
      %s137 = sshll.u32 [#allocation2], 4
      %s138 = int_to_ptr.vmem [resolvable:$true] %s137
      %140 = dma.vmem_to_hbm [thread:$0]  %s138, 512, %s4, [#allocation3]
    $region21: #{extractor_forward.11} parent=1 // pred_fallthru
      _
    // Predicated region
    $region22: #{extractor_forward.11} parent=1 // pred_check
      _
    $region23: #{extractor_forward.11} parent=1 // pred_check_branch
      %142 = sbr.rel (0) target = $region25
    $region24: #{extractor_forward.11} parent=1 // pred_region
      %143 = dma.done [#allocation3], 512
    $region25: #{extractor_forward.11} parent=1 // pred_fallthru
      _
    %144 = vsyncpa [#allocation3], 1

// kernel: extractor_forward.10
$region0: #{extractor_forward.10}
  #allocation0 [shape = 'u32[]', space=smem, size = 0x4, offset = 0x4, fixed_abs, tag = 'smem constant byte address 0x4 - core index']
  #allocation1 [shape = 'u32[144,128]{1,0:T(1,128)}', space=vmem, size = 0x12000, scoped, tag = 'internal scratch']
  %s0 = inlined_call_operand.vmem [shape: bf16[8,2048], index: 0, kind: input, shape index: {}]
  %s1 = inlined_call_operand.vmem [shape: bf16[2048,512], index: 1, kind: input, shape index: {}]
  %s2 = inlined_call_operand.vmem [shape: f32[1,512], index: 2, kind: input, shape index: {}]
  %s3 = inlined_call_operand.vmem [shape: f32[8,512], index: 3, kind: output, shape index: {0}]
  %s4 = inlined_call_operand.vmem [shape: f32[1,2,512], index: 4, kind: output, shape index: {1}]
  %5 = xla_tuple %s3, %s4
  %s6 = sld [smem:[#allocation0]]
  $region30: #{extractor_forward.10} parent=0
    _
  %s8 = ssub.s32 1, %s6
  %s9 = scalar_select 0, %s8, %s6
  // Predicated region
  $region2: #{extractor_forward.10} parent=0 // pred_check
    _
  $region3: #{extractor_forward.10} parent=0 // pred_check_branch
    %11 = sbr.rel (0) target = $region5
  $region4: #{extractor_forward.10} parent=0 // pred_region
    _
  $region5: #{extractor_forward.10} parent=0 // pred_fallthru
    _
  // Predicated region
  $region6: #{extractor_forward.10} parent=0 // pred_check
    _
  $region7: #{extractor_forward.10} parent=0 // pred_check_branch
    %13 = sbr.rel (0) target = $region9
  $region8: #{extractor_forward.10} parent=0 // pred_region
    _
  $region9: #{extractor_forward.10} parent=0 // pred_fallthru
    _
  // Predicated region
  $region10: #{extractor_forward.10} parent=0 // pred_check
    _
  $region11: #{extractor_forward.10} parent=0 // pred_check_branch
    %15 = sbr.rel (0) target = $region13
  $region12: #{extractor_forward.10} parent=0 // pred_region
    _
  $region13: #{extractor_forward.10} parent=0 // pred_fallthru
    _
  %v16 = vld [vmem:[%s0] sm:$0xff]
  %v17 = vld [vmem:[%s0 + $0x8] sm:$0xff]
  %v18 = vld [vmem:[%s0 + $0x10] sm:$0xff]
  %v19 = vld [vmem:[%s0 + $0x18] sm:$0xff]
  %v20 = vld [vmem:[%s0 + $0x20] sm:$0xff]
  %v21 = vld [vmem:[%s0 + $0x28] sm:$0xff]
  %v22 = vld [vmem:[%s0 + $0x30] sm:$0xff]
  %v23 = vld [vmem:[%s0 + $0x38] sm:$0xff]
  %v24 = vld [vmem:[%s1] sm:$0xff]
  %v25 = vld [vmem:[%s1 + $0x8] sm:$0xff]
  %v26 = vld [vmem:[%s1 + $0x10] sm:$0xff]
  %v27 = vld [vmem:[%s1 + $0x18] sm:$0xff]
  %v28 = vld [vmem:[%s1 + $0x20] sm:$0xff]
  %v29 = vld [vmem:[%s1 + $0x28] sm:$0xff]
  %v30 = vld [vmem:[%s1 + $0x30] sm:$0xff]
  %v31 = vld [vmem:[%s1 + $0x38] sm:$0xff]
  %v32 = vld [vmem:[%s1 + $0x40] sm:$0xff]
  %v33 = vld [vmem:[%s1 + $0x48] sm:$0xff]
  %v34 = vld [vmem:[%s1 + $0x50] sm:$0xff]
  %v35 = vld [vmem:[%s1 + $0x58] sm:$0xff]
  %v36 = vld [vmem:[%s1 + $0x60] sm:$0xff]
  %v37 = vld [vmem:[%s1 + $0x68] sm:$0xff]
  %v38 = vld [vmem:[%s1 + $0x70] sm:$0xff]
  %v39 = vld [vmem:[%s1 + $0x78] sm:$0xff]
  %v40 = vld [vmem:[%s1 + $0x80] sm:$0xff]
  %v41 = vld [vmem:[%s1 + $0x88] sm:$0xff]
  %v42 = vld [vmem:[%s1 + $0x90] sm:$0xff]
  %v43 = vld [vmem:[%s1 + $0x98] sm:$0xff]
  %v44 = vld [vmem:[%s1 + $0xa0] sm:$0xff]
  %v45 = vld [vmem:[%s1 + $0xa8] sm:$0xff]
  %v46 = vld [vmem:[%s1 + $0xb0] sm:$0xff]
  %v47 = vld [vmem:[%s1 + $0xb8] sm:$0xff]
  %v48 = vld [vmem:[%s1 + $0xc0] sm:$0xff]
  %v49 = vld [vmem:[%s1 + $0xc8] sm:$0xff]
  %v50 = vld [vmem:[%s1 + $0xd0] sm:$0xff]
  %v51 = vld [vmem:[%s1 + $0xd8] sm:$0xff]
  %v52 = vld [vmem:[%s1 + $0xe0] sm:$0xff]
  %v53 = vld [vmem:[%s1 + $0xe8] sm:$0xff]
  %v54 = vld [vmem:[%s1 + $0xf0] sm:$0xff]
  %v55 = vld [vmem:[%s1 + $0xf8] sm:$0xff]
  %v56 = vld [vmem:[%s1 + $0x100] sm:$0xff]
  %v57 = vld [vmem:[%s1 + $0x108] sm:$0xff]
  %v58 = vld [vmem:[%s1 + $0x110] sm:$0xff]
  %v59 = vld [vmem:[%s1 + $0x118] sm:$0xff]
  %v60 = vld [vmem:[%s1 + $0x120] sm:$0xff]
  %v61 = vld [vmem:[%s1 + $0x128] sm:$0xff]
  %v62 = vld [vmem:[%s1 + $0x130] sm:$0xff]
  %v63 = vld [vmem:[%s1 + $0x138] sm:$0xff]
  %v64 = vld [vmem:[%s1 + $0x140] sm:$0xff]
  %v65 = vld [vmem:[%s1 + $0x148] sm:$0xff]
  %v66 = vld [vmem:[%s1 + $0x150] sm:$0xff]
  %v67 = vld [vmem:[%s1 + $0x158] sm:$0xff]
  %v68 = vld [vmem:[%s1 + $0x160] sm:$0xff]
  %v69 = vld [vmem:[%s1 + $0x168] sm:$0xff]
  %v70 = vld [vmem:[%s1 + $0x170] sm:$0xff]
  %v71 = vld [vmem:[%s1 + $0x178] sm:$0xff]
  %v72 = vld [vmem:[%s1 + $0x180] sm:$0xff]
  %v73 = vld [vmem:[%s1 + $0x188] sm:$0xff]
  %v74 = vld [vmem:[%s1 + $0x190] sm:$0xff]
  %v75 = vld [vmem:[%s1 + $0x198] sm:$0xff]
  %v76 = vld [vmem:[%s1 + $0x1a0] sm:$0xff]
  %v77 = vld [vmem:[%s1 + $0x1a8] sm:$0xff]
  %v78 = vld [vmem:[%s1 + $0x1b0] sm:$0xff]
  %v79 = vld [vmem:[%s1 + $0x1b8] sm:$0xff]
  %v80 = vld [vmem:[%s1 + $0x1c0] sm:$0xff]
  %v81 = vld [vmem:[%s1 + $0x1c8] sm:$0xff]
  %v82 = vld [vmem:[%s1 + $0x1d0] sm:$0xff]
  %v83 = vld [vmem:[%s1 + $0x1d8] sm:$0xff]
  %v84 = vld [vmem:[%s1 + $0x1e0] sm:$0xff]
  %v85 = vld [vmem:[%s1 + $0x1e8] sm:$0xff]
  %v86 = vld [vmem:[%s1 + $0x1f0] sm:$0xff]
  %v87 = vld [vmem:[%s1 + $0x1f8] sm:$0xff]
  %v88 = vld [vmem:[%s1 + $0x200] sm:$0xff]
  %v89 = vld [vmem:[%s1 + $0x208] sm:$0xff]
  %v90 = vld [vmem:[%s1 + $0x210] sm:$0xff]
  %v91 = vld [vmem:[%s1 + $0x218] sm:$0xff]
  %v92 = vld [vmem:[%s1 + $0x220] sm:$0xff]
  %v93 = vld [vmem:[%s1 + $0x228] sm:$0xff]
  %v94 = vld [vmem:[%s1 + $0x230] sm:$0xff]
  %v95 = vld [vmem:[%s1 + $0x238] sm:$0xff]
  %v96 = vld [vmem:[%s1 + $0x240] sm:$0xff]
  %v97 = vld [vmem:[%s1 + $0x248] sm:$0xff]
  %v98 = vld [vmem:[%s1 + $0x250] sm:$0xff]
  %v99 = vld [vmem:[%s1 + $0x258] sm:$0xff]
  %v100 = vld [vmem:[%s1 + $0x260] sm:$0xff]
  %v101 = vld [vmem:[%s1 + $0x268] sm:$0xff]
  %v102 = vld [vmem:[%s1 + $0x270] sm:$0xff]
  %v103 = vld [vmem:[%s1 + $0x278] sm:$0xff]
  %v104 = vld [vmem:[%s1 + $0x280] sm:$0xff]
  %v105 = vld [vmem:[%s1 + $0x288] sm:$0xff]
  %v106 = vld [vmem:[%s1 + $0x290] sm:$0xff]
  %v107 = vld [vmem:[%s1 + $0x298] sm:$0xff]
  %v108 = vld [vmem:[%s1 + $0x2a0] sm:$0xff]
  %v109 = vld [vmem:[%s1 + $0x2a8] sm:$0xff]
  %v110 = vld [vmem:[%s1 + $0x2b0] sm:$0xff]
  %v111 = vld [vmem:[%s1 + $0x2b8] sm:$0xff]
  %v112 = vld [vmem:[%s1 + $0x2c0] sm:$0xff]
  %v113 = vld [vmem:[%s1 + $0x2c8] sm:$0xff]
  %v114 = vld [vmem:[%s1 + $0x2d0] sm:$0xff]
  %v115 = vld [vmem:[%s1 + $0x2d8] sm:$0xff]
  %v116 = vld [vmem:[%s1 + $0x2e0] sm:$0xff]
  %v117 = vld [vmem:[%s1 + $0x2e8] sm:$0xff]
  %v118 = vld [vmem:[%s1 + $0x2f0] sm:$0xff]
  %v119 = vld [vmem:[%s1 + $0x2f8] sm:$0xff]
  %v120 = vld [vmem:[%s1 + $0x300] sm:$0xff]
  %v121 = vld [vmem:[%s1 + $0x308] sm:$0xff]
  %v122 = vld [vmem:[%s1 + $0x310] sm:$0xff]
  %v123 = vld [vmem:[%s1 + $0x318] sm:$0xff]
  %v124 = vld [vmem:[%s1 + $0x320] sm:$0xff]
  %v125 = vld [vmem:[%s1 + $0x328] sm:$0xff]
  %v126 = vld [vmem:[%s1 + $0x330] sm:$0xff]
  %v127 = vld [vmem:[%s1 + $0x338] sm:$0xff]
  %v128 = vld [vmem:[%s1 + $0x340] sm:$0xff]
  %v129 = vld [vmem:[%s1 + $0x348] sm:$0xff]
  %v130 = vld [vmem:[%s1 + $0x350] sm:$0xff]
  %v131 = vld [vmem:[%s1 + $0x358] sm:$0xff]
  %v132 = vld [vmem:[%s1 + $0x360] sm:$0xff]
  %v133 = vld [vmem:[%s1 + $0x368] sm:$0xff]
  %v134 = vld [vmem:[%s1 + $0x370] sm:$0xff]
  %v135 = vld [vmem:[%s1 + $0x378] sm:$0xff]
  %v136 = vld [vmem:[%s1 + $0x380] sm:$0xff]
  %v137 = vld [vmem:[%s1 + $0x388] sm:$0xff]
  %v138 = vld [vmem:[%s1 + $0x390] sm:$0xff]
  %v139 = vld [vmem:[%s1 + $0x398] sm:$0xff]
  %v140 = vld [vmem:[%s1 + $0x3a0] sm:$0xff]
  %v141 = vld [vmem:[%s1 + $0x3a8] sm:$0xff]
  %v142 = vld [vmem:[%s1 + $0x3b0] sm:$0xff]
  %v143 = vld [vmem:[%s1 + $0x3b8] sm:$0xff]
  %v144 = vld [vmem:[%s1 + $0x3c0] sm:$0xff]
  %v145 = vld [vmem:[%s1 + $0x3c8] sm:$0xff]
  %v146 = vld [vmem:[%s1 + $0x3d0] sm:$0xff]
  %v147 = vld [vmem:[%s1 + $0x3d8] sm:$0xff]
  %v148 = vld [vmem:[%s1 + $0x3e0] sm:$0xff]
  %v149 = vld [vmem:[%s1 + $0x3e8] sm:$0xff]
  %v150 = vld [vmem:[%s1 + $0x3f0] sm:$0xff]
  %v151 = vld [vmem:[%s1 + $0x3f8] sm:$0xff]
  %v152 = vld [vmem:[%s1 + $0x400] sm:$0xff]
  %v153 = vld [vmem:[%s1 + $0x408] sm:$0xff]
  %v154 = vld [vmem:[%s1 + $0x410] sm:$0xff]
  %v155 = vld [vmem:[%s1 + $0x418] sm:$0xff]
  %v156 = vld [vmem:[%s1 + $0x420] sm:$0xff]
  %v157 = vld [vmem:[%s1 + $0x428] sm:$0xff]
  %v158 = vld [vmem:[%s1 + $0x430] sm:$0xff]
  %v159 = vld [vmem:[%s1 + $0x438] sm:$0xff]
  %v160 = vld [vmem:[%s1 + $0x440] sm:$0xff]
  %v161 = vld [vmem:[%s1 + $0x448] sm:$0xff]
  %v162 = vld [vmem:[%s1 + $0x450] sm:$0xff]
  %v163 = vld [vmem:[%s1 + $0x458] sm:$0xff]
  %v164 = vld [vmem:[%s1 + $0x460] sm:$0xff]
  %v165 = vld [vmem:[%s1 + $0x468] sm:$0xff]
  %v166 = vld [vmem:[%s1 + $0x470] sm:$0xff]
  %v167 = vld [vmem:[%s1 + $0x478] sm:$0xff]
  %v168 = vld [vmem:[%s1 + $0x480] sm:$0xff]
  %v169 = vld [vmem:[%s1 + $0x488] sm:$0xff]
  %v170 = vld [vmem:[%s1 + $0x490] sm:$0xff]
  %v171 = vld [vmem:[%s1 + $0x498] sm:$0xff]
  %v172 = vld [vmem:[%s1 + $0x4a0] sm:$0xff]
  %v173 = vld [vmem:[%s1 + $0x4a8] sm:$0xff]
  %v174 = vld [vmem:[%s1 + $0x4b0] sm:$0xff]
  %v175 = vld [vmem:[%s1 + $0x4b8] sm:$0xff]
  %v176 = vld [vmem:[%s1 + $0x4c0] sm:$0xff]
  %v177 = vld [vmem:[%s1 + $0x4c8] sm:$0xff]
  %v178 = vld [vmem:[%s1 + $0x4d0] sm:$0xff]
  %v179 = vld [vmem:[%s1 + $0x4d8] sm:$0xff]
  %v180 = vld [vmem:[%s1 + $0x4e0] sm:$0xff]
  %v181 = vld [vmem:[%s1 + $0x4e8] sm:$0xff]
  %v182 = vld [vmem:[%s1 + $0x4f0] sm:$0xff]
  %v183 = vld [vmem:[%s1 + $0x4f8] sm:$0xff]
  %v184 = vld [vmem:[%s1 + $0x500] sm:$0xff]
  %v185 = vld [vmem:[%s1 + $0x508] sm:$0xff]
  %v186 = vld [vmem:[%s1 + $0x510] sm:$0xff]
  %v187 = vld [vmem:[%s1 + $0x518] sm:$0xff]
  %v188 = vld [vmem:[%s1 + $0x520] sm:$0xff]
  %v189 = vld [vmem:[%s1 + $0x528] sm:$0xff]
  %v190 = vld [vmem:[%s1 + $0x530] sm:$0xff]
  %v191 = vld [vmem:[%s1 + $0x538] sm:$0xff]
  %v192 = vld [vmem:[%s1 + $0x540] sm:$0xff]
  %v193 = vld [vmem:[%s1 + $0x548] sm:$0xff]
  %v194 = vld [vmem:[%s1 + $0x550] sm:$0xff]
  %v195 = vld [vmem:[%s1 + $0x558] sm:$0xff]
  %v196 = vld [vmem:[%s1 + $0x560] sm:$0xff]
  %v197 = vld [vmem:[%s1 + $0x568] sm:$0xff]
  %v198 = vld [vmem:[%s1 + $0x570] sm:$0xff]
  %v199 = vld [vmem:[%s1 + $0x578] sm:$0xff]
  %v200 = vld [vmem:[%s1 + $0x580] sm:$0xff]
  %v201 = vld [vmem:[%s1 + $0x588] sm:$0xff]
  %v202 = vld [vmem:[%s1 + $0x590] sm:$0xff]
  %v203 = vld [vmem:[%s1 + $0x598] sm:$0xff]
  %v204 = vld [vmem:[%s1 + $0x5a0] sm:$0xff]
  %v205 = vld [vmem:[%s1 + $0x5a8] sm:$0xff]
  %v206 = vld [vmem:[%s1 + $0x5b0] sm:$0xff]
  %v207 = vld [vmem:[%s1 + $0x5b8] sm:$0xff]
  %v208 = vld [vmem:[%s1 + $0x5c0] sm:$0xff]
  %v209 = vld [vmem:[%s1 + $0x5c8] sm:$0xff]
  %v210 = vld [vmem:[%s1 + $0x5d0] sm:$0xff]
  %v211 = vld [vmem:[%s1 + $0x5d8] sm:$0xff]
  %v212 = vld [vmem:[%s1 + $0x5e0] sm:$0xff]
  %v213 = vld [vmem:[%s1 + $0x5e8] sm:$0xff]
  %v214 = vld [vmem:[%s1 + $0x5f0] sm:$0xff]
  %v215 = vld [vmem:[%s1 + $0x5f8] sm:$0xff]
  %v216 = vld [vmem:[%s1 + $0x600] sm:$0xff]
  %v217 = vld [vmem:[%s1 + $0x608] sm:$0xff]
  %v218 = vld [vmem:[%s1 + $0x610] sm:$0xff]
  %v219 = vld [vmem:[%s1 + $0x618] sm:$0xff]
  %v220 = vld [vmem:[%s1 + $0x620] sm:$0xff]
  %v221 = vld [vmem:[%s1 + $0x628] sm:$0xff]
  %v222 = vld [vmem:[%s1 + $0x630] sm:$0xff]
  %v223 = vld [vmem:[%s1 + $0x638] sm:$0xff]
  %v224 = vld [vmem:[%s1 + $0x640] sm:$0xff]
  %v225 = vld [vmem:[%s1 + $0x648] sm:$0xff]
  %v226 = vld [vmem:[%s1 + $0x650] sm:$0xff]
  %v227 = vld [vmem:[%s1 + $0x658] sm:$0xff]
  %v228 = vld [vmem:[%s1 + $0x660] sm:$0xff]
  %v229 = vld [vmem:[%s1 + $0x668] sm:$0xff]
  %v230 = vld [vmem:[%s1 + $0x670] sm:$0xff]
  %v231 = vld [vmem:[%s1 + $0x678] sm:$0xff]
  %v232 = vld [vmem:[%s1 + $0x680] sm:$0xff]
  %v233 = vld [vmem:[%s1 + $0x688] sm:$0xff]
  %v234 = vld [vmem:[%s1 + $0x690] sm:$0xff]
  %v235 = vld [vmem:[%s1 + $0x698] sm:$0xff]
  %v236 = vld [vmem:[%s1 + $0x6a0] sm:$0xff]
  %v237 = vld [vmem:[%s1 + $0x6a8] sm:$0xff]
  %v238 = vld [vmem:[%s1 + $0x6b0] sm:$0xff]
  %v239 = vld [vmem:[%s1 + $0x6b8] sm:$0xff]
  %v240 = vld [vmem:[%s1 + $0x6c0] sm:$0xff]
  %v241 = vld [vmem:[%s1 + $0x6c8] sm:$0xff]
  %v242 = vld [vmem:[%s1 + $0x6d0] sm:$0xff]
  %v243 = vld [vmem:[%s1 + $0x6d8] sm:$0xff]
  %v244 = vld [vmem:[%s1 + $0x6e0] sm:$0xff]
  %v245 = vld [vmem:[%s1 + $0x6e8] sm:$0xff]
  %v246 = vld [vmem:[%s1 + $0x6f0] sm:$0xff]
  %v247 = vld [vmem:[%s1 + $0x6f8] sm:$0xff]
  %v248 = vld [vmem:[%s1 + $0x700] sm:$0xff]
  %v249 = vld [vmem:[%s1 + $0x708] sm:$0xff]
  %v250 = vld [vmem:[%s1 + $0x710] sm:$0xff]
  %v251 = vld [vmem:[%s1 + $0x718] sm:$0xff]
  %v252 = vld [vmem:[%s1 + $0x720] sm:$0xff]
  %v253 = vld [vmem:[%s1 + $0x728] sm:$0xff]
  %v254 = vld [vmem:[%s1 + $0x730] sm:$0xff]
  %v255 = vld [vmem:[%s1 + $0x738] sm:$0xff]
  %v256 = vld [vmem:[%s1 + $0x740] sm:$0xff]
  %v257 = vld [vmem:[%s1 + $0x748] sm:$0xff]
  %v258 = vld [vmem:[%s1 + $0x750] sm:$0xff]
  %v259 = vld [vmem:[%s1 + $0x758] sm:$0xff]
  %v260 = vld [vmem:[%s1 + $0x760] sm:$0xff]
  %v261 = vld [vmem:[%s1 + $0x768] sm:$0xff]
  %v262 = vld [vmem:[%s1 + $0x770] sm:$0xff]
  %v263 = vld [vmem:[%s1 + $0x778] sm:$0xff]
  %v264 = vld [vmem:[%s1 + $0x780] sm:$0xff]
  %v265 = vld [vmem:[%s1 + $0x788] sm:$0xff]
  %v266 = vld [vmem:[%s1 + $0x790] sm:$0xff]
  %v267 = vld [vmem:[%s1 + $0x798] sm:$0xff]
  %v268 = vld [vmem:[%s1 + $0x7a0] sm:$0xff]
  %v269 = vld [vmem:[%s1 + $0x7a8] sm:$0xff]
  %v270 = vld [vmem:[%s1 + $0x7b0] sm:$0xff]
  %v271 = vld [vmem:[%s1 + $0x7b8] sm:$0xff]
  %v272 = vld [vmem:[%s1 + $0x7c0] sm:$0xff]
  %v273 = vld [vmem:[%s1 + $0x7c8] sm:$0xff]
  %v274 = vld [vmem:[%s1 + $0x7d0] sm:$0xff]
  %v275 = vld [vmem:[%s1 + $0x7d8] sm:$0xff]
  %v276 = vld [vmem:[%s1 + $0x7e0] sm:$0xff]
  %v277 = vld [vmem:[%s1 + $0x7e8] sm:$0xff]
  %v278 = vld [vmem:[%s1 + $0x7f0] sm:$0xff]
  %v279 = vld [vmem:[%s1 + $0x7f8] sm:$0xff]
  %v280 = vld [vmem:[%s1 + $0x800] sm:$0xff]
  %v281 = vld [vmem:[%s1 + $0x808] sm:$0xff]
  %v282 = vld [vmem:[%s1 + $0x810] sm:$0xff]
  %v283 = vld [vmem:[%s1 + $0x818] sm:$0xff]
  %v284 = vld [vmem:[%s1 + $0x820] sm:$0xff]
  %v285 = vld [vmem:[%s1 + $0x828] sm:$0xff]
  %v286 = vld [vmem:[%s1 + $0x830] sm:$0xff]
  %v287 = vld [vmem:[%s1 + $0x838] sm:$0xff]
  %v288 = vld [vmem:[%s1 + $0x840] sm:$0xff]
  %v289 = vld [vmem:[%s1 + $0x848] sm:$0xff]
  %v290 = vld [vmem:[%s1 + $0x850] sm:$0xff]
  %v291 = vld [vmem:[%s1 + $0x858] sm:$0xff]
  %v292 = vld [vmem:[%s1 + $0x860] sm:$0xff]
  %v293 = vld [vmem:[%s1 + $0x868] sm:$0xff]
  %v294 = vld [vmem:[%s1 + $0x870] sm:$0xff]
  %v295 = vld [vmem:[%s1 + $0x878] sm:$0xff]
  %v296 = vld [vmem:[%s1 + $0x880] sm:$0xff]
  %v297 = vld [vmem:[%s1 + $0x888] sm:$0xff]
  %v298 = vld [vmem:[%s1 + $0x890] sm:$0xff]
  %v299 = vld [vmem:[%s1 + $0x898] sm:$0xff]
  %v300 = vld [vmem:[%s1 + $0x8a0] sm:$0xff]
  %v301 = vld [vmem:[%s1 + $0x8a8] sm:$0xff]
  %v302 = vld [vmem:[%s1 + $0x8b0] sm:$0xff]
  %v303 = vld [vmem:[%s1 + $0x8b8] sm:$0xff]
  %v304 = vld [vmem:[%s1 + $0x8c0] sm:$0xff]
  %v305 = vld [vmem:[%s1 + $0x8c8] sm:$0xff]
  %v306 = vld [vmem:[%s1 + $0x8d0] sm:$0xff]
  %v307 = vld [vmem:[%s1 + $0x8d8] sm:$0xff]
  %v308 = vld [vmem:[%s1 + $0x8e0] sm:$0xff]
  %v309 = vld [vmem:[%s1 + $0x8e8] sm:$0xff]
  %v310 = vld [vmem:[%s1 + $0x8f0] sm:$0xff]
  %v311 = vld [vmem:[%s1 + $0x8f8] sm:$0xff]
  %v312 = vld [vmem:[%s1 + $0x900] sm:$0xff]
  %v313 = vld [vmem:[%s1 + $0x908] sm:$0xff]
  %v314 = vld [vmem:[%s1 + $0x910] sm:$0xff]
  %v315 = vld [vmem:[%s1 + $0x918] sm:$0xff]
  %v316 = vld [vmem:[%s1 + $0x920] sm:$0xff]
  %v317 = vld [vmem:[%s1 + $0x928] sm:$0xff]
  %v318 = vld [vmem:[%s1 + $0x930] sm:$0xff]
  %v319 = vld [vmem:[%s1 + $0x938] sm:$0xff]
  %v320 = vld [vmem:[%s1 + $0x940] sm:$0xff]
  %v321 = vld [vmem:[%s1 + $0x948] sm:$0xff]
  %v322 = vld [vmem:[%s1 + $0x950] sm:$0xff]
  %v323 = vld [vmem:[%s1 + $0x958] sm:$0xff]
  %v324 = vld [vmem:[%s1 + $0x960] sm:$0xff]
  %v325 = vld [vmem:[%s1 + $0x968] sm:$0xff]
  %v326 = vld [vmem:[%s1 + $0x970] sm:$0xff]
  %v327 = vld [vmem:[%s1 + $0x978] sm:$0xff]
  %v328 = vld [vmem:[%s1 + $0x980] sm:$0xff]
  %v329 = vld [vmem:[%s1 + $0x988] sm:$0xff]
  %v330 = vld [vmem:[%s1 + $0x990] sm:$0xff]
  %v331 = vld [vmem:[%s1 + $0x998] sm:$0xff]
  %v332 = vld [vmem:[%s1 + $0x9a0] sm:$0xff]
  %v333 = vld [vmem:[%s1 + $0x9a8] sm:$0xff]
  %v334 = vld [vmem:[%s1 + $0x9b0] sm:$0xff]
  %v335 = vld [vmem:[%s1 + $0x9b8] sm:$0xff]
  %v336 = vld [vmem:[%s1 + $0x9c0] sm:$0xff]
  %v337 = vld [vmem:[%s1 + $0x9c8] sm:$0xff]
  %v338 = vld [vmem:[%s1 + $0x9d0] sm:$0xff]
  %v339 = vld [vmem:[%s1 + $0x9d8] sm:$0xff]
  %v340 = vld [vmem:[%s1 + $0x9e0] sm:$0xff]
  %v341 = vld [vmem:[%s1 + $0x9e8] sm:$0xff]
  %v342 = vld [vmem:[%s1 + $0x9f0] sm:$0xff]
  %v343 = vld [vmem:[%s1 + $0x9f8] sm:$0xff]
  %v344 = vld [vmem:[%s1 + $0xa00] sm:$0xff]
  %v345 = vld [vmem:[%s1 + $0xa08] sm:$0xff]
  %v346 = vld [vmem:[%s1 + $0xa10] sm:$0xff]
  %v347 = vld [vmem:[%s1 + $0xa18] sm:$0xff]
  %v348 = vld [vmem:[%s1 + $0xa20] sm:$0xff]
  %v349 = vld [vmem:[%s1 + $0xa28] sm:$0xff]
  %v350 = vld [vmem:[%s1 + $0xa30] sm:$0xff]
  %v351 = vld [vmem:[%s1 + $0xa38] sm:$0xff]
  %v352 = vld [vmem:[%s1 + $0xa40] sm:$0xff]
  %v353 = vld [vmem:[%s1 + $0xa48] sm:$0xff]
  %v354 = vld [vmem:[%s1 + $0xa50] sm:$0xff]
  %v355 = vld [vmem:[%s1 + $0xa58] sm:$0xff]
  %v356 = vld [vmem:[%s1 + $0xa60] sm:$0xff]
  %v357 = vld [vmem:[%s1 + $0xa68] sm:$0xff]
  %v358 = vld [vmem:[%s1 + $0xa70] sm:$0xff]
  %v359 = vld [vmem:[%s1 + $0xa78] sm:$0xff]
  %v360 = vld [vmem:[%s1 + $0xa80] sm:$0xff]
  %v361 = vld [vmem:[%s1 + $0xa88] sm:$0xff]
  %v362 = vld [vmem:[%s1 + $0xa90] sm:$0xff]
  %v363 = vld [vmem:[%s1 + $0xa98] sm:$0xff]
  %v364 = vld [vmem:[%s1 + $0xaa0] sm:$0xff]
  %v365 = vld [vmem:[%s1 + $0xaa8] sm:$0xff]
  %v366 = vld [vmem:[%s1 + $0xab0] sm:$0xff]
  %v367 = vld [vmem:[%s1 + $0xab8] sm:$0xff]
  %v368 = vld [vmem:[%s1 + $0xac0] sm:$0xff]
  %v369 = vld [vmem:[%s1 + $0xac8] sm:$0xff]
  %v370 = vld [vmem:[%s1 + $0xad0] sm:$0xff]
  %v371 = vld [vmem:[%s1 + $0xad8] sm:$0xff]
  %v372 = vld [vmem:[%s1 + $0xae0] sm:$0xff]
  %v373 = vld [vmem:[%s1 + $0xae8] sm:$0xff]
  %v374 = vld [vmem:[%s1 + $0xaf0] sm:$0xff]
  %v375 = vld [vmem:[%s1 + $0xaf8] sm:$0xff]
  %v376 = vld [vmem:[%s1 + $0xb00] sm:$0xff]
  %v377 = vld [vmem:[%s1 + $0xb08] sm:$0xff]
  %v378 = vld [vmem:[%s1 + $0xb10] sm:$0xff]
  %v379 = vld [vmem:[%s1 + $0xb18] sm:$0xff]
  %v380 = vld [vmem:[%s1 + $0xb20] sm:$0xff]
  %v381 = vld [vmem:[%s1 + $0xb28] sm:$0xff]
  %v382 = vld [vmem:[%s1 + $0xb30] sm:$0xff]
  %v383 = vld [vmem:[%s1 + $0xb38] sm:$0xff]
  %v384 = vld [vmem:[%s1 + $0xb40] sm:$0xff]
  %v385 = vld [vmem:[%s1 + $0xb48] sm:$0xff]
  %v386 = vld [vmem:[%s1 + $0xb50] sm:$0xff]
  %v387 = vld [vmem:[%s1 + $0xb58] sm:$0xff]
  %v388 = vld [vmem:[%s1 + $0xb60] sm:$0xff]
  %v389 = vld [vmem:[%s1 + $0xb68] sm:$0xff]
  %v390 = vld [vmem:[%s1 + $0xb70] sm:$0xff]
  %v391 = vld [vmem:[%s1 + $0xb78] sm:$0xff]
  %v392 = vld [vmem:[%s1 + $0xb80] sm:$0xff]
  %v393 = vld [vmem:[%s1 + $0xb88] sm:$0xff]
  %v394 = vld [vmem:[%s1 + $0xb90] sm:$0xff]
  %v395 = vld [vmem:[%s1 + $0xb98] sm:$0xff]
  %v396 = vld [vmem:[%s1 + $0xba0] sm:$0xff]
  %v397 = vld [vmem:[%s1 + $0xba8] sm:$0xff]
  %v398 = vld [vmem:[%s1 + $0xbb0] sm:$0xff]
  %v399 = vld [vmem:[%s1 + $0xbb8] sm:$0xff]
  %v400 = vld [vmem:[%s1 + $0xbc0] sm:$0xff]
  %v401 = vld [vmem:[%s1 + $0xbc8] sm:$0xff]
  %v402 = vld [vmem:[%s1 + $0xbd0] sm:$0xff]
  %v403 = vld [vmem:[%s1 + $0xbd8] sm:$0xff]
  %v404 = vld [vmem:[%s1 + $0xbe0] sm:$0xff]
  %v405 = vld [vmem:[%s1 + $0xbe8] sm:$0xff]
  %v406 = vld [vmem:[%s1 + $0xbf0] sm:$0xff]
  %v407 = vld [vmem:[%s1 + $0xbf8] sm:$0xff]
  %v408 = vld [vmem:[%s1 + $0xc00] sm:$0xff]
  %v409 = vld [vmem:[%s1 + $0xc08] sm:$0xff]
  %v410 = vld [vmem:[%s1 + $0xc10] sm:$0xff]
  %v411 = vld [vmem:[%s1 + $0xc18] sm:$0xff]
  %v412 = vld [vmem:[%s1 + $0xc20] sm:$0xff]
  %v413 = vld [vmem:[%s1 + $0xc28] sm:$0xff]
  %v414 = vld [vmem:[%s1 + $0xc30] sm:$0xff]
  %v415 = vld [vmem:[%s1 + $0xc38] sm:$0xff]
  %v416 = vld [vmem:[%s1 + $0xc40] sm:$0xff]
  %v417 = vld [vmem:[%s1 + $0xc48] sm:$0xff]
  %v418 = vld [vmem:[%s1 + $0xc50] sm:$0xff]
  %v419 = vld [vmem:[%s1 + $0xc58] sm:$0xff]
  %v420 = vld [vmem:[%s1 + $0xc60] sm:$0xff]
  %v421 = vld [vmem:[%s1 + $0xc68] sm:$0xff]
  %v422 = vld [vmem:[%s1 + $0xc70] sm:$0xff]
  %v423 = vld [vmem:[%s1 + $0xc78] sm:$0xff]
  %v424 = vld [vmem:[%s1 + $0xc80] sm:$0xff]
  %v425 = vld [vmem:[%s1 + $0xc88] sm:$0xff]
  %v426 = vld [vmem:[%s1 + $0xc90] sm:$0xff]
  %v427 = vld [vmem:[%s1 + $0xc98] sm:$0xff]
  %v428 = vld [vmem:[%s1 + $0xca0] sm:$0xff]
  %v429 = vld [vmem:[%s1 + $0xca8] sm:$0xff]
  %v430 = vld [vmem:[%s1 + $0xcb0] sm:$0xff]
  %v431 = vld [vmem:[%s1 + $0xcb8] sm:$0xff]
  %v432 = vld [vmem:[%s1 + $0xcc0] sm:$0xff]
  %v433 = vld [vmem:[%s1 + $0xcc8] sm:$0xff]
  %v434 = vld [vmem:[%s1 + $0xcd0] sm:$0xff]
  %v435 = vld [vmem:[%s1 + $0xcd8] sm:$0xff]
  %v436 = vld [vmem:[%s1 + $0xce0] sm:$0xff]
  %v437 = vld [vmem:[%s1 + $0xce8] sm:$0xff]
  %v438 = vld [vmem:[%s1 + $0xcf0] sm:$0xff]
  %v439 = vld [vmem:[%s1 + $0xcf8] sm:$0xff]
  %v440 = vld [vmem:[%s1 + $0xd00] sm:$0xff]
  %v441 = vld [vmem:[%s1 + $0xd08] sm:$0xff]
  %v442 = vld [vmem:[%s1 + $0xd10] sm:$0xff]
  %v443 = vld [vmem:[%s1 + $0xd18] sm:$0xff]
  %v444 = vld [vmem:[%s1 + $0xd20] sm:$0xff]
  %v445 = vld [vmem:[%s1 + $0xd28] sm:$0xff]
  %v446 = vld [vmem:[%s1 + $0xd30] sm:$0xff]
  %v447 = vld [vmem:[%s1 + $0xd38] sm:$0xff]
  %v448 = vld [vmem:[%s1 + $0xd40] sm:$0xff]
  %v449 = vld [vmem:[%s1 + $0xd48] sm:$0xff]
  %v450 = vld [vmem:[%s1 + $0xd50] sm:$0xff]
  %v451 = vld [vmem:[%s1 + $0xd58] sm:$0xff]
  %v452 = vld [vmem:[%s1 + $0xd60] sm:$0xff]
  %v453 = vld [vmem:[%s1 + $0xd68] sm:$0xff]
  %v454 = vld [vmem:[%s1 + $0xd70] sm:$0xff]
  %v455 = vld [vmem:[%s1 + $0xd78] sm:$0xff]
  %v456 = vld [vmem:[%s1 + $0xd80] sm:$0xff]
  %v457 = vld [vmem:[%s1 + $0xd88] sm:$0xff]
  %v458 = vld [vmem:[%s1 + $0xd90] sm:$0xff]
  %v459 = vld [vmem:[%s1 + $0xd98] sm:$0xff]
  %v460 = vld [vmem:[%s1 + $0xda0] sm:$0xff]
  %v461 = vld [vmem:[%s1 + $0xda8] sm:$0xff]
  %v462 = vld [vmem:[%s1 + $0xdb0] sm:$0xff]
  %v463 = vld [vmem:[%s1 + $0xdb8] sm:$0xff]
  %v464 = vld [vmem:[%s1 + $0xdc0] sm:$0xff]
  %v465 = vld [vmem:[%s1 + $0xdc8] sm:$0xff]
  %v466 = vld [vmem:[%s1 + $0xdd0] sm:$0xff]
  %v467 = vld [vmem:[%s1 + $0xdd8] sm:$0xff]
  %v468 = vld [vmem:[%s1 + $0xde0] sm:$0xff]
  %v469 = vld [vmem:[%s1 + $0xde8] sm:$0xff]
  %v470 = vld [vmem:[%s1 + $0xdf0] sm:$0xff]
  %v471 = vld [vmem:[%s1 + $0xdf8] sm:$0xff]
  %v472 = vld [vmem:[%s1 + $0xe00] sm:$0xff]
  %v473 = vld [vmem:[%s1 + $0xe08] sm:$0xff]
  %v474 = vld [vmem:[%s1 + $0xe10] sm:$0xff]
  %v475 = vld [vmem:[%s1 + $0xe18] sm:$0xff]
  %v476 = vld [vmem:[%s1 + $0xe20] sm:$0xff]
  %v477 = vld [vmem:[%s1 + $0xe28] sm:$0xff]
  %v478 = vld [vmem:[%s1 + $0xe30] sm:$0xff]
  %v479 = vld [vmem:[%s1 + $0xe38] sm:$0xff]
  %v480 = vld [vmem:[%s1 + $0xe40] sm:$0xff]
  %v481 = vld [vmem:[%s1 + $0xe48] sm:$0xff]
  %v482 = vld [vmem:[%s1 + $0xe50] sm:$0xff]
  %v483 = vld [vmem:[%s1 + $0xe58] sm:$0xff]
  %v484 = vld [vmem:[%s1 + $0xe60] sm:$0xff]
  %v485 = vld [vmem:[%s1 + $0xe68] sm:$0xff]
  %v486 = vld [vmem:[%s1 + $0xe70] sm:$0xff]
  %v487 = vld [vmem:[%s1 + $0xe78] sm:$0xff]
  %v488 = vld [vmem:[%s1 + $0xe80] sm:$0xff]
  %v489 = vld [vmem:[%s1 + $0xe88] sm:$0xff]
  %v490 = vld [vmem:[%s1 + $0xe90] sm:$0xff]
  %v491 = vld [vmem:[%s1 + $0xe98] sm:$0xff]
  %v492 = vld [vmem:[%s1 + $0xea0] sm:$0xff]
  %v493 = vld [vmem:[%s1 + $0xea8] sm:$0xff]
  %v494 = vld [vmem:[%s1 + $0xeb0] sm:$0xff]
  %v495 = vld [vmem:[%s1 + $0xeb8] sm:$0xff]
  %v496 = vld [vmem:[%s1 + $0xec0] sm:$0xff]
  %v497 = vld [vmem:[%s1 + $0xec8] sm:$0xff]
  %v498 = vld [vmem:[%s1 + $0xed0] sm:$0xff]
  %v499 = vld [vmem:[%s1 + $0xed8] sm:$0xff]
  %v500 = vld [vmem:[%s1 + $0xee0] sm:$0xff]
  %v501 = vld [vmem:[%s1 + $0xee8] sm:$0xff]
  %v502 = vld [vmem:[%s1 + $0xef0] sm:$0xff]
  %v503 = vld [vmem:[%s1 + $0xef8] sm:$0xff]
  %v504 = vld [vmem:[%s1 + $0xf00] sm:$0xff]
  %v505 = vld [vmem:[%s1 + $0xf08] sm:$0xff]
  %v506 = vld [vmem:[%s1 + $0xf10] sm:$0xff]
  %v507 = vld [vmem:[%s1 + $0xf18] sm:$0xff]
  %v508 = vld [vmem:[%s1 + $0xf20] sm:$0xff]
  %v509 = vld [vmem:[%s1 + $0xf28] sm:$0xff]
  %v510 = vld [vmem:[%s1 + $0xf30] sm:$0xff]
  %v511 = vld [vmem:[%s1 + $0xf38] sm:$0xff]
  %v512 = vld [vmem:[%s1 + $0xf40] sm:$0xff]
  %v513 = vld [vmem:[%s1 + $0xf48] sm:$0xff]
  %v514 = vld [vmem:[%s1 + $0xf50] sm:$0xff]
  %v515 = vld [vmem:[%s1 + $0xf58] sm:$0xff]
  %v516 = vld [vmem:[%s1 + $0xf60] sm:$0xff]
  %v517 = vld [vmem:[%s1 + $0xf68] sm:$0xff]
  %v518 = vld [vmem:[%s1 + $0xf70] sm:$0xff]
  %v519 = vld [vmem:[%s1 + $0xf78] sm:$0xff]
  %v520 = vld [vmem:[%s1 + $0xf80] sm:$0xff]
  %v521 = vld [vmem:[%s1 + $0xf88] sm:$0xff]
  %v522 = vld [vmem:[%s1 + $0xf90] sm:$0xff]
  %v523 = vld [vmem:[%s1 + $0xf98] sm:$0xff]
  %v524 = vld [vmem:[%s1 + $0xfa0] sm:$0xff]
  %v525 = vld [vmem:[%s1 + $0xfa8] sm:$0xff]
  %v526 = vld [vmem:[%s1 + $0xfb0] sm:$0xff]
  %v527 = vld [vmem:[%s1 + $0xfb8] sm:$0xff]
  %v528 = vld [vmem:[%s1 + $0xfc0] sm:$0xff]
  %v529 = vld [vmem:[%s1 + $0xfc8] sm:$0xff]
  %v530 = vld [vmem:[%s1 + $0xfd0] sm:$0xff]
  %v531 = vld [vmem:[%s1 + $0xfd8] sm:$0xff]
  %v532 = vld [vmem:[%s1 + $0xfe0] sm:$0xff]
  %v533 = vld [vmem:[%s1 + $0xfe8] sm:$0xff]
  %v534 = vld [vmem:[%s1 + $0xff0] sm:$0xff]
  %v535 = vld [vmem:[%s1 + $0xff8] sm:$0xff]
  %v536 = vld [vmem:[%s2] sm:$0xf]
  %v538 = vlaneseq
  %v539 = vshrl.u32 %v538, 7
  %v540 = vsub.s32 0, %v539
  %v541 = vrot.slane %v536, %v540
  %v542 = vlaneseq
  %v543 = vshrl.u32 %v542, 7
  %v544 = vsub.s32 1, %v543
  %v545 = vrot.slane %v536, %v544
  %v546 = vlaneseq
  %v547 = vshrl.u32 %v546, 7
  %v548 = vsub.s32 2, %v547
  %v549 = vrot.slane %v536, %v548
  %v550 = vlaneseq
  %v551 = vshrl.u32 %v550, 7
  %v552 = vsub.s32 3, %v551
  %v553 = vrot.slane %v536, %v552
  %v566 = vunpack.c.l.b16 %v16
  %v567 = vunpack.c.h.b16 %v16
  %v568 = vunpack.c.l.b16 %v17
  %v569 = vunpack.c.h.b16 %v17
  %v570 = vunpack.c.l.b16 %v18
  %v571 = vunpack.c.h.b16 %v18
  %v572 = vunpack.c.l.b16 %v19
  %v573 = vunpack.c.h.b16 %v19
  %v574 = vunpack.c.l.b16 %v20
  %v575 = vunpack.c.h.b16 %v20
  %v576 = vunpack.c.l.b16 %v21
  %v577 = vunpack.c.h.b16 %v21
  %v578 = vunpack.c.l.b16 %v22
  %v579 = vunpack.c.h.b16 %v22
  %v580 = vunpack.c.l.b16 %v23
  %v581 = vunpack.c.h.b16 %v23
  %v582 = vpack.c.b16 %v566, %v566
  %v583 = vpack.c.b16 %v567, %v567
  %v584 = vpack.c.b16 %v568, %v568
  %v585 = vpack.c.b16 %v569, %v569
  %v586 = vpack.c.b16 %v570, %v570
  %v587 = vpack.c.b16 %v571, %v571
  %v588 = vpack.c.b16 %v572, %v572
  %v589 = vpack.c.b16 %v573, %v573
  %v590 = vpack.c.b16 %v574, %v574
  %v591 = vpack.c.b16 %v575, %v575
  %v592 = vpack.c.b16 %v576, %v576
  %v593 = vpack.c.b16 %v577, %v577
  %v594 = vpack.c.b16 %v578, %v578
  %v595 = vpack.c.b16 %v579, %v579
  %v596 = vpack.c.b16 %v580, %v580
  %v597 = vpack.c.b16 %v581, %v581
  %v1126 = vunpack.c.l.b16 %v24
  %v1127 = vunpack.c.h.b16 %v24
  %v1128 = vunpack.c.l.b16 %v25
  %v1129 = vunpack.c.h.b16 %v25
  %v1130 = vunpack.c.l.b16 %v26
  %v1131 = vunpack.c.h.b16 %v26
  %v1132 = vunpack.c.l.b16 %v27
  %v1133 = vunpack.c.h.b16 %v27
  %v1134 = vunpack.c.l.b16 %v28
  %v1135 = vunpack.c.h.b16 %v28
  %v1136 = vunpack.c.l.b16 %v29
  %v1137 = vunpack.c.h.b16 %v29
  %v1138 = vunpack.c.l.b16 %v30
  %v1139 = vunpack.c.h.b16 %v30
  %v1140 = vunpack.c.l.b16 %v31
  %v1141 = vunpack.c.h.b16 %v31
  %v1142 = vunpack.c.l.b16 %v32
  %v1143 = vunpack.c.h.b16 %v32
  %v1144 = vunpack.c.l.b16 %v33
  %v1145 = vunpack.c.h.b16 %v33
  %v1146 = vunpack.c.l.b16 %v34
  %v1147 = vunpack.c.h.b16 %v34
  %v1148 = vunpack.c.l.b16 %v35
  %v1149 = vunpack.c.h.b16 %v35
  %v1150 = vunpack.c.l.b16 %v36
  %v1151 = vunpack.c.h.b16 %v36
  %v1152 = vunpack.c.l.b16 %v37
  %v1153 = vunpack.c.h.b16 %v37
  %v1154 = vunpack.c.l.b16 %v38
  %v1155 = vunpack.c.h.b16 %v38
  %v1156 = vunpack.c.l.b16 %v39
  %v1157 = vunpack.c.h.b16 %v39
  %v1158 = vunpack.c.l.b16 %v40
  %v1159 = vunpack.c.h.b16 %v40
  %v1160 = vunpack.c.l.b16 %v41
  %v1161 = vunpack.c.h.b16 %v41
  %v1162 = vunpack.c.l.b16 %v42
  %v1163 = vunpack.c.h.b16 %v42
  %v1164 = vunpack.c.l.b16 %v43
  %v1165 = vunpack.c.h.b16 %v43
  %v1166 = vunpack.c.l.b16 %v44
  %v1167 = vunpack.c.h.b16 %v44
  %v1168 = vunpack.c.l.b16 %v45
  %v1169 = vunpack.c.h.b16 %v45
  %v1170 = vunpack.c.l.b16 %v46
  %v1171 = vunpack.c.h.b16 %v46
  %v1172 = vunpack.c.l.b16 %v47
  %v1173 = vunpack.c.h.b16 %v47
  %v1174 = vunpack.c.l.b16 %v48
  %v1175 = vunpack.c.h.b16 %v48
  %v1176 = vunpack.c.l.b16 %v49
  %v1177 = vunpack.c.h.b16 %v49
  %v1178 = vunpack.c.l.b16 %v50
  %v1179 = vunpack.c.h.b16 %v50
  %v1180 = vunpack.c.l.b16 %v51
  %v1181 = vunpack.c.h.b16 %v51
  %v1182 = vunpack.c.l.b16 %v52
  %v1183 = vunpack.c.h.b16 %v52
  %v1184 = vunpack.c.l.b16 %v53
  %v1185 = vunpack.c.h.b16 %v53
  %v1186 = vunpack.c.l.b16 %v54
  %v1187 = vunpack.c.h.b16 %v54
  %v1188 = vunpack.c.l.b16 %v55
  %v1189 = vunpack.c.h.b16 %v55
  %v1190 = vunpack.c.l.b16 %v56
  %v1191 = vunpack.c.h.b16 %v56
  %v1192 = vunpack.c.l.b16 %v57
  %v1193 = vunpack.c.h.b16 %v57
  %v1194 = vunpack.c.l.b16 %v58
  %v1195 = vunpack.c.h.b16 %v58
  %v1196 = vunpack.c.l.b16 %v59
  %v1197 = vunpack.c.h.b16 %v59
  %v1198 = vunpack.c.l.b16 %v60
  %v1199 = vunpack.c.h.b16 %v60
  %v1200 = vunpack.c.l.b16 %v61
  %v1201 = vunpack.c.h.b16 %v61
  %v1202 = vunpack.c.l.b16 %v62
  %v1203 = vunpack.c.h.b16 %v62
  %v1204 = vunpack.c.l.b16 %v63
  %v1205 = vunpack.c.h.b16 %v63
  %v1206 = vunpack.c.l.b16 %v64
  %v1207 = vunpack.c.h.b16 %v64
  %v1208 = vunpack.c.l.b16 %v65
  %v1209 = vunpack.c.h.b16 %v65
  %v1210 = vunpack.c.l.b16 %v66
  %v1211 = vunpack.c.h.b16 %v66
  %v1212 = vunpack.c.l.b16 %v67
  %v1213 = vunpack.c.h.b16 %v67
  %v1214 = vunpack.c.l.b16 %v68
  %v1215 = vunpack.c.h.b16 %v68
  %v1216 = vunpack.c.l.b16 %v69
  %v1217 = vunpack.c.h.b16 %v69
  %v1218 = vunpack.c.l.b16 %v70
  %v1219 = vunpack.c.h.b16 %v70
  %v1220 = vunpack.c.l.b16 %v71
  %v1221 = vunpack.c.h.b16 %v71
  %v1222 = vunpack.c.l.b16 %v72
  %v1223 = vunpack.c.h.b16 %v72
  %v1224 = vunpack.c.l.b16 %v73
  %v1225 = vunpack.c.h.b16 %v73
  %v1226 = vunpack.c.l.b16 %v74
  %v1227 = vunpack.c.h.b16 %v74
  %v1228 = vunpack.c.l.b16 %v75
  %v1229 = vunpack.c.h.b16 %v75
  %v1230 = vunpack.c.l.b16 %v76
  %v1231 = vunpack.c.h.b16 %v76
  %v1232 = vunpack.c.l.b16 %v77
  %v1233 = vunpack.c.h.b16 %v77
  %v1234 = vunpack.c.l.b16 %v78
  %v1235 = vunpack.c.h.b16 %v78
  %v1236 = vunpack.c.l.b16 %v79
  %v1237 = vunpack.c.h.b16 %v79
  %v1238 = vunpack.c.l.b16 %v80
  %v1239 = vunpack.c.h.b16 %v80
  %v1240 = vunpack.c.l.b16 %v81
  %v1241 = vunpack.c.h.b16 %v81
  %v1242 = vunpack.c.l.b16 %v82
  %v1243 = vunpack.c.h.b16 %v82
  %v1244 = vunpack.c.l.b16 %v83
  %v1245 = vunpack.c.h.b16 %v83
  %v1246 = vunpack.c.l.b16 %v84
  %v1247 = vunpack.c.h.b16 %v84
  %v1248 = vunpack.c.l.b16 %v85
  %v1249 = vunpack.c.h.b16 %v85
  %v1250 = vunpack.c.l.b16 %v86
  %v1251 = vunpack.c.h.b16 %v86
  %v1252 = vunpack.c.l.b16 %v87
  %v1253 = vunpack.c.h.b16 %v87
  %v1254 = vunpack.c.l.b16 %v88
  %v1255 = vunpack.c.h.b16 %v88
  %v1256 = vunpack.c.l.b16 %v89
  %v1257 = vunpack.c.h.b16 %v89
  %v1258 = vunpack.c.l.b16 %v90
  %v1259 = vunpack.c.h.b16 %v90
  %v1260 = vunpack.c.l.b16 %v91
  %v1261 = vunpack.c.h.b16 %v91
  %v1262 = vunpack.c.l.b16 %v92
  %v1263 = vunpack.c.h.b16 %v92
  %v1264 = vunpack.c.l.b16 %v93
  %v1265 = vunpack.c.h.b16 %v93
  %v1266 = vunpack.c.l.b16 %v94
  %v1267 = vunpack.c.h.b16 %v94
  %v1268 = vunpack.c.l.b16 %v95
  %v1269 = vunpack.c.h.b16 %v95
  %v1270 = vunpack.c.l.b16 %v96
  %v1271 = vunpack.c.h.b16 %v96
  %v1272 = vunpack.c.l.b16 %v97
  %v1273 = vunpack.c.h.b16 %v97
  %v1274 = vunpack.c.l.b16 %v98
  %v1275 = vunpack.c.h.b16 %v98
  %v1276 = vunpack.c.l.b16 %v99
  %v1277 = vunpack.c.h.b16 %v99
  %v1278 = vunpack.c.l.b16 %v100
  %v1279 = vunpack.c.h.b16 %v100
  %v1280 = vunpack.c.l.b16 %v101
  %v1281 = vunpack.c.h.b16 %v101
  %v1282 = vunpack.c.l.b16 %v102
  %v1283 = vunpack.c.h.b16 %v102
  %v1284 = vunpack.c.l.b16 %v103
  %v1285 = vunpack.c.h.b16 %v103
  %v1286 = vunpack.c.l.b16 %v104
  %v1287 = vunpack.c.h.b16 %v104
  %v1288 = vunpack.c.l.b16 %v105
  %v1289 = vunpack.c.h.b16 %v105
  %v1290 = vunpack.c.l.b16 %v106
  %v1291 = vunpack.c.h.b16 %v106
  %v1292 = vunpack.c.l.b16 %v107
  %v1293 = vunpack.c.h.b16 %v107
  %v1294 = vunpack.c.l.b16 %v108
  %v1295 = vunpack.c.h.b16 %v108
  %v1296 = vunpack.c.l.b16 %v109
  %v1297 = vunpack.c.h.b16 %v109
  %v1298 = vunpack.c.l.b16 %v110
  %v1299 = vunpack.c.h.b16 %v110
  %v1300 = vunpack.c.l.b16 %v111
  %v1301 = vunpack.c.h.b16 %v111
  %v1302 = vunpack.c.l.b16 %v112
  %v1303 = vunpack.c.h.b16 %v112
  %v1304 = vunpack.c.l.b16 %v113
  %v1305 = vunpack.c.h.b16 %v113
  %v1306 = vunpack.c.l.b16 %v114
  %v1307 = vunpack.c.h.b16 %v114
  %v1308 = vunpack.c.l.b16 %v115
  %v1309 = vunpack.c.h.b16 %v115
  %v1310 = vunpack.c.l.b16 %v116
  %v1311 = vunpack.c.h.b16 %v116
  %v1312 = vunpack.c.l.b16 %v117
  %v1313 = vunpack.c.h.b16 %v117
  %v1314 = vunpack.c.l.b16 %v118
  %v1315 = vunpack.c.h.b16 %v118
  %v1316 = vunpack.c.l.b16 %v119
  %v1317 = vunpack.c.h.b16 %v119
  %v1318 = vunpack.c.l.b16 %v120
  %v1319 = vunpack.c.h.b16 %v120
  %v1320 = vunpack.c.l.b16 %v121
  %v1321 = vunpack.c.h.b16 %v121
  %v1322 = vunpack.c.l.b16 %v122
  %v1323 = vunpack.c.h.b16 %v122
  %v1324 = vunpack.c.l.b16 %v123
  %v1325 = vunpack.c.h.b16 %v123
  %v1326 = vunpack.c.l.b16 %v124
  %v1327 = vunpack.c.h.b16 %v124
  %v1328 = vunpack.c.l.b16 %v125
  %v1329 = vunpack.c.h.b16 %v125
  %v1330 = vunpack.c.l.b16 %v126
  %v1331 = vunpack.c.h.b16 %v126
  %v1332 = vunpack.c.l.b16 %v127
  %v1333 = vunpack.c.h.b16 %v127
  %v1334 = vunpack.c.l.b16 %v128
  %v1335 = vunpack.c.h.b16 %v128
  %v1336 = vunpack.c.l.b16 %v129
  %v1337 = vunpack.c.h.b16 %v129
  %v1338 = vunpack.c.l.b16 %v130
  %v1339 = vunpack.c.h.b16 %v130
  %v1340 = vunpack.c.l.b16 %v131
  %v1341 = vunpack.c.h.b16 %v131
  %v1342 = vunpack.c.l.b16 %v132
  %v1343 = vunpack.c.h.b16 %v132
  %v1344 = vunpack.c.l.b16 %v133
  %v1345 = vunpack.c.h.b16 %v133
  %v1346 = vunpack.c.l.b16 %v134
  %v1347 = vunpack.c.h.b16 %v134
  %v1348 = vunpack.c.l.b16 %v135
  %v1349 = vunpack.c.h.b16 %v135
  %v1350 = vunpack.c.l.b16 %v136
  %v1351 = vunpack.c.h.b16 %v136
  %v1352 = vunpack.c.l.b16 %v137
  %v1353 = vunpack.c.h.b16 %v137
  %v1354 = vunpack.c.l.b16 %v138
  %v1355 = vunpack.c.h.b16 %v138
  %v1356 = vunpack.c.l.b16 %v139
  %v1357 = vunpack.c.h.b16 %v139
  %v1358 = vunpack.c.l.b16 %v140
  %v1359 = vunpack.c.h.b16 %v140
  %v1360 = vunpack.c.l.b16 %v141
  %v1361 = vunpack.c.h.b16 %v141
  %v1362 = vunpack.c.l.b16 %v142
  %v1363 = vunpack.c.h.b16 %v142
  %v1364 = vunpack.c.l.b16 %v143
  %v1365 = vunpack.c.h.b16 %v143
  %v1366 = vunpack.c.l.b16 %v144
  %v1367 = vunpack.c.h.b16 %v144
  %v1368 = vunpack.c.l.b16 %v145
  %v1369 = vunpack.c.h.b16 %v145
  %v1370 = vunpack.c.l.b16 %v146
  %v1371 = vunpack.c.h.b16 %v146
  %v1372 = vunpack.c.l.b16 %v147
  %v1373 = vunpack.c.h.b16 %v147
  %v1374 = vunpack.c.l.b16 %v148
  %v1375 = vunpack.c.h.b16 %v148
  %v1376 = vunpack.c.l.b16 %v149
  %v1377 = vunpack.c.h.b16 %v149
  %v1378 = vunpack.c.l.b16 %v150
  %v1379 = vunpack.c.h.b16 %v150
  %v1380 = vunpack.c.l.b16 %v151
  %v1381 = vunpack.c.h.b16 %v151
  %v1382 = vunpack.c.l.b16 %v152
  %v1383 = vunpack.c.h.b16 %v152
  %v1384 = vunpack.c.l.b16 %v153
  %v1385 = vunpack.c.h.b16 %v153
  %v1386 = vunpack.c.l.b16 %v154
  %v1387 = vunpack.c.h.b16 %v154
  %v1388 = vunpack.c.l.b16 %v155
  %v1389 = vunpack.c.h.b16 %v155
  %v1390 = vunpack.c.l.b16 %v156
  %v1391 = vunpack.c.h.b16 %v156
  %v1392 = vunpack.c.l.b16 %v157
  %v1393 = vunpack.c.h.b16 %v157
  %v1394 = vunpack.c.l.b16 %v158
  %v1395 = vunpack.c.h.b16 %v158
  %v1396 = vunpack.c.l.b16 %v159
  %v1397 = vunpack.c.h.b16 %v159
  %v1398 = vunpack.c.l.b16 %v160
  %v1399 = vunpack.c.h.b16 %v160
  %v1400 = vunpack.c.l.b16 %v161
  %v1401 = vunpack.c.h.b16 %v161
  %v1402 = vunpack.c.l.b16 %v162
  %v1403 = vunpack.c.h.b16 %v162
  %v1404 = vunpack.c.l.b16 %v163
  %v1405 = vunpack.c.h.b16 %v163
  %v1406 = vunpack.c.l.b16 %v164
  %v1407 = vunpack.c.h.b16 %v164
  %v1408 = vunpack.c.l.b16 %v165
  %v1409 = vunpack.c.h.b16 %v165
  %v1410 = vunpack.c.l.b16 %v166
  %v1411 = vunpack.c.h.b16 %v166
  %v1412 = vunpack.c.l.b16 %v167
  %v1413 = vunpack.c.h.b16 %v167
  %v1414 = vunpack.c.l.b16 %v168
  %v1415 = vunpack.c.h.b16 %v168
  %v1416 = vunpack.c.l.b16 %v169
  %v1417 = vunpack.c.h.b16 %v169
  %v1418 = vunpack.c.l.b16 %v170
  %v1419 = vunpack.c.h.b16 %v170
  %v1420 = vunpack.c.l.b16 %v171
  %v1421 = vunpack.c.h.b16 %v171
  %v1422 = vunpack.c.l.b16 %v172
  %v1423 = vunpack.c.h.b16 %v172
  %v1424 = vunpack.c.l.b16 %v173
  %v1425 = vunpack.c.h.b16 %v173
  %v1426 = vunpack.c.l.b16 %v174
  %v1427 = vunpack.c.h.b16 %v174
  %v1428 = vunpack.c.l.b16 %v175
  %v1429 = vunpack.c.h.b16 %v175
  %v1430 = vunpack.c.l.b16 %v176
  %v1431 = vunpack.c.h.b16 %v176
  %v1432 = vunpack.c.l.b16 %v177
  %v1433 = vunpack.c.h.b16 %v177
  %v1434 = vunpack.c.l.b16 %v178
  %v1435 = vunpack.c.h.b16 %v178
  %v1436 = vunpack.c.l.b16 %v179
  %v1437 = vunpack.c.h.b16 %v179
  %v1438 = vunpack.c.l.b16 %v180
  %v1439 = vunpack.c.h.b16 %v180
  %v1440 = vunpack.c.l.b16 %v181
  %v1441 = vunpack.c.h.b16 %v181
  %v1442 = vunpack.c.l.b16 %v182
  %v1443 = vunpack.c.h.b16 %v182
  %v1444 = vunpack.c.l.b16 %v183
  %v1445 = vunpack.c.h.b16 %v183
  %v1446 = vunpack.c.l.b16 %v184
  %v1447 = vunpack.c.h.b16 %v184
  %v1448 = vunpack.c.l.b16 %v185
  %v1449 = vunpack.c.h.b16 %v185
  %v1450 = vunpack.c.l.b16 %v186
  %v1451 = vunpack.c.h.b16 %v186
  %v1452 = vunpack.c.l.b16 %v187
  %v1453 = vunpack.c.h.b16 %v187
  %v1454 = vunpack.c.l.b16 %v188
  %v1455 = vunpack.c.h.b16 %v188
  %v1456 = vunpack.c.l.b16 %v189
  %v1457 = vunpack.c.h.b16 %v189
  %v1458 = vunpack.c.l.b16 %v190
  %v1459 = vunpack.c.h.b16 %v190
  %v1460 = vunpack.c.l.b16 %v191
  %v1461 = vunpack.c.h.b16 %v191
  %v1462 = vunpack.c.l.b16 %v192
  %v1463 = vunpack.c.h.b16 %v192
  %v1464 = vunpack.c.l.b16 %v193
  %v1465 = vunpack.c.h.b16 %v193
  %v1466 = vunpack.c.l.b16 %v194
  %v1467 = vunpack.c.h.b16 %v194
  %v1468 = vunpack.c.l.b16 %v195
  %v1469 = vunpack.c.h.b16 %v195
  %v1470 = vunpack.c.l.b16 %v196
  %v1471 = vunpack.c.h.b16 %v196
  %v1472 = vunpack.c.l.b16 %v197
  %v1473 = vunpack.c.h.b16 %v197
  %v1474 = vunpack.c.l.b16 %v198
  %v1475 = vunpack.c.h.b16 %v198
  %v1476 = vunpack.c.l.b16 %v199
  %v1477 = vunpack.c.h.b16 %v199
  %v1478 = vunpack.c.l.b16 %v200
  %v1479 = vunpack.c.h.b16 %v200
  %v1480 = vunpack.c.l.b16 %v201
  %v1481 = vunpack.c.h.b16 %v201
  %v1482 = vunpack.c.l.b16 %v202
  %v1483 = vunpack.c.h.b16 %v202
  %v1484 = vunpack.c.l.b16 %v203
  %v1485 = vunpack.c.h.b16 %v203
  %v1486 = vunpack.c.l.b16 %v204
  %v1487 = vunpack.c.h.b16 %v204
  %v1488 = vunpack.c.l.b16 %v205
  %v1489 = vunpack.c.h.b16 %v205
  %v1490 = vunpack.c.l.b16 %v206
  %v1491 = vunpack.c.h.b16 %v206
  %v1492 = vunpack.c.l.b16 %v207
  %v1493 = vunpack.c.h.b16 %v207
  %v1494 = vunpack.c.l.b16 %v208
  %v1495 = vunpack.c.h.b16 %v208
  %v1496 = vunpack.c.l.b16 %v209
  %v1497 = vunpack.c.h.b16 %v209
  %v1498 = vunpack.c.l.b16 %v210
  %v1499 = vunpack.c.h.b16 %v210
  %v1500 = vunpack.c.l.b16 %v211
  %v1501 = vunpack.c.h.b16 %v211
  %v1502 = vunpack.c.l.b16 %v212
  %v1503 = vunpack.c.h.b16 %v212
  %v1504 = vunpack.c.l.b16 %v213
  %v1505 = vunpack.c.h.b16 %v213
  %v1506 = vunpack.c.l.b16 %v214
  %v1507 = vunpack.c.h.b16 %v214
  %v1508 = vunpack.c.l.b16 %v215
  %v1509 = vunpack.c.h.b16 %v215
  %v1510 = vunpack.c.l.b16 %v216
  %v1511 = vunpack.c.h.b16 %v216
  %v1512 = vunpack.c.l.b16 %v217
  %v1513 = vunpack.c.h.b16 %v217
  %v1514 = vunpack.c.l.b16 %v218
  %v1515 = vunpack.c.h.b16 %v218
  %v1516 = vunpack.c.l.b16 %v219
  %v1517 = vunpack.c.h.b16 %v219
  %v1518 = vunpack.c.l.b16 %v220
  %v1519 = vunpack.c.h.b16 %v220
  %v1520 = vunpack.c.l.b16 %v221
  %v1521 = vunpack.c.h.b16 %v221
  %v1522 = vunpack.c.l.b16 %v222
  %v1523 = vunpack.c.h.b16 %v222
  %v1524 = vunpack.c.l.b16 %v223
  %v1525 = vunpack.c.h.b16 %v223
  %v1526 = vunpack.c.l.b16 %v224
  %v1527 = vunpack.c.h.b16 %v224
  %v1528 = vunpack.c.l.b16 %v225
  %v1529 = vunpack.c.h.b16 %v225
  %v1530 = vunpack.c.l.b16 %v226
  %v1531 = vunpack.c.h.b16 %v226
  %v1532 = vunpack.c.l.b16 %v227
  %v1533 = vunpack.c.h.b16 %v227
  %v1534 = vunpack.c.l.b16 %v228
  %v1535 = vunpack.c.h.b16 %v228
  %v1536 = vunpack.c.l.b16 %v229
  %v1537 = vunpack.c.h.b16 %v229
  %v1538 = vunpack.c.l.b16 %v230
  %v1539 = vunpack.c.h.b16 %v230
  %v1540 = vunpack.c.l.b16 %v231
  %v1541 = vunpack.c.h.b16 %v231
  %v1542 = vunpack.c.l.b16 %v232
  %v1543 = vunpack.c.h.b16 %v232
  %v1544 = vunpack.c.l.b16 %v233
  %v1545 = vunpack.c.h.b16 %v233
  %v1546 = vunpack.c.l.b16 %v234
  %v1547 = vunpack.c.h.b16 %v234
  %v1548 = vunpack.c.l.b16 %v235
  %v1549 = vunpack.c.h.b16 %v235
  %v1550 = vunpack.c.l.b16 %v236
  %v1551 = vunpack.c.h.b16 %v236
  %v1552 = vunpack.c.l.b16 %v237
  %v1553 = vunpack.c.h.b16 %v237
  %v1554 = vunpack.c.l.b16 %v238
  %v1555 = vunpack.c.h.b16 %v238
  %v1556 = vunpack.c.l.b16 %v239
  %v1557 = vunpack.c.h.b16 %v239
  %v1558 = vunpack.c.l.b16 %v240
  %v1559 = vunpack.c.h.b16 %v240
  %v1560 = vunpack.c.l.b16 %v241
  %v1561 = vunpack.c.h.b16 %v241
  %v1562 = vunpack.c.l.b16 %v242
  %v1563 = vunpack.c.h.b16 %v242
  %v1564 = vunpack.c.l.b16 %v243
  %v1565 = vunpack.c.h.b16 %v243
  %v1566 = vunpack.c.l.b16 %v244
  %v1567 = vunpack.c.h.b16 %v244
  %v1568 = vunpack.c.l.b16 %v245
  %v1569 = vunpack.c.h.b16 %v245
  %v1570 = vunpack.c.l.b16 %v246
  %v1571 = vunpack.c.h.b16 %v246
  %v1572 = vunpack.c.l.b16 %v247
  %v1573 = vunpack.c.h.b16 %v247
  %v1574 = vunpack.c.l.b16 %v248
  %v1575 = vunpack.c.h.b16 %v248
  %v1576 = vunpack.c.l.b16 %v249
  %v1577 = vunpack.c.h.b16 %v249
  %v1578 = vunpack.c.l.b16 %v250
  %v1579 = vunpack.c.h.b16 %v250
  %v1580 = vunpack.c.l.b16 %v251
  %v1581 = vunpack.c.h.b16 %v251
  %v1582 = vunpack.c.l.b16 %v252
  %v1583 = vunpack.c.h.b16 %v252
  %v1584 = vunpack.c.l.b16 %v253
  %v1585 = vunpack.c.h.b16 %v253
  %v1586 = vunpack.c.l.b16 %v254
  %v1587 = vunpack.c.h.b16 %v254
  %v1588 = vunpack.c.l.b16 %v255
  %v1589 = vunpack.c.h.b16 %v255
  %v1590 = vunpack.c.l.b16 %v256
  %v1591 = vunpack.c.h.b16 %v256
  %v1592 = vunpack.c.l.b16 %v257
  %v1593 = vunpack.c.h.b16 %v257
  %v1594 = vunpack.c.l.b16 %v258
  %v1595 = vunpack.c.h.b16 %v258
  %v1596 = vunpack.c.l.b16 %v259
  %v1597 = vunpack.c.h.b16 %v259
  %v1598 = vunpack.c.l.b16 %v260
  %v1599 = vunpack.c.h.b16 %v260
  %v1600 = vunpack.c.l.b16 %v261
  %v1601 = vunpack.c.h.b16 %v261
  %v1602 = vunpack.c.l.b16 %v262
  %v1603 = vunpack.c.h.b16 %v262
  %v1604 = vunpack.c.l.b16 %v263
  %v1605 = vunpack.c.h.b16 %v263
  %v1606 = vunpack.c.l.b16 %v264
  %v1607 = vunpack.c.h.b16 %v264
  %v1608 = vunpack.c.l.b16 %v265
  %v1609 = vunpack.c.h.b16 %v265
  %v1610 = vunpack.c.l.b16 %v266
  %v1611 = vunpack.c.h.b16 %v266
  %v1612 = vunpack.c.l.b16 %v267
  %v1613 = vunpack.c.h.b16 %v267
  %v1614 = vunpack.c.l.b16 %v268
  %v1615 = vunpack.c.h.b16 %v268
  %v1616 = vunpack.c.l.b16 %v269
  %v1617 = vunpack.c.h.b16 %v269
  %v1618 = vunpack.c.l.b16 %v270
  %v1619 = vunpack.c.h.b16 %v270
  %v1620 = vunpack.c.l.b16 %v271
  %v1621 = vunpack.c.h.b16 %v271
  %v1622 = vunpack.c.l.b16 %v272
  %v1623 = vunpack.c.h.b16 %v272
  %v1624 = vunpack.c.l.b16 %v273
  %v1625 = vunpack.c.h.b16 %v273
  %v1626 = vunpack.c.l.b16 %v274
  %v1627 = vunpack.c.h.b16 %v274
  %v1628 = vunpack.c.l.b16 %v275
  %v1629 = vunpack.c.h.b16 %v275
  %v1630 = vunpack.c.l.b16 %v276
  %v1631 = vunpack.c.h.b16 %v276
  %v1632 = vunpack.c.l.b16 %v277
  %v1633 = vunpack.c.h.b16 %v277
  %v1634 = vunpack.c.l.b16 %v278
  %v1635 = vunpack.c.h.b16 %v278
  %v1636 = vunpack.c.l.b16 %v279
  %v1637 = vunpack.c.h.b16 %v279
  %v1638 = vunpack.c.l.b16 %v280
  %v1639 = vunpack.c.h.b16 %v280
  %v1640 = vunpack.c.l.b16 %v281
  %v1641 = vunpack.c.h.b16 %v281
  %v1642 = vunpack.c.l.b16 %v282
  %v1643 = vunpack.c.h.b16 %v282
  %v1644 = vunpack.c.l.b16 %v283
  %v1645 = vunpack.c.h.b16 %v283
  %v1646 = vunpack.c.l.b16 %v284
  %v1647 = vunpack.c.h.b16 %v284
  %v1648 = vunpack.c.l.b16 %v285
  %v1649 = vunpack.c.h.b16 %v285
  %v1650 = vunpack.c.l.b16 %v286
  %v1651 = vunpack.c.h.b16 %v286
  %v1652 = vunpack.c.l.b16 %v287
  %v1653 = vunpack.c.h.b16 %v287
  %v1654 = vunpack.c.l.b16 %v288
  %v1655 = vunpack.c.h.b16 %v288
  %v1656 = vunpack.c.l.b16 %v289
  %v1657 = vunpack.c.h.b16 %v289
  %v1658 = vunpack.c.l.b16 %v290
  %v1659 = vunpack.c.h.b16 %v290
  %v1660 = vunpack.c.l.b16 %v291
  %v1661 = vunpack.c.h.b16 %v291
  %v1662 = vunpack.c.l.b16 %v292
  %v1663 = vunpack.c.h.b16 %v292
  %v1664 = vunpack.c.l.b16 %v293
  %v1665 = vunpack.c.h.b16 %v293
  %v1666 = vunpack.c.l.b16 %v294
  %v1667 = vunpack.c.h.b16 %v294
  %v1668 = vunpack.c.l.b16 %v295
  %v1669 = vunpack.c.h.b16 %v295
  %v1670 = vunpack.c.l.b16 %v296
  %v1671 = vunpack.c.h.b16 %v296
  %v1672 = vunpack.c.l.b16 %v297
  %v1673 = vunpack.c.h.b16 %v297
  %v1674 = vunpack.c.l.b16 %v298
  %v1675 = vunpack.c.h.b16 %v298
  %v1676 = vunpack.c.l.b16 %v299
  %v1677 = vunpack.c.h.b16 %v299
  %v1678 = vunpack.c.l.b16 %v300
  %v1679 = vunpack.c.h.b16 %v300
  %v1680 = vunpack.c.l.b16 %v301
  %v1681 = vunpack.c.h.b16 %v301
  %v1682 = vunpack.c.l.b16 %v302
  %v1683 = vunpack.c.h.b16 %v302
  %v1684 = vunpack.c.l.b16 %v303
  %v1685 = vunpack.c.h.b16 %v303
  %v1686 = vunpack.c.l.b16 %v304
  %v1687 = vunpack.c.h.b16 %v304
  %v1688 = vunpack.c.l.b16 %v305
  %v1689 = vunpack.c.h.b16 %v305
  %v1690 = vunpack.c.l.b16 %v306
  %v1691 = vunpack.c.h.b16 %v306
  %v1692 = vunpack.c.l.b16 %v307
  %v1693 = vunpack.c.h.b16 %v307
  %v1694 = vunpack.c.l.b16 %v308
  %v1695 = vunpack.c.h.b16 %v308
  %v1696 = vunpack.c.l.b16 %v309
  %v1697 = vunpack.c.h.b16 %v309
  %v1698 = vunpack.c.l.b16 %v310
  %v1699 = vunpack.c.h.b16 %v310
  %v1700 = vunpack.c.l.b16 %v311
  %v1701 = vunpack.c.h.b16 %v311
  %v1702 = vunpack.c.l.b16 %v312
  %v1703 = vunpack.c.h.b16 %v312
  %v1704 = vunpack.c.l.b16 %v313
  %v1705 = vunpack.c.h.b16 %v313
  %v1706 = vunpack.c.l.b16 %v314
  %v1707 = vunpack.c.h.b16 %v314
  %v1708 = vunpack.c.l.b16 %v315
  %v1709 = vunpack.c.h.b16 %v315
  %v1710 = vunpack.c.l.b16 %v316
  %v1711 = vunpack.c.h.b16 %v316
  %v1712 = vunpack.c.l.b16 %v317
  %v1713 = vunpack.c.h.b16 %v317
  %v1714 = vunpack.c.l.b16 %v318
  %v1715 = vunpack.c.h.b16 %v318
  %v1716 = vunpack.c.l.b16 %v319
  %v1717 = vunpack.c.h.b16 %v319
  %v1718 = vunpack.c.l.b16 %v320
  %v1719 = vunpack.c.h.b16 %v320
  %v1720 = vunpack.c.l.b16 %v321
  %v1721 = vunpack.c.h.b16 %v321
  %v1722 = vunpack.c.l.b16 %v322
  %v1723 = vunpack.c.h.b16 %v322
  %v1724 = vunpack.c.l.b16 %v323
  %v1725 = vunpack.c.h.b16 %v323
  %v1726 = vunpack.c.l.b16 %v324
  %v1727 = vunpack.c.h.b16 %v324
  %v1728 = vunpack.c.l.b16 %v325
  %v1729 = vunpack.c.h.b16 %v325
  %v1730 = vunpack.c.l.b16 %v326
  %v1731 = vunpack.c.h.b16 %v326
  %v1732 = vunpack.c.l.b16 %v327
  %v1733 = vunpack.c.h.b16 %v327
  %v1734 = vunpack.c.l.b16 %v328
  %v1735 = vunpack.c.h.b16 %v328
  %v1736 = vunpack.c.l.b16 %v329
  %v1737 = vunpack.c.h.b16 %v329
  %v1738 = vunpack.c.l.b16 %v330
  %v1739 = vunpack.c.h.b16 %v330
  %v1740 = vunpack.c.l.b16 %v331
  %v1741 = vunpack.c.h.b16 %v331
  %v1742 = vunpack.c.l.b16 %v332
  %v1743 = vunpack.c.h.b16 %v332
  %v1744 = vunpack.c.l.b16 %v333
  %v1745 = vunpack.c.h.b16 %v333
  %v1746 = vunpack.c.l.b16 %v334
  %v1747 = vunpack.c.h.b16 %v334
  %v1748 = vunpack.c.l.b16 %v335
  %v1749 = vunpack.c.h.b16 %v335
  %v1750 = vunpack.c.l.b16 %v336
  %v1751 = vunpack.c.h.b16 %v336
  %v1752 = vunpack.c.l.b16 %v337
  %v1753 = vunpack.c.h.b16 %v337
  %v1754 = vunpack.c.l.b16 %v338
  %v1755 = vunpack.c.h.b16 %v338
  %v1756 = vunpack.c.l.b16 %v339
  %v1757 = vunpack.c.h.b16 %v339
  %v1758 = vunpack.c.l.b16 %v340
  %v1759 = vunpack.c.h.b16 %v340
  %v1760 = vunpack.c.l.b16 %v341
  %v1761 = vunpack.c.h.b16 %v341
  %v1762 = vunpack.c.l.b16 %v342
  %v1763 = vunpack.c.h.b16 %v342
  %v1764 = vunpack.c.l.b16 %v343
  %v1765 = vunpack.c.h.b16 %v343
  %v1766 = vunpack.c.l.b16 %v344
  %v1767 = vunpack.c.h.b16 %v344
  %v1768 = vunpack.c.l.b16 %v345
  %v1769 = vunpack.c.h.b16 %v345
  %v1770 = vunpack.c.l.b16 %v346
  %v1771 = vunpack.c.h.b16 %v346
  %v1772 = vunpack.c.l.b16 %v347
  %v1773 = vunpack.c.h.b16 %v347
  %v1774 = vunpack.c.l.b16 %v348
  %v1775 = vunpack.c.h.b16 %v348
  %v1776 = vunpack.c.l.b16 %v349
  %v1777 = vunpack.c.h.b16 %v349
  %v1778 = vunpack.c.l.b16 %v350
  %v1779 = vunpack.c.h.b16 %v350
  %v1780 = vunpack.c.l.b16 %v351
  %v1781 = vunpack.c.h.b16 %v351
  %v1782 = vunpack.c.l.b16 %v352
  %v1783 = vunpack.c.h.b16 %v352
  %v1784 = vunpack.c.l.b16 %v353
  %v1785 = vunpack.c.h.b16 %v353
  %v1786 = vunpack.c.l.b16 %v354
  %v1787 = vunpack.c.h.b16 %v354
  %v1788 = vunpack.c.l.b16 %v355
  %v1789 = vunpack.c.h.b16 %v355
  %v1790 = vunpack.c.l.b16 %v356
  %v1791 = vunpack.c.h.b16 %v356
  %v1792 = vunpack.c.l.b16 %v357
  %v1793 = vunpack.c.h.b16 %v357
  %v1794 = vunpack.c.l.b16 %v358
  %v1795 = vunpack.c.h.b16 %v358
  %v1796 = vunpack.c.l.b16 %v359
  %v1797 = vunpack.c.h.b16 %v359
  %v1798 = vunpack.c.l.b16 %v360
  %v1799 = vunpack.c.h.b16 %v360
  %v1800 = vunpack.c.l.b16 %v361
  %v1801 = vunpack.c.h.b16 %v361
  %v1802 = vunpack.c.l.b16 %v362
  %v1803 = vunpack.c.h.b16 %v362
  %v1804 = vunpack.c.l.b16 %v363
  %v1805 = vunpack.c.h.b16 %v363
  %v1806 = vunpack.c.l.b16 %v364
  %v1807 = vunpack.c.h.b16 %v364
  %v1808 = vunpack.c.l.b16 %v365
  %v1809 = vunpack.c.h.b16 %v365
  %v1810 = vunpack.c.l.b16 %v366
  %v1811 = vunpack.c.h.b16 %v366
  %v1812 = vunpack.c.l.b16 %v367
  %v1813 = vunpack.c.h.b16 %v367
  %v1814 = vunpack.c.l.b16 %v368
  %v1815 = vunpack.c.h.b16 %v368
  %v1816 = vunpack.c.l.b16 %v369
  %v1817 = vunpack.c.h.b16 %v369
  %v1818 = vunpack.c.l.b16 %v370
  %v1819 = vunpack.c.h.b16 %v370
  %v1820 = vunpack.c.l.b16 %v371
  %v1821 = vunpack.c.h.b16 %v371
  %v1822 = vunpack.c.l.b16 %v372
  %v1823 = vunpack.c.h.b16 %v372
  %v1824 = vunpack.c.l.b16 %v373
  %v1825 = vunpack.c.h.b16 %v373
  %v1826 = vunpack.c.l.b16 %v374
  %v1827 = vunpack.c.h.b16 %v374
  %v1828 = vunpack.c.l.b16 %v375
  %v1829 = vunpack.c.h.b16 %v375
  %v1830 = vunpack.c.l.b16 %v376
  %v1831 = vunpack.c.h.b16 %v376
  %v1832 = vunpack.c.l.b16 %v377
  %v1833 = vunpack.c.h.b16 %v377
  %v1834 = vunpack.c.l.b16 %v378
  %v1835 = vunpack.c.h.b16 %v378
  %v1836 = vunpack.c.l.b16 %v379
  %v1837 = vunpack.c.h.b16 %v379
  %v1838 = vunpack.c.l.b16 %v380
  %v1839 = vunpack.c.h.b16 %v380
  %v1840 = vunpack.c.l.b16 %v381
  %v1841 = vunpack.c.h.b16 %v381
  %v1842 = vunpack.c.l.b16 %v382
  %v1843 = vunpack.c.h.b16 %v382
  %v1844 = vunpack.c.l.b16 %v383
  %v1845 = vunpack.c.h.b16 %v383
  %v1846 = vunpack.c.l.b16 %v384
  %v1847 = vunpack.c.h.b16 %v384
  %v1848 = vunpack.c.l.b16 %v385
  %v1849 = vunpack.c.h.b16 %v385
  %v1850 = vunpack.c.l.b16 %v386
  %v1851 = vunpack.c.h.b16 %v386
  %v1852 = vunpack.c.l.b16 %v387
  %v1853 = vunpack.c.h.b16 %v387
  %v1854 = vunpack.c.l.b16 %v388
  %v1855 = vunpack.c.h.b16 %v388
  %v1856 = vunpack.c.l.b16 %v389
  %v1857 = vunpack.c.h.b16 %v389
  %v1858 = vunpack.c.l.b16 %v390
  %v1859 = vunpack.c.h.b16 %v390
  %v1860 = vunpack.c.l.b16 %v391
  %v1861 = vunpack.c.h.b16 %v391
  %v1862 = vunpack.c.l.b16 %v392
  %v1863 = vunpack.c.h.b16 %v392
  %v1864 = vunpack.c.l.b16 %v393
  %v1865 = vunpack.c.h.b16 %v393
  %v1866 = vunpack.c.l.b16 %v394
  %v1867 = vunpack.c.h.b16 %v394
  %v1868 = vunpack.c.l.b16 %v395
  %v1869 = vunpack.c.h.b16 %v395
  %v1870 = vunpack.c.l.b16 %v396
  %v1871 = vunpack.c.h.b16 %v396
  %v1872 = vunpack.c.l.b16 %v397
  %v1873 = vunpack.c.h.b16 %v397
  %v1874 = vunpack.c.l.b16 %v398
  %v1875 = vunpack.c.h.b16 %v398
  %v1876 = vunpack.c.l.b16 %v399
  %v1877 = vunpack.c.h.b16 %v399
  %v1878 = vunpack.c.l.b16 %v400
  %v1879 = vunpack.c.h.b16 %v400
  %v1880 = vunpack.c.l.b16 %v401
  %v1881 = vunpack.c.h.b16 %v401
  %v1882 = vunpack.c.l.b16 %v402
  %v1883 = vunpack.c.h.b16 %v402
  %v1884 = vunpack.c.l.b16 %v403
  %v1885 = vunpack.c.h.b16 %v403
  %v1886 = vunpack.c.l.b16 %v404
  %v1887 = vunpack.c.h.b16 %v404
  %v1888 = vunpack.c.l.b16 %v405
  %v1889 = vunpack.c.h.b16 %v405
  %v1890 = vunpack.c.l.b16 %v406
  %v1891 = vunpack.c.h.b16 %v406
  %v1892 = vunpack.c.l.b16 %v407
  %v1893 = vunpack.c.h.b16 %v407
  %v1894 = vunpack.c.l.b16 %v408
  %v1895 = vunpack.c.h.b16 %v408
  %v1896 = vunpack.c.l.b16 %v409
  %v1897 = vunpack.c.h.b16 %v409
  %v1898 = vunpack.c.l.b16 %v410
  %v1899 = vunpack.c.h.b16 %v410
  %v1900 = vunpack.c.l.b16 %v411
  %v1901 = vunpack.c.h.b16 %v411
  %v1902 = vunpack.c.l.b16 %v412
  %v1903 = vunpack.c.h.b16 %v412
  %v1904 = vunpack.c.l.b16 %v413
  %v1905 = vunpack.c.h.b16 %v413
  %v1906 = vunpack.c.l.b16 %v414
  %v1907 = vunpack.c.h.b16 %v414
  %v1908 = vunpack.c.l.b16 %v415
  %v1909 = vunpack.c.h.b16 %v415
  %v1910 = vunpack.c.l.b16 %v416
  %v1911 = vunpack.c.h.b16 %v416
  %v1912 = vunpack.c.l.b16 %v417
  %v1913 = vunpack.c.h.b16 %v417
  %v1914 = vunpack.c.l.b16 %v418
  %v1915 = vunpack.c.h.b16 %v418
  %v1916 = vunpack.c.l.b16 %v419
  %v1917 = vunpack.c.h.b16 %v419
  %v1918 = vunpack.c.l.b16 %v420
  %v1919 = vunpack.c.h.b16 %v420
  %v1920 = vunpack.c.l.b16 %v421
  %v1921 = vunpack.c.h.b16 %v421
  %v1922 = vunpack.c.l.b16 %v422
  %v1923 = vunpack.c.h.b16 %v422
  %v1924 = vunpack.c.l.b16 %v423
  %v1925 = vunpack.c.h.b16 %v423
  %v1926 = vunpack.c.l.b16 %v424
  %v1927 = vunpack.c.h.b16 %v424
  %v1928 = vunpack.c.l.b16 %v425
  %v1929 = vunpack.c.h.b16 %v425
  %v1930 = vunpack.c.l.b16 %v426
  %v1931 = vunpack.c.h.b16 %v426
  %v1932 = vunpack.c.l.b16 %v427
  %v1933 = vunpack.c.h.b16 %v427
  %v1934 = vunpack.c.l.b16 %v428
  %v1935 = vunpack.c.h.b16 %v428
  %v1936 = vunpack.c.l.b16 %v429
  %v1937 = vunpack.c.h.b16 %v429
  %v1938 = vunpack.c.l.b16 %v430
  %v1939 = vunpack.c.h.b16 %v430
  %v1940 = vunpack.c.l.b16 %v431
  %v1941 = vunpack.c.h.b16 %v431
  %v1942 = vunpack.c.l.b16 %v432
  %v1943 = vunpack.c.h.b16 %v432
  %v1944 = vunpack.c.l.b16 %v433
  %v1945 = vunpack.c.h.b16 %v433
  %v1946 = vunpack.c.l.b16 %v434
  %v1947 = vunpack.c.h.b16 %v434
  %v1948 = vunpack.c.l.b16 %v435
  %v1949 = vunpack.c.h.b16 %v435
  %v1950 = vunpack.c.l.b16 %v436
  %v1951 = vunpack.c.h.b16 %v436
  %v1952 = vunpack.c.l.b16 %v437
  %v1953 = vunpack.c.h.b16 %v437
  %v1954 = vunpack.c.l.b16 %v438
  %v1955 = vunpack.c.h.b16 %v438
  %v1956 = vunpack.c.l.b16 %v439
  %v1957 = vunpack.c.h.b16 %v439
  %v1958 = vunpack.c.l.b16 %v440
  %v1959 = vunpack.c.h.b16 %v440
  %v1960 = vunpack.c.l.b16 %v441
  %v1961 = vunpack.c.h.b16 %v441
  %v1962 = vunpack.c.l.b16 %v442
  %v1963 = vunpack.c.h.b16 %v442
  %v1964 = vunpack.c.l.b16 %v443
  %v1965 = vunpack.c.h.b16 %v443
  %v1966 = vunpack.c.l.b16 %v444
  %v1967 = vunpack.c.h.b16 %v444
  %v1968 = vunpack.c.l.b16 %v445
  %v1969 = vunpack.c.h.b16 %v445
  %v1970 = vunpack.c.l.b16 %v446
  %v1971 = vunpack.c.h.b16 %v446
  %v1972 = vunpack.c.l.b16 %v447
  %v1973 = vunpack.c.h.b16 %v447
  %v1974 = vunpack.c.l.b16 %v448
  %v1975 = vunpack.c.h.b16 %v448
  %v1976 = vunpack.c.l.b16 %v449
  %v1977 = vunpack.c.h.b16 %v449
  %v1978 = vunpack.c.l.b16 %v450
  %v1979 = vunpack.c.h.b16 %v450
  %v1980 = vunpack.c.l.b16 %v451
  %v1981 = vunpack.c.h.b16 %v451
  %v1982 = vunpack.c.l.b16 %v452
  %v1983 = vunpack.c.h.b16 %v452
  %v1984 = vunpack.c.l.b16 %v453
  %v1985 = vunpack.c.h.b16 %v453
  %v1986 = vunpack.c.l.b16 %v454
  %v1987 = vunpack.c.h.b16 %v454
  %v1988 = vunpack.c.l.b16 %v455
  %v1989 = vunpack.c.h.b16 %v455
  %v1990 = vunpack.c.l.b16 %v456
  %v1991 = vunpack.c.h.b16 %v456
  %v1992 = vunpack.c.l.b16 %v457
  %v1993 = vunpack.c.h.b16 %v457
  %v1994 = vunpack.c.l.b16 %v458
  %v1995 = vunpack.c.h.b16 %v458
  %v1996 = vunpack.c.l.b16 %v459
  %v1997 = vunpack.c.h.b16 %v459
  %v1998 = vunpack.c.l.b16 %v460
  %v1999 = vunpack.c.h.b16 %v460
  %v2000 = vunpack.c.l.b16 %v461
  %v2001 = vunpack.c.h.b16 %v461
  %v2002 = vunpack.c.l.b16 %v462
  %v2003 = vunpack.c.h.b16 %v462
  %v2004 = vunpack.c.l.b16 %v463
  %v2005 = vunpack.c.h.b16 %v463
  %v2006 = vunpack.c.l.b16 %v464
  %v2007 = vunpack.c.h.b16 %v464
  %v2008 = vunpack.c.l.b16 %v465
  %v2009 = vunpack.c.h.b16 %v465
  %v2010 = vunpack.c.l.b16 %v466
  %v2011 = vunpack.c.h.b16 %v466
  %v2012 = vunpack.c.l.b16 %v467
  %v2013 = vunpack.c.h.b16 %v467
  %v2014 = vunpack.c.l.b16 %v468
  %v2015 = vunpack.c.h.b16 %v468
  %v2016 = vunpack.c.l.b16 %v469
  %v2017 = vunpack.c.h.b16 %v469
  %v2018 = vunpack.c.l.b16 %v470
  %v2019 = vunpack.c.h.b16 %v470
  %v2020 = vunpack.c.l.b16 %v471
  %v2021 = vunpack.c.h.b16 %v471
  %v2022 = vunpack.c.l.b16 %v472
  %v2023 = vunpack.c.h.b16 %v472
  %v2024 = vunpack.c.l.b16 %v473
  %v2025 = vunpack.c.h.b16 %v473
  %v2026 = vunpack.c.l.b16 %v474
  %v2027 = vunpack.c.h.b16 %v474
  %v2028 = vunpack.c.l.b16 %v475
  %v2029 = vunpack.c.h.b16 %v475
  %v2030 = vunpack.c.l.b16 %v476
  %v2031 = vunpack.c.h.b16 %v476
  %v2032 = vunpack.c.l.b16 %v477
  %v2033 = vunpack.c.h.b16 %v477
  %v2034 = vunpack.c.l.b16 %v478
  %v2035 = vunpack.c.h.b16 %v478
  %v2036 = vunpack.c.l.b16 %v479
  %v2037 = vunpack.c.h.b16 %v479
  %v2038 = vunpack.c.l.b16 %v480
  %v2039 = vunpack.c.h.b16 %v480
  %v2040 = vunpack.c.l.b16 %v481
  %v2041 = vunpack.c.h.b16 %v481
  %v2042 = vunpack.c.l.b16 %v482
  %v2043 = vunpack.c.h.b16 %v482
  %v2044 = vunpack.c.l.b16 %v483
  %v2045 = vunpack.c.h.b16 %v483
  %v2046 = vunpack.c.l.b16 %v484
  %v2047 = vunpack.c.h.b16 %v484
  %v2048 = vunpack.c.l.b16 %v485
  %v2049 = vunpack.c.h.b16 %v485
  %v2050 = vunpack.c.l.b16 %v486
  %v2051 = vunpack.c.h.b16 %v486
  %v2052 = vunpack.c.l.b16 %v487
  %v2053 = vunpack.c.h.b16 %v487
  %v2054 = vunpack.c.l.b16 %v488
  %v2055 = vunpack.c.h.b16 %v488
  %v2056 = vunpack.c.l.b16 %v489
  %v2057 = vunpack.c.h.b16 %v489
  %v2058 = vunpack.c.l.b16 %v490
  %v2059 = vunpack.c.h.b16 %v490
  %v2060 = vunpack.c.l.b16 %v491
  %v2061 = vunpack.c.h.b16 %v491
  %v2062 = vunpack.c.l.b16 %v492
  %v2063 = vunpack.c.h.b16 %v492
  %v2064 = vunpack.c.l.b16 %v493
  %v2065 = vunpack.c.h.b16 %v493
  %v2066 = vunpack.c.l.b16 %v494
  %v2067 = vunpack.c.h.b16 %v494
  %v2068 = vunpack.c.l.b16 %v495
  %v2069 = vunpack.c.h.b16 %v495
  %v2070 = vunpack.c.l.b16 %v496
  %v2071 = vunpack.c.h.b16 %v496
  %v2072 = vunpack.c.l.b16 %v497
  %v2073 = vunpack.c.h.b16 %v497
  %v2074 = vunpack.c.l.b16 %v498
  %v2075 = vunpack.c.h.b16 %v498
  %v2076 = vunpack.c.l.b16 %v499
  %v2077 = vunpack.c.h.b16 %v499
  %v2078 = vunpack.c.l.b16 %v500
  %v2079 = vunpack.c.h.b16 %v500
  %v2080 = vunpack.c.l.b16 %v501
  %v2081 = vunpack.c.h.b16 %v501
  %v2082 = vunpack.c.l.b16 %v502
  %v2083 = vunpack.c.h.b16 %v502
  %v2084 = vunpack.c.l.b16 %v503
  %v2085 = vunpack.c.h.b16 %v503
  %v2086 = vunpack.c.l.b16 %v504
  %v2087 = vunpack.c.h.b16 %v504
  %v2088 = vunpack.c.l.b16 %v505
  %v2089 = vunpack.c.h.b16 %v505
  %v2090 = vunpack.c.l.b16 %v506
  %v2091 = vunpack.c.h.b16 %v506
  %v2092 = vunpack.c.l.b16 %v507
  %v2093 = vunpack.c.h.b16 %v507
  %v2094 = vunpack.c.l.b16 %v508
  %v2095 = vunpack.c.h.b16 %v508
  %v2096 = vunpack.c.l.b16 %v509
  %v2097 = vunpack.c.h.b16 %v509
  %v2098 = vunpack.c.l.b16 %v510
  %v2099 = vunpack.c.h.b16 %v510
  %v2100 = vunpack.c.l.b16 %v511
  %v2101 = vunpack.c.h.b16 %v511
  %v2102 = vunpack.c.l.b16 %v512
  %v2103 = vunpack.c.h.b16 %v512
  %v2104 = vunpack.c.l.b16 %v513
  %v2105 = vunpack.c.h.b16 %v513
  %v2106 = vunpack.c.l.b16 %v514
  %v2107 = vunpack.c.h.b16 %v514
  %v2108 = vunpack.c.l.b16 %v515
  %v2109 = vunpack.c.h.b16 %v515
  %v2110 = vunpack.c.l.b16 %v516
  %v2111 = vunpack.c.h.b16 %v516
  %v2112 = vunpack.c.l.b16 %v517
  %v2113 = vunpack.c.h.b16 %v517
  %v2114 = vunpack.c.l.b16 %v518
  %v2115 = vunpack.c.h.b16 %v518
  %v2116 = vunpack.c.l.b16 %v519
  %v2117 = vunpack.c.h.b16 %v519
  %v2118 = vunpack.c.l.b16 %v520
  %v2119 = vunpack.c.h.b16 %v520
  %v2120 = vunpack.c.l.b16 %v521
  %v2121 = vunpack.c.h.b16 %v521
  %v2122 = vunpack.c.l.b16 %v522
  %v2123 = vunpack.c.h.b16 %v522
  %v2124 = vunpack.c.l.b16 %v523
  %v2125 = vunpack.c.h.b16 %v523
  %v2126 = vunpack.c.l.b16 %v524
  %v2127 = vunpack.c.h.b16 %v524
  %v2128 = vunpack.c.l.b16 %v525
  %v2129 = vunpack.c.h.b16 %v525
  %v2130 = vunpack.c.l.b16 %v526
  %v2131 = vunpack.c.h.b16 %v526
  %v2132 = vunpack.c.l.b16 %v527
  %v2133 = vunpack.c.h.b16 %v527
  %v2134 = vunpack.c.l.b16 %v528
  %v2135 = vunpack.c.h.b16 %v528
  %v2136 = vunpack.c.l.b16 %v529
  %v2137 = vunpack.c.h.b16 %v529
  %v2138 = vunpack.c.l.b16 %v530
  %v2139 = vunpack.c.h.b16 %v530
  %v2140 = vunpack.c.l.b16 %v531
  %v2141 = vunpack.c.h.b16 %v531
  %v2142 = vunpack.c.l.b16 %v532
  %v2143 = vunpack.c.h.b16 %v532
  %v2144 = vunpack.c.l.b16 %v533
  %v2145 = vunpack.c.h.b16 %v533
  %v2146 = vunpack.c.l.b16 %v534
  %v2147 = vunpack.c.h.b16 %v534
  %v2148 = vunpack.c.l.b16 %v535
  %v2149 = vunpack.c.h.b16 %v535
  %v2150 = vpack.c.b16 %v1130, %v1126
  %v2151 = vpack.c.b16 %v1131, %v1127
  %v2152 = vpack.c.b16 %v1132, %v1128
  %v2153 = vpack.c.b16 %v1133, %v1129
  %v2154 = vpack.c.b16 %v1138, %v1134
  %v2155 = vpack.c.b16 %v1139, %v1135
  %v2156 = vpack.c.b16 %v1140, %v1136
  %v2157 = vpack.c.b16 %v1141, %v1137
  %v2158 = vpack.c.b16 %v1146, %v1142
  %v2159 = vpack.c.b16 %v1147, %v1143
  %v2160 = vpack.c.b16 %v1148, %v1144
  %v2161 = vpack.c.b16 %v1149, %v1145
  %v2162 = vpack.c.b16 %v1154, %v1150
  %v2163 = vpack.c.b16 %v1155, %v1151
  %v2164 = vpack.c.b16 %v1156, %v1152
  %v2165 = vpack.c.b16 %v1157, %v1153
  %v2166 = vpack.c.b16 %v1162, %v1158
  %v2167 = vpack.c.b16 %v1163, %v1159
  %v2168 = vpack.c.b16 %v1164, %v1160
  %v2169 = vpack.c.b16 %v1165, %v1161
  %v2170 = vpack.c.b16 %v1170, %v1166
  %v2171 = vpack.c.b16 %v1171, %v1167
  %v2172 = vpack.c.b16 %v1172, %v1168
  %v2173 = vpack.c.b16 %v1173, %v1169
  %v2174 = vpack.c.b16 %v1178, %v1174
  %v2175 = vpack.c.b16 %v1179, %v1175
  %v2176 = vpack.c.b16 %v1180, %v1176
  %v2177 = vpack.c.b16 %v1181, %v1177
  %v2178 = vpack.c.b16 %v1186, %v1182
  %v2179 = vpack.c.b16 %v1187, %v1183
  %v2180 = vpack.c.b16 %v1188, %v1184
  %v2181 = vpack.c.b16 %v1189, %v1185
  %v2182 = vpack.c.b16 %v1194, %v1190
  %v2183 = vpack.c.b16 %v1195, %v1191
  %v2184 = vpack.c.b16 %v1196, %v1192
  %v2185 = vpack.c.b16 %v1197, %v1193
  %v2186 = vpack.c.b16 %v1202, %v1198
  %v2187 = vpack.c.b16 %v1203, %v1199
  %v2188 = vpack.c.b16 %v1204, %v1200
  %v2189 = vpack.c.b16 %v1205, %v1201
  %v2190 = vpack.c.b16 %v1210, %v1206
  %v2191 = vpack.c.b16 %v1211, %v1207
  %v2192 = vpack.c.b16 %v1212, %v1208
  %v2193 = vpack.c.b16 %v1213, %v1209
  %v2194 = vpack.c.b16 %v1218, %v1214
  %v2195 = vpack.c.b16 %v1219, %v1215
  %v2196 = vpack.c.b16 %v1220, %v1216
  %v2197 = vpack.c.b16 %v1221, %v1217
  %v2198 = vpack.c.b16 %v1226, %v1222
  %v2199 = vpack.c.b16 %v1227, %v1223
  %v2200 = vpack.c.b16 %v1228, %v1224
  %v2201 = vpack.c.b16 %v1229, %v1225
  %v2202 = vpack.c.b16 %v1234, %v1230
  %v2203 = vpack.c.b16 %v1235, %v1231
  %v2204 = vpack.c.b16 %v1236, %v1232
  %v2205 = vpack.c.b16 %v1237, %v1233
  %v2206 = vpack.c.b16 %v1242, %v1238
  %v2207 = vpack.c.b16 %v1243, %v1239
  %v2208 = vpack.c.b16 %v1244, %v1240
  %v2209 = vpack.c.b16 %v1245, %v1241
  %v2210 = vpack.c.b16 %v1250, %v1246
  %v2211 = vpack.c.b16 %v1251, %v1247
  %v2212 = vpack.c.b16 %v1252, %v1248
  %v2213 = vpack.c.b16 %v1253, %v1249
  %v2214 = vpack.c.b16 %v1258, %v1254
  %v2215 = vpack.c.b16 %v1259, %v1255
  %v2216 = vpack.c.b16 %v1260, %v1256
  %v2217 = vpack.c.b16 %v1261, %v1257
  %v2218 = vpack.c.b16 %v1266, %v1262
  %v2219 = vpack.c.b16 %v1267, %v1263
  %v2220 = vpack.c.b16 %v1268, %v1264
  %v2221 = vpack.c.b16 %v1269, %v1265
  %v2222 = vpack.c.b16 %v1274, %v1270
  %v2223 = vpack.c.b16 %v1275, %v1271
  %v2224 = vpack.c.b16 %v1276, %v1272
  %v2225 = vpack.c.b16 %v1277, %v1273
  %v2226 = vpack.c.b16 %v1282, %v1278
  %v2227 = vpack.c.b16 %v1283, %v1279
  %v2228 = vpack.c.b16 %v1284, %v1280
  %v2229 = vpack.c.b16 %v1285, %v1281
  %v2230 = vpack.c.b16 %v1290, %v1286
  %v2231 = vpack.c.b16 %v1291, %v1287
  %v2232 = vpack.c.b16 %v1292, %v1288
  %v2233 = vpack.c.b16 %v1293, %v1289
  %v2234 = vpack.c.b16 %v1298, %v1294
  %v2235 = vpack.c.b16 %v1299, %v1295
  %v2236 = vpack.c.b16 %v1300, %v1296
  %v2237 = vpack.c.b16 %v1301, %v1297
  %v2238 = vpack.c.b16 %v1306, %v1302
  %v2239 = vpack.c.b16 %v1307, %v1303
  %v2240 = vpack.c.b16 %v1308, %v1304
  %v2241 = vpack.c.b16 %v1309, %v1305
  %v2242 = vpack.c.b16 %v1314, %v1310
  %v2243 = vpack.c.b16 %v1315, %v1311
  %v2244 = vpack.c.b16 %v1316, %v1312
  %v2245 = vpack.c.b16 %v1317, %v1313
  %v2246 = vpack.c.b16 %v1322, %v1318
  %v2247 = vpack.c.b16 %v1323, %v1319
  %v2248 = vpack.c.b16 %v1324, %v1320
  %v2249 = vpack.c.b16 %v1325, %v1321
  %v2250 = vpack.c.b16 %v1330, %v1326
  %v2251 = vpack.c.b16 %v1331, %v1327
  %v2252 = vpack.c.b16 %v1332, %v1328
  %v2253 = vpack.c.b16 %v1333, %v1329
  %v2254 = vpack.c.b16 %v1338, %v1334
  %v2255 = vpack.c.b16 %v1339, %v1335
  %v2256 = vpack.c.b16 %v1340, %v1336
  %v2257 = vpack.c.b16 %v1341, %v1337
  %v2258 = vpack.c.b16 %v1346, %v1342
  %v2259 = vpack.c.b16 %v1347, %v1343
  %v2260 = vpack.c.b16 %v1348, %v1344
  %v2261 = vpack.c.b16 %v1349, %v1345
  %v2262 = vpack.c.b16 %v1354, %v1350
  %v2263 = vpack.c.b16 %v1355, %v1351
  %v2264 = vpack.c.b16 %v1356, %v1352
  %v2265 = vpack.c.b16 %v1357, %v1353
  %v2266 = vpack.c.b16 %v1362, %v1358
  %v2267 = vpack.c.b16 %v1363, %v1359
  %v2268 = vpack.c.b16 %v1364, %v1360
  %v2269 = vpack.c.b16 %v1365, %v1361
  %v2270 = vpack.c.b16 %v1370, %v1366
  %v2271 = vpack.c.b16 %v1371, %v1367
  %v2272 = vpack.c.b16 %v1372, %v1368
  %v2273 = vpack.c.b16 %v1373, %v1369
  %v2274 = vpack.c.b16 %v1378, %v1374
  %v2275 = vpack.c.b16 %v1379, %v1375
  %v2276 = vpack.c.b16 %v1380, %v1376
  %v2277 = vpack.c.b16 %v1381, %v1377
  %v2278 = vpack.c.b16 %v1386, %v1382
  %v2279 = vpack.c.b16 %v1387, %v1383
  %v2280 = vpack.c.b16 %v1388, %v1384
  %v2281 = vpack.c.b16 %v1389, %v1385
  %v2282 = vpack.c.b16 %v1394, %v1390
  %v2283 = vpack.c.b16 %v1395, %v1391
  %v2284 = vpack.c.b16 %v1396, %v1392
  %v2285 = vpack.c.b16 %v1397, %v1393
  %v2286 = vpack.c.b16 %v1402, %v1398
  %v2287 = vpack.c.b16 %v1403, %v1399
  %v2288 = vpack.c.b16 %v1404, %v1400
  %v2289 = vpack.c.b16 %v1405, %v1401
  %v2290 = vpack.c.b16 %v1410, %v1406
  %v2291 = vpack.c.b16 %v1411, %v1407
  %v2292 = vpack.c.b16 %v1412, %v1408
  %v2293 = vpack.c.b16 %v1413, %v1409
  %v2294 = vpack.c.b16 %v1418, %v1414
  %v2295 = vpack.c.b16 %v1419, %v1415
  %v2296 = vpack.c.b16 %v1420, %v1416
  %v2297 = vpack.c.b16 %v1421, %v1417
  %v2298 = vpack.c.b16 %v1426, %v1422
  %v2299 = vpack.c.b16 %v1427, %v1423
  %v2300 = vpack.c.b16 %v1428, %v1424
  %v2301 = vpack.c.b16 %v1429, %v1425
  %v2302 = vpack.c.b16 %v1434, %v1430
  %v2303 = vpack.c.b16 %v1435, %v1431
  %v2304 = vpack.c.b16 %v1436, %v1432
  %v2305 = vpack.c.b16 %v1437, %v1433
  %v2306 = vpack.c.b16 %v1442, %v1438
  %v2307 = vpack.c.b16 %v1443, %v1439
  %v2308 = vpack.c.b16 %v1444, %v1440
  %v2309 = vpack.c.b16 %v1445, %v1441
  %v2310 = vpack.c.b16 %v1450, %v1446
  %v2311 = vpack.c.b16 %v1451, %v1447
  %v2312 = vpack.c.b16 %v1452, %v1448
  %v2313 = vpack.c.b16 %v1453, %v1449
  %v2314 = vpack.c.b16 %v1458, %v1454
  %v2315 = vpack.c.b16 %v1459, %v1455
  %v2316 = vpack.c.b16 %v1460, %v1456
  %v2317 = vpack.c.b16 %v1461, %v1457
  %v2318 = vpack.c.b16 %v1466, %v1462
  %v2319 = vpack.c.b16 %v1467, %v1463
  %v2320 = vpack.c.b16 %v1468, %v1464
  %v2321 = vpack.c.b16 %v1469, %v1465
  %v2322 = vpack.c.b16 %v1474, %v1470
  %v2323 = vpack.c.b16 %v1475, %v1471
  %v2324 = vpack.c.b16 %v1476, %v1472
  %v2325 = vpack.c.b16 %v1477, %v1473
  %v2326 = vpack.c.b16 %v1482, %v1478
  %v2327 = vpack.c.b16 %v1483, %v1479
  %v2328 = vpack.c.b16 %v1484, %v1480
  %v2329 = vpack.c.b16 %v1485, %v1481
  %v2330 = vpack.c.b16 %v1490, %v1486
  %v2331 = vpack.c.b16 %v1491, %v1487
  %v2332 = vpack.c.b16 %v1492, %v1488
  %v2333 = vpack.c.b16 %v1493, %v1489
  %v2334 = vpack.c.b16 %v1498, %v1494
  %v2335 = vpack.c.b16 %v1499, %v1495
  %v2336 = vpack.c.b16 %v1500, %v1496
  %v2337 = vpack.c.b16 %v1501, %v1497
  %v2338 = vpack.c.b16 %v1506, %v1502
  %v2339 = vpack.c.b16 %v1507, %v1503
  %v2340 = vpack.c.b16 %v1508, %v1504
  %v2341 = vpack.c.b16 %v1509, %v1505
  %v2342 = vpack.c.b16 %v1514, %v1510
  %v2343 = vpack.c.b16 %v1515, %v1511
  %v2344 = vpack.c.b16 %v1516, %v1512
  %v2345 = vpack.c.b16 %v1517, %v1513
  %v2346 = vpack.c.b16 %v1522, %v1518
  %v2347 = vpack.c.b16 %v1523, %v1519
  %v2348 = vpack.c.b16 %v1524, %v1520
  %v2349 = vpack.c.b16 %v1525, %v1521
  %v2350 = vpack.c.b16 %v1530, %v1526
  %v2351 = vpack.c.b16 %v1531, %v1527
  %v2352 = vpack.c.b16 %v1532, %v1528
  %v2353 = vpack.c.b16 %v1533, %v1529
  %v2354 = vpack.c.b16 %v1538, %v1534
  %v2355 = vpack.c.b16 %v1539, %v1535
  %v2356 = vpack.c.b16 %v1540, %v1536
  %v2357 = vpack.c.b16 %v1541, %v1537
  %v2358 = vpack.c.b16 %v1546, %v1542
  %v2359 = vpack.c.b16 %v1547, %v1543
  %v2360 = vpack.c.b16 %v1548, %v1544
  %v2361 = vpack.c.b16 %v1549, %v1545
  %v2362 = vpack.c.b16 %v1554, %v1550
  %v2363 = vpack.c.b16 %v1555, %v1551
  %v2364 = vpack.c.b16 %v1556, %v1552
  %v2365 = vpack.c.b16 %v1557, %v1553
  %v2366 = vpack.c.b16 %v1562, %v1558
  %v2367 = vpack.c.b16 %v1563, %v1559
  %v2368 = vpack.c.b16 %v1564, %v1560
  %v2369 = vpack.c.b16 %v1565, %v1561
  %v2370 = vpack.c.b16 %v1570, %v1566
  %v2371 = vpack.c.b16 %v1571, %v1567
  %v2372 = vpack.c.b16 %v1572, %v1568
  %v2373 = vpack.c.b16 %v1573, %v1569
  %v2374 = vpack.c.b16 %v1578, %v1574
  %v2375 = vpack.c.b16 %v1579, %v1575
  %v2376 = vpack.c.b16 %v1580, %v1576
  %v2377 = vpack.c.b16 %v1581, %v1577
  %v2378 = vpack.c.b16 %v1586, %v1582
  %v2379 = vpack.c.b16 %v1587, %v1583
  %v2380 = vpack.c.b16 %v1588, %v1584
  %v2381 = vpack.c.b16 %v1589, %v1585
  %v2382 = vpack.c.b16 %v1594, %v1590
  %v2383 = vpack.c.b16 %v1595, %v1591
  %v2384 = vpack.c.b16 %v1596, %v1592
  %v2385 = vpack.c.b16 %v1597, %v1593
  %v2386 = vpack.c.b16 %v1602, %v1598
  %v2387 = vpack.c.b16 %v1603, %v1599
  %v2388 = vpack.c.b16 %v1604, %v1600
  %v2389 = vpack.c.b16 %v1605, %v1601
  %v2390 = vpack.c.b16 %v1610, %v1606
  %v2391 = vpack.c.b16 %v1611, %v1607
  %v2392 = vpack.c.b16 %v1612, %v1608
  %v2393 = vpack.c.b16 %v1613, %v1609
  %v2394 = vpack.c.b16 %v1618, %v1614
  %v2395 = vpack.c.b16 %v1619, %v1615
  %v2396 = vpack.c.b16 %v1620, %v1616
  %v2397 = vpack.c.b16 %v1621, %v1617
  %v2398 = vpack.c.b16 %v1626, %v1622
  %v2399 = vpack.c.b16 %v1627, %v1623
  %v2400 = vpack.c.b16 %v1628, %v1624
  %v2401 = vpack.c.b16 %v1629, %v1625
  %v2402 = vpack.c.b16 %v1634, %v1630
  %v2403 = vpack.c.b16 %v1635, %v1631
  %v2404 = vpack.c.b16 %v1636, %v1632
  %v2405 = vpack.c.b16 %v1637, %v1633
  %v2406 = vpack.c.b16 %v1642, %v1638
  %v2407 = vpack.c.b16 %v1643, %v1639
  %v2408 = vpack.c.b16 %v1644, %v1640
  %v2409 = vpack.c.b16 %v1645, %v1641
  %v2410 = vpack.c.b16 %v1650, %v1646
  %v2411 = vpack.c.b16 %v1651, %v1647
  %v2412 = vpack.c.b16 %v1652, %v1648
  %v2413 = vpack.c.b16 %v1653, %v1649
  %v2414 = vpack.c.b16 %v1658, %v1654
  %v2415 = vpack.c.b16 %v1659, %v1655
  %v2416 = vpack.c.b16 %v1660, %v1656
  %v2417 = vpack.c.b16 %v1661, %v1657
  %v2418 = vpack.c.b16 %v1666, %v1662
  %v2419 = vpack.c.b16 %v1667, %v1663
  %v2420 = vpack.c.b16 %v1668, %v1664
  %v2421 = vpack.c.b16 %v1669, %v1665
  %v2422 = vpack.c.b16 %v1674, %v1670
  %v2423 = vpack.c.b16 %v1675, %v1671
  %v2424 = vpack.c.b16 %v1676, %v1672
  %v2425 = vpack.c.b16 %v1677, %v1673
  %v2426 = vpack.c.b16 %v1682, %v1678
  %v2427 = vpack.c.b16 %v1683, %v1679
  %v2428 = vpack.c.b16 %v1684, %v1680
  %v2429 = vpack.c.b16 %v1685, %v1681
  %v2430 = vpack.c.b16 %v1690, %v1686
  %v2431 = vpack.c.b16 %v1691, %v1687
  %v2432 = vpack.c.b16 %v1692, %v1688
  %v2433 = vpack.c.b16 %v1693, %v1689
  %v2434 = vpack.c.b16 %v1698, %v1694
  %v2435 = vpack.c.b16 %v1699, %v1695
  %v2436 = vpack.c.b16 %v1700, %v1696
  %v2437 = vpack.c.b16 %v1701, %v1697
  %v2438 = vpack.c.b16 %v1706, %v1702
  %v2439 = vpack.c.b16 %v1707, %v1703
  %v2440 = vpack.c.b16 %v1708, %v1704
  %v2441 = vpack.c.b16 %v1709, %v1705
  %v2442 = vpack.c.b16 %v1714, %v1710
  %v2443 = vpack.c.b16 %v1715, %v1711
  %v2444 = vpack.c.b16 %v1716, %v1712
  %v2445 = vpack.c.b16 %v1717, %v1713
  %v2446 = vpack.c.b16 %v1722, %v1718
  %v2447 = vpack.c.b16 %v1723, %v1719
  %v2448 = vpack.c.b16 %v1724, %v1720
  %v2449 = vpack.c.b16 %v1725, %v1721
  %v2450 = vpack.c.b16 %v1730, %v1726
  %v2451 = vpack.c.b16 %v1731, %v1727
  %v2452 = vpack.c.b16 %v1732, %v1728
  %v2453 = vpack.c.b16 %v1733, %v1729
  %v2454 = vpack.c.b16 %v1738, %v1734
  %v2455 = vpack.c.b16 %v1739, %v1735
  %v2456 = vpack.c.b16 %v1740, %v1736
  %v2457 = vpack.c.b16 %v1741, %v1737
  %v2458 = vpack.c.b16 %v1746, %v1742
  %v2459 = vpack.c.b16 %v1747, %v1743
  %v2460 = vpack.c.b16 %v1748, %v1744
  %v2461 = vpack.c.b16 %v1749, %v1745
  %v2462 = vpack.c.b16 %v1754, %v1750
  %v2463 = vpack.c.b16 %v1755, %v1751
  %v2464 = vpack.c.b16 %v1756, %v1752
  %v2465 = vpack.c.b16 %v1757, %v1753
  %v2466 = vpack.c.b16 %v1762, %v1758
  %v2467 = vpack.c.b16 %v1763, %v1759
  %v2468 = vpack.c.b16 %v1764, %v1760
  %v2469 = vpack.c.b16 %v1765, %v1761
  %v2470 = vpack.c.b16 %v1770, %v1766
  %v2471 = vpack.c.b16 %v1771, %v1767
  %v2472 = vpack.c.b16 %v1772, %v1768
  %v2473 = vpack.c.b16 %v1773, %v1769
  %v2474 = vpack.c.b16 %v1778, %v1774
  %v2475 = vpack.c.b16 %v1779, %v1775
  %v2476 = vpack.c.b16 %v1780, %v1776
  %v2477 = vpack.c.b16 %v1781, %v1777
  %v2478 = vpack.c.b16 %v1786, %v1782
  %v2479 = vpack.c.b16 %v1787, %v1783
  %v2480 = vpack.c.b16 %v1788, %v1784
  %v2481 = vpack.c.b16 %v1789, %v1785
  %v2482 = vpack.c.b16 %v1794, %v1790
  %v2483 = vpack.c.b16 %v1795, %v1791
  %v2484 = vpack.c.b16 %v1796, %v1792
  %v2485 = vpack.c.b16 %v1797, %v1793
  %v2486 = vpack.c.b16 %v1802, %v1798
  %v2487 = vpack.c.b16 %v1803, %v1799
  %v2488 = vpack.c.b16 %v1804, %v1800
  %v2489 = vpack.c.b16 %v1805, %v1801
  %v2490 = vpack.c.b16 %v1810, %v1806
  %v2491 = vpack.c.b16 %v1811, %v1807
  %v2492 = vpack.c.b16 %v1812, %v1808
  %v2493 = vpack.c.b16 %v1813, %v1809
  %v2494 = vpack.c.b16 %v1818, %v1814
  %v2495 = vpack.c.b16 %v1819, %v1815
  %v2496 = vpack.c.b16 %v1820, %v1816
  %v2497 = vpack.c.b16 %v1821, %v1817
  %v2498 = vpack.c.b16 %v1826, %v1822
  %v2499 = vpack.c.b16 %v1827, %v1823
  %v2500 = vpack.c.b16 %v1828, %v1824
  %v2501 = vpack.c.b16 %v1829, %v1825
  %v2502 = vpack.c.b16 %v1834, %v1830
  %v2503 = vpack.c.b16 %v1835, %v1831
  %v2504 = vpack.c.b16 %v1836, %v1832
  %v2505 = vpack.c.b16 %v1837, %v1833
  %v2506 = vpack.c.b16 %v1842, %v1838
  %v2507 = vpack.c.b16 %v1843, %v1839
  %v2508 = vpack.c.b16 %v1844, %v1840
  %v2509 = vpack.c.b16 %v1845, %v1841
  %v2510 = vpack.c.b16 %v1850, %v1846
  %v2511 = vpack.c.b16 %v1851, %v1847
  %v2512 = vpack.c.b16 %v1852, %v1848
  %v2513 = vpack.c.b16 %v1853, %v1849
  %v2514 = vpack.c.b16 %v1858, %v1854
  %v2515 = vpack.c.b16 %v1859, %v1855
  %v2516 = vpack.c.b16 %v1860, %v1856
  %v2517 = vpack.c.b16 %v1861, %v1857
  %v2518 = vpack.c.b16 %v1866, %v1862
  %v2519 = vpack.c.b16 %v1867, %v1863
  %v2520 = vpack.c.b16 %v1868, %v1864
  %v2521 = vpack.c.b16 %v1869, %v1865
  %v2522 = vpack.c.b16 %v1874, %v1870
  %v2523 = vpack.c.b16 %v1875, %v1871
  %v2524 = vpack.c.b16 %v1876, %v1872
  %v2525 = vpack.c.b16 %v1877, %v1873
  %v2526 = vpack.c.b16 %v1882, %v1878
  %v2527 = vpack.c.b16 %v1883, %v1879
  %v2528 = vpack.c.b16 %v1884, %v1880
  %v2529 = vpack.c.b16 %v1885, %v1881
  %v2530 = vpack.c.b16 %v1890, %v1886
  %v2531 = vpack.c.b16 %v1891, %v1887
  %v2532 = vpack.c.b16 %v1892, %v1888
  %v2533 = vpack.c.b16 %v1893, %v1889
  %v2534 = vpack.c.b16 %v1898, %v1894
  %v2535 = vpack.c.b16 %v1899, %v1895
  %v2536 = vpack.c.b16 %v1900, %v1896
  %v2537 = vpack.c.b16 %v1901, %v1897
  %v2538 = vpack.c.b16 %v1906, %v1902
  %v2539 = vpack.c.b16 %v1907, %v1903
  %v2540 = vpack.c.b16 %v1908, %v1904
  %v2541 = vpack.c.b16 %v1909, %v1905
  %v2542 = vpack.c.b16 %v1914, %v1910
  %v2543 = vpack.c.b16 %v1915, %v1911
  %v2544 = vpack.c.b16 %v1916, %v1912
  %v2545 = vpack.c.b16 %v1917, %v1913
  %v2546 = vpack.c.b16 %v1922, %v1918
  %v2547 = vpack.c.b16 %v1923, %v1919
  %v2548 = vpack.c.b16 %v1924, %v1920
  %v2549 = vpack.c.b16 %v1925, %v1921
  %v2550 = vpack.c.b16 %v1930, %v1926
  %v2551 = vpack.c.b16 %v1931, %v1927
  %v2552 = vpack.c.b16 %v1932, %v1928
  %v2553 = vpack.c.b16 %v1933, %v1929
  %v2554 = vpack.c.b16 %v1938, %v1934
  %v2555 = vpack.c.b16 %v1939, %v1935
  %v2556 = vpack.c.b16 %v1940, %v1936
  %v2557 = vpack.c.b16 %v1941, %v1937
  %v2558 = vpack.c.b16 %v1946, %v1942
  %v2559 = vpack.c.b16 %v1947, %v1943
  %v2560 = vpack.c.b16 %v1948, %v1944
  %v2561 = vpack.c.b16 %v1949, %v1945
  %v2562 = vpack.c.b16 %v1954, %v1950
  %v2563 = vpack.c.b16 %v1955, %v1951
  %v2564 = vpack.c.b16 %v1956, %v1952
  %v2565 = vpack.c.b16 %v1957, %v1953
  %v2566 = vpack.c.b16 %v1962, %v1958
  %v2567 = vpack.c.b16 %v1963, %v1959
  %v2568 = vpack.c.b16 %v1964, %v1960
  %v2569 = vpack.c.b16 %v1965, %v1961
  %v2570 = vpack.c.b16 %v1970, %v1966
  %v2571 = vpack.c.b16 %v1971, %v1967
  %v2572 = vpack.c.b16 %v1972, %v1968
  %v2573 = vpack.c.b16 %v1973, %v1969
  %v2574 = vpack.c.b16 %v1978, %v1974
  %v2575 = vpack.c.b16 %v1979, %v1975
  %v2576 = vpack.c.b16 %v1980, %v1976
  %v2577 = vpack.c.b16 %v1981, %v1977
  %v2578 = vpack.c.b16 %v1986, %v1982
  %v2579 = vpack.c.b16 %v1987, %v1983
  %v2580 = vpack.c.b16 %v1988, %v1984
  %v2581 = vpack.c.b16 %v1989, %v1985
  %v2582 = vpack.c.b16 %v1994, %v1990
  %v2583 = vpack.c.b16 %v1995, %v1991
  %v2584 = vpack.c.b16 %v1996, %v1992
  %v2585 = vpack.c.b16 %v1997, %v1993
  %v2586 = vpack.c.b16 %v2002, %v1998
  %v2587 = vpack.c.b16 %v2003, %v1999
  %v2588 = vpack.c.b16 %v2004, %v2000
  %v2589 = vpack.c.b16 %v2005, %v2001
  %v2590 = vpack.c.b16 %v2010, %v2006
  %v2591 = vpack.c.b16 %v2011, %v2007
  %v2592 = vpack.c.b16 %v2012, %v2008
  %v2593 = vpack.c.b16 %v2013, %v2009
  %v2594 = vpack.c.b16 %v2018, %v2014
  %v2595 = vpack.c.b16 %v2019, %v2015
  %v2596 = vpack.c.b16 %v2020, %v2016
  %v2597 = vpack.c.b16 %v2021, %v2017
  %v2598 = vpack.c.b16 %v2026, %v2022
  %v2599 = vpack.c.b16 %v2027, %v2023
  %v2600 = vpack.c.b16 %v2028, %v2024
  %v2601 = vpack.c.b16 %v2029, %v2025
  %v2602 = vpack.c.b16 %v2034, %v2030
  %v2603 = vpack.c.b16 %v2035, %v2031
  %v2604 = vpack.c.b16 %v2036, %v2032
  %v2605 = vpack.c.b16 %v2037, %v2033
  %v2606 = vpack.c.b16 %v2042, %v2038
  %v2607 = vpack.c.b16 %v2043, %v2039
  %v2608 = vpack.c.b16 %v2044, %v2040
  %v2609 = vpack.c.b16 %v2045, %v2041
  %v2610 = vpack.c.b16 %v2050, %v2046
  %v2611 = vpack.c.b16 %v2051, %v2047
  %v2612 = vpack.c.b16 %v2052, %v2048
  %v2613 = vpack.c.b16 %v2053, %v2049
  %v2614 = vpack.c.b16 %v2058, %v2054
  %v2615 = vpack.c.b16 %v2059, %v2055
  %v2616 = vpack.c.b16 %v2060, %v2056
  %v2617 = vpack.c.b16 %v2061, %v2057
  %v2618 = vpack.c.b16 %v2066, %v2062
  %v2619 = vpack.c.b16 %v2067, %v2063
  %v2620 = vpack.c.b16 %v2068, %v2064
  %v2621 = vpack.c.b16 %v2069, %v2065
  %v2622 = vpack.c.b16 %v2074, %v2070
  %v2623 = vpack.c.b16 %v2075, %v2071
  %v2624 = vpack.c.b16 %v2076, %v2072
  %v2625 = vpack.c.b16 %v2077, %v2073
  %v2626 = vpack.c.b16 %v2082, %v2078
  %v2627 = vpack.c.b16 %v2083, %v2079
  %v2628 = vpack.c.b16 %v2084, %v2080
  %v2629 = vpack.c.b16 %v2085, %v2081
  %v2630 = vpack.c.b16 %v2090, %v2086
  %v2631 = vpack.c.b16 %v2091, %v2087
  %v2632 = vpack.c.b16 %v2092, %v2088
  %v2633 = vpack.c.b16 %v2093, %v2089
  %v2634 = vpack.c.b16 %v2098, %v2094
  %v2635 = vpack.c.b16 %v2099, %v2095
  %v2636 = vpack.c.b16 %v2100, %v2096
  %v2637 = vpack.c.b16 %v2101, %v2097
  %v2638 = vpack.c.b16 %v2106, %v2102
  %v2639 = vpack.c.b16 %v2107, %v2103
  %v2640 = vpack.c.b16 %v2108, %v2104
  %v2641 = vpack.c.b16 %v2109, %v2105
  %v2642 = vpack.c.b16 %v2114, %v2110
  %v2643 = vpack.c.b16 %v2115, %v2111
  %v2644 = vpack.c.b16 %v2116, %v2112
  %v2645 = vpack.c.b16 %v2117, %v2113
  %v2646 = vpack.c.b16 %v2122, %v2118
  %v2647 = vpack.c.b16 %v2123, %v2119
  %v2648 = vpack.c.b16 %v2124, %v2120
  %v2649 = vpack.c.b16 %v2125, %v2121
  %v2650 = vpack.c.b16 %v2130, %v2126
  %v2651 = vpack.c.b16 %v2131, %v2127
  %v2652 = vpack.c.b16 %v2132, %v2128
  %v2653 = vpack.c.b16 %v2133, %v2129
  %v2654 = vpack.c.b16 %v2138, %v2134
  %v2655 = vpack.c.b16 %v2139, %v2135
  %v2656 = vpack.c.b16 %v2140, %v2136
  %v2657 = vpack.c.b16 %v2141, %v2137
  %v2658 = vpack.c.b16 %v2146, %v2142
  %v2659 = vpack.c.b16 %v2147, %v2143
  %v2660 = vpack.c.b16 %v2148, %v2144
  %v2661 = vpack.c.b16 %v2149, %v2145
  %3174 = vmatprep.subr.bf16.mxu0 %v2179
  %3175 = vmatpush1.bf16.msra.mxu0 %v2178
  %3176 = vmatprep.subr.bf16.mxu0 %v2175
  %3177 = vmatpush1.bf16.msra.mxu0 %v2174
  %3178 = vmatprep.subr.bf16.mxu0 %v2171
  %3179 = vmatpush1.bf16.msra.mxu0 %v2170
  %3180 = vmatprep.subr.bf16.mxu0 %v2167
  %3181 = vmatpush1.bf16.msra.mxu0 %v2166
  %3182 = vmatprep.subr.bf16.mxu0 %v2163
  %3183 = vmatpush1.bf16.msra.mxu0 %v2162
  %3184 = vmatprep.subr.bf16.mxu0 %v2159
  %3185 = vmatpush1.bf16.msra.mxu0 %v2158
  %3186 = vmatprep.subr.bf16.mxu0 %v2155
  %3187 = vmatpush1.bf16.msra.mxu0 %v2154
  %3188 = vmatprep.subr.bf16.mxu0 %v2151
  %3189 = vmatpush1.bf16.msra.mxu0 %v2150
  %3190 = vmatprep.subr.bf16.mxu0 %v2211
  %3191 = vmatpush2.bf16.msra.mxu0 %v2210
  %3192 = vmatprep.subr.bf16.mxu0 %v2207
  %3193 = vmatpush2.bf16.msra.mxu0 %v2206
  %3194 = vmatprep.subr.bf16.mxu0 %v2203
  %3195 = vmatpush2.bf16.msra.mxu0 %v2202
  %3196 = vmatprep.subr.bf16.mxu0 %v2199
  %3197 = vmatpush2.bf16.msra.mxu0 %v2198
  %3198 = vmatprep.subr.bf16.mxu0 %v2195
  %3199 = vmatpush2.bf16.msra.mxu0 %v2194
  %3200 = vmatprep.subr.bf16.mxu0 %v2191
  %3201 = vmatpush2.bf16.msra.mxu0 %v2190
  %3202 = vmatprep.subr.bf16.mxu0 %v2187
  %3203 = vmatpush2.bf16.msra.mxu0 %v2186
  %3204 = vmatprep.subr.bf16.mxu0 %v2183
  %3205 = vmatpush2.bf16.msra.mxu0 %v2182
  %3206 = vmatprep.mubr.bf16.mxu0 %v583
  %3207 = vmatmul.mubr.bf16.gmra.mxu0 %v582
  %v3208 = vpop.f32.mrf.mxu0
  %v3209 = vadd.f32 %v541, %v3208
  %v3210 = vpop.f32.mrf.mxu0
  %v3211 = vadd.f32 %v545, %v3210
  %v3212 = vpop.f32.mrf.mxu0
  %v3213 = vpop.f32.mrf.mxu0
  %3214 = vdwg.mxu0
  %3215 = vmatprep.subr.bf16.mxu0 %v2243
  %3216 = vmatpush1.bf16.msra.mxu0 %v2242
  %3217 = vmatprep.subr.bf16.mxu0 %v2239
  %3218 = vmatpush1.bf16.msra.mxu0 %v2238
  %3219 = vmatprep.subr.bf16.mxu0 %v2235
  %3220 = vmatpush1.bf16.msra.mxu0 %v2234
  %3221 = vmatprep.subr.bf16.mxu0 %v2231
  %3222 = vmatpush1.bf16.msra.mxu0 %v2230
  %3223 = vmatprep.subr.bf16.mxu0 %v2227
  %3224 = vmatpush1.bf16.msra.mxu0 %v2226
  %3225 = vmatprep.subr.bf16.mxu0 %v2223
  %3226 = vmatpush1.bf16.msra.mxu0 %v2222
  %3227 = vmatprep.subr.bf16.mxu0 %v2219
  %3228 = vmatpush1.bf16.msra.mxu0 %v2218
  %3229 = vmatprep.subr.bf16.mxu0 %v2215
  %3230 = vmatpush1.bf16.msra.mxu0 %v2214
  %3231 = vmatprep.subr.bf16.mxu0 %v2275
  %3232 = vmatpush2.bf16.msra.mxu0 %v2274
  %3233 = vmatprep.subr.bf16.mxu0 %v2271
  %3234 = vmatpush2.bf16.msra.mxu0 %v2270
  %3235 = vmatprep.subr.bf16.mxu0 %v2267
  %3236 = vmatpush2.bf16.msra.mxu0 %v2266
  %3237 = vmatprep.subr.bf16.mxu0 %v2263
  %3238 = vmatpush2.bf16.msra.mxu0 %v2262
  %3239 = vmatprep.subr.bf16.mxu0 %v2259
  %3240 = vmatpush2.bf16.msra.mxu0 %v2258
  %3241 = vmatprep.subr.bf16.mxu0 %v2255
  %3242 = vmatpush2.bf16.msra.mxu0 %v2254
  %3243 = vmatprep.subr.bf16.mxu0 %v2251
  %3244 = vmatpush2.bf16.msra.mxu0 %v2250
  %3245 = vmatprep.subr.bf16.mxu0 %v2247
  %3246 = vmatpush2.bf16.msra.mxu0 %v2246
  %3247 = vmatprep.mubr.bf16.mxu0 %v585
  %3248 = vmatmul.mubr.bf16.gmra.mxu0 %v584
  %v3249 = vpop.f32.mrf.mxu0
  %v3250 = vadd.f32 %v3209, %v3249
  %v3251 = vpop.f32.mrf.mxu0
  %v3252 = vadd.f32 %v3211, %v3251
  %v3253 = vpop.f32.mrf.mxu0
  %v3254 = vpop.f32.mrf.mxu0
  %3255 = vdwg.mxu0
  %3256 = vmatprep.subr.bf16.mxu0 %v2307
  %3257 = vmatpush1.bf16.msra.mxu0 %v2306
  %3258 = vmatprep.subr.bf16.mxu0 %v2303
  %3259 = vmatpush1.bf16.msra.mxu0 %v2302
  %3260 = vmatprep.subr.bf16.mxu0 %v2299
  %3261 = vmatpush1.bf16.msra.mxu0 %v2298
  %3262 = vmatprep.subr.bf16.mxu0 %v2295
  %3263 = vmatpush1.bf16.msra.mxu0 %v2294
  %3264 = vmatprep.subr.bf16.mxu0 %v2291
  %3265 = vmatpush1.bf16.msra.mxu0 %v2290
  %3266 = vmatprep.subr.bf16.mxu0 %v2287
  %3267 = vmatpush1.bf16.msra.mxu0 %v2286
  %3268 = vmatprep.subr.bf16.mxu0 %v2283
  %3269 = vmatpush1.bf16.msra.mxu0 %v2282
  %3270 = vmatprep.subr.bf16.mxu0 %v2279
  %3271 = vmatpush1.bf16.msra.mxu0 %v2278
  %3272 = vmatprep.subr.bf16.mxu0 %v2339
  %3273 = vmatpush2.bf16.msra.mxu0 %v2338
  %3274 = vmatprep.subr.bf16.mxu0 %v2335
  %3275 = vmatpush2.bf16.msra.mxu0 %v2334
  %3276 = vmatprep.subr.bf16.mxu0 %v2331
  %3277 = vmatpush2.bf16.msra.mxu0 %v2330
  %3278 = vmatprep.subr.bf16.mxu0 %v2327
  %3279 = vmatpush2.bf16.msra.mxu0 %v2326
  %3280 = vmatprep.subr.bf16.mxu0 %v2323
  %3281 = vmatpush2.bf16.msra.mxu0 %v2322
  %3282 = vmatprep.subr.bf16.mxu0 %v2319
  %3283 = vmatpush2.bf16.msra.mxu0 %v2318
  %3284 = vmatprep.subr.bf16.mxu0 %v2315
  %3285 = vmatpush2.bf16.msra.mxu0 %v2314
  %3286 = vmatprep.subr.bf16.mxu0 %v2311
  %3287 = vmatpush2.bf16.msra.mxu0 %v2310
  %3288 = vmatprep.mubr.bf16.mxu0 %v587
  %3289 = vmatmul.mubr.bf16.gmra.mxu0 %v586
  %v3290 = vpop.f32.mrf.mxu0
  %v3291 = vadd.f32 %v3250, %v3290
  %v3292 = vpop.f32.mrf.mxu0
  %v3293 = vadd.f32 %v3252, %v3292
  %v3294 = vpop.f32.mrf.mxu0
  %v3295 = vpop.f32.mrf.mxu0
  %3296 = vdwg.mxu0
  %3297 = vmatprep.subr.bf16.mxu0 %v2371
  %3298 = vmatpush1.bf16.msra.mxu0 %v2370
  %3299 = vmatprep.subr.bf16.mxu0 %v2367
  %3300 = vmatpush1.bf16.msra.mxu0 %v2366
  %3301 = vmatprep.subr.bf16.mxu0 %v2363
  %3302 = vmatpush1.bf16.msra.mxu0 %v2362
  %3303 = vmatprep.subr.bf16.mxu0 %v2359
  %3304 = vmatpush1.bf16.msra.mxu0 %v2358
  %3305 = vmatprep.subr.bf16.mxu0 %v2355
  %3306 = vmatpush1.bf16.msra.mxu0 %v2354
  %3307 = vmatprep.subr.bf16.mxu0 %v2351
  %3308 = vmatpush1.bf16.msra.mxu0 %v2350
  %3309 = vmatprep.subr.bf16.mxu0 %v2347
  %3310 = vmatpush1.bf16.msra.mxu0 %v2346
  %3311 = vmatprep.subr.bf16.mxu0 %v2343
  %3312 = vmatpush1.bf16.msra.mxu0 %v2342
  %3313 = vmatprep.subr.bf16.mxu0 %v2403
  %3314 = vmatpush2.bf16.msra.mxu0 %v2402
  %3315 = vmatprep.subr.bf16.mxu0 %v2399
  %3316 = vmatpush2.bf16.msra.mxu0 %v2398
  %3317 = vmatprep.subr.bf16.mxu0 %v2395
  %3318 = vmatpush2.bf16.msra.mxu0 %v2394
  %3319 = vmatprep.subr.bf16.mxu0 %v2391
  %3320 = vmatpush2.bf16.msra.mxu0 %v2390
  %3321 = vmatprep.subr.bf16.mxu0 %v2387
  %3322 = vmatpush2.bf16.msra.mxu0 %v2386
  %3323 = vmatprep.subr.bf16.mxu0 %v2383
  %3324 = vmatpush2.bf16.msra.mxu0 %v2382
  %3325 = vmatprep.subr.bf16.mxu0 %v2379
  %3326 = vmatpush2.bf16.msra.mxu0 %v2378
  %3327 = vmatprep.subr.bf16.mxu0 %v2375
  %3328 = vmatpush2.bf16.msra.mxu0 %v2374
  %3329 = vmatprep.mubr.bf16.mxu0 %v589
  %3330 = vmatmul.mubr.bf16.gmra.mxu0 %v588
  %v3331 = vpop.f32.mrf.mxu0
  %v3332 = vadd.f32 %v3291, %v3331
  %v3333 = vpop.f32.mrf.mxu0
  %v3334 = vadd.f32 %v3293, %v3333
  %v3335 = vpop.f32.mrf.mxu0
  %v3336 = vpop.f32.mrf.mxu0
  %3337 = vdwg.mxu0
  %3338 = vmatprep.subr.bf16.mxu0 %v2435
  %3339 = vmatpush1.bf16.msra.mxu0 %v2434
  %3340 = vmatprep.subr.bf16.mxu0 %v2431
  %3341 = vmatpush1.bf16.msra.mxu0 %v2430
  %3342 = vmatprep.subr.bf16.mxu0 %v2427
  %3343 = vmatpush1.bf16.msra.mxu0 %v2426
  %3344 = vmatprep.subr.bf16.mxu0 %v2423
  %3345 = vmatpush1.bf16.msra.mxu0 %v2422
  %3346 = vmatprep.subr.bf16.mxu0 %v2419
  %3347 = vmatpush1.bf16.msra.mxu0 %v2418
  %3348 = vmatprep.subr.bf16.mxu0 %v2415
  %3349 = vmatpush1.bf16.msra.mxu0 %v2414
  %3350 = vmatprep.subr.bf16.mxu0 %v2411
  %3351 = vmatpush1.bf16.msra.mxu0 %v2410
  %3352 = vmatprep.subr.bf16.mxu0 %v2407
  %3353 = vmatpush1.bf16.msra.mxu0 %v2406
  %3354 = vmatprep.subr.bf16.mxu0 %v2467
  %3355 = vmatpush2.bf16.msra.mxu0 %v2466
  %3356 = vmatprep.subr.bf16.mxu0 %v2463
  %3357 = vmatpush2.bf16.msra.mxu0 %v2462
  %3358 = vmatprep.subr.bf16.mxu0 %v2459
  %3359 = vmatpush2.bf16.msra.mxu0 %v2458
  %3360 = vmatprep.subr.bf16.mxu0 %v2455
  %3361 = vmatpush2.bf16.msra.mxu0 %v2454
  %3362 = vmatprep.subr.bf16.mxu0 %v2451
  %3363 = vmatpush2.bf16.msra.mxu0 %v2450
  %3364 = vmatprep.subr.bf16.mxu0 %v2447
  %3365 = vmatpush2.bf16.msra.mxu0 %v2446
  %3366 = vmatprep.subr.bf16.mxu0 %v2443
  %3367 = vmatpush2.bf16.msra.mxu0 %v2442
  %3368 = vmatprep.subr.bf16.mxu0 %v2439
  %3369 = vmatpush2.bf16.msra.mxu0 %v2438
  %3370 = vmatprep.mubr.bf16.mxu0 %v591
  %3371 = vmatmul.mubr.bf16.gmra.mxu0 %v590
  %v3372 = vpop.f32.mrf.mxu0
  %v3373 = vadd.f32 %v3332, %v3372
  %v3374 = vpop.f32.mrf.mxu0
  %v3375 = vadd.f32 %v3334, %v3374
  %v3376 = vpop.f32.mrf.mxu0
  %v3377 = vpop.f32.mrf.mxu0
  %3378 = vdwg.mxu0
  %3379 = vmatprep.subr.bf16.mxu0 %v2499
  %3380 = vmatpush1.bf16.msra.mxu0 %v2498
  %3381 = vmatprep.subr.bf16.mxu0 %v2495
  %3382 = vmatpush1.bf16.msra.mxu0 %v2494
  %3383 = vmatprep.subr.bf16.mxu0 %v2491
  %3384 = vmatpush1.bf16.msra.mxu0 %v2490
  %3385 = vmatprep.subr.bf16.mxu0 %v2487
  %3386 = vmatpush1.bf16.msra.mxu0 %v2486
  %3387 = vmatprep.subr.bf16.mxu0 %v2483
  %3388 = vmatpush1.bf16.msra.mxu0 %v2482
  %3389 = vmatprep.subr.bf16.mxu0 %v2479
  %3390 = vmatpush1.bf16.msra.mxu0 %v2478
  %3391 = vmatprep.subr.bf16.mxu0 %v2475
  %3392 = vmatpush1.bf16.msra.mxu0 %v2474
  %3393 = vmatprep.subr.bf16.mxu0 %v2471
  %3394 = vmatpush1.bf16.msra.mxu0 %v2470
  %3395 = vmatprep.subr.bf16.mxu0 %v2531
  %3396 = vmatpush2.bf16.msra.mxu0 %v2530
  %3397 = vmatprep.subr.bf16.mxu0 %v2527
  %3398 = vmatpush2.bf16.msra.mxu0 %v2526
  %3399 = vmatprep.subr.bf16.mxu0 %v2523
  %3400 = vmatpush2.bf16.msra.mxu0 %v2522
  %3401 = vmatprep.subr.bf16.mxu0 %v2519
  %3402 = vmatpush2.bf16.msra.mxu0 %v2518
  %3403 = vmatprep.subr.bf16.mxu0 %v2515
  %3404 = vmatpush2.bf16.msra.mxu0 %v2514
  %3405 = vmatprep.subr.bf16.mxu0 %v2511
  %3406 = vmatpush2.bf16.msra.mxu0 %v2510
  %3407 = vmatprep.subr.bf16.mxu0 %v2507
  %3408 = vmatpush2.bf16.msra.mxu0 %v2506
  %3409 = vmatprep.subr.bf16.mxu0 %v2503
  %3410 = vmatpush2.bf16.msra.mxu0 %v2502
  %3411 = vmatprep.mubr.bf16.mxu0 %v593
  %3412 = vmatmul.mubr.bf16.gmra.mxu0 %v592
  %v3413 = vpop.f32.mrf.mxu0
  %v3414 = vadd.f32 %v3373, %v3413
  %v3415 = vpop.f32.mrf.mxu0
  %v3416 = vadd.f32 %v3375, %v3415
  %v3417 = vpop.f32.mrf.mxu0
  %v3418 = vpop.f32.mrf.mxu0
  %3419 = vdwg.mxu0
  %3420 = vmatprep.subr.bf16.mxu0 %v2563
  %3421 = vmatpush1.bf16.msra.mxu0 %v2562
  %3422 = vmatprep.subr.bf16.mxu0 %v2559
  %3423 = vmatpush1.bf16.msra.mxu0 %v2558
  %3424 = vmatprep.subr.bf16.mxu0 %v2555
  %3425 = vmatpush1.bf16.msra.mxu0 %v2554
  %3426 = vmatprep.subr.bf16.mxu0 %v2551
  %3427 = vmatpush1.bf16.msra.mxu0 %v2550
  %3428 = vmatprep.subr.bf16.mxu0 %v2547
  %3429 = vmatpush1.bf16.msra.mxu0 %v2546
  %3430 = vmatprep.subr.bf16.mxu0 %v2543
  %3431 = vmatpush1.bf16.msra.mxu0 %v2542
  %3432 = vmatprep.subr.bf16.mxu0 %v2539
  %3433 = vmatpush1.bf16.msra.mxu0 %v2538
  %3434 = vmatprep.subr.bf16.mxu0 %v2535
  %3435 = vmatpush1.bf16.msra.mxu0 %v2534
  %3436 = vmatprep.subr.bf16.mxu0 %v2595
  %3437 = vmatpush2.bf16.msra.mxu0 %v2594
  %3438 = vmatprep.subr.bf16.mxu0 %v2591
  %3439 = vmatpush2.bf16.msra.mxu0 %v2590
  %3440 = vmatprep.subr.bf16.mxu0 %v2587
  %3441 = vmatpush2.bf16.msra.mxu0 %v2586
  %3442 = vmatprep.subr.bf16.mxu0 %v2583
  %3443 = vmatpush2.bf16.msra.mxu0 %v2582
  %3444 = vmatprep.subr.bf16.mxu0 %v2579
  %3445 = vmatpush2.bf16.msra.mxu0 %v2578
  %3446 = vmatprep.subr.bf16.mxu0 %v2575
  %3447 = vmatpush2.bf16.msra.mxu0 %v2574
  %3448 = vmatprep.subr.bf16.mxu0 %v2571
  %3449 = vmatpush2.bf16.msra.mxu0 %v2570
  %3450 = vmatprep.subr.bf16.mxu0 %v2567
  %3451 = vmatpush2.bf16.msra.mxu0 %v2566
  %3452 = vmatprep.mubr.bf16.mxu0 %v595
  %3453 = vmatmul.mubr.bf16.gmra.mxu0 %v594
  %v3454 = vpop.f32.mrf.mxu0
  %v3455 = vadd.f32 %v3414, %v3454
  %v3456 = vpop.f32.mrf.mxu0
  %v3457 = vadd.f32 %v3416, %v3456
  %v3458 = vpop.f32.mrf.mxu0
  %v3459 = vpop.f32.mrf.mxu0
  %3460 = vdwg.mxu0
  %3461 = vmatprep.subr.bf16.mxu0 %v2627
  %3462 = vmatpush1.bf16.msra.mxu0 %v2626
  %3463 = vmatprep.subr.bf16.mxu0 %v2623
  %3464 = vmatpush1.bf16.msra.mxu0 %v2622
  %3465 = vmatprep.subr.bf16.mxu0 %v2619
  %3466 = vmatpush1.bf16.msra.mxu0 %v2618
  %3467 = vmatprep.subr.bf16.mxu0 %v2615
  %3468 = vmatpush1.bf16.msra.mxu0 %v2614
  %3469 = vmatprep.subr.bf16.mxu0 %v2611
  %3470 = vmatpush1.bf16.msra.mxu0 %v2610
  %3471 = vmatprep.subr.bf16.mxu0 %v2607
  %3472 = vmatpush1.bf16.msra.mxu0 %v2606
  %3473 = vmatprep.subr.bf16.mxu0 %v2603
  %3474 = vmatpush1.bf16.msra.mxu0 %v2602
  %3475 = vmatprep.subr.bf16.mxu0 %v2599
  %3476 = vmatpush1.bf16.msra.mxu0 %v2598
  %3477 = vmatprep.subr.bf16.mxu0 %v2659
  %3478 = vmatpush2.bf16.msra.mxu0 %v2658
  %3479 = vmatprep.subr.bf16.mxu0 %v2655
  %3480 = vmatpush2.bf16.msra.mxu0 %v2654
  %3481 = vmatprep.subr.bf16.mxu0 %v2651
  %3482 = vmatpush2.bf16.msra.mxu0 %v2650
  %3483 = vmatprep.subr.bf16.mxu0 %v2647
  %3484 = vmatpush2.bf16.msra.mxu0 %v2646
  %3485 = vmatprep.subr.bf16.mxu0 %v2643
  %3486 = vmatpush2.bf16.msra.mxu0 %v2642
  %3487 = vmatprep.subr.bf16.mxu0 %v2639
  %3488 = vmatpush2.bf16.msra.mxu0 %v2638
  %3489 = vmatprep.subr.bf16.mxu0 %v2635
  %3490 = vmatpush2.bf16.msra.mxu0 %v2634
  %3491 = vmatprep.subr.bf16.mxu0 %v2631
  %3492 = vmatpush2.bf16.msra.mxu0 %v2630
  %3493 = vmatprep.mubr.bf16.mxu0 %v597
  %3494 = vmatmul.mubr.bf16.gmra.mxu0 %v596
  %v3495 = vpop.f32.mrf.mxu0
  %v3496 = vadd.f32 %v3455, %v3495
  %v3497 = vpop.f32.mrf.mxu0
  %v3498 = vadd.f32 %v3457, %v3497
  %v3499 = vpop.f32.mrf.mxu0
  %v3500 = vpop.f32.mrf.mxu0
  %3501 = vdwg.mxu0
  %3502 = vmatprep.subr.bf16.mxu0 %v2181
  %3503 = vmatpush1.bf16.msra.mxu0 %v2180
  %3504 = vmatprep.subr.bf16.mxu0 %v2177
  %3505 = vmatpush1.bf16.msra.mxu0 %v2176
  %3506 = vmatprep.subr.bf16.mxu0 %v2173
  %3507 = vmatpush1.bf16.msra.mxu0 %v2172
  %3508 = vmatprep.subr.bf16.mxu0 %v2169
  %3509 = vmatpush1.bf16.msra.mxu0 %v2168
  %3510 = vmatprep.subr.bf16.mxu0 %v2165
  %3511 = vmatpush1.bf16.msra.mxu0 %v2164
  %3512 = vmatprep.subr.bf16.mxu0 %v2161
  %3513 = vmatpush1.bf16.msra.mxu0 %v2160
  %3514 = vmatprep.subr.bf16.mxu0 %v2157
  %3515 = vmatpush1.bf16.msra.mxu0 %v2156
  %3516 = vmatprep.subr.bf16.mxu0 %v2153
  %3517 = vmatpush1.bf16.msra.mxu0 %v2152
  %3518 = vmatprep.subr.bf16.mxu0 %v2213
  %3519 = vmatpush2.bf16.msra.mxu0 %v2212
  %3520 = vmatprep.subr.bf16.mxu0 %v2209
  %3521 = vmatpush2.bf16.msra.mxu0 %v2208
  %3522 = vmatprep.subr.bf16.mxu0 %v2205
  %3523 = vmatpush2.bf16.msra.mxu0 %v2204
  %3524 = vmatprep.subr.bf16.mxu0 %v2201
  %3525 = vmatpush2.bf16.msra.mxu0 %v2200
  %3526 = vmatprep.subr.bf16.mxu0 %v2197
  %3527 = vmatpush2.bf16.msra.mxu0 %v2196
  %3528 = vmatprep.subr.bf16.mxu0 %v2193
  %3529 = vmatpush2.bf16.msra.mxu0 %v2192
  %3530 = vmatprep.subr.bf16.mxu0 %v2189
  %3531 = vmatpush2.bf16.msra.mxu0 %v2188
  %3532 = vmatprep.subr.bf16.mxu0 %v2185
  %3533 = vmatpush2.bf16.msra.mxu0 %v2184
  %3534 = vmatprep.mubr.bf16.mxu0 %v583
  %3535 = vmatmul.mubr.bf16.gmra.mxu0 %v582
  %v3536 = vpop.f32.mrf.mxu0
  %v3537 = vadd.f32 %v549, %v3536
  %v3538 = vpop.f32.mrf.mxu0
  %v3539 = vadd.f32 %v553, %v3538
  %v3540 = vpop.f32.mrf.mxu0
  %v3541 = vpop.f32.mrf.mxu0
  %3542 = vdwg.mxu0
  %3543 = vmatprep.subr.bf16.mxu0 %v2245
  %3544 = vmatpush1.bf16.msra.mxu0 %v2244
  %3545 = vmatprep.subr.bf16.mxu0 %v2241
  %3546 = vmatpush1.bf16.msra.mxu0 %v2240
  %3547 = vmatprep.subr.bf16.mxu0 %v2237
  %3548 = vmatpush1.bf16.msra.mxu0 %v2236
  %3549 = vmatprep.subr.bf16.mxu0 %v2233
  %3550 = vmatpush1.bf16.msra.mxu0 %v2232
  %3551 = vmatprep.subr.bf16.mxu0 %v2229
  %3552 = vmatpush1.bf16.msra.mxu0 %v2228
  %3553 = vmatprep.subr.bf16.mxu0 %v2225
  %3554 = vmatpush1.bf16.msra.mxu0 %v2224
  %3555 = vmatprep.subr.bf16.mxu0 %v2221
  %3556 = vmatpush1.bf16.msra.mxu0 %v2220
  %3557 = vmatprep.subr.bf16.mxu0 %v2217
  %3558 = vmatpush1.bf16.msra.mxu0 %v2216
  %3559 = vmatprep.subr.bf16.mxu0 %v2277
  %3560 = vmatpush2.bf16.msra.mxu0 %v2276
  %3561 = vmatprep.subr.bf16.mxu0 %v2273
  %3562 = vmatpush2.bf16.msra.mxu0 %v2272
  %3563 = vmatprep.subr.bf16.mxu0 %v2269
  %3564 = vmatpush2.bf16.msra.mxu0 %v2268
  %3565 = vmatprep.subr.bf16.mxu0 %v2265
  %3566 = vmatpush2.bf16.msra.mxu0 %v2264
  %3567 = vmatprep.subr.bf16.mxu0 %v2261
  %3568 = vmatpush2.bf16.msra.mxu0 %v2260
  %3569 = vmatprep.subr.bf16.mxu0 %v2257
  %3570 = vmatpush2.bf16.msra.mxu0 %v2256
  %3571 = vmatprep.subr.bf16.mxu0 %v2253
  %3572 = vmatpush2.bf16.msra.mxu0 %v2252
  %3573 = vmatprep.subr.bf16.mxu0 %v2249
  %3574 = vmatpush2.bf16.msra.mxu0 %v2248
  %3575 = vmatprep.mubr.bf16.mxu0 %v585
  %3576 = vmatmul.mubr.bf16.gmra.mxu0 %v584
  %v3577 = vpop.f32.mrf.mxu0
  %v3578 = vadd.f32 %v3537, %v3577
  %v3579 = vpop.f32.mrf.mxu0
  %v3580 = vadd.f32 %v3539, %v3579
  %v3581 = vpop.f32.mrf.mxu0
  %v3582 = vpop.f32.mrf.mxu0
  %3583 = vdwg.mxu0
  %3584 = vmatprep.subr.bf16.mxu0 %v2309
  %3585 = vmatpush1.bf16.msra.mxu0 %v2308
  %3586 = vmatprep.subr.bf16.mxu0 %v2305
  %3587 = vmatpush1.bf16.msra.mxu0 %v2304
  %3588 = vmatprep.subr.bf16.mxu0 %v2301
  %3589 = vmatpush1.bf16.msra.mxu0 %v2300
  %3590 = vmatprep.subr.bf16.mxu0 %v2297
  %3591 = vmatpush1.bf16.msra.mxu0 %v2296
  %3592 = vmatprep.subr.bf16.mxu0 %v2293
  %3593 = vmatpush1.bf16.msra.mxu0 %v2292
  %3594 = vmatprep.subr.bf16.mxu0 %v2289
  %3595 = vmatpush1.bf16.msra.mxu0 %v2288
  %3596 = vmatprep.subr.bf16.mxu0 %v2285
  %3597 = vmatpush1.bf16.msra.mxu0 %v2284
  %3598 = vmatprep.subr.bf16.mxu0 %v2281
  %3599 = vmatpush1.bf16.msra.mxu0 %v2280
  %3600 = vmatprep.subr.bf16.mxu0 %v2341
  %3601 = vmatpush2.bf16.msra.mxu0 %v2340
  %3602 = vmatprep.subr.bf16.mxu0 %v2337
  %3603 = vmatpush2.bf16.msra.mxu0 %v2336
  %3604 = vmatprep.subr.bf16.mxu0 %v2333
  %3605 = vmatpush2.bf16.msra.mxu0 %v2332
  %3606 = vmatprep.subr.bf16.mxu0 %v2329
  %3607 = vmatpush2.bf16.msra.mxu0 %v2328
  %3608 = vmatprep.subr.bf16.mxu0 %v2325
  %3609 = vmatpush2.bf16.msra.mxu0 %v2324
  %3610 = vmatprep.subr.bf16.mxu0 %v2321
  %3611 = vmatpush2.bf16.msra.mxu0 %v2320
  %3612 = vmatprep.subr.bf16.mxu0 %v2317
  %3613 = vmatpush2.bf16.msra.mxu0 %v2316
  %3614 = vmatprep.subr.bf16.mxu0 %v2313
  %3615 = vmatpush2.bf16.msra.mxu0 %v2312
  %3616 = vmatprep.mubr.bf16.mxu0 %v587
  %3617 = vmatmul.mubr.bf16.gmra.mxu0 %v586
  %v3618 = vpop.f32.mrf.mxu0
  %v3619 = vadd.f32 %v3578, %v3618
  %v3620 = vpop.f32.mrf.mxu0
  %v3621 = vadd.f32 %v3580, %v3620
  %v3622 = vpop.f32.mrf.mxu0
  %v3623 = vpop.f32.mrf.mxu0
  %3624 = vdwg.mxu0
  %3625 = vmatprep.subr.bf16.mxu0 %v2373
  %3626 = vmatpush1.bf16.msra.mxu0 %v2372
  %3627 = vmatprep.subr.bf16.mxu0 %v2369
  %3628 = vmatpush1.bf16.msra.mxu0 %v2368
  %3629 = vmatprep.subr.bf16.mxu0 %v2365
  %3630 = vmatpush1.bf16.msra.mxu0 %v2364
  %3631 = vmatprep.subr.bf16.mxu0 %v2361
  %3632 = vmatpush1.bf16.msra.mxu0 %v2360
  %3633 = vmatprep.subr.bf16.mxu0 %v2357
  %3634 = vmatpush1.bf16.msra.mxu0 %v2356
  %3635 = vmatprep.subr.bf16.mxu0 %v2353
  %3636 = vmatpush1.bf16.msra.mxu0 %v2352
  %3637 = vmatprep.subr.bf16.mxu0 %v2349
  %3638 = vmatpush1.bf16.msra.mxu0 %v2348
  %3639 = vmatprep.subr.bf16.mxu0 %v2345
  %3640 = vmatpush1.bf16.msra.mxu0 %v2344
  %3641 = vmatprep.subr.bf16.mxu0 %v2405
  %3642 = vmatpush2.bf16.msra.mxu0 %v2404
  %3643 = vmatprep.subr.bf16.mxu0 %v2401
  %3644 = vmatpush2.bf16.msra.mxu0 %v2400
  %3645 = vmatprep.subr.bf16.mxu0 %v2397
  %3646 = vmatpush2.bf16.msra.mxu0 %v2396
  %3647 = vmatprep.subr.bf16.mxu0 %v2393
  %3648 = vmatpush2.bf16.msra.mxu0 %v2392
  %3649 = vmatprep.subr.bf16.mxu0 %v2389
  %3650 = vmatpush2.bf16.msra.mxu0 %v2388
  %3651 = vmatprep.subr.bf16.mxu0 %v2385
  %3652 = vmatpush2.bf16.msra.mxu0 %v2384
  %3653 = vmatprep.subr.bf16.mxu0 %v2381
  %3654 = vmatpush2.bf16.msra.mxu0 %v2380
  %3655 = vmatprep.subr.bf16.mxu0 %v2377
  %3656 = vmatpush2.bf16.msra.mxu0 %v2376
  %3657 = vmatprep.mubr.bf16.mxu0 %v589
  %3658 = vmatmul.mubr.bf16.gmra.mxu0 %v588
  %v3659 = vpop.f32.mrf.mxu0
  %v3660 = vadd.f32 %v3619, %v3659
  %v3661 = vpop.f32.mrf.mxu0
  %v3662 = vadd.f32 %v3621, %v3661
  %v3663 = vpop.f32.mrf.mxu0
  %v3664 = vpop.f32.mrf.mxu0
  %3665 = vdwg.mxu0
  %3666 = vmatprep.subr.bf16.mxu0 %v2437
  %3667 = vmatpush1.bf16.msra.mxu0 %v2436
  %3668 = vmatprep.subr.bf16.mxu0 %v2433
  %3669 = vmatpush1.bf16.msra.mxu0 %v2432
  %3670 = vmatprep.subr.bf16.mxu0 %v2429
  %3671 = vmatpush1.bf16.msra.mxu0 %v2428
  %3672 = vmatprep.subr.bf16.mxu0 %v2425
  %3673 = vmatpush1.bf16.msra.mxu0 %v2424
  %3674 = vmatprep.subr.bf16.mxu0 %v2421
  %3675 = vmatpush1.bf16.msra.mxu0 %v2420
  %3676 = vmatprep.subr.bf16.mxu0 %v2417
  %3677 = vmatpush1.bf16.msra.mxu0 %v2416
  %3678 = vmatprep.subr.bf16.mxu0 %v2413
  %3679 = vmatpush1.bf16.msra.mxu0 %v2412
  %3680 = vmatprep.subr.bf16.mxu0 %v2409
  %3681 = vmatpush1.bf16.msra.mxu0 %v2408
  %3682 = vmatprep.subr.bf16.mxu0 %v2469
  %3683 = vmatpush2.bf16.msra.mxu0 %v2468
  %3684 = vmatprep.subr.bf16.mxu0 %v2465
  %3685 = vmatpush2.bf16.msra.mxu0 %v2464
  %3686 = vmatprep.subr.bf16.mxu0 %v2461
  %3687 = vmatpush2.bf16.msra.mxu0 %v2460
  %3688 = vmatprep.subr.bf16.mxu0 %v2457
  %3689 = vmatpush2.bf16.msra.mxu0 %v2456
  %3690 = vmatprep.subr.bf16.mxu0 %v2453
  %3691 = vmatpush2.bf16.msra.mxu0 %v2452
  %3692 = vmatprep.subr.bf16.mxu0 %v2449
  %3693 = vmatpush2.bf16.msra.mxu0 %v2448
  %3694 = vmatprep.subr.bf16.mxu0 %v2445
  %3695 = vmatpush2.bf16.msra.mxu0 %v2444
  %3696 = vmatprep.subr.bf16.mxu0 %v2441
  %3697 = vmatpush2.bf16.msra.mxu0 %v2440
  %3698 = vmatprep.mubr.bf16.mxu0 %v591
  %3699 = vmatmul.mubr.bf16.gmra.mxu0 %v590
  %v3700 = vpop.f32.mrf.mxu0
  %v3701 = vadd.f32 %v3660, %v3700
  %v3702 = vpop.f32.mrf.mxu0
  %v3703 = vadd.f32 %v3662, %v3702
  %v3704 = vpop.f32.mrf.mxu0
  %v3705 = vpop.f32.mrf.mxu0
  %3706 = vdwg.mxu0
  %3707 = vmatprep.subr.bf16.mxu0 %v2501
  %3708 = vmatpush1.bf16.msra.mxu0 %v2500
  %3709 = vmatprep.subr.bf16.mxu0 %v2497
  %3710 = vmatpush1.bf16.msra.mxu0 %v2496
  %3711 = vmatprep.subr.bf16.mxu0 %v2493
  %3712 = vmatpush1.bf16.msra.mxu0 %v2492
  %3713 = vmatprep.subr.bf16.mxu0 %v2489
  %3714 = vmatpush1.bf16.msra.mxu0 %v2488
  %3715 = vmatprep.subr.bf16.mxu0 %v2485
  %3716 = vmatpush1.bf16.msra.mxu0 %v2484
  %3717 = vmatprep.subr.bf16.mxu0 %v2481
  %3718 = vmatpush1.bf16.msra.mxu0 %v2480
  %3719 = vmatprep.subr.bf16.mxu0 %v2477
  %3720 = vmatpush1.bf16.msra.mxu0 %v2476
  %3721 = vmatprep.subr.bf16.mxu0 %v2473
  %3722 = vmatpush1.bf16.msra.mxu0 %v2472
  %3723 = vmatprep.subr.bf16.mxu0 %v2533
  %3724 = vmatpush2.bf16.msra.mxu0 %v2532
  %3725 = vmatprep.subr.bf16.mxu0 %v2529
  %3726 = vmatpush2.bf16.msra.mxu0 %v2528
  %3727 = vmatprep.subr.bf16.mxu0 %v2525
  %3728 = vmatpush2.bf16.msra.mxu0 %v2524
  %3729 = vmatprep.subr.bf16.mxu0 %v2521
  %3730 = vmatpush2.bf16.msra.mxu0 %v2520
  %3731 = vmatprep.subr.bf16.mxu0 %v2517
  %3732 = vmatpush2.bf16.msra.mxu0 %v2516
  %3733 = vmatprep.subr.bf16.mxu0 %v2513
  %3734 = vmatpush2.bf16.msra.mxu0 %v2512
  %3735 = vmatprep.subr.bf16.mxu0 %v2509
  %3736 = vmatpush2.bf16.msra.mxu0 %v2508
  %3737 = vmatprep.subr.bf16.mxu0 %v2505
  %3738 = vmatpush2.bf16.msra.mxu0 %v2504
  %3739 = vmatprep.mubr.bf16.mxu0 %v593
  %3740 = vmatmul.mubr.bf16.gmra.mxu0 %v592
  %v3741 = vpop.f32.mrf.mxu0
  %v3742 = vadd.f32 %v3701, %v3741
  %v3743 = vpop.f32.mrf.mxu0
  %v3744 = vadd.f32 %v3703, %v3743
  %v3745 = vpop.f32.mrf.mxu0
  %v3746 = vpop.f32.mrf.mxu0
  %3747 = vdwg.mxu0
  %3748 = vmatprep.subr.bf16.mxu0 %v2565
  %3749 = vmatpush1.bf16.msra.mxu0 %v2564
  %3750 = vmatprep.subr.bf16.mxu0 %v2561
  %3751 = vmatpush1.bf16.msra.mxu0 %v2560
  %3752 = vmatprep.subr.bf16.mxu0 %v2557
  %3753 = vmatpush1.bf16.msra.mxu0 %v2556
  %3754 = vmatprep.subr.bf16.mxu0 %v2553
  %3755 = vmatpush1.bf16.msra.mxu0 %v2552
  %3756 = vmatprep.subr.bf16.mxu0 %v2549
  %3757 = vmatpush1.bf16.msra.mxu0 %v2548
  %3758 = vmatprep.subr.bf16.mxu0 %v2545
  %3759 = vmatpush1.bf16.msra.mxu0 %v2544
  %3760 = vmatprep.subr.bf16.mxu0 %v2541
  %3761 = vmatpush1.bf16.msra.mxu0 %v2540
  %3762 = vmatprep.subr.bf16.mxu0 %v2537
  %3763 = vmatpush1.bf16.msra.mxu0 %v2536
  %3764 = vmatprep.subr.bf16.mxu0 %v2597
  %3765 = vmatpush2.bf16.msra.mxu0 %v2596
  %3766 = vmatprep.subr.bf16.mxu0 %v2593
  %3767 = vmatpush2.bf16.msra.mxu0 %v2592
  %3768 = vmatprep.subr.bf16.mxu0 %v2589
  %3769 = vmatpush2.bf16.msra.mxu0 %v2588
  %3770 = vmatprep.subr.bf16.mxu0 %v2585
  %3771 = vmatpush2.bf16.msra.mxu0 %v2584
  %3772 = vmatprep.subr.bf16.mxu0 %v2581
  %3773 = vmatpush2.bf16.msra.mxu0 %v2580
  %3774 = vmatprep.subr.bf16.mxu0 %v2577
  %3775 = vmatpush2.bf16.msra.mxu0 %v2576
  %3776 = vmatprep.subr.bf16.mxu0 %v2573
  %3777 = vmatpush2.bf16.msra.mxu0 %v2572
  %3778 = vmatprep.subr.bf16.mxu0 %v2569
  %3779 = vmatpush2.bf16.msra.mxu0 %v2568
  %3780 = vmatprep.mubr.bf16.mxu0 %v595
  %3781 = vmatmul.mubr.bf16.gmra.mxu0 %v594
  %v3782 = vpop.f32.mrf.mxu0
  %v3783 = vadd.f32 %v3742, %v3782
  %v3784 = vpop.f32.mrf.mxu0
  %v3785 = vadd.f32 %v3744, %v3784
  %v3786 = vpop.f32.mrf.mxu0
  %v3787 = vpop.f32.mrf.mxu0
  %3788 = vdwg.mxu0
  %3789 = vmatprep.subr.bf16.mxu0 %v2629
  %3790 = vmatpush1.bf16.msra.mxu0 %v2628
  %3791 = vmatprep.subr.bf16.mxu0 %v2625
  %3792 = vmatpush1.bf16.msra.mxu0 %v2624
  %3793 = vmatprep.subr.bf16.mxu0 %v2621
  %3794 = vmatpush1.bf16.msra.mxu0 %v2620
  %3795 = vmatprep.subr.bf16.mxu0 %v2617
  %3796 = vmatpush1.bf16.msra.mxu0 %v2616
  %3797 = vmatprep.subr.bf16.mxu0 %v2613
  %3798 = vmatpush1.bf16.msra.mxu0 %v2612
  %3799 = vmatprep.subr.bf16.mxu0 %v2609
  %3800 = vmatpush1.bf16.msra.mxu0 %v2608
  %3801 = vmatprep.subr.bf16.mxu0 %v2605
  %3802 = vmatpush1.bf16.msra.mxu0 %v2604
  %3803 = vmatprep.subr.bf16.mxu0 %v2601
  %3804 = vmatpush1.bf16.msra.mxu0 %v2600
  %3805 = vmatprep.subr.bf16.mxu0 %v2661
  %3806 = vmatpush2.bf16.msra.mxu0 %v2660
  %3807 = vmatprep.subr.bf16.mxu0 %v2657
  %3808 = vmatpush2.bf16.msra.mxu0 %v2656
  %3809 = vmatprep.subr.bf16.mxu0 %v2653
  %3810 = vmatpush2.bf16.msra.mxu0 %v2652
  %3811 = vmatprep.subr.bf16.mxu0 %v2649
  %3812 = vmatpush2.bf16.msra.mxu0 %v2648
  %3813 = vmatprep.subr.bf16.mxu0 %v2645
  %3814 = vmatpush2.bf16.msra.mxu0 %v2644
  %3815 = vmatprep.subr.bf16.mxu0 %v2641
  %3816 = vmatpush2.bf16.msra.mxu0 %v2640
  %3817 = vmatprep.subr.bf16.mxu0 %v2637
  %3818 = vmatpush2.bf16.msra.mxu0 %v2636
  %3819 = vmatprep.subr.bf16.mxu0 %v2633
  %3820 = vmatpush2.bf16.msra.mxu0 %v2632
  %3821 = vmatprep.mubr.bf16.mxu0 %v597
  %3822 = vmatmul.mubr.bf16.gmra.mxu0 %v596
  %v3823 = vpop.f32.mrf.mxu0
  %v3824 = vadd.f32 %v3783, %v3823
  %v3825 = vpop.f32.mrf.mxu0
  %v3826 = vadd.f32 %v3785, %v3825
  %v3827 = vpop.f32.mrf.mxu0
  %v3828 = vpop.f32.mrf.mxu0
  %3829 = vdwg.mxu0
  %3830 = vst [vmem:[%s3] sm:$0xff] %v3496
  %3831 = vst [vmem:[%s3 + $0x8] sm:$0xff] %v3498
  %3832 = vst [vmem:[%s3 + $0x10] sm:$0xff] %v3824
  %3833 = vst [vmem:[%s3 + $0x18] sm:$0xff] %v3826
  %v3834 = vrot.slane %v3496, 4
  %v3835 = vadd.f32 %v3496, %v3834
  %v3836 = vrot.slane %v3835, 2
  %v3837 = vadd.f32 %v3835, %v3836
  %v3838 = vrot.slane %v3837, 1
  %v3839 = vadd.f32 %v3837, %v3838
  %v3840 = vrot.slane %v3498, 4
  %v3841 = vadd.f32 %v3498, %v3840
  %v3842 = vrot.slane %v3841, 2
  %v3843 = vadd.f32 %v3841, %v3842
  %v3844 = vrot.slane %v3843, 1
  %v3845 = vadd.f32 %v3843, %v3844
  %v3846 = vrot.slane %v3824, 4
  %v3847 = vadd.f32 %v3824, %v3846
  %v3848 = vrot.slane %v3847, 2
  %v3849 = vadd.f32 %v3847, %v3848
  %v3850 = vrot.slane %v3849, 1
  %v3851 = vadd.f32 %v3849, %v3850
  %v3852 = vrot.slane %v3826, 4
  %v3853 = vadd.f32 %v3826, %v3852
  %v3854 = vrot.slane %v3853, 2
  %v3855 = vadd.f32 %v3853, %v3854
  %v3856 = vrot.slane %v3855, 1
  %v3857 = vadd.f32 %v3855, %v3856
  %v3858 = vmul.f32 %v3496, %v3496
  %v3859 = vmul.f32 %v3498, %v3498
  %v3860 = vmul.f32 %v3824, %v3824
  %v3861 = vmul.f32 %v3826, %v3826
  %v3862 = vrot.slane %v3858, 4
  %v3863 = vadd.f32 %v3858, %v3862
  %v3864 = vrot.slane %v3863, 2
  %v3865 = vadd.f32 %v3863, %v3864
  %v3866 = vrot.slane %v3865, 1
  %v3867 = vadd.f32 %v3865, %v3866
  %v3868 = vrot.slane %v3859, 4
  %v3869 = vadd.f32 %v3859, %v3868
  %v3870 = vrot.slane %v3869, 2
  %v3871 = vadd.f32 %v3869, %v3870
  %v3872 = vrot.slane %v3871, 1
  %v3873 = vadd.f32 %v3871, %v3872
  %v3874 = vrot.slane %v3860, 4
  %v3875 = vadd.f32 %v3860, %v3874
  %v3876 = vrot.slane %v3875, 2
  %v3877 = vadd.f32 %v3875, %v3876
  %v3878 = vrot.slane %v3877, 1
  %v3879 = vadd.f32 %v3877, %v3878
  %v3880 = vrot.slane %v3861, 4
  %v3881 = vadd.f32 %v3861, %v3880
  %v3882 = vrot.slane %v3881, 2
  %v3883 = vadd.f32 %v3881, %v3882
  %v3884 = vrot.slane %v3883, 1
  %v3885 = vadd.f32 %v3883, %v3884
  %vm3886 = vcmask 1040384
  %v3887 = vsel %vm3886, %v3839, %v3867
  %v3888 = vsel %vm3886, %v3845, %v3873
  %v3889 = vsel %vm3886, %v3851, %v3879
  %v3890 = vsel %vm3886, %v3857, %v3885
  %v3895 = vcombine.low %v3887, %v3888
  %v3896 = vcombine.low %v3889, %v3890
  %v3898 = vunpack.c.l.s4 1983009808
  %v3899 = vunpack.c.0.s8 %v3898
  %v3900 = vlaneseq
  %v3901 = vshrl.u32 %v3900, 7
  %v3902 = vsub.s32 %v3899, %v3901
  %v3903 = vrot.slane %v3895, %v3902
  %v3905 = vunpack.c.l.s4 1983009808
  %v3906 = vunpack.c.0.s8 %v3905
  %v3907 = vlaneseq
  %v3908 = vshrl.u32 %v3907, 7
  %v3909 = vsub.s32 %v3906, %v3908
  %v3910 = vrot.slane %v3896, %v3909
  %v3911 = vcombine.low %v3903, %v3910
  %3913 = vst [vmem:[%s4] sm:$0xff] %v3911
  // Predicated region
  $region14: #{extractor_forward.10} parent=0 // pred_check
    _
  $region15: #{extractor_forward.10} parent=0 // pred_check_branch
    %3915 = sbr.rel (0) target = $region17
  $region16: #{extractor_forward.10} parent=0 // pred_region
    _
  $region17: #{extractor_forward.10} parent=0 // pred_fallthru
    _
  // Predicated region
  $region18: #{extractor_forward.10} parent=0 // pred_check
    _
  $region19: #{extractor_forward.10} parent=0 // pred_check_branch
    %3917 = sbr.rel (0) target = $region21
  $region20: #{extractor_forward.10} parent=0 // pred_region
    _
  $region21: #{extractor_forward.10} parent=0 // pred_fallthru
    _
  // Predicated region
  $region22: #{extractor_forward.10} parent=0 // pred_check
    _
  $region23: #{extractor_forward.10} parent=0 // pred_check_branch
    %3919 = sbr.rel (0) target = $region25
  $region24: #{extractor_forward.10} parent=0 // pred_region
    _
  $region25: #{extractor_forward.10} parent=0 // pred_fallthru
    _
  // Predicated region
  $region26: #{extractor_forward.10} parent=0 // pred_check
    _
  $region27: #{extractor_forward.10} parent=0 // pred_check_branch
    %3921 = sbr.rel (0) target = $region29
  $region28: #{extractor_forward.10} parent=0 // pred_region
    _
  $region29: #{extractor_forward.10} parent=0 // pred_fallthru
    _

</llo_original>
